<compile_context>
chip_gen: v7x
topology: tpu7x:2x2x1
jax: 0.10.0
libtpu: 0.0.40
codegen_flags: <defaults>
</compile_context>

<pallas_src>
import functools
import math

import jax
import jax.numpy as jnp
from jax import lax
from jax.experimental import pallas as pl
from jax.experimental.pallas import tpu as pltpu


class Cfg:
    num_features_relation = 32   # C (== NFR)
    num_graph = 4                # NG
    num_groups = 3               # G
    training_stage = 2
    train_dropout_prob = 0.3     # nn.Dropout is constructed but never used in forward


_LN_EPS = 1e-5


def _sigmoid(x):
    return 1.0 / (1.0 + jnp.exp(-x))


def _elu(x):
    # guarded exp: never evaluates exp() on large positive x (grad-safe)
    return jnp.where(x > 0, x, jnp.exp(jnp.minimum(x, 0.0)) - 1.0)


# ---------------------------------------------------------------------------
# Kernel 1: stacked fc_rn_theta + similarity graphs + adjacency channel
#           + LayerNorm([NG+1]); output in GRU-ready (T, H, B, N, N) layout.
# ---------------------------------------------------------------------------
def _edge_feature_kernel(x_ref, adj_ref, w_ref, b_ref, gam_ref, bet_ref, out_ref,
                         *, B, N, C, NG, inv_sqrt_c):
    H = NG + 1
    x = x_ref[...].reshape(B * N, C)                                   # (B*N, C)
    # all NG graphs' thetas in one lane-dense matmul: (B*N, C) @ (C, NG*C)
    theta = jnp.dot(x, w_ref[...], preferred_element_type=jnp.float32) + b_ref[...]

    chans = []
    for g in range(NG):
        th = theta[:, g * C:(g + 1) * C].reshape(B, N, C)              # (B, N, C)
        s = jnp.einsum('bnc,bmc->bnm', th, th,
                       preferred_element_type=jnp.float32) * inv_sqrt_c
        chans.append(s)                                                # (B, N, N)
    chans.append(adj_ref[...].reshape(B, N, N))                        # adjacency channel

    # LayerNorm over the H=NG+1 channels (elementwise over the channel list)
    mu = chans[0]
    for c in chans[1:]:
        mu = mu + c
    mu = mu * (1.0 / H)
    var = (chans[0] - mu) ** 2
    for c in chans[1:]:
        var = var + (c - mu) ** 2
    var = var * (1.0 / H)
    inv = lax.rsqrt(var + _LN_EPS)

    for h in range(H):
        out_ref[0, h] = (chans[h] - mu) * inv * gam_ref[h] + bet_ref[h]


def edge_features(x, adj0, w_stk, b_stk, ln_g, ln_b, *, NG):
    B, T, N, C = x.shape
    H = NG + 1
    kernel = functools.partial(_edge_feature_kernel, B=B, N=N, C=C, NG=NG,
                               inv_sqrt_c=1.0 / math.sqrt(C))
    return pl.pallas_call(
        kernel,
        out_shape=jax.ShapeDtypeStruct((T, H, B, N, N), jnp.float32),
        grid=(T,),
        in_specs=[
            pl.BlockSpec((B, 1, N, C), lambda t: (0, t, 0, 0)),
            pl.BlockSpec((B, 1, N, N), lambda t: (0, t, 0, 0)),
            pl.BlockSpec((C, NG * C), lambda t: (0, 0)),
            pl.BlockSpec((1, NG * C), lambda t: (0, 0)),
            pl.BlockSpec(memory_space=pltpu.MemorySpace.SMEM),
            pl.BlockSpec(memory_space=pltpu.MemorySpace.SMEM),
        ],
        out_specs=pl.BlockSpec((1, H, B, N, N), lambda t: (t, 0, 0, 0, 0)),
        compiler_params=pltpu.CompilerParams(dimension_semantics=("parallel",)),
    )(x, adj0, w_stk, b_stk, ln_g, ln_b)


# ---------------------------------------------------------------------------
# Kernel 2: bidirectional single-layer GRU in (H, M) column layout.
#           grid=(2,) over directions (independent -> parallel / 2 TCs on v7x).
#           Per step only 2 fused matmuls: g = Wi4 @ x_t + Wh4 @ h + b4, with
#           Wi4 = [Wir;Wiz;Win;0], Wh4 = [Whr;Whz;0;Whn], b4 = [bir+bhr;biz+bhz;bin;bhn].
# ---------------------------------------------------------------------------
def _gru_kernel(ef_ref, h0_ref, wi_ref, wh_ref, b_ref, out_ref, *, T, H):
    wi = wi_ref[0]                # (4H, H)
    wh = wh_ref[0]                # (4H, H)
    b = b_ref[0]                  # (4H, 1)

    def step(x_t, h):
        g = (jnp.dot(wi, x_t, preferred_element_type=jnp.float32)
             + jnp.dot(wh, h, preferred_element_type=jnp.float32) + b)   # (4H, M)
        r = _sigmoid(g[0:H])
        z = _sigmoid(g[H:2 * H])
        n = jnp.tanh(g[2 * H:3 * H] + r * g[3 * H:4 * H])
        return (1.0 - z) * n + z * h

    d = pl.program_id(0)

    @pl.when(d == 0)              # forward direction
    def _():
        h = h0_ref[0]
        for t in range(T):
            h = step(ef_ref[t], h)
            out_ref[0, t] = h

    @pl.when(d == 1)              # reverse direction
    def _():
        h = h0_ref[0]
        for t in range(T - 1, -1, -1):
            h = step(ef_ref[t], h)
            out_ref[0, t] = h


def gru_bidirectional(ef, h1, wi4, wh4, b4):
    T, H, M = ef.shape
    kernel = functools.partial(_gru_kernel, T=T, H=H)
    return pl.pallas_call(
        kernel,
        out_shape=jax.ShapeDtypeStruct((2, T, H, M), jnp.float32),
        grid=(2,),
        in_specs=[
            pl.BlockSpec((T, H, M), lambda d: (0, 0, 0)),
            pl.BlockSpec((1, H, M), lambda d: (d, 0, 0)),
            pl.BlockSpec((1, 4 * H, H), lambda d: (d, 0, 0)),
            pl.BlockSpec((1, 4 * H, H), lambda d: (d, 0, 0)),
            pl.BlockSpec((1, 4 * H, 1), lambda d: (d, 0, 0)),
        ],
        out_specs=pl.BlockSpec((1, T, H, M), lambda d: (d, 0, 0, 0)),
        compiler_params=pltpu.CompilerParams(dimension_semantics=("parallel",)),
    )(ef, h1, wi4, wh4, b4)


# ---------------------------------------------------------------------------
# Kernel 3: direction mean + fc_edge + LayerNorm(NG) + ELU + symmetrize
#           + mean over T + fc_groups, fused; grid=(B,).
# ---------------------------------------------------------------------------
def _head_kernel(gru_ref, we_ref, be_ref, lg_ref, lb_ref, wg_ref, bg_ref, out_ref,
                 *, T, H, NG, G):
    gv = gru_ref[...]                                   # (2, T, H, 1, N, N)
    g = 0.5 * (gv[0, :, :, 0] + gv[1, :, :, 0])         # mean over directions: (T, H, N, N)

    # fc_edge: Linear(H -> NG) as per-channel scalar FMAs (channel dims are tiny)
    e = []
    for ng in range(NG):
        acc = we_ref[ng, 0] * g[:, 0]
        for h in range(1, H):
            acc = acc + we_ref[ng, h] * g[:, h]
        e.append(acc + be_ref[ng])                      # (T, N, N)

    # LayerNorm over NG channels
    mu = e[0]
    for c in e[1:]:
        mu = mu + c
    mu = mu * (1.0 / NG)
    var = (e[0] - mu) ** 2
    for c in e[1:]:
        var = var + (c - mu) ** 2
    var = var * (1.0 / NG)
    inv = lax.rsqrt(var + _LN_EPS)

    # affine + ELU + symmetrize + mean over T
    sym = []
    for ng in range(NG):
        c = (e[ng] - mu) * inv * lg_ref[ng] + lb_ref[ng]
        c = _elu(c)
        m = c[0] + c[0].T
        for t in range(1, T):
            m = m + c[t] + c[t].T
        sym.append(m * (0.5 / T))                       # (N, N)

    # fc_groups: Linear(NG -> G); mean over T already applied (commutes with affine)
    for k in range(G):
        acc = wg_ref[k, 0] * sym[0]
        for ng in range(1, NG):
            acc = acc + wg_ref[k, ng] * sym[ng]
        out_ref[0, k] = acc + bg_ref[k]


def relation_head(gru6, w_edge, b_edge, ln_g, ln_b, w_g, b_g):
    _, T, H, B, N, _ = gru6.shape
    NG = w_edge.shape[0]
    G = w_g.shape[0]
    kernel = functools.partial(_head_kernel, T=T, H=H, NG=NG, G=G)
    return pl.pallas_call(
        kernel,
        out_shape=jax.ShapeDtypeStruct((B, G, N, N), jnp.float32),
        grid=(B,),
        in_specs=[
            pl.BlockSpec((2, T, H, 1, N, N), lambda b: (0, 0, 0, b, 0, 0)),
            pl.BlockSpec(memory_space=pltpu.MemorySpace.SMEM),   # W_edge (NG, H)
            pl.BlockSpec(memory_space=pltpu.MemorySpace.SMEM),   # b_edge (NG,)
            pl.BlockSpec(memory_space=pltpu.MemorySpace.SMEM),   # ln_g   (NG,)
            pl.BlockSpec(memory_space=pltpu.MemorySpace.SMEM),   # ln_b   (NG,)
            pl.BlockSpec(memory_space=pltpu.MemorySpace.SMEM),   # W_g    (G, NG)
            pl.BlockSpec(memory_space=pltpu.MemorySpace.SMEM),   # b_g    (G,)
        ],
        out_specs=pl.BlockSpec((1, G, N, N), lambda b: (b, 0, 0, 0)),
        compiler_params=pltpu.CompilerParams(dimension_semantics=("parallel",)),
    )(gru6, w_edge, b_edge, ln_g, ln_b, w_g, b_g)


# ---------------------------------------------------------------------------
# Full forward (three pallas_calls, only free reshapes + one tiny transpose as glue)
# ---------------------------------------------------------------------------
def relation_forward(params, features, adj_mask, h1, cfg):
    B, T, N, C = features.shape
    NG = cfg.num_graph
    H = NG + 1
    M = B * N * N

    x = features.astype(jnp.float32)
    # torch requires T1 == B*T so A[0] stacks with the (B*T, N, N) similarity maps
    adj0 = adj_mask[0].astype(jnp.float32).reshape(B, T, N, N)

    ef5 = edge_features(x, adj0, params["w_theta_stk"], params["b_theta_stk"],
                        params["ln_gru_g"], params["ln_gru_b"], NG=NG)   # (T, H, B, N, N)
    ef = ef5.reshape(T, H, M)                                            # free trailing merge

    gru_out = gru_bidirectional(ef, h1, params["wi4"], params["wh4"],
                                params["b4"])                            # (2, T, H, M)

    scores = relation_head(gru_out.reshape(2, T, H, B, N, N),
                           params["W_edge"], params["b_edge"],
                           params["ln_g"], params["ln_b"],
                           params["W_g"], params["b_g"])                 # (B, G, N, N)
    group_scores = jnp.transpose(scores, (0, 2, 3, 1))                   # (B, N, N, G)
    return (None, None, group_scores)


# ---------------------------------------------------------------------------
# Pure-JAX reference (mirrors the PyTorch math / layout) for a numerical check
# ---------------------------------------------------------------------------
def reference_forward(params, features, adj_mask, h1, cfg):
    B, T, N, C = features.shape
    NG = cfg.num_graph
    H = NG + 1

    x = features.reshape(B * T, N, C).astype(jnp.float32)
    sims = []
    for g in range(NG):
        w = params["w_theta_stk"][:, g * C:(g + 1) * C]
        b = params["b_theta_stk"][:, g * C:(g + 1) * C]
        theta = x @ w + b
        sims.append(theta @ jnp.swapaxes(theta, 1, 2) / math.sqrt(C))
    edge = jnp.stack(sims + [adj_mask[0].astype(jnp.float32)], axis=-1)   # (BT, N, N, H)
    edge = edge.reshape(B, T, N, N, H)
    ef = jnp.transpose(edge, (1, 0, 2, 3, 4)).reshape(T, B * N * N, H)
    mu = ef.mean(-1, keepdims=True)
    var = ((ef - mu) ** 2).mean(-1, keepdims=True)
    ef = (ef - mu) * lax.rsqrt(var + _LN_EPS) * params["ln_gru_g"] + params["ln_gru_b"]

    Wi, Wh, bi, bh = params["Wi"], params["Wh"], params["bi"], params["bh"]

    def run_dir(d, order):
        h = h1[d].T                                                       # (M, H)
        outs = [None] * T
        for t in order:
            xt = ef[t]
            r = _sigmoid(xt @ Wi[d, 0].T + h @ Wh[d, 0].T + bi[d, 0] + bh[d, 0])
            z = _sigmoid(xt @ Wi[d, 1].T + h @ Wh[d, 1].T + bi[d, 1] + bh[d, 1])
            n = jnp.tanh(xt @ Wi[d, 2].T + bi[d, 2] + r * (h @ Wh[d, 2].T + bh[d, 2]))
            h = (1.0 - z) * n + z * h
            outs[t] = h
        return jnp.stack(outs, 0)

    out = 0.5 * (run_dir(0, range(T)) + run_dir(1, range(T - 1, -1, -1)))  # (T, M, H)
    gmat = jnp.transpose(out.reshape(T, B, N, N, H), (1, 0, 2, 3, 4))      # (B, T, N, N, H)
    e = gmat @ params["W_edge"].T + params["b_edge"]
    mu = e.mean(-1, keepdims=True)
    var = ((e - mu) ** 2).mean(-1, keepdims=True)
    e = (e - mu) * lax.rsqrt(var + _LN_EPS) * params["ln_g"] + params["ln_b"]
    e = _elu(e)
    sym = 0.5 * (e + jnp.swapaxes(e, 2, 3))
    scores = sym @ params["W_g"].T + params["b_g"]                         # (B, T, N, N, G)
    return scores.mean(axis=1)                                             # (B, N, N, G)


def init_params(key, cfg):
    C = cfg.num_features_relation
    NG = cfg.num_graph
    H = NG + 1
    G = cfg.num_groups
    ks = jax.random.split(key, 12)

    # fc_rn_theta_list: NG x Linear(C, C); stacked so theta_all = x @ w_theta_stk + b
    w_theta = jax.random.normal(ks[0], (NG, C, C), jnp.float32) * math.sqrt(2.0 / C)
    w_theta_stk = jnp.concatenate([w_theta[g].T for g in range(NG)], axis=1)   # (C, NG*C)
    b_theta_stk = 0.1 * jax.random.normal(ks[1], (1, NG * C), jnp.float32)

    # GRU weights. TODO(synk): torch uses orthogonal_ init; deterministic normal here.
    Wi = jax.random.normal(ks[2], (2, 3, H, H), jnp.float32) / math.sqrt(H)
    Wh = jax.random.normal(ks[3], (2, 3, H, H), jnp.float32) / math.sqrt(H)
    bi = 0.1 * jax.random.normal(ks[4], (2, 3, H), jnp.float32)
    bh = 0.1 * jax.random.normal(ks[5], (2, 3, H), jnp.float32)
    zeros_h = jnp.zeros((2, H, H), jnp.float32)
    wi4 = jnp.concatenate([Wi[:, 0], Wi[:, 1], Wi[:, 2], zeros_h], axis=1)     # (2, 4H, H)
    wh4 = jnp.concatenate([Wh[:, 0], Wh[:, 1], zeros_h, Wh[:, 2]], axis=1)     # (2, 4H, H)
    b4 = jnp.concatenate([bi[:, 0] + bh[:, 0], bi[:, 1] + bh[:, 1],
                          bi[:, 2], bh[:, 2]], axis=1)[..., None]              # (2, 4H, 1)

    return dict(
        w_theta_stk=w_theta_stk,
        b_theta_stk=b_theta_stk,
        ln_gru_g=1.0 + 0.1 * jax.random.normal(ks[6], (H,), jnp.float32),
        ln_gru_b=0.1 * jax.random.normal(ks[7], (H,), jnp.float32),
        Wi=Wi, Wh=Wh, bi=bi, bh=bh,
        wi4=wi4, wh4=wh4, b4=b4,
        W_edge=jax.random.normal(ks[8], (NG, H), jnp.float32) * math.sqrt(2.0 / H),
        b_edge=0.1 * jax.random.normal(ks[9], (NG,), jnp.float32),
        ln_g=1.0 + 0.1 * jax.random.normal(ks[10], (NG,), jnp.float32),
        ln_b=0.1 * jax.random.normal(ks[11], (NG,), jnp.float32),
        W_g=jax.random.normal(ks[8], (G, NG), jnp.float32) * math.sqrt(2.0 / NG),
        b_g=jnp.zeros((G,), jnp.float32),
    )


if __name__ == "__main__":
    cfg = Cfg()
    B, T, N = 2, 4, 8
    C = cfg.num_features_relation
    NG = cfg.num_graph
    H = NG + 1
    T1 = B * T          # torch requires T1 == B*T for the stack with A[0]
    M = B * N * N

    key = jax.random.PRNGKey(0)
    k_feat, k_adj, k_h, k_par = jax.random.split(key, 4)
    features = jax.random.normal(k_feat, (B, T, N, C), jnp.float32)
    adj_mask = (jax.random.uniform(k_adj, (B, T1, N, N)) > 0.5).astype(jnp.float32)
    # TODO(synk): torch draws a fresh xavier_normal_ h1 every forward call; fixed sample here.
    h1 = jax.random.normal(k_h, (2, H, M), jnp.float32) * math.sqrt(2.0 / (M + H))
    params = init_params(k_par, cfg)

    fwd = jax.jit(lambda f, a, h: relation_forward(params, f, a, h, cfg))
    _, _, group_scores = fwd(features, adj_mask, h1)
    group_scores = jax.block_until_ready(group_scores)

    ref = reference_forward(params, features, adj_mask, h1, cfg)
    assert group_scores.shape == (B, N, N, cfg.num_groups), group_scores.shape
    max_err = float(jnp.max(jnp.abs(group_scores - ref)))
    assert jnp.allclose(group_scores, ref, atol=1e-2, rtol=1e-2), max_err
    print("KERNEL_OK")
</pallas_src>

<mosaic_0001>
module attributes {stable_mosaic.version = 11 : i64} {
  func.func @_gru_kernel(%arg0: i32, %arg1: memref<4x5x128xf32, #tpu.memory_space<vmem>>, %arg2: memref<1x5x128xf32, #tpu.memory_space<vmem>>, %arg3: memref<1x20x5xf32, #tpu.memory_space<vmem>>, %arg4: memref<1x20x5xf32, #tpu.memory_space<vmem>>, %arg5: memref<1x20x1xf32, #tpu.memory_space<vmem>>, %arg6: memref<1x4x5x128xf32, #tpu.memory_space<vmem>>) attributes {dimension_semantics = [#tpu.dimension_semantics<parallel>], iteration_bounds = array<i64: 2>, scalar_prefetch = 0 : i64, scratch_operands = 0 : i64, tpu.core_type = #tpu.core_type<tc>, window_params = [{pipeline_mode = #tpu.pipeline_mode<synchronous>, transform_indices = @transform_0, window_bounds = array<i64: 4, 5, 128>}, {transform_indices = @transform_1, window_bounds = array<i64: 1, 5, 128>}, {transform_indices = @transform_2, window_bounds = array<i64: 1, 20, 5>}, {transform_indices = @transform_3, window_bounds = array<i64: 1, 20, 5>}, {transform_indices = @transform_4, window_bounds = array<i64: 1, 20, 1>}, {transform_indices = @transform_5, window_bounds = array<i64: 1, 4, 5, 128>}]} {
    %c0 = arith.constant 0 : index
    %c0_0 = arith.constant 0 : index
    %c0_1 = arith.constant 0 : index
    %0 = vector.load %arg3[%c0, %c0_0, %c0_1] : memref<1x20x5xf32, #tpu.memory_space<vmem>>, vector<1x20x5xf32>
    %1 = vector.shape_cast %0 : vector<1x20x5xf32> to vector<20x5xf32>
    %c0_2 = arith.constant 0 : index
    %c0_3 = arith.constant 0 : index
    %c0_4 = arith.constant 0 : index
    %2 = vector.load %arg4[%c0_2, %c0_3, %c0_4] : memref<1x20x5xf32, #tpu.memory_space<vmem>>, vector<1x20x5xf32>
    %3 = vector.shape_cast %2 : vector<1x20x5xf32> to vector<20x5xf32>
    %c0_5 = arith.constant 0 : index
    %c0_6 = arith.constant 0 : index
    %c0_7 = arith.constant 0 : index
    %4 = vector.load %arg5[%c0_5, %c0_6, %c0_7] : memref<1x20x1xf32, #tpu.memory_space<vmem>>, vector<1x20x1xf32>
    %5 = vector.shape_cast %4 : vector<1x20x1xf32> to vector<20x1xf32>
    %c0_i32 = arith.constant 0 : i32
    %6 = arith.cmpi eq, %arg0, %c0_i32 : i32
    %7 = arith.extui %6 : i1 to i32
    %c0_i32_8 = arith.constant 0 : i32
    %8 = arith.cmpi ne, %7, %c0_i32_8 : i32
    scf.if %8 {
      %c0_10 = arith.constant 0 : index
      %c0_11 = arith.constant 0 : index
      %c0_12 = arith.constant 0 : index
      %12 = vector.load %arg2[%c0_10, %c0_11, %c0_12] : memref<1x5x128xf32, #tpu.memory_space<vmem>>, vector<1x5x128xf32>
      %13 = vector.shape_cast %12 : vector<1x5x128xf32> to vector<5x128xf32>
      %c0_13 = arith.constant 0 : index
      %c0_14 = arith.constant 0 : index
      %c0_15 = arith.constant 0 : index
      %14 = vector.load %arg1[%c0_13, %c0_14, %c0_15] : memref<4x5x128xf32, #tpu.memory_space<vmem>>, vector<1x5x128xf32>
      %15 = vector.shape_cast %14 : vector<1x5x128xf32> to vector<5x128xf32>
      %cst = arith.constant dense<0.000000e+00> : vector<20x128xf32>
      %16 = tpu.matmul %1, %15, %cst {dimension_numbers = #tpu.dot_dimension_numbers<[1], [0], [0], [1], [0, 0, 1, 1], [], []>} : vector<20x5xf32>, vector<5x128xf32>, vector<20x128xf32> -> vector<20x128xf32>
      %cst_16 = arith.constant dense<0.000000e+00> : vector<20x128xf32>
      %17 = tpu.matmul %3, %13, %cst_16 {dimension_numbers = #tpu.dot_dimension_numbers<[1], [0], [0], [1], [0, 0, 1, 1], [], []>} : vector<20x5xf32>, vector<5x128xf32>, vector<20x128xf32> -> vector<20x128xf32>
      %18 = arith.addf %16, %17 : vector<20x128xf32>
      %19 = vector.broadcast %5 : vector<20x1xf32> to vector<20x128xf32>
      %20 = arith.addf %18, %19 : vector<20x128xf32>
      %21 = vector.extract_strided_slice %20 {offsets = [0, 0], sizes = [5, 128], strides = [1, 1]} : vector<20x128xf32> to vector<5x128xf32>
      %cst_17 = arith.constant 0.000000e+00 : f32
      %22 = vector.broadcast %cst_17 : f32 to vector<5x128xf32>
      %23 = arith.subf %22, %21 : vector<5x128xf32>
      %24 = math.exp %23 : vector<5x128xf32>
      %cst_18 = arith.constant 1.000000e+00 : f32
      %25 = vector.broadcast %cst_18 : f32 to vector<5x128xf32>
      %26 = arith.addf %25, %24 : vector<5x128xf32>
      %cst_19 = arith.constant 1.000000e+00 : f32
      %27 = vector.broadcast %cst_19 : f32 to vector<5x128xf32>
      %28 = arith.divf %27, %26 : vector<5x128xf32>
      %29 = vector.extract_strided_slice %20 {offsets = [5, 0], sizes = [5, 128], strides = [1, 1]} : vector<20x128xf32> to vector<5x128xf32>
      %cst_20 = arith.constant 0.000000e+00 : f32
      %30 = vector.broadcast %cst_20 : f32 to vector<5x128xf32>
      %31 = arith.subf %30, %29 : vector<5x128xf32>
      %32 = math.exp %31 : vector<5x128xf32>
      %cst_21 = arith.constant 1.000000e+00 : f32
      %33 = vector.broadcast %cst_21 : f32 to vector<5x128xf32>
      %34 = arith.addf %33, %32 : vector<5x128xf32>
      %cst_22 = arith.constant 1.000000e+00 : f32
      %35 = vector.broadcast %cst_22 : f32 to vector<5x128xf32>
      %36 = arith.divf %35, %34 : vector<5x128xf32>
      %37 = vector.extract_strided_slice %20 {offsets = [10, 0], sizes = [5, 128], strides = [1, 1]} : vector<20x128xf32> to vector<5x128xf32>
      %38 = vector.extract_strided_slice %20 {offsets = [15, 0], sizes = [5, 128], strides = [1, 1]} : vector<20x128xf32> to vector<5x128xf32>
      %39 = arith.mulf %28, %38 : vector<5x128xf32>
      %40 = arith.addf %37, %39 : vector<5x128xf32>
      %41 = math.tanh %40 : vector<5x128xf32>
      %cst_23 = arith.constant 1.000000e+00 : f32
      %42 = vector.broadcast %cst_23 : f32 to vector<5x128xf32>
      %43 = arith.subf %42, %36 : vector<5x128xf32>
      %44 = arith.mulf %43, %41 : vector<5x128xf32>
      %45 = arith.mulf %36, %13 : vector<5x128xf32>
      %46 = arith.addf %44, %45 : vector<5x128xf32>
      %c0_24 = arith.constant 0 : index
      %c0_25 = arith.constant 0 : index
      %c0_26 = arith.constant 0 : index
      %c0_27 = arith.constant 0 : index
      %47 = vector.load %arg6[%c0_24, %c0_25, %c0_26, %c0_27] : memref<1x4x5x128xf32, #tpu.memory_space<vmem>>, vector<1x1x5x128xf32>
      %48 = vector.shape_cast %47 : vector<1x1x5x128xf32> to vector<5x128xf32>
      %49 = vector.shape_cast %46 : vector<5x128xf32> to vector<1x1x5x128xf32>
      tpu.vector_store %arg6[%c0_24, %c0_25, %c0_26, %c0_27], %49 {strides = array<i32>} : memref<1x4x5x128xf32, #tpu.memory_space<vmem>>, vector<1x1x5x128xf32>,
      %c1 = arith.constant 1 : index
      %c0_28 = arith.constant 0 : index
      %c0_29 = arith.constant 0 : index
      %50 = vector.load %arg1[%c1, %c0_28, %c0_29] : memref<4x5x128xf32, #tpu.memory_space<vmem>>, vector<1x5x128xf32>
      %51 = vector.shape_cast %50 : vector<1x5x128xf32> to vector<5x128xf32>
      %cst_30 = arith.constant dense<0.000000e+00> : vector<20x128xf32>
      %52 = tpu.matmul %1, %51, %cst_30 {dimension_numbers = #tpu.dot_dimension_numbers<[1], [0], [0], [1], [0, 0, 1, 1], [], []>} : vector<20x5xf32>, vector<5x128xf32>, vector<20x128xf32> -> vector<20x128xf32>
      %cst_31 = arith.constant dense<0.000000e+00> : vector<20x128xf32>
      %53 = tpu.matmul %3, %46, %cst_31 {dimension_numbers = #tpu.dot_dimension_numbers<[1], [0], [0], [1], [0, 0, 1, 1], [], []>} : vector<20x5xf32>, vector<5x128xf32>, vector<20x128xf32> -> vector<20x128xf32>
      %54 = arith.addf %52, %53 : vector<20x128xf32>
      %55 = vector.broadcast %5 : vector<20x1xf32> to vector<20x128xf32>
      %56 = arith.addf %54, %55 : vector<20x128xf32>
      %57 = vector.extract_strided_slice %56 {offsets = [0, 0], sizes = [5, 128], strides = [1, 1]} : vector<20x128xf32> to vector<5x128xf32>
      %cst_32 = arith.constant 0.000000e+00 : f32
      %58 = vector.broadcast %cst_32 : f32 to vector<5x128xf32>
      %59 = arith.subf %58, %57 : vector<5x128xf32>
      %60 = math.exp %59 : vector<5x128xf32>
      %cst_33 = arith.constant 1.000000e+00 : f32
      %61 = vector.broadcast %cst_33 : f32 to vector<5x128xf32>
      %62 = arith.addf %61, %60 : vector<5x128xf32>
      %cst_34 = arith.constant 1.000000e+00 : f32
      %63 = vector.broadcast %cst_34 : f32 to vector<5x128xf32>
      %64 = arith.divf %63, %62 : vector<5x128xf32>
      %65 = vector.extract_strided_slice %56 {offsets = [5, 0], sizes = [5, 128], strides = [1, 1]} : vector<20x128xf32> to vector<5x128xf32>
      %cst_35 = arith.constant 0.000000e+00 : f32
      %66 = vector.broadcast %cst_35 : f32 to vector<5x128xf32>
      %67 = arith.subf %66, %65 : vector<5x128xf32>
      %68 = math.exp %67 : vector<5x128xf32>
      %cst_36 = arith.constant 1.000000e+00 : f32
      %69 = vector.broadcast %cst_36 : f32 to vector<5x128xf32>
      %70 = arith.addf %69, %68 : vector<5x128xf32>
      %cst_37 = arith.constant 1.000000e+00 : f32
      %71 = vector.broadcast %cst_37 : f32 to vector<5x128xf32>
      %72 = arith.divf %71, %70 : vector<5x128xf32>
      %73 = vector.extract_strided_slice %56 {offsets = [10, 0], sizes = [5, 128], strides = [1, 1]} : vector<20x128xf32> to vector<5x128xf32>
      %74 = vector.extract_strided_slice %56 {offsets = [15, 0], sizes = [5, 128], strides = [1, 1]} : vector<20x128xf32> to vector<5x128xf32>
      %75 = arith.mulf %64, %74 : vector<5x128xf32>
      %76 = arith.addf %73, %75 : vector<5x128xf32>
      %77 = math.tanh %76 : vector<5x128xf32>
      %cst_38 = arith.constant 1.000000e+00 : f32
      %78 = vector.broadcast %cst_38 : f32 to vector<5x128xf32>
      %79 = arith.subf %78, %72 : vector<5x128xf32>
      %80 = arith.mulf %79, %77 : vector<5x128xf32>
      %81 = arith.mulf %72, %46 : vector<5x128xf32>
      %82 = arith.addf %80, %81 : vector<5x128xf32>
      %c0_39 = arith.constant 0 : index
      %c1_40 = arith.constant 1 : index
      %c0_41 = arith.constant 0 : index
      %c0_42 = arith.constant 0 : index
      %83 = vector.load %arg6[%c0_39, %c1_40, %c0_41, %c0_42] : memref<1x4x5x128xf32, #tpu.memory_space<vmem>>, vector<1x1x5x128xf32>
      %84 = vector.shape_cast %83 : vector<1x1x5x128xf32> to vector<5x128xf32>
      %85 = vector.shape_cast %82 : vector<5x128xf32> to vector<1x1x5x128xf32>
      tpu.vector_store %arg6[%c0_39, %c1_40, %c0_41, %c0_42], %85 {strides = array<i32>} : memref<1x4x5x128xf32, #tpu.memory_space<vmem>>, vector<1x1x5x128xf32>,
      %c2 = arith.constant 2 : index
      %c0_43 = arith.constant 0 : index
      %c0_44 = arith.constant 0 : index
      %86 = vector.load %arg1[%c2, %c0_43, %c0_44] : memref<4x5x128xf32, #tpu.memory_space<vmem>>, vector<1x5x128xf32>
      %87 = vector.shape_cast %86 : vector<1x5x128xf32> to vector<5x128xf32>
      %cst_45 = arith.constant dense<0.000000e+00> : vector<20x128xf32>
      %88 = tpu.matmul %1, %87, %cst_45 {dimension_numbers = #tpu.dot_dimension_numbers<[1], [0], [0], [1], [0, 0, 1, 1], [], []>} : vector<20x5xf32>, vector<5x128xf32>, vector<20x128xf32> -> vector<20x128xf32>
      %cst_46 = arith.constant dense<0.000000e+00> : vector<20x128xf32>
      %89 = tpu.matmul %3, %82, %cst_46 {dimension_numbers = #tpu.dot_dimension_numbers<[1], [0], [0], [1], [0, 0, 1, 1], [], []>} : vector<20x5xf32>, vector<5x128xf32>, vector<20x128xf32> -> vector<20x128xf32>
      %90 = arith.addf %88, %89 : vector<20x128xf32>
      %91 = vector.broadcast %5 : vector<20x1xf32> to vector<20x128xf32>
      %92 = arith.addf %90, %91 : vector<20x128xf32>
      %93 = vector.extract_strided_slice %92 {offsets = [0, 0], sizes = [5, 128], strides = [1, 1]} : vector<20x128xf32> to vector<5x128xf32>
      %cst_47 = arith.constant 0.000000e+00 : f32
      %94 = vector.broadcast %cst_47 : f32 to vector<5x128xf32>
      %95 = arith.subf %94, %93 : vector<5x128xf32>
      %96 = math.exp %95 : vector<5x128xf32>
      %cst_48 = arith.constant 1.000000e+00 : f32
      %97 = vector.broadcast %cst_48 : f32 to vector<5x128xf32>
      %98 = arith.addf %97, %96 : vector<5x128xf32>
      %cst_49 = arith.constant 1.000000e+00 : f32
      %99 = vector.broadcast %cst_49 : f32 to vector<5x128xf32>
      %100 = arith.divf %99, %98 : vector<5x128xf32>
      %101 = vector.extract_strided_slice %92 {offsets = [5, 0], sizes = [5, 128], strides = [1, 1]} : vector<20x128xf32> to vector<5x128xf32>
      %cst_50 = arith.constant 0.000000e+00 : f32
      %102 = vector.broadcast %cst_50 : f32 to vector<5x128xf32>
      %103 = arith.subf %102, %101 : vector<5x128xf32>
      %104 = math.exp %103 : vector<5x128xf32>
      %cst_51 = arith.constant 1.000000e+00 : f32
      %105 = vector.broadcast %cst_51 : f32 to vector<5x128xf32>
      %106 = arith.addf %105, %104 : vector<5x128xf32>
      %cst_52 = arith.constant 1.000000e+00 : f32
      %107 = vector.broadcast %cst_52 : f32 to vector<5x128xf32>
      %108 = arith.divf %107, %106 : vector<5x128xf32>
      %109 = vector.extract_strided_slice %92 {offsets = [10, 0], sizes = [5, 128], strides = [1, 1]} : vector<20x128xf32> to vector<5x128xf32>
      %110 = vector.extract_strided_slice %92 {offsets = [15, 0], sizes = [5, 128], strides = [1, 1]} : vector<20x128xf32> to vector<5x128xf32>
      %111 = arith.mulf %100, %110 : vector<5x128xf32>
      %112 = arith.addf %109, %111 : vector<5x128xf32>
      %113 = math.tanh %112 : vector<5x128xf32>
      %cst_53 = arith.constant 1.000000e+00 : f32
      %114 = vector.broadcast %cst_53 : f32 to vector<5x128xf32>
      %115 = arith.subf %114, %108 : vector<5x128xf32>
      %116 = arith.mulf %115, %113 : vector<5x128xf32>
      %117 = arith.mulf %108, %82 : vector<5x128xf32>
      %118 = arith.addf %116, %117 : vector<5x128xf32>
      %c0_54 = arith.constant 0 : index
      %c2_55 = arith.constant 2 : index
      %c0_56 = arith.constant 0 : index
      %c0_57 = arith.constant 0 : index
      %119 = vector.load %arg6[%c0_54, %c2_55, %c0_56, %c0_57] : memref<1x4x5x128xf32, #tpu.memory_space<vmem>>, vector<1x1x5x128xf32>
      %120 = vector.shape_cast %119 : vector<1x1x5x128xf32> to vector<5x128xf32>
      %121 = vector.shape_cast %118 : vector<5x128xf32> to vector<1x1x5x128xf32>
      tpu.vector_store %arg6[%c0_54, %c2_55, %c0_56, %c0_57], %121 {strides = array<i32>} : memref<1x4x5x128xf32, #tpu.memory_space<vmem>>, vector<1x1x5x128xf32>,
      %c3 = arith.constant 3 : index
      %c0_58 = arith.constant 0 : index
      %c0_59 = arith.constant 0 : index
      %122 = vector.load %arg1[%c3, %c0_58, %c0_59] : memref<4x5x128xf32, #tpu.memory_space<vmem>>, vector<1x5x128xf32>
      %123 = vector.shape_cast %122 : vector<1x5x128xf32> to vector<5x128xf32>
      %cst_60 = arith.constant dense<0.000000e+00> : vector<20x128xf32>
      %124 = tpu.matmul %1, %123, %cst_60 {dimension_numbers = #tpu.dot_dimension_numbers<[1], [0], [0], [1], [0, 0, 1, 1], [], []>} : vector<20x5xf32>, vector<5x128xf32>, vector<20x128xf32> -> vector<20x128xf32>
      %cst_61 = arith.constant dense<0.000000e+00> : vector<20x128xf32>
      %125 = tpu.matmul %3, %118, %cst_61 {dimension_numbers = #tpu.dot_dimension_numbers<[1], [0], [0], [1], [0, 0, 1, 1], [], []>} : vector<20x5xf32>, vector<5x128xf32>, vector<20x128xf32> -> vector<20x128xf32>
      %126 = arith.addf %124, %125 : vector<20x128xf32>
      %127 = vector.broadcast %5 : vector<20x1xf32> to vector<20x128xf32>
      %128 = arith.addf %126, %127 : vector<20x128xf32>
      %129 = vector.extract_strided_slice %128 {offsets = [0, 0], sizes = [5, 128], strides = [1, 1]} : vector<20x128xf32> to vector<5x128xf32>
      %cst_62 = arith.constant 0.000000e+00 : f32
      %130 = vector.broadcast %cst_62 : f32 to vector<5x128xf32>
      %131 = arith.subf %130, %129 : vector<5x128xf32>
      %132 = math.exp %131 : vector<5x128xf32>
      %cst_63 = arith.constant 1.000000e+00 : f32
      %133 = vector.broadcast %cst_63 : f32 to vector<5x128xf32>
      %134 = arith.addf %133, %132 : vector<5x128xf32>
      %cst_64 = arith.constant 1.000000e+00 : f32
      %135 = vector.broadcast %cst_64 : f32 to vector<5x128xf32>
      %136 = arith.divf %135, %134 : vector<5x128xf32>
      %137 = vector.extract_strided_slice %128 {offsets = [5, 0], sizes = [5, 128], strides = [1, 1]} : vector<20x128xf32> to vector<5x128xf32>
      %cst_65 = arith.constant 0.000000e+00 : f32
      %138 = vector.broadcast %cst_65 : f32 to vector<5x128xf32>
      %139 = arith.subf %138, %137 : vector<5x128xf32>
      %140 = math.exp %139 : vector<5x128xf32>
      %cst_66 = arith.constant 1.000000e+00 : f32
      %141 = vector.broadcast %cst_66 : f32 to vector<5x128xf32>
      %142 = arith.addf %141, %140 : vector<5x128xf32>
      %cst_67 = arith.constant 1.000000e+00 : f32
      %143 = vector.broadcast %cst_67 : f32 to vector<5x128xf32>
      %144 = arith.divf %143, %142 : vector<5x128xf32>
      %145 = vector.extract_strided_slice %128 {offsets = [10, 0], sizes = [5, 128], strides = [1, 1]} : vector<20x128xf32> to vector<5x128xf32>
      %146 = vector.extract_strided_slice %128 {offsets = [15, 0], sizes = [5, 128], strides = [1, 1]} : vector<20x128xf32> to vector<5x128xf32>
      %147 = arith.mulf %136, %146 : vector<5x128xf32>
      %148 = arith.addf %145, %147 : vector<5x128xf32>
      %149 = math.tanh %148 : vector<5x128xf32>
      %cst_68 = arith.constant 1.000000e+00 : f32
      %150 = vector.broadcast %cst_68 : f32 to vector<5x128xf32>
      %151 = arith.subf %150, %144 : vector<5x128xf32>
      %152 = arith.mulf %151, %149 : vector<5x128xf32>
      %153 = arith.mulf %144, %118 : vector<5x128xf32>
      %154 = arith.addf %152, %153 : vector<5x128xf32>
      %c0_69 = arith.constant 0 : index
      %c3_70 = arith.constant 3 : index
      %c0_71 = arith.constant 0 : index
      %c0_72 = arith.constant 0 : index
      %155 = vector.load %arg6[%c0_69, %c3_70, %c0_71, %c0_72] : memref<1x4x5x128xf32, #tpu.memory_space<vmem>>, vector<1x1x5x128xf32>
      %156 = vector.shape_cast %155 : vector<1x1x5x128xf32> to vector<5x128xf32>
      %157 = vector.shape_cast %154 : vector<5x128xf32> to vector<1x1x5x128xf32>
      tpu.vector_store %arg6[%c0_69, %c3_70, %c0_71, %c0_72], %157 {strides = array<i32>} : memref<1x4x5x128xf32, #tpu.memory_space<vmem>>, vector<1x1x5x128xf32>,
    } else {
    }
    %c1_i32 = arith.constant 1 : i32
    %9 = arith.cmpi eq, %arg0, %c1_i32 : i32
    %10 = arith.extui %9 : i1 to i32
    %c0_i32_9 = arith.constant 0 : i32
    %11 = arith.cmpi ne, %10, %c0_i32_9 : i32
    scf.if %11 {
      %c0_10 = arith.constant 0 : index
      %c0_11 = arith.constant 0 : index
      %c0_12 = arith.constant 0 : index
      %12 = vector.load %arg2[%c0_10, %c0_11, %c0_12] : memref<1x5x128xf32, #tpu.memory_space<vmem>>, vector<1x5x128xf32>
      %13 = vector.shape_cast %12 : vector<1x5x128xf32> to vector<5x128xf32>
      %c3 = arith.constant 3 : index
      %c0_13 = arith.constant 0 : index
      %c0_14 = arith.constant 0 : index
      %14 = vector.load %arg1[%c3, %c0_13, %c0_14] : memref<4x5x128xf32, #tpu.memory_space<vmem>>, vector<1x5x128xf32>
      %15 = vector.shape_cast %14 : vector<1x5x128xf32> to vector<5x128xf32>
      %cst = arith.constant dense<0.000000e+00> : vector<20x128xf32>
      %16 = tpu.matmul %1, %15, %cst {dimension_numbers = #tpu.dot_dimension_numbers<[1], [0], [0], [1], [0, 0, 1, 1], [], []>} : vector<20x5xf32>, vector<5x128xf32>, vector<20x128xf32> -> vector<20x128xf32>
      %cst_15 = arith.constant dense<0.000000e+00> : vector<20x128xf32>
      %17 = tpu.matmul %3, %13, %cst_15 {dimension_numbers = #tpu.dot_dimension_numbers<[1], [0], [0], [1], [0, 0, 1, 1], [], []>} : vector<20x5xf32>, vector<5x128xf32>, vector<20x128xf32> -> vector<20x128xf32>
      %18 = arith.addf %16, %17 : vector<20x128xf32>
      %19 = vector.broadcast %5 : vector<20x1xf32> to vector<20x128xf32>
      %20 = arith.addf %18, %19 : vector<20x128xf32>
      %21 = vector.extract_strided_slice %20 {offsets = [0, 0], sizes = [5, 128], strides = [1, 1]} : vector<20x128xf32> to vector<5x128xf32>
      %cst_16 = arith.constant 0.000000e+00 : f32
      %22 = vector.broadcast %cst_16 : f32 to vector<5x128xf32>
      %23 = arith.subf %22, %21 : vector<5x128xf32>
      %24 = math.exp %23 : vector<5x128xf32>
      %cst_17 = arith.constant 1.000000e+00 : f32
      %25 = vector.broadcast %cst_17 : f32 to vector<5x128xf32>
      %26 = arith.addf %25, %24 : vector<5x128xf32>
      %cst_18 = arith.constant 1.000000e+00 : f32
      %27 = vector.broadcast %cst_18 : f32 to vector<5x128xf32>
      %28 = arith.divf %27, %26 : vector<5x128xf32>
      %29 = vector.extract_strided_slice %20 {offsets = [5, 0], sizes = [5, 128], strides = [1, 1]} : vector<20x128xf32> to vector<5x128xf32>
      %cst_19 = arith.constant 0.000000e+00 : f32
      %30 = vector.broadcast %cst_19 : f32 to vector<5x128xf32>
      %31 = arith.subf %30, %29 : vector<5x128xf32>
      %32 = math.exp %31 : vector<5x128xf32>
      %cst_20 = arith.constant 1.000000e+00 : f32
      %33 = vector.broadcast %cst_20 : f32 to vector<5x128xf32>
      %34 = arith.addf %33, %32 : vector<5x128xf32>
      %cst_21 = arith.constant 1.000000e+00 : f32
      %35 = vector.broadcast %cst_21 : f32 to vector<5x128xf32>
      %36 = arith.divf %35, %34 : vector<5x128xf32>
      %37 = vector.extract_strided_slice %20 {offsets = [10, 0], sizes = [5, 128], strides = [1, 1]} : vector<20x128xf32> to vector<5x128xf32>
      %38 = vector.extract_strided_slice %20 {offsets = [15, 0], sizes = [5, 128], strides = [1, 1]} : vector<20x128xf32> to vector<5x128xf32>
      %39 = arith.mulf %28, %38 : vector<5x128xf32>
      %40 = arith.addf %37, %39 : vector<5x128xf32>
      %41 = math.tanh %40 : vector<5x128xf32>
      %cst_22 = arith.constant 1.000000e+00 : f32
      %42 = vector.broadcast %cst_22 : f32 to vector<5x128xf32>
      %43 = arith.subf %42, %36 : vector<5x128xf32>
      %44 = arith.mulf %43, %41 : vector<5x128xf32>
      %45 = arith.mulf %36, %13 : vector<5x128xf32>
      %46 = arith.addf %44, %45 : vector<5x128xf32>
      %c0_23 = arith.constant 0 : index
      %c3_24 = arith.constant 3 : index
      %c0_25 = arith.constant 0 : index
      %c0_26 = arith.constant 0 : index
      %47 = vector.load %arg6[%c0_23, %c3_24, %c0_25, %c0_26] : memref<1x4x5x128xf32, #tpu.memory_space<vmem>>, vector<1x1x5x128xf32>
      %48 = vector.shape_cast %47 : vector<1x1x5x128xf32> to vector<5x128xf32>
      %49 = vector.shape_cast %46 : vector<5x128xf32> to vector<1x1x5x128xf32>
      tpu.vector_store %arg6[%c0_23, %c3_24, %c0_25, %c0_26], %49 {strides = array<i32>} : memref<1x4x5x128xf32, #tpu.memory_space<vmem>>, vector<1x1x5x128xf32>,
      %c2 = arith.constant 2 : index
      %c0_27 = arith.constant 0 : index
      %c0_28 = arith.constant 0 : index
      %50 = vector.load %arg1[%c2, %c0_27, %c0_28] : memref<4x5x128xf32, #tpu.memory_space<vmem>>, vector<1x5x128xf32>
      %51 = vector.shape_cast %50 : vector<1x5x128xf32> to vector<5x128xf32>
      %cst_29 = arith.constant dense<0.000000e+00> : vector<20x128xf32>
      %52 = tpu.matmul %1, %51, %cst_29 {dimension_numbers = #tpu.dot_dimension_numbers<[1], [0], [0], [1], [0, 0, 1, 1], [], []>} : vector<20x5xf32>, vector<5x128xf32>, vector<20x128xf32> -> vector<20x128xf32>
      %cst_30 = arith.constant dense<0.000000e+00> : vector<20x128xf32>
      %53 = tpu.matmul %3, %46, %cst_30 {dimension_numbers = #tpu.dot_dimension_numbers<[1], [0], [0], [1], [0, 0, 1, 1], [], []>} : vector<20x5xf32>, vector<5x128xf32>, vector<20x128xf32> -> vector<20x128xf32>
      %54 = arith.addf %52, %53 : vector<20x128xf32>
      %55 = vector.broadcast %5 : vector<20x1xf32> to vector<20x128xf32>
      %56 = arith.addf %54, %55 : vector<20x128xf32>
      %57 = vector.extract_strided_slice %56 {offsets = [0, 0], sizes = [5, 128], strides = [1, 1]} : vector<20x128xf32> to vector<5x128xf32>
      %cst_31 = arith.constant 0.000000e+00 : f32
      %58 = vector.broadcast %cst_31 : f32 to vector<5x128xf32>
      %59 = arith.subf %58, %57 : vector<5x128xf32>
      %60 = math.exp %59 : vector<5x128xf32>
      %cst_32 = arith.constant 1.000000e+00 : f32
      %61 = vector.broadcast %cst_32 : f32 to vector<5x128xf32>
      %62 = arith.addf %61, %60 : vector<5x128xf32>
      %cst_33 = arith.constant 1.000000e+00 : f32
      %63 = vector.broadcast %cst_33 : f32 to vector<5x128xf32>
      %64 = arith.divf %63, %62 : vector<5x128xf32>
      %65 = vector.extract_strided_slice %56 {offsets = [5, 0], sizes = [5, 128], strides = [1, 1]} : vector<20x128xf32> to vector<5x128xf32>
      %cst_34 = arith.constant 0.000000e+00 : f32
      %66 = vector.broadcast %cst_34 : f32 to vector<5x128xf32>
      %67 = arith.subf %66, %65 : vector<5x128xf32>
      %68 = math.exp %67 : vector<5x128xf32>
      %cst_35 = arith.constant 1.000000e+00 : f32
      %69 = vector.broadcast %cst_35 : f32 to vector<5x128xf32>
      %70 = arith.addf %69, %68 : vector<5x128xf32>
      %cst_36 = arith.constant 1.000000e+00 : f32
      %71 = vector.broadcast %cst_36 : f32 to vector<5x128xf32>
      %72 = arith.divf %71, %70 : vector<5x128xf32>
      %73 = vector.extract_strided_slice %56 {offsets = [10, 0], sizes = [5, 128], strides = [1, 1]} : vector<20x128xf32> to vector<5x128xf32>
      %74 = vector.extract_strided_slice %56 {offsets = [15, 0], sizes = [5, 128], strides = [1, 1]} : vector<20x128xf32> to vector<5x128xf32>
      %75 = arith.mulf %64, %74 : vector<5x128xf32>
      %76 = arith.addf %73, %75 : vector<5x128xf32>
      %77 = math.tanh %76 : vector<5x128xf32>
      %cst_37 = arith.constant 1.000000e+00 : f32
      %78 = vector.broadcast %cst_37 : f32 to vector<5x128xf32>
      %79 = arith.subf %78, %72 : vector<5x128xf32>
      %80 = arith.mulf %79, %77 : vector<5x128xf32>
      %81 = arith.mulf %72, %46 : vector<5x128xf32>
      %82 = arith.addf %80, %81 : vector<5x128xf32>
      %c0_38 = arith.constant 0 : index
      %c2_39 = arith.constant 2 : index
      %c0_40 = arith.constant 0 : index
      %c0_41 = arith.constant 0 : index
      %83 = vector.load %arg6[%c0_38, %c2_39, %c0_40, %c0_41] : memref<1x4x5x128xf32, #tpu.memory_space<vmem>>, vector<1x1x5x128xf32>
      %84 = vector.shape_cast %83 : vector<1x1x5x128xf32> to vector<5x128xf32>
      %85 = vector.shape_cast %82 : vector<5x128xf32> to vector<1x1x5x128xf32>
      tpu.vector_store %arg6[%c0_38, %c2_39, %c0_40, %c0_41], %85 {strides = array<i32>} : memref<1x4x5x128xf32, #tpu.memory_space<vmem>>, vector<1x1x5x128xf32>,
      %c1 = arith.constant 1 : index
      %c0_42 = arith.constant 0 : index
      %c0_43 = arith.constant 0 : index
      %86 = vector.load %arg1[%c1, %c0_42, %c0_43] : memref<4x5x128xf32, #tpu.memory_space<vmem>>, vector<1x5x128xf32>
      %87 = vector.shape_cast %86 : vector<1x5x128xf32> to vector<5x128xf32>
      %cst_44 = arith.constant dense<0.000000e+00> : vector<20x128xf32>
      %88 = tpu.matmul %1, %87, %cst_44 {dimension_numbers = #tpu.dot_dimension_numbers<[1], [0], [0], [1], [0, 0, 1, 1], [], []>} : vector<20x5xf32>, vector<5x128xf32>, vector<20x128xf32> -> vector<20x128xf32>
      %cst_45 = arith.constant dense<0.000000e+00> : vector<20x128xf32>
      %89 = tpu.matmul %3, %82, %cst_45 {dimension_numbers = #tpu.dot_dimension_numbers<[1], [0], [0], [1], [0, 0, 1, 1], [], []>} : vector<20x5xf32>, vector<5x128xf32>, vector<20x128xf32> -> vector<20x128xf32>
      %90 = arith.addf %88, %89 : vector<20x128xf32>
      %91 = vector.broadcast %5 : vector<20x1xf32> to vector<20x128xf32>
      %92 = arith.addf %90, %91 : vector<20x128xf32>
      %93 = vector.extract_strided_slice %92 {offsets = [0, 0], sizes = [5, 128], strides = [1, 1]} : vector<20x128xf32> to vector<5x128xf32>
      %cst_46 = arith.constant 0.000000e+00 : f32
      %94 = vector.broadcast %cst_46 : f32 to vector<5x128xf32>
      %95 = arith.subf %94, %93 : vector<5x128xf32>
      %96 = math.exp %95 : vector<5x128xf32>
      %cst_47 = arith.constant 1.000000e+00 : f32
      %97 = vector.broadcast %cst_47 : f32 to vector<5x128xf32>
      %98 = arith.addf %97, %96 : vector<5x128xf32>
      %cst_48 = arith.constant 1.000000e+00 : f32
      %99 = vector.broadcast %cst_48 : f32 to vector<5x128xf32>
      %100 = arith.divf %99, %98 : vector<5x128xf32>
      %101 = vector.extract_strided_slice %92 {offsets = [5, 0], sizes = [5, 128], strides = [1, 1]} : vector<20x128xf32> to vector<5x128xf32>
      %cst_49 = arith.constant 0.000000e+00 : f32
      %102 = vector.broadcast %cst_49 : f32 to vector<5x128xf32>
      %103 = arith.subf %102, %101 : vector<5x128xf32>
      %104 = math.exp %103 : vector<5x128xf32>
      %cst_50 = arith.constant 1.000000e+00 : f32
      %105 = vector.broadcast %cst_50 : f32 to vector<5x128xf32>
      %106 = arith.addf %105, %104 : vector<5x128xf32>
      %cst_51 = arith.constant 1.000000e+00 : f32
      %107 = vector.broadcast %cst_51 : f32 to vector<5x128xf32>
      %108 = arith.divf %107, %106 : vector<5x128xf32>
      %109 = vector.extract_strided_slice %92 {offsets = [10, 0], sizes = [5, 128], strides = [1, 1]} : vector<20x128xf32> to vector<5x128xf32>
      %110 = vector.extract_strided_slice %92 {offsets = [15, 0], sizes = [5, 128], strides = [1, 1]} : vector<20x128xf32> to vector<5x128xf32>
      %111 = arith.mulf %100, %110 : vector<5x128xf32>
      %112 = arith.addf %109, %111 : vector<5x128xf32>
      %113 = math.tanh %112 : vector<5x128xf32>
      %cst_52 = arith.constant 1.000000e+00 : f32
      %114 = vector.broadcast %cst_52 : f32 to vector<5x128xf32>
      %115 = arith.subf %114, %108 : vector<5x128xf32>
      %116 = arith.mulf %115, %113 : vector<5x128xf32>
      %117 = arith.mulf %108, %82 : vector<5x128xf32>
      %118 = arith.addf %116, %117 : vector<5x128xf32>
      %c0_53 = arith.constant 0 : index
      %c1_54 = arith.constant 1 : index
      %c0_55 = arith.constant 0 : index
      %c0_56 = arith.constant 0 : index
      %119 = vector.load %arg6[%c0_53, %c1_54, %c0_55, %c0_56] : memref<1x4x5x128xf32, #tpu.memory_space<vmem>>, vector<1x1x5x128xf32>
      %120 = vector.shape_cast %119 : vector<1x1x5x128xf32> to vector<5x128xf32>
      %121 = vector.shape_cast %118 : vector<5x128xf32> to vector<1x1x5x128xf32>
      tpu.vector_store %arg6[%c0_53, %c1_54, %c0_55, %c0_56], %121 {strides = array<i32>} : memref<1x4x5x128xf32, #tpu.memory_space<vmem>>, vector<1x1x5x128xf32>,
      %c0_57 = arith.constant 0 : index
      %c0_58 = arith.constant 0 : index
      %c0_59 = arith.constant 0 : index
      %122 = vector.load %arg1[%c0_57, %c0_58, %c0_59] : memref<4x5x128xf32, #tpu.memory_space<vmem>>, vector<1x5x128xf32>
      %123 = vector.shape_cast %122 : vector<1x5x128xf32> to vector<5x128xf32>
      %cst_60 = arith.constant dense<0.000000e+00> : vector<20x128xf32>
      %124 = tpu.matmul %1, %123, %cst_60 {dimension_numbers = #tpu.dot_dimension_numbers<[1], [0], [0], [1], [0, 0, 1, 1], [], []>} : vector<20x5xf32>, vector<5x128xf32>, vector<20x128xf32> -> vector<20x128xf32>
      %cst_61 = arith.constant dense<0.000000e+00> : vector<20x128xf32>
      %125 = tpu.matmul %3, %118, %cst_61 {dimension_numbers = #tpu.dot_dimension_numbers<[1], [0], [0], [1], [0, 0, 1, 1], [], []>} : vector<20x5xf32>, vector<5x128xf32>, vector<20x128xf32> -> vector<20x128xf32>
      %126 = arith.addf %124, %125 : vector<20x128xf32>
      %127 = vector.broadcast %5 : vector<20x1xf32> to vector<20x128xf32>
      %128 = arith.addf %126, %127 : vector<20x128xf32>
      %129 = vector.extract_strided_slice %128 {offsets = [0, 0], sizes = [5, 128], strides = [1, 1]} : vector<20x128xf32> to vector<5x128xf32>
      %cst_62 = arith.constant 0.000000e+00 : f32
      %130 = vector.broadcast %cst_62 : f32 to vector<5x128xf32>
      %131 = arith.subf %130, %129 : vector<5x128xf32>
      %132 = math.exp %131 : vector<5x128xf32>
      %cst_63 = arith.constant 1.000000e+00 : f32
      %133 = vector.broadcast %cst_63 : f32 to vector<5x128xf32>
      %134 = arith.addf %133, %132 : vector<5x128xf32>
      %cst_64 = arith.constant 1.000000e+00 : f32
      %135 = vector.broadcast %cst_64 : f32 to vector<5x128xf32>
      %136 = arith.divf %135, %134 : vector<5x128xf32>
      %137 = vector.extract_strided_slice %128 {offsets = [5, 0], sizes = [5, 128], strides = [1, 1]} : vector<20x128xf32> to vector<5x128xf32>
      %cst_65 = arith.constant 0.000000e+00 : f32
      %138 = vector.broadcast %cst_65 : f32 to vector<5x128xf32>
      %139 = arith.subf %138, %137 : vector<5x128xf32>
      %140 = math.exp %139 : vector<5x128xf32>
      %cst_66 = arith.constant 1.000000e+00 : f32
      %141 = vector.broadcast %cst_66 : f32 to vector<5x128xf32>
      %142 = arith.addf %141, %140 : vector<5x128xf32>
      %cst_67 = arith.constant 1.000000e+00 : f32
      %143 = vector.broadcast %cst_67 : f32 to vector<5x128xf32>
      %144 = arith.divf %143, %142 : vector<5x128xf32>
      %145 = vector.extract_strided_slice %128 {offsets = [10, 0], sizes = [5, 128], strides = [1, 1]} : vector<20x128xf32> to vector<5x128xf32>
      %146 = vector.extract_strided_slice %128 {offsets = [15, 0], sizes = [5, 128], strides = [1, 1]} : vector<20x128xf32> to vector<5x128xf32>
      %147 = arith.mulf %136, %146 : vector<5x128xf32>
      %148 = arith.addf %145, %147 : vector<5x128xf32>
      %149 = math.tanh %148 : vector<5x128xf32>
      %cst_68 = arith.constant 1.000000e+00 : f32
      %150 = vector.broadcast %cst_68 : f32 to vector<5x128xf32>
      %151 = arith.subf %150, %144 : vector<5x128xf32>
      %152 = arith.mulf %151, %149 : vector<5x128xf32>
      %153 = arith.mulf %144, %118 : vector<5x128xf32>
      %154 = arith.addf %152, %153 : vector<5x128xf32>
      %c0_69 = arith.constant 0 : index
      %c0_70 = arith.constant 0 : index
      %c0_71 = arith.constant 0 : index
      %c0_72 = arith.constant 0 : index
      %155 = vector.load %arg6[%c0_69, %c0_70, %c0_71, %c0_72] : memref<1x4x5x128xf32, #tpu.memory_space<vmem>>, vector<1x1x5x128xf32>
      %156 = vector.shape_cast %155 : vector<1x1x5x128xf32> to vector<5x128xf32>
      %157 = vector.shape_cast %154 : vector<5x128xf32> to vector<1x1x5x128xf32>
      tpu.vector_store %arg6[%c0_69, %c0_70, %c0_71, %c0_72], %157 {strides = array<i32>} : memref<1x4x5x128xf32, #tpu.memory_space<vmem>>, vector<1x1x5x128xf32>,
    } else {
    }
    return
  }
  func.func @transform_0(%arg0: i32) -> (i32, i32, i32) {
    %c0_i32 = arith.constant 0 : i32
    %c0_i32_0 = arith.constant 0 : i32
    %c0_i32_1 = arith.constant 0 : i32
    %c0_i32_2 = arith.constant 0 : i32
    return %c0_i32, %c0_i32_0, %c0_i32_1 : i32, i32, i32
  }
  func.func @transform_1(%arg0: i32) -> (i32, i32, i32) {
    %c0_i32 = arith.constant 0 : i32
    %c0_i32_0 = arith.constant 0 : i32
    %c0_i32_1 = arith.constant 0 : i32
    return %arg0, %c0_i32, %c0_i32_0 : i32, i32, i32
  }
  func.func @transform_2(%arg0: i32) -> (i32, i32, i32) {
    %c0_i32 = arith.constant 0 : i32
    %c0_i32_0 = arith.constant 0 : i32
    %c0_i32_1 = arith.constant 0 : i32
    return %arg0, %c0_i32, %c0_i32_0 : i32, i32, i32
  }
  func.func @transform_3(%arg0: i32) -> (i32, i32, i32) {
    %c0_i32 = arith.constant 0 : i32
    %c0_i32_0 = arith.constant 0 : i32
    %c0_i32_1 = arith.constant 0 : i32
    return %arg0, %c0_i32, %c0_i32_0 : i32, i32, i32
  }
  func.func @transform_4(%arg0: i32) -> (i32, i32, i32) {
    %c0_i32 = arith.constant 0 : i32
    %c0_i32_0 = arith.constant 0 : i32
    %c0_i32_1 = arith.constant 0 : i32
    return %arg0, %c0_i32, %c0_i32_0 : i32, i32, i32
  }
  func.func @transform_5(%arg0: i32) -> (i32, i32, i32, i32) {
    %c0_i32 = arith.constant 0 : i32
    %c0_i32_0 = arith.constant 0 : i32
    %c0_i32_1 = arith.constant 0 : i32
    %c0_i32_2 = arith.constant 0 : i32
    return %arg0, %c0_i32, %c0_i32_0, %c0_i32_1 : i32, i32, i32, i32
  }
}

module attributes {stable_mosaic.version = 11 : i64} {
  func.func @_edge_feature_kernel(%arg0: i32, %arg1: memref<2x1x8x32xf32, #tpu.memory_space<vmem>>, %arg2: memref<2x1x8x8xf32, #tpu.memory_space<vmem>>, %arg3: memref<32x128xf32, #tpu.memory_space<vmem>>, %arg4: memref<1x128xf32, #tpu.memory_space<vmem>>, %arg5: memref<5xf32, #tpu.memory_space<smem>>, %arg6: memref<5xf32, #tpu.memory_space<smem>>, %arg7: memref<1x5x2x8x8xf32, #tpu.memory_space<vmem>>) attributes {dimension_semantics = [#tpu.dimension_semantics<parallel>], iteration_bounds = array<i64: 4>, scalar_prefetch = 0 : i64, scratch_operands = 0 : i64, tpu.core_type = #tpu.core_type<tc>, window_params = [{transform_indices = @transform_0, window_bounds = array<i64: 2, 1, 8, 32>}, {transform_indices = @transform_1, window_bounds = array<i64: 2, 1, 8, 8>}, {pipeline_mode = #tpu.pipeline_mode<synchronous>, transform_indices = @transform_2, window_bounds = array<i64: 32, 128>}, {pipeline_mode = #tpu.pipeline_mode<synchronous>, transform_indices = @transform_3, window_bounds = array<i64: 1, 128>}, {transform_indices = @transform_4, window_bounds = array<i64: 5>}, {transform_indices = @transform_5, window_bounds = array<i64: 5>}, {transform_indices = @transform_6, window_bounds = array<i64: 1, 5, 2, 8, 8>}]} {
    %c0 = arith.constant 0 : index
    %c0_0 = arith.constant 0 : index
    %c0_1 = arith.constant 0 : index
    %c0_2 = arith.constant 0 : index
    %0 = vector.load %arg1[%c0, %c0_0, %c0_1, %c0_2] : memref<2x1x8x32xf32, #tpu.memory_space<vmem>>, vector<2x1x8x32xf32>
    %1 = vector.shape_cast %0 : vector<2x1x8x32xf32> to vector<16x32xf32>
    %c0_3 = arith.constant 0 : index
    %c0_4 = arith.constant 0 : index
    %2 = vector.load %arg3[%c0_3, %c0_4] : memref<32x128xf32, #tpu.memory_space<vmem>>, vector<32x128xf32>
    %cst = arith.constant dense<0.000000e+00> : vector<16x128xf32>
    %3 = tpu.matmul %1, %2, %cst {dimension_numbers = #tpu.dot_dimension_numbers<[1], [0], [0], [1], [0, 0, 1, 1], [], []>} : vector<16x32xf32>, vector<32x128xf32>, vector<16x128xf32> -> vector<16x128xf32>
    %c0_5 = arith.constant 0 : index
    %c0_6 = arith.constant 0 : index
    %4 = vector.load %arg4[%c0_5, %c0_6] : memref<1x128xf32, #tpu.memory_space<vmem>>, vector<1x128xf32>
    %5 = vector.broadcast %4 : vector<1x128xf32> to vector<16x128xf32>
    %6 = arith.addf %3, %5 : vector<16x128xf32>
    %7 = vector.extract_strided_slice %6 {offsets = [0, 0], sizes = [16, 32], strides = [1, 1]} : vector<16x128xf32> to vector<16x32xf32>
    %8 = vector.shape_cast %7 : vector<16x32xf32> to vector<2x8x32xf32>
    "tpu.trace_start"() <{level = 10 : i32, message = "bnc,bmc->bnm"}> : () -> ()
    %cst_7 = arith.constant dense<0.000000e+00> : vector<2x8x8xf32>
    %9 = tpu.matmul %8, %8, %cst_7 {dimension_numbers = #tpu.dot_dimension_numbers<[2], [2], [1], [1], [0, 0, 0, 1, 1, 1], [0], [0]>} : vector<2x8x32xf32>, vector<2x8x32xf32>, vector<2x8x8xf32> -> vector<2x8x8xf32>
    "tpu.trace_stop"() : () -> ()
    %cst_8 = arith.constant 0.176776692 : f32
    %10 = vector.broadcast %cst_8 : f32 to vector<2x8x8xf32>
    %11 = arith.mulf %9, %10 : vector<2x8x8xf32>
    %12 = vector.extract_strided_slice %6 {offsets = [0, 32], sizes = [16, 32], strides = [1, 1]} : vector<16x128xf32> to vector<16x32xf32>
    %13 = vector.shape_cast %12 : vector<16x32xf32> to vector<2x8x32xf32>
    "tpu.trace_start"() <{level = 10 : i32, message = "bnc,bmc->bnm"}> : () -> ()
    %cst_9 = arith.constant dense<0.000000e+00> : vector<2x8x8xf32>
    %14 = tpu.matmul %13, %13, %cst_9 {dimension_numbers = #tpu.dot_dimension_numbers<[2], [2], [1], [1], [0, 0, 0, 1, 1, 1], [0], [0]>} : vector<2x8x32xf32>, vector<2x8x32xf32>, vector<2x8x8xf32> -> vector<2x8x8xf32>
    "tpu.trace_stop"() : () -> ()
    %cst_10 = arith.constant 0.176776692 : f32
    %15 = vector.broadcast %cst_10 : f32 to vector<2x8x8xf32>
    %16 = arith.mulf %14, %15 : vector<2x8x8xf32>
    %17 = vector.extract_strided_slice %6 {offsets = [0, 64], sizes = [16, 32], strides = [1, 1]} : vector<16x128xf32> to vector<16x32xf32>
    %18 = vector.shape_cast %17 : vector<16x32xf32> to vector<2x8x32xf32>
    "tpu.trace_start"() <{level = 10 : i32, message = "bnc,bmc->bnm"}> : () -> ()
    %cst_11 = arith.constant dense<0.000000e+00> : vector<2x8x8xf32>
    %19 = tpu.matmul %18, %18, %cst_11 {dimension_numbers = #tpu.dot_dimension_numbers<[2], [2], [1], [1], [0, 0, 0, 1, 1, 1], [0], [0]>} : vector<2x8x32xf32>, vector<2x8x32xf32>, vector<2x8x8xf32> -> vector<2x8x8xf32>
    "tpu.trace_stop"() : () -> ()
    %cst_12 = arith.constant 0.176776692 : f32
    %20 = vector.broadcast %cst_12 : f32 to vector<2x8x8xf32>
    %21 = arith.mulf %19, %20 : vector<2x8x8xf32>
    %22 = vector.extract_strided_slice %6 {offsets = [0, 96], sizes = [16, 32], strides = [1, 1]} : vector<16x128xf32> to vector<16x32xf32>
    %23 = vector.shape_cast %22 : vector<16x32xf32> to vector<2x8x32xf32>
    "tpu.trace_start"() <{level = 10 : i32, message = "bnc,bmc->bnm"}> : () -> ()
    %cst_13 = arith.constant dense<0.000000e+00> : vector<2x8x8xf32>
    %24 = tpu.matmul %23, %23, %cst_13 {dimension_numbers = #tpu.dot_dimension_numbers<[2], [2], [1], [1], [0, 0, 0, 1, 1, 1], [0], [0]>} : vector<2x8x32xf32>, vector<2x8x32xf32>, vector<2x8x8xf32> -> vector<2x8x8xf32>
    "tpu.trace_stop"() : () -> ()
    %cst_14 = arith.constant 0.176776692 : f32
    %25 = vector.broadcast %cst_14 : f32 to vector<2x8x8xf32>
    %26 = arith.mulf %24, %25 : vector<2x8x8xf32>
    %c0_15 = arith.constant 0 : index
    %c0_16 = arith.constant 0 : index
    %c0_17 = arith.constant 0 : index
    %c0_18 = arith.constant 0 : index
    %27 = vector.load %arg2[%c0_15, %c0_16, %c0_17, %c0_18] : memref<2x1x8x8xf32, #tpu.memory_space<vmem>>, vector<2x1x8x8xf32>
    %28 = vector.shape_cast %27 : vector<2x1x8x8xf32> to vector<2x8x8xf32>
    %29 = arith.addf %11, %16 : vector<2x8x8xf32>
    %30 = arith.addf %29, %21 : vector<2x8x8xf32>
    %31 = arith.addf %30, %26 : vector<2x8x8xf32>
    %32 = arith.addf %31, %28 : vector<2x8x8xf32>
    %cst_19 = arith.constant 2.000000e-01 : f32
    %33 = vector.broadcast %cst_19 : f32 to vector<2x8x8xf32>
    %34 = arith.mulf %32, %33 : vector<2x8x8xf32>
    %35 = arith.subf %11, %34 : vector<2x8x8xf32>
    %36 = arith.mulf %35, %35 : vector<2x8x8xf32>
    %37 = arith.subf %16, %34 : vector<2x8x8xf32>
    %38 = arith.mulf %37, %37 : vector<2x8x8xf32>
    %39 = arith.addf %36, %38 : vector<2x8x8xf32>
    %40 = arith.subf %21, %34 : vector<2x8x8xf32>
    %41 = arith.mulf %40, %40 : vector<2x8x8xf32>
    %42 = arith.addf %39, %41 : vector<2x8x8xf32>
    %43 = arith.subf %26, %34 : vector<2x8x8xf32>
    %44 = arith.mulf %43, %43 : vector<2x8x8xf32>
    %45 = arith.addf %42, %44 : vector<2x8x8xf32>
    %46 = arith.subf %28, %34 : vector<2x8x8xf32>
    %47 = arith.mulf %46, %46 : vector<2x8x8xf32>
    %48 = arith.addf %45, %47 : vector<2x8x8xf32>
    %cst_20 = arith.constant 2.000000e-01 : f32
    %49 = vector.broadcast %cst_20 : f32 to vector<2x8x8xf32>
    %50 = arith.mulf %48, %49 : vector<2x8x8xf32>
    %cst_21 = arith.constant 9.99999974E-6 : f32
    %51 = vector.broadcast %cst_21 : f32 to vector<2x8x8xf32>
    %52 = arith.addf %50, %51 : vector<2x8x8xf32>
    %53 = math.rsqrt %52 : vector<2x8x8xf32>
    %54 = arith.subf %11, %34 : vector<2x8x8xf32>
    %55 = arith.mulf %54, %53 : vector<2x8x8xf32>
    %c0_22 = arith.constant 0 : index
    %56 = memref.load %arg5[%c0_22] : memref<5xf32, #tpu.memory_space<smem>>
    %57 = vector.broadcast %56 : f32 to vector<2x8x8xf32>
    %58 = arith.mulf %55, %57 : vector<2x8x8xf32>
    %c0_23 = arith.constant 0 : index
    %59 = memref.load %arg6[%c0_23] : memref<5xf32, #tpu.memory_space<smem>>
    %60 = vector.broadcast %59 : f32 to vector<2x8x8xf32>
    %61 = arith.addf %58, %60 : vector<2x8x8xf32>
    %c0_24 = arith.constant 0 : index
    %c0_25 = arith.constant 0 : index
    %c0_26 = arith.constant 0 : index
    %c0_27 = arith.constant 0 : index
    %c0_28 = arith.constant 0 : index
    %62 = vector.load %arg7[%c0_24, %c0_25, %c0_26, %c0_27, %c0_28] : memref<1x5x2x8x8xf32, #tpu.memory_space<vmem>>, vector<1x1x2x8x8xf32>
    %63 = vector.shape_cast %62 : vector<1x1x2x8x8xf32> to vector<2x8x8xf32>
    %64 = vector.shape_cast %61 : vector<2x8x8xf32> to vector<1x1x2x8x8xf32>
    tpu.vector_store %arg7[%c0_24, %c0_25, %c0_26, %c0_27, %c0_28], %64 {strides = array<i32>} : memref<1x5x2x8x8xf32, #tpu.memory_space<vmem>>, vector<1x1x2x8x8xf32>,
    %65 = arith.subf %16, %34 : vector<2x8x8xf32>
    %66 = arith.mulf %65, %53 : vector<2x8x8xf32>
    %c1 = arith.constant 1 : index
    %67 = memref.load %arg5[%c1] : memref<5xf32, #tpu.memory_space<smem>>
    %68 = vector.broadcast %67 : f32 to vector<2x8x8xf32>
    %69 = arith.mulf %66, %68 : vector<2x8x8xf32>
    %c1_29 = arith.constant 1 : index
    %70 = memref.load %arg6[%c1_29] : memref<5xf32, #tpu.memory_space<smem>>
    %71 = vector.broadcast %70 : f32 to vector<2x8x8xf32>
    %72 = arith.addf %69, %71 : vector<2x8x8xf32>
    %c0_30 = arith.constant 0 : index
    %c1_31 = arith.constant 1 : index
    %c0_32 = arith.constant 0 : index
    %c0_33 = arith.constant 0 : index
    %c0_34 = arith.constant 0 : index
    %73 = vector.load %arg7[%c0_30, %c1_31, %c0_32, %c0_33, %c0_34] : memref<1x5x2x8x8xf32, #tpu.memory_space<vmem>>, vector<1x1x2x8x8xf32>
    %74 = vector.shape_cast %73 : vector<1x1x2x8x8xf32> to vector<2x8x8xf32>
    %75 = vector.shape_cast %72 : vector<2x8x8xf32> to vector<1x1x2x8x8xf32>
    tpu.vector_store %arg7[%c0_30, %c1_31, %c0_32, %c0_33, %c0_34], %75 {strides = array<i32>} : memref<1x5x2x8x8xf32, #tpu.memory_space<vmem>>, vector<1x1x2x8x8xf32>,
    %76 = arith.subf %21, %34 : vector<2x8x8xf32>
    %77 = arith.mulf %76, %53 : vector<2x8x8xf32>
    %c2 = arith.constant 2 : index
    %78 = memref.load %arg5[%c2] : memref<5xf32, #tpu.memory_space<smem>>
    %79 = vector.broadcast %78 : f32 to vector<2x8x8xf32>
    %80 = arith.mulf %77, %79 : vector<2x8x8xf32>
    %c2_35 = arith.constant 2 : index
    %81 = memref.load %arg6[%c2_35] : memref<5xf32, #tpu.memory_space<smem>>
    %82 = vector.broadcast %81 : f32 to vector<2x8x8xf32>
    %83 = arith.addf %80, %82 : vector<2x8x8xf32>
    %c0_36 = arith.constant 0 : index
    %c2_37 = arith.constant 2 : index
    %c0_38 = arith.constant 0 : index
    %c0_39 = arith.constant 0 : index
    %c0_40 = arith.constant 0 : index
    %84 = vector.load %arg7[%c0_36, %c2_37, %c0_38, %c0_39, %c0_40] : memref<1x5x2x8x8xf32, #tpu.memory_space<vmem>>, vector<1x1x2x8x8xf32>
    %85 = vector.shape_cast %84 : vector<1x1x2x8x8xf32> to vector<2x8x8xf32>
    %86 = vector.shape_cast %83 : vector<2x8x8xf32> to vector<1x1x2x8x8xf32>
    tpu.vector_store %arg7[%c0_36, %c2_37, %c0_38, %c0_39, %c0_40], %86 {strides = array<i32>} : memref<1x5x2x8x8xf32, #tpu.memory_space<vmem>>, vector<1x1x2x8x8xf32>,
    %87 = arith.subf %26, %34 : vector<2x8x8xf32>
    %88 = arith.mulf %87, %53 : vector<2x8x8xf32>
    %c3 = arith.constant 3 : index
    %89 = memref.load %arg5[%c3] : memref<5xf32, #tpu.memory_space<smem>>
    %90 = vector.broadcast %89 : f32 to vector<2x8x8xf32>
    %91 = arith.mulf %88, %90 : vector<2x8x8xf32>
    %c3_41 = arith.constant 3 : index
    %92 = memref.load %arg6[%c3_41] : memref<5xf32, #tpu.memory_space<smem>>
    %93 = vector.broadcast %92 : f32 to vector<2x8x8xf32>
    %94 = arith.addf %91, %93 : vector<2x8x8xf32>
    %c0_42 = arith.constant 0 : index
    %c3_43 = arith.constant 3 : index
    %c0_44 = arith.constant 0 : index
    %c0_45 = arith.constant 0 : index
    %c0_46 = arith.constant 0 : index
    %95 = vector.load %arg7[%c0_42, %c3_43, %c0_44, %c0_45, %c0_46] : memref<1x5x2x8x8xf32, #tpu.memory_space<vmem>>, vector<1x1x2x8x8xf32>
    %96 = vector.shape_cast %95 : vector<1x1x2x8x8xf32> to vector<2x8x8xf32>
    %97 = vector.shape_cast %94 : vector<2x8x8xf32> to vector<1x1x2x8x8xf32>
    tpu.vector_store %arg7[%c0_42, %c3_43, %c0_44, %c0_45, %c0_46], %97 {strides = array<i32>} : memref<1x5x2x8x8xf32, #tpu.memory_space<vmem>>, vector<1x1x2x8x8xf32>,
    %98 = arith.subf %28, %34 : vector<2x8x8xf32>
    %99 = arith.mulf %98, %53 : vector<2x8x8xf32>
    %c4 = arith.constant 4 : index
    %100 = memref.load %arg5[%c4] : memref<5xf32, #tpu.memory_space<smem>>
    %101 = vector.broadcast %100 : f32 to vector<2x8x8xf32>
    %102 = arith.mulf %99, %101 : vector<2x8x8xf32>
    %c4_47 = arith.constant 4 : index
    %103 = memref.load %arg6[%c4_47] : memref<5xf32, #tpu.memory_space<smem>>
    %104 = vector.broadcast %103 : f32 to vector<2x8x8xf32>
    %105 = arith.addf %102, %104 : vector<2x8x8xf32>
    %c0_48 = arith.constant 0 : index
    %c4_49 = arith.constant 4 : index
    %c0_50 = arith.constant 0 : index
    %c0_51 = arith.constant 0 : index
    %c0_52 = arith.constant 0 : index
    %106 = vector.load %arg7[%c0_48, %c4_49, %c0_50, %c0_51, %c0_52] : memref<1x5x2x8x8xf32, #tpu.memory_space<vmem>>, vector<1x1x2x8x8xf32>
    %107 = vector.shape_cast %106 : vector<1x1x2x8x8xf32> to vector<2x8x8xf32>
    %108 = vector.shape_cast %105 : vector<2x8x8xf32> to vector<1x1x2x8x8xf32>
    tpu.vector_store %arg7[%c0_48, %c4_49, %c0_50, %c0_51, %c0_52], %108 {strides = array<i32>} : memref<1x5x2x8x8xf32, #tpu.memory_space<vmem>>, vector<1x1x2x8x8xf32>,
    return
  }
  func.func @transform_0(%arg0: i32) -> (i32, i32, i32, i32) {
    %c0_i32 = arith.constant 0 : i32
    %c0_i32_0 = arith.constant 0 : i32
    %c0_i32_1 = arith.constant 0 : i32
    %c0_i32_2 = arith.constant 0 : i32
    return %c0_i32, %arg0, %c0_i32_0, %c0_i32_1 : i32, i32, i32, i32
  }
  func.func @transform_1(%arg0: i32) -> (i32, i32, i32, i32) {
    %c0_i32 = arith.constant 0 : i32
    %c0_i32_0 = arith.constant 0 : i32
    %c0_i32_1 = arith.constant 0 : i32
    %c0_i32_2 = arith.constant 0 : i32
    return %c0_i32, %arg0, %c0_i32_0, %c0_i32_1 : i32, i32, i32, i32
  }
  func.func @transform_2(%arg0: i32) -> (i32, i32) {
    %c0_i32 = arith.constant 0 : i32
    %c0_i32_0 = arith.constant 0 : i32
    %c0_i32_1 = arith.constant 0 : i32
    return %c0_i32, %c0_i32_0 : i32, i32
  }
  func.func @transform_3(%arg0: i32) -> (i32, i32) {
    %c0_i32 = arith.constant 0 : i32
    %c0_i32_0 = arith.constant 0 : i32
    %c0_i32_1 = arith.constant 0 : i32
    return %c0_i32, %c0_i32_0 : i32, i32
  }
  func.func @transform_4(%arg0: i32) -> i32 {
    %c0_i32 = arith.constant 0 : i32
    %c0_i32_0 = arith.constant 0 : i32
    return %c0_i32 : i32
  }
  func.func @transform_5(%arg0: i32) -> i32 {
    %c0_i32 = arith.constant 0 : i32
    %c0_i32_0 = arith.constant 0 : i32
    return %c0_i32 : i32
  }
  func.func @transform_6(%arg0: i32) -> (i32, i32, i32, i32, i32) {
    %c0_i32 = arith.constant 0 : i32
    %c0_i32_0 = arith.constant 0 : i32
    %c0_i32_1 = arith.constant 0 : i32
    %c0_i32_2 = arith.constant 0 : i32
    %c0_i32_3 = arith.constant 0 : i32
    return %arg0, %c0_i32, %c0_i32_0, %c0_i32_1, %c0_i32_2 : i32, i32, i32, i32, i32
  }
}

module attributes {stable_mosaic.version = 11 : i64} {
  func.func @_head_kernel(%arg0: i32, %arg1: memref<2x4x5x1x8x8xf32, #tpu.memory_space<vmem>>, %arg2: memref<4x5xf32, #tpu.memory_space<smem>>, %arg3: memref<4xf32, #tpu.memory_space<smem>>, %arg4: memref<4xf32, #tpu.memory_space<smem>>, %arg5: memref<4xf32, #tpu.memory_space<smem>>, %arg6: memref<3x4xf32, #tpu.memory_space<smem>>, %arg7: memref<3xf32, #tpu.memory_space<smem>>, %arg8: memref<1x3x8x8xf32, #tpu.memory_space<vmem>>) attributes {dimension_semantics = [#tpu.dimension_semantics<parallel>], iteration_bounds = array<i64: 2>, scalar_prefetch = 0 : i64, scratch_operands = 0 : i64, tpu.core_type = #tpu.core_type<tc>, window_params = [{transform_indices = @transform_0, window_bounds = array<i64: 2, 4, 5, 1, 8, 8>}, {transform_indices = @transform_1, window_bounds = array<i64: 4, 5>}, {transform_indices = @transform_2, window_bounds = array<i64: 4>}, {transform_indices = @transform_3, window_bounds = array<i64: 4>}, {transform_indices = @transform_4, window_bounds = array<i64: 4>}, {transform_indices = @transform_5, window_bounds = array<i64: 3, 4>}, {transform_indices = @transform_6, window_bounds = array<i64: 3>}, {transform_indices = @transform_7, window_bounds = array<i64: 1, 3, 8, 8>}]} {
    %c0 = arith.constant 0 : index
    %c0_0 = arith.constant 0 : index
    %c0_1 = arith.constant 0 : index
    %c0_2 = arith.constant 0 : index
    %c0_3 = arith.constant 0 : index
    %c0_4 = arith.constant 0 : index
    %0 = vector.load %arg1[%c0, %c0_0, %c0_1, %c0_2, %c0_3, %c0_4] : memref<2x4x5x1x8x8xf32, #tpu.memory_space<vmem>>, vector<2x4x5x1x8x8xf32>
    %1 = vector.extract_strided_slice %0 {offsets = [0, 0, 0, 0, 0, 0], sizes = [1, 4, 5, 1, 8, 8], strides = [1, 1, 1, 1, 1, 1]} : vector<2x4x5x1x8x8xf32> to vector<1x4x5x1x8x8xf32>
    %2 = vector.shape_cast %1 : vector<1x4x5x1x8x8xf32> to vector<4x5x8x8xf32>
    %3 = vector.extract_strided_slice %0 {offsets = [1, 0, 0, 0, 0, 0], sizes = [1, 4, 5, 1, 8, 8], strides = [1, 1, 1, 1, 1, 1]} : vector<2x4x5x1x8x8xf32> to vector<1x4x5x1x8x8xf32>
    %4 = vector.shape_cast %3 : vector<1x4x5x1x8x8xf32> to vector<4x5x8x8xf32>
    %5 = arith.addf %2, %4 : vector<4x5x8x8xf32>
    %cst = arith.constant 5.000000e-01 : f32
    %6 = vector.broadcast %cst : f32 to vector<4x5x8x8xf32>
    %7 = arith.mulf %6, %5 : vector<4x5x8x8xf32>
    %c0_5 = arith.constant 0 : index
    %c0_6 = arith.constant 0 : index
    %8 = memref.load %arg2[%c0_5, %c0_6] : memref<4x5xf32, #tpu.memory_space<smem>>
    %9 = vector.extract_strided_slice %7 {offsets = [0, 0, 0, 0], sizes = [4, 1, 8, 8], strides = [1, 1, 1, 1]} : vector<4x5x8x8xf32> to vector<4x1x8x8xf32>
    %10 = vector.shape_cast %9 : vector<4x1x8x8xf32> to vector<4x8x8xf32>
    %11 = vector.broadcast %8 : f32 to vector<4x8x8xf32>
    %12 = arith.mulf %11, %10 : vector<4x8x8xf32>
    %c0_7 = arith.constant 0 : index
    %c1 = arith.constant 1 : index
    %13 = memref.load %arg2[%c0_7, %c1] : memref<4x5xf32, #tpu.memory_space<smem>>
    %14 = vector.extract_strided_slice %7 {offsets = [0, 1, 0, 0], sizes = [4, 1, 8, 8], strides = [1, 1, 1, 1]} : vector<4x5x8x8xf32> to vector<4x1x8x8xf32>
    %15 = vector.shape_cast %14 : vector<4x1x8x8xf32> to vector<4x8x8xf32>
    %16 = vector.broadcast %13 : f32 to vector<4x8x8xf32>
    %17 = arith.mulf %16, %15 : vector<4x8x8xf32>
    %18 = arith.addf %12, %17 : vector<4x8x8xf32>
    %c0_8 = arith.constant 0 : index
    %c2 = arith.constant 2 : index
    %19 = memref.load %arg2[%c0_8, %c2] : memref<4x5xf32, #tpu.memory_space<smem>>
    %20 = vector.extract_strided_slice %7 {offsets = [0, 2, 0, 0], sizes = [4, 1, 8, 8], strides = [1, 1, 1, 1]} : vector<4x5x8x8xf32> to vector<4x1x8x8xf32>
    %21 = vector.shape_cast %20 : vector<4x1x8x8xf32> to vector<4x8x8xf32>
    %22 = vector.broadcast %19 : f32 to vector<4x8x8xf32>
    %23 = arith.mulf %22, %21 : vector<4x8x8xf32>
    %24 = arith.addf %18, %23 : vector<4x8x8xf32>
    %c0_9 = arith.constant 0 : index
    %c3 = arith.constant 3 : index
    %25 = memref.load %arg2[%c0_9, %c3] : memref<4x5xf32, #tpu.memory_space<smem>>
    %26 = vector.extract_strided_slice %7 {offsets = [0, 3, 0, 0], sizes = [4, 1, 8, 8], strides = [1, 1, 1, 1]} : vector<4x5x8x8xf32> to vector<4x1x8x8xf32>
    %27 = vector.shape_cast %26 : vector<4x1x8x8xf32> to vector<4x8x8xf32>
    %28 = vector.broadcast %25 : f32 to vector<4x8x8xf32>
    %29 = arith.mulf %28, %27 : vector<4x8x8xf32>
    %30 = arith.addf %24, %29 : vector<4x8x8xf32>
    %c0_10 = arith.constant 0 : index
    %c4 = arith.constant 4 : index
    %31 = memref.load %arg2[%c0_10, %c4] : memref<4x5xf32, #tpu.memory_space<smem>>
    %32 = vector.extract_strided_slice %7 {offsets = [0, 4, 0, 0], sizes = [4, 1, 8, 8], strides = [1, 1, 1, 1]} : vector<4x5x8x8xf32> to vector<4x1x8x8xf32>
    %33 = vector.shape_cast %32 : vector<4x1x8x8xf32> to vector<4x8x8xf32>
    %34 = vector.broadcast %31 : f32 to vector<4x8x8xf32>
    %35 = arith.mulf %34, %33 : vector<4x8x8xf32>
    %36 = arith.addf %30, %35 : vector<4x8x8xf32>
    %c0_11 = arith.constant 0 : index
    %37 = memref.load %arg3[%c0_11] : memref<4xf32, #tpu.memory_space<smem>>
    %38 = vector.broadcast %37 : f32 to vector<4x8x8xf32>
    %39 = arith.addf %36, %38 : vector<4x8x8xf32>
    %c1_12 = arith.constant 1 : index
    %c0_13 = arith.constant 0 : index
    %40 = memref.load %arg2[%c1_12, %c0_13] : memref<4x5xf32, #tpu.memory_space<smem>>
    %41 = vector.extract_strided_slice %7 {offsets = [0, 0, 0, 0], sizes = [4, 1, 8, 8], strides = [1, 1, 1, 1]} : vector<4x5x8x8xf32> to vector<4x1x8x8xf32>
    %42 = vector.shape_cast %41 : vector<4x1x8x8xf32> to vector<4x8x8xf32>
    %43 = vector.broadcast %40 : f32 to vector<4x8x8xf32>
    %44 = arith.mulf %43, %42 : vector<4x8x8xf32>
    %c1_14 = arith.constant 1 : index
    %c1_15 = arith.constant 1 : index
    %45 = memref.load %arg2[%c1_14, %c1_15] : memref<4x5xf32, #tpu.memory_space<smem>>
    %46 = vector.extract_strided_slice %7 {offsets = [0, 1, 0, 0], sizes = [4, 1, 8, 8], strides = [1, 1, 1, 1]} : vector<4x5x8x8xf32> to vector<4x1x8x8xf32>
    %47 = vector.shape_cast %46 : vector<4x1x8x8xf32> to vector<4x8x8xf32>
    %48 = vector.broadcast %45 : f32 to vector<4x8x8xf32>
    %49 = arith.mulf %48, %47 : vector<4x8x8xf32>
    %50 = arith.addf %44, %49 : vector<4x8x8xf32>
    %c1_16 = arith.constant 1 : index
    %c2_17 = arith.constant 2 : index
    %51 = memref.load %arg2[%c1_16, %c2_17] : memref<4x5xf32, #tpu.memory_space<smem>>
    %52 = vector.extract_strided_slice %7 {offsets = [0, 2, 0, 0], sizes = [4, 1, 8, 8], strides = [1, 1, 1, 1]} : vector<4x5x8x8xf32> to vector<4x1x8x8xf32>
    %53 = vector.shape_cast %52 : vector<4x1x8x8xf32> to vector<4x8x8xf32>
    %54 = vector.broadcast %51 : f32 to vector<4x8x8xf32>
    %55 = arith.mulf %54, %53 : vector<4x8x8xf32>
    %56 = arith.addf %50, %55 : vector<4x8x8xf32>
    %c1_18 = arith.constant 1 : index
    %c3_19 = arith.constant 3 : index
    %57 = memref.load %arg2[%c1_18, %c3_19] : memref<4x5xf32, #tpu.memory_space<smem>>
    %58 = vector.extract_strided_slice %7 {offsets = [0, 3, 0, 0], sizes = [4, 1, 8, 8], strides = [1, 1, 1, 1]} : vector<4x5x8x8xf32> to vector<4x1x8x8xf32>
    %59 = vector.shape_cast %58 : vector<4x1x8x8xf32> to vector<4x8x8xf32>
    %60 = vector.broadcast %57 : f32 to vector<4x8x8xf32>
    %61 = arith.mulf %60, %59 : vector<4x8x8xf32>
    %62 = arith.addf %56, %61 : vector<4x8x8xf32>
    %c1_20 = arith.constant 1 : index
    %c4_21 = arith.constant 4 : index
    %63 = memref.load %arg2[%c1_20, %c4_21] : memref<4x5xf32, #tpu.memory_space<smem>>
    %64 = vector.extract_strided_slice %7 {offsets = [0, 4, 0, 0], sizes = [4, 1, 8, 8], strides = [1, 1, 1, 1]} : vector<4x5x8x8xf32> to vector<4x1x8x8xf32>
    %65 = vector.shape_cast %64 : vector<4x1x8x8xf32> to vector<4x8x8xf32>
    %66 = vector.broadcast %63 : f32 to vector<4x8x8xf32>
    %67 = arith.mulf %66, %65 : vector<4x8x8xf32>
    %68 = arith.addf %62, %67 : vector<4x8x8xf32>
    %c1_22 = arith.constant 1 : index
    %69 = memref.load %arg3[%c1_22] : memref<4xf32, #tpu.memory_space<smem>>
    %70 = vector.broadcast %69 : f32 to vector<4x8x8xf32>
    %71 = arith.addf %68, %70 : vector<4x8x8xf32>
    %c2_23 = arith.constant 2 : index
    %c0_24 = arith.constant 0 : index
    %72 = memref.load %arg2[%c2_23, %c0_24] : memref<4x5xf32, #tpu.memory_space<smem>>
    %73 = vector.extract_strided_slice %7 {offsets = [0, 0, 0, 0], sizes = [4, 1, 8, 8], strides = [1, 1, 1, 1]} : vector<4x5x8x8xf32> to vector<4x1x8x8xf32>
    %74 = vector.shape_cast %73 : vector<4x1x8x8xf32> to vector<4x8x8xf32>
    %75 = vector.broadcast %72 : f32 to vector<4x8x8xf32>
    %76 = arith.mulf %75, %74 : vector<4x8x8xf32>
    %c2_25 = arith.constant 2 : index
    %c1_26 = arith.constant 1 : index
    %77 = memref.load %arg2[%c2_25, %c1_26] : memref<4x5xf32, #tpu.memory_space<smem>>
    %78 = vector.extract_strided_slice %7 {offsets = [0, 1, 0, 0], sizes = [4, 1, 8, 8], strides = [1, 1, 1, 1]} : vector<4x5x8x8xf32> to vector<4x1x8x8xf32>
    %79 = vector.shape_cast %78 : vector<4x1x8x8xf32> to vector<4x8x8xf32>
    %80 = vector.broadcast %77 : f32 to vector<4x8x8xf32>
    %81 = arith.mulf %80, %79 : vector<4x8x8xf32>
    %82 = arith.addf %76, %81 : vector<4x8x8xf32>
    %c2_27 = arith.constant 2 : index
    %c2_28 = arith.constant 2 : index
    %83 = memref.load %arg2[%c2_27, %c2_28] : memref<4x5xf32, #tpu.memory_space<smem>>
    %84 = vector.extract_strided_slice %7 {offsets = [0, 2, 0, 0], sizes = [4, 1, 8, 8], strides = [1, 1, 1, 1]} : vector<4x5x8x8xf32> to vector<4x1x8x8xf32>
    %85 = vector.shape_cast %84 : vector<4x1x8x8xf32> to vector<4x8x8xf32>
    %86 = vector.broadcast %83 : f32 to vector<4x8x8xf32>
    %87 = arith.mulf %86, %85 : vector<4x8x8xf32>
    %88 = arith.addf %82, %87 : vector<4x8x8xf32>
    %c2_29 = arith.constant 2 : index
    %c3_30 = arith.constant 3 : index
    %89 = memref.load %arg2[%c2_29, %c3_30] : memref<4x5xf32, #tpu.memory_space<smem>>
    %90 = vector.extract_strided_slice %7 {offsets = [0, 3, 0, 0], sizes = [4, 1, 8, 8], strides = [1, 1, 1, 1]} : vector<4x5x8x8xf32> to vector<4x1x8x8xf32>
    %91 = vector.shape_cast %90 : vector<4x1x8x8xf32> to vector<4x8x8xf32>
    %92 = vector.broadcast %89 : f32 to vector<4x8x8xf32>
    %93 = arith.mulf %92, %91 : vector<4x8x8xf32>
    %94 = arith.addf %88, %93 : vector<4x8x8xf32>
    %c2_31 = arith.constant 2 : index
    %c4_32 = arith.constant 4 : index
    %95 = memref.load %arg2[%c2_31, %c4_32] : memref<4x5xf32, #tpu.memory_space<smem>>
    %96 = vector.extract_strided_slice %7 {offsets = [0, 4, 0, 0], sizes = [4, 1, 8, 8], strides = [1, 1, 1, 1]} : vector<4x5x8x8xf32> to vector<4x1x8x8xf32>
    %97 = vector.shape_cast %96 : vector<4x1x8x8xf32> to vector<4x8x8xf32>
    %98 = vector.broadcast %95 : f32 to vector<4x8x8xf32>
    %99 = arith.mulf %98, %97 : vector<4x8x8xf32>
    %100 = arith.addf %94, %99 : vector<4x8x8xf32>
    %c2_33 = arith.constant 2 : index
    %101 = memref.load %arg3[%c2_33] : memref<4xf32, #tpu.memory_space<smem>>
    %102 = vector.broadcast %101 : f32 to vector<4x8x8xf32>
    %103 = arith.addf %100, %102 : vector<4x8x8xf32>
    %c3_34 = arith.constant 3 : index
    %c0_35 = arith.constant 0 : index
    %104 = memref.load %arg2[%c3_34, %c0_35] : memref<4x5xf32, #tpu.memory_space<smem>>
    %105 = vector.extract_strided_slice %7 {offsets = [0, 0, 0, 0], sizes = [4, 1, 8, 8], strides = [1, 1, 1, 1]} : vector<4x5x8x8xf32> to vector<4x1x8x8xf32>
    %106 = vector.shape_cast %105 : vector<4x1x8x8xf32> to vector<4x8x8xf32>
    %107 = vector.broadcast %104 : f32 to vector<4x8x8xf32>
    %108 = arith.mulf %107, %106 : vector<4x8x8xf32>
    %c3_36 = arith.constant 3 : index
    %c1_37 = arith.constant 1 : index
    %109 = memref.load %arg2[%c3_36, %c1_37] : memref<4x5xf32, #tpu.memory_space<smem>>
    %110 = vector.extract_strided_slice %7 {offsets = [0, 1, 0, 0], sizes = [4, 1, 8, 8], strides = [1, 1, 1, 1]} : vector<4x5x8x8xf32> to vector<4x1x8x8xf32>
    %111 = vector.shape_cast %110 : vector<4x1x8x8xf32> to vector<4x8x8xf32>
    %112 = vector.broadcast %109 : f32 to vector<4x8x8xf32>
    %113 = arith.mulf %112, %111 : vector<4x8x8xf32>
    %114 = arith.addf %108, %113 : vector<4x8x8xf32>
    %c3_38 = arith.constant 3 : index
    %c2_39 = arith.constant 2 : index
    %115 = memref.load %arg2[%c3_38, %c2_39] : memref<4x5xf32, #tpu.memory_space<smem>>
    %116 = vector.extract_strided_slice %7 {offsets = [0, 2, 0, 0], sizes = [4, 1, 8, 8], strides = [1, 1, 1, 1]} : vector<4x5x8x8xf32> to vector<4x1x8x8xf32>
    %117 = vector.shape_cast %116 : vector<4x1x8x8xf32> to vector<4x8x8xf32>
    %118 = vector.broadcast %115 : f32 to vector<4x8x8xf32>
    %119 = arith.mulf %118, %117 : vector<4x8x8xf32>
    %120 = arith.addf %114, %119 : vector<4x8x8xf32>
    %c3_40 = arith.constant 3 : index
    %c3_41 = arith.constant 3 : index
    %121 = memref.load %arg2[%c3_40, %c3_41] : memref<4x5xf32, #tpu.memory_space<smem>>
    %122 = vector.extract_strided_slice %7 {offsets = [0, 3, 0, 0], sizes = [4, 1, 8, 8], strides = [1, 1, 1, 1]} : vector<4x5x8x8xf32> to vector<4x1x8x8xf32>
    %123 = vector.shape_cast %122 : vector<4x1x8x8xf32> to vector<4x8x8xf32>
    %124 = vector.broadcast %121 : f32 to vector<4x8x8xf32>
    %125 = arith.mulf %124, %123 : vector<4x8x8xf32>
    %126 = arith.addf %120, %125 : vector<4x8x8xf32>
    %c3_42 = arith.constant 3 : index
    %c4_43 = arith.constant 4 : index
    %127 = memref.load %arg2[%c3_42, %c4_43] : memref<4x5xf32, #tpu.memory_space<smem>>
    %128 = vector.extract_strided_slice %7 {offsets = [0, 4, 0, 0], sizes = [4, 1, 8, 8], strides = [1, 1, 1, 1]} : vector<4x5x8x8xf32> to vector<4x1x8x8xf32>
    %129 = vector.shape_cast %128 : vector<4x1x8x8xf32> to vector<4x8x8xf32>
    %130 = vector.broadcast %127 : f32 to vector<4x8x8xf32>
    %131 = arith.mulf %130, %129 : vector<4x8x8xf32>
    %132 = arith.addf %126, %131 : vector<4x8x8xf32>
    %c3_44 = arith.constant 3 : index
    %133 = memref.load %arg3[%c3_44] : memref<4xf32, #tpu.memory_space<smem>>
    %134 = vector.broadcast %133 : f32 to vector<4x8x8xf32>
    %135 = arith.addf %132, %134 : vector<4x8x8xf32>
    %136 = arith.addf %39, %71 : vector<4x8x8xf32>
    %137 = arith.addf %136, %103 : vector<4x8x8xf32>
    %138 = arith.addf %137, %135 : vector<4x8x8xf32>
    %cst_45 = arith.constant 2.500000e-01 : f32
    %139 = vector.broadcast %cst_45 : f32 to vector<4x8x8xf32>
    %140 = arith.mulf %138, %139 : vector<4x8x8xf32>
    %141 = arith.subf %39, %140 : vector<4x8x8xf32>
    %142 = arith.mulf %141, %141 : vector<4x8x8xf32>
    %143 = arith.subf %71, %140 : vector<4x8x8xf32>
    %144 = arith.mulf %143, %143 : vector<4x8x8xf32>
    %145 = arith.addf %142, %144 : vector<4x8x8xf32>
    %146 = arith.subf %103, %140 : vector<4x8x8xf32>
    %147 = arith.mulf %146, %146 : vector<4x8x8xf32>
    %148 = arith.addf %145, %147 : vector<4x8x8xf32>
    %149 = arith.subf %135, %140 : vector<4x8x8xf32>
    %150 = arith.mulf %149, %149 : vector<4x8x8xf32>
    %151 = arith.addf %148, %150 : vector<4x8x8xf32>
    %cst_46 = arith.constant 2.500000e-01 : f32
    %152 = vector.broadcast %cst_46 : f32 to vector<4x8x8xf32>
    %153 = arith.mulf %151, %152 : vector<4x8x8xf32>
    %cst_47 = arith.constant 9.99999974E-6 : f32
    %154 = vector.broadcast %cst_47 : f32 to vector<4x8x8xf32>
    %155 = arith.addf %153, %154 : vector<4x8x8xf32>
    %156 = math.rsqrt %155 : vector<4x8x8xf32>
    %157 = arith.subf %39, %140 : vector<4x8x8xf32>
    %158 = arith.mulf %157, %156 : vector<4x8x8xf32>
    %c0_48 = arith.constant 0 : index
    %159 = memref.load %arg4[%c0_48] : memref<4xf32, #tpu.memory_space<smem>>
    %160 = vector.broadcast %159 : f32 to vector<4x8x8xf32>
    %161 = arith.mulf %158, %160 : vector<4x8x8xf32>
    %c0_49 = arith.constant 0 : index
    %162 = memref.load %arg5[%c0_49] : memref<4xf32, #tpu.memory_space<smem>>
    %163 = vector.broadcast %162 : f32 to vector<4x8x8xf32>
    %164 = arith.addf %161, %163 : vector<4x8x8xf32>
    %cst_50 = arith.constant 0.000000e+00 : f32
    %165 = vector.broadcast %cst_50 : f32 to vector<4x8x8xf32>
    %166 = arith.cmpf ogt, %164, %165 : vector<4x8x8xf32>
    %cst_51 = arith.constant 0.000000e+00 : f32
    %167 = vector.broadcast %cst_51 : f32 to vector<4x8x8xf32>
    %168 = arith.minimumf %164, %167 : vector<4x8x8xf32>
    %169 = math.exp %168 : vector<4x8x8xf32>
    %cst_52 = arith.constant 1.000000e+00 : f32
    %170 = vector.broadcast %cst_52 : f32 to vector<4x8x8xf32>
    %171 = arith.subf %169, %170 : vector<4x8x8xf32>
    %172 = arith.select %166, %164, %171 : vector<4x8x8xi1>, vector<4x8x8xf32>
    %173 = vector.extract_strided_slice %172 {offsets = [0, 0, 0], sizes = [1, 8, 8], strides = [1, 1, 1]} : vector<4x8x8xf32> to vector<1x8x8xf32>
    %174 = vector.shape_cast %173 : vector<1x8x8xf32> to vector<8x8xf32>
    %175 = vector.extract_strided_slice %172 {offsets = [0, 0, 0], sizes = [1, 8, 8], strides = [1, 1, 1]} : vector<4x8x8xf32> to vector<1x8x8xf32>
    %176 = vector.shape_cast %175 : vector<1x8x8xf32> to vector<8x8xf32>
    %177 = tpu.transpose %176, [1, 0] : vector<8x8xf32> -> vector<8x8xf32>
    %178 = arith.addf %174, %177 : vector<8x8xf32>
    %179 = vector.extract_strided_slice %172 {offsets = [1, 0, 0], sizes = [1, 8, 8], strides = [1, 1, 1]} : vector<4x8x8xf32> to vector<1x8x8xf32>
    %180 = vector.shape_cast %179 : vector<1x8x8xf32> to vector<8x8xf32>
    %181 = arith.addf %178, %180 : vector<8x8xf32>
    %182 = vector.extract_strided_slice %172 {offsets = [1, 0, 0], sizes = [1, 8, 8], strides = [1, 1, 1]} : vector<4x8x8xf32> to vector<1x8x8xf32>
    %183 = vector.shape_cast %182 : vector<1x8x8xf32> to vector<8x8xf32>
    %184 = tpu.transpose %183, [1, 0] : vector<8x8xf32> -> vector<8x8xf32>
    %185 = arith.addf %181, %184 : vector<8x8xf32>
    %186 = vector.extract_strided_slice %172 {offsets = [2, 0, 0], sizes = [1, 8, 8], strides = [1, 1, 1]} : vector<4x8x8xf32> to vector<1x8x8xf32>
    %187 = vector.shape_cast %186 : vector<1x8x8xf32> to vector<8x8xf32>
    %188 = arith.addf %185, %187 : vector<8x8xf32>
    %189 = vector.extract_strided_slice %172 {offsets = [2, 0, 0], sizes = [1, 8, 8], strides = [1, 1, 1]} : vector<4x8x8xf32> to vector<1x8x8xf32>
    %190 = vector.shape_cast %189 : vector<1x8x8xf32> to vector<8x8xf32>
    %191 = tpu.transpose %190, [1, 0] : vector<8x8xf32> -> vector<8x8xf32>
    %192 = arith.addf %188, %191 : vector<8x8xf32>
    %193 = vector.extract_strided_slice %172 {offsets = [3, 0, 0], sizes = [1, 8, 8], strides = [1, 1, 1]} : vector<4x8x8xf32> to vector<1x8x8xf32>
    %194 = vector.shape_cast %193 : vector<1x8x8xf32> to vector<8x8xf32>
    %195 = arith.addf %192, %194 : vector<8x8xf32>
    %196 = vector.extract_strided_slice %172 {offsets = [3, 0, 0], sizes = [1, 8, 8], strides = [1, 1, 1]} : vector<4x8x8xf32> to vector<1x8x8xf32>
    %197 = vector.shape_cast %196 : vector<1x8x8xf32> to vector<8x8xf32>
    %198 = tpu.transpose %197, [1, 0] : vector<8x8xf32> -> vector<8x8xf32>
    %199 = arith.addf %195, %198 : vector<8x8xf32>
    %cst_53 = arith.constant 1.250000e-01 : f32
    %200 = vector.broadcast %cst_53 : f32 to vector<8x8xf32>
    %201 = arith.mulf %199, %200 : vector<8x8xf32>
    %202 = arith.subf %71, %140 : vector<4x8x8xf32>
    %203 = arith.mulf %202, %156 : vector<4x8x8xf32>
    %c1_54 = arith.constant 1 : index
    %204 = memref.load %arg4[%c1_54] : memref<4xf32, #tpu.memory_space<smem>>
    %205 = vector.broadcast %204 : f32 to vector<4x8x8xf32>
    %206 = arith.mulf %203, %205 : vector<4x8x8xf32>
    %c1_55 = arith.constant 1 : index
    %207 = memref.load %arg5[%c1_55] : memref<4xf32, #tpu.memory_space<smem>>
    %208 = vector.broadcast %207 : f32 to vector<4x8x8xf32>
    %209 = arith.addf %206, %208 : vector<4x8x8xf32>
    %cst_56 = arith.constant 0.000000e+00 : f32
    %210 = vector.broadcast %cst_56 : f32 to vector<4x8x8xf32>
    %211 = arith.cmpf ogt, %209, %210 : vector<4x8x8xf32>
    %cst_57 = arith.constant 0.000000e+00 : f32
    %212 = vector.broadcast %cst_57 : f32 to vector<4x8x8xf32>
    %213 = arith.minimumf %209, %212 : vector<4x8x8xf32>
    %214 = math.exp %213 : vector<4x8x8xf32>
    %cst_58 = arith.constant 1.000000e+00 : f32
    %215 = vector.broadcast %cst_58 : f32 to vector<4x8x8xf32>
    %216 = arith.subf %214, %215 : vector<4x8x8xf32>
    %217 = arith.select %211, %209, %216 : vector<4x8x8xi1>, vector<4x8x8xf32>
    %218 = vector.extract_strided_slice %217 {offsets = [0, 0, 0], sizes = [1, 8, 8], strides = [1, 1, 1]} : vector<4x8x8xf32> to vector<1x8x8xf32>
    %219 = vector.shape_cast %218 : vector<1x8x8xf32> to vector<8x8xf32>
    %220 = vector.extract_strided_slice %217 {offsets = [0, 0, 0], sizes = [1, 8, 8], strides = [1, 1, 1]} : vector<4x8x8xf32> to vector<1x8x8xf32>
    %221 = vector.shape_cast %220 : vector<1x8x8xf32> to vector<8x8xf32>
    %222 = tpu.transpose %221, [1, 0] : vector<8x8xf32> -> vector<8x8xf32>
    %223 = arith.addf %219, %222 : vector<8x8xf32>
    %224 = vector.extract_strided_slice %217 {offsets = [1, 0, 0], sizes = [1, 8, 8], strides = [1, 1, 1]} : vector<4x8x8xf32> to vector<1x8x8xf32>
    %225 = vector.shape_cast %224 : vector<1x8x8xf32> to vector<8x8xf32>
    %226 = arith.addf %223, %225 : vector<8x8xf32>
    %227 = vector.extract_strided_slice %217 {offsets = [1, 0, 0], sizes = [1, 8, 8], strides = [1, 1, 1]} : vector<4x8x8xf32> to vector<1x8x8xf32>
    %228 = vector.shape_cast %227 : vector<1x8x8xf32> to vector<8x8xf32>
    %229 = tpu.transpose %228, [1, 0] : vector<8x8xf32> -> vector<8x8xf32>
    %230 = arith.addf %226, %229 : vector<8x8xf32>
    %231 = vector.extract_strided_slice %217 {offsets = [2, 0, 0], sizes = [1, 8, 8], strides = [1, 1, 1]} : vector<4x8x8xf32> to vector<1x8x8xf32>
    %232 = vector.shape_cast %231 : vector<1x8x8xf32> to vector<8x8xf32>
    %233 = arith.addf %230, %232 : vector<8x8xf32>
    %234 = vector.extract_strided_slice %217 {offsets = [2, 0, 0], sizes = [1, 8, 8], strides = [1, 1, 1]} : vector<4x8x8xf32> to vector<1x8x8xf32>
    %235 = vector.shape_cast %234 : vector<1x8x8xf32> to vector<8x8xf32>
    %236 = tpu.transpose %235, [1, 0] : vector<8x8xf32> -> vector<8x8xf32>
    %237 = arith.addf %233, %236 : vector<8x8xf32>
    %238 = vector.extract_strided_slice %217 {offsets = [3, 0, 0], sizes = [1, 8, 8], strides = [1, 1, 1]} : vector<4x8x8xf32> to vector<1x8x8xf32>
    %239 = vector.shape_cast %238 : vector<1x8x8xf32> to vector<8x8xf32>
    %240 = arith.addf %237, %239 : vector<8x8xf32>
    %241 = vector.extract_strided_slice %217 {offsets = [3, 0, 0], sizes = [1, 8, 8], strides = [1, 1, 1]} : vector<4x8x8xf32> to vector<1x8x8xf32>
    %242 = vector.shape_cast %241 : vector<1x8x8xf32> to vector<8x8xf32>
    %243 = tpu.transpose %242, [1, 0] : vector<8x8xf32> -> vector<8x8xf32>
    %244 = arith.addf %240, %243 : vector<8x8xf32>
    %cst_59 = arith.constant 1.250000e-01 : f32
    %245 = vector.broadcast %cst_59 : f32 to vector<8x8xf32>
    %246 = arith.mulf %244, %245 : vector<8x8xf32>
    %247 = arith.subf %103, %140 : vector<4x8x8xf32>
    %248 = arith.mulf %247, %156 : vector<4x8x8xf32>
    %c2_60 = arith.constant 2 : index
    %249 = memref.load %arg4[%c2_60] : memref<4xf32, #tpu.memory_space<smem>>
    %250 = vector.broadcast %249 : f32 to vector<4x8x8xf32>
    %251 = arith.mulf %248, %250 : vector<4x8x8xf32>
    %c2_61 = arith.constant 2 : index
    %252 = memref.load %arg5[%c2_61] : memref<4xf32, #tpu.memory_space<smem>>
    %253 = vector.broadcast %252 : f32 to vector<4x8x8xf32>
    %254 = arith.addf %251, %253 : vector<4x8x8xf32>
    %cst_62 = arith.constant 0.000000e+00 : f32
    %255 = vector.broadcast %cst_62 : f32 to vector<4x8x8xf32>
    %256 = arith.cmpf ogt, %254, %255 : vector<4x8x8xf32>
    %cst_63 = arith.constant 0.000000e+00 : f32
    %257 = vector.broadcast %cst_63 : f32 to vector<4x8x8xf32>
    %258 = arith.minimumf %254, %257 : vector<4x8x8xf32>
    %259 = math.exp %258 : vector<4x8x8xf32>
    %cst_64 = arith.constant 1.000000e+00 : f32
    %260 = vector.broadcast %cst_64 : f32 to vector<4x8x8xf32>
    %261 = arith.subf %259, %260 : vector<4x8x8xf32>
    %262 = arith.select %256, %254, %261 : vector<4x8x8xi1>, vector<4x8x8xf32>
    %263 = vector.extract_strided_slice %262 {offsets = [0, 0, 0], sizes = [1, 8, 8], strides = [1, 1, 1]} : vector<4x8x8xf32> to vector<1x8x8xf32>
    %264 = vector.shape_cast %263 : vector<1x8x8xf32> to vector<8x8xf32>
    %265 = vector.extract_strided_slice %262 {offsets = [0, 0, 0], sizes = [1, 8, 8], strides = [1, 1, 1]} : vector<4x8x8xf32> to vector<1x8x8xf32>
    %266 = vector.shape_cast %265 : vector<1x8x8xf32> to vector<8x8xf32>
    %267 = tpu.transpose %266, [1, 0] : vector<8x8xf32> -> vector<8x8xf32>
    %268 = arith.addf %264, %267 : vector<8x8xf32>
    %269 = vector.extract_strided_slice %262 {offsets = [1, 0, 0], sizes = [1, 8, 8], strides = [1, 1, 1]} : vector<4x8x8xf32> to vector<1x8x8xf32>
    %270 = vector.shape_cast %269 : vector<1x8x8xf32> to vector<8x8xf32>
    %271 = arith.addf %268, %270 : vector<8x8xf32>
    %272 = vector.extract_strided_slice %262 {offsets = [1, 0, 0], sizes = [1, 8, 8], strides = [1, 1, 1]} : vector<4x8x8xf32> to vector<1x8x8xf32>
    %273 = vector.shape_cast %272 : vector<1x8x8xf32> to vector<8x8xf32>
    %274 = tpu.transpose %273, [1, 0] : vector<8x8xf32> -> vector<8x8xf32>
    %275 = arith.addf %271, %274 : vector<8x8xf32>
    %276 = vector.extract_strided_slice %262 {offsets = [2, 0, 0], sizes = [1, 8, 8], strides = [1, 1, 1]} : vector<4x8x8xf32> to vector<1x8x8xf32>
    %277 = vector.shape_cast %276 : vector<1x8x8xf32> to vector<8x8xf32>
    %278 = arith.addf %275, %277 : vector<8x8xf32>
    %279 = vector.extract_strided_slice %262 {offsets = [2, 0, 0], sizes = [1, 8, 8], strides = [1, 1, 1]} : vector<4x8x8xf32> to vector<1x8x8xf32>
    %280 = vector.shape_cast %279 : vector<1x8x8xf32> to vector<8x8xf32>
    %281 = tpu.transpose %280, [1, 0] : vector<8x8xf32> -> vector<8x8xf32>
    %282 = arith.addf %278, %281 : vector<8x8xf32>
    %283 = vector.extract_strided_slice %262 {offsets = [3, 0, 0], sizes = [1, 8, 8], strides = [1, 1, 1]} : vector<4x8x8xf32> to vector<1x8x8xf32>
    %284 = vector.shape_cast %283 : vector<1x8x8xf32> to vector<8x8xf32>
    %285 = arith.addf %282, %284 : vector<8x8xf32>
    %286 = vector.extract_strided_slice %262 {offsets = [3, 0, 0], sizes = [1, 8, 8], strides = [1, 1, 1]} : vector<4x8x8xf32> to vector<1x8x8xf32>
    %287 = vector.shape_cast %286 : vector<1x8x8xf32> to vector<8x8xf32>
    %288 = tpu.transpose %287, [1, 0] : vector<8x8xf32> -> vector<8x8xf32>
    %289 = arith.addf %285, %288 : vector<8x8xf32>
    %cst_65 = arith.constant 1.250000e-01 : f32
    %290 = vector.broadcast %cst_65 : f32 to vector<8x8xf32>
    %291 = arith.mulf %289, %290 : vector<8x8xf32>
    %292 = arith.subf %135, %140 : vector<4x8x8xf32>
    %293 = arith.mulf %292, %156 : vector<4x8x8xf32>
    %c3_66 = arith.constant 3 : index
    %294 = memref.load %arg4[%c3_66] : memref<4xf32, #tpu.memory_space<smem>>
    %295 = vector.broadcast %294 : f32 to vector<4x8x8xf32>
    %296 = arith.mulf %293, %295 : vector<4x8x8xf32>
    %c3_67 = arith.constant 3 : index
    %297 = memref.load %arg5[%c3_67] : memref<4xf32, #tpu.memory_space<smem>>
    %298 = vector.broadcast %297 : f32 to vector<4x8x8xf32>
    %299 = arith.addf %296, %298 : vector<4x8x8xf32>
    %cst_68 = arith.constant 0.000000e+00 : f32
    %300 = vector.broadcast %cst_68 : f32 to vector<4x8x8xf32>
    %301 = arith.cmpf ogt, %299, %300 : vector<4x8x8xf32>
    %cst_69 = arith.constant 0.000000e+00 : f32
    %302 = vector.broadcast %cst_69 : f32 to vector<4x8x8xf32>
    %303 = arith.minimumf %299, %302 : vector<4x8x8xf32>
    %304 = math.exp %303 : vector<4x8x8xf32>
    %cst_70 = arith.constant 1.000000e+00 : f32
    %305 = vector.broadcast %cst_70 : f32 to vector<4x8x8xf32>
    %306 = arith.subf %304, %305 : vector<4x8x8xf32>
    %307 = arith.select %301, %299, %306 : vector<4x8x8xi1>, vector<4x8x8xf32>
    %308 = vector.extract_strided_slice %307 {offsets = [0, 0, 0], sizes = [1, 8, 8], strides = [1, 1, 1]} : vector<4x8x8xf32> to vector<1x8x8xf32>
    %309 = vector.shape_cast %308 : vector<1x8x8xf32> to vector<8x8xf32>
    %310 = vector.extract_strided_slice %307 {offsets = [0, 0, 0], sizes = [1, 8, 8], strides = [1, 1, 1]} : vector<4x8x8xf32> to vector<1x8x8xf32>
    %311 = vector.shape_cast %310 : vector<1x8x8xf32> to vector<8x8xf32>
    %312 = tpu.transpose %311, [1, 0] : vector<8x8xf32> -> vector<8x8xf32>
    %313 = arith.addf %309, %312 : vector<8x8xf32>
    %314 = vector.extract_strided_slice %307 {offsets = [1, 0, 0], sizes = [1, 8, 8], strides = [1, 1, 1]} : vector<4x8x8xf32> to vector<1x8x8xf32>
    %315 = vector.shape_cast %314 : vector<1x8x8xf32> to vector<8x8xf32>
    %316 = arith.addf %313, %315 : vector<8x8xf32>
    %317 = vector.extract_strided_slice %307 {offsets = [1, 0, 0], sizes = [1, 8, 8], strides = [1, 1, 1]} : vector<4x8x8xf32> to vector<1x8x8xf32>
    %318 = vector.shape_cast %317 : vector<1x8x8xf32> to vector<8x8xf32>
    %319 = tpu.transpose %318, [1, 0] : vector<8x8xf32> -> vector<8x8xf32>
    %320 = arith.addf %316, %319 : vector<8x8xf32>
    %321 = vector.extract_strided_slice %307 {offsets = [2, 0, 0], sizes = [1, 8, 8], strides = [1, 1, 1]} : vector<4x8x8xf32> to vector<1x8x8xf32>
    %322 = vector.shape_cast %321 : vector<1x8x8xf32> to vector<8x8xf32>
    %323 = arith.addf %320, %322 : vector<8x8xf32>
    %324 = vector.extract_strided_slice %307 {offsets = [2, 0, 0], sizes = [1, 8, 8], strides = [1, 1, 1]} : vector<4x8x8xf32> to vector<1x8x8xf32>
    %325 = vector.shape_cast %324 : vector<1x8x8xf32> to vector<8x8xf32>
    %326 = tpu.transpose %325, [1, 0] : vector<8x8xf32> -> vector<8x8xf32>
    %327 = arith.addf %323, %326 : vector<8x8xf32>
    %328 = vector.extract_strided_slice %307 {offsets = [3, 0, 0], sizes = [1, 8, 8], strides = [1, 1, 1]} : vector<4x8x8xf32> to vector<1x8x8xf32>
    %329 = vector.shape_cast %328 : vector<1x8x8xf32> to vector<8x8xf32>
    %330 = arith.addf %327, %329 : vector<8x8xf32>
    %331 = vector.extract_strided_slice %307 {offsets = [3, 0, 0], sizes = [1, 8, 8], strides = [1, 1, 1]} : vector<4x8x8xf32> to vector<1x8x8xf32>
    %332 = vector.shape_cast %331 : vector<1x8x8xf32> to vector<8x8xf32>
    %333 = tpu.transpose %332, [1, 0] : vector<8x8xf32> -> vector<8x8xf32>
    %334 = arith.addf %330, %333 : vector<8x8xf32>
    %cst_71 = arith.constant 1.250000e-01 : f32
    %335 = vector.broadcast %cst_71 : f32 to vector<8x8xf32>
    %336 = arith.mulf %334, %335 : vector<8x8xf32>
    %c0_72 = arith.constant 0 : index
    %c0_73 = arith.constant 0 : index
    %337 = memref.load %arg6[%c0_72, %c0_73] : memref<3x4xf32, #tpu.memory_space<smem>>
    %338 = vector.broadcast %337 : f32 to vector<8x8xf32>
    %339 = arith.mulf %338, %201 : vector<8x8xf32>
    %c0_74 = arith.constant 0 : index
    %c1_75 = arith.constant 1 : index
    %340 = memref.load %arg6[%c0_74, %c1_75] : memref<3x4xf32, #tpu.memory_space<smem>>
    %341 = vector.broadcast %340 : f32 to vector<8x8xf32>
    %342 = arith.mulf %341, %246 : vector<8x8xf32>
    %343 = arith.addf %339, %342 : vector<8x8xf32>
    %c0_76 = arith.constant 0 : index
    %c2_77 = arith.constant 2 : index
    %344 = memref.load %arg6[%c0_76, %c2_77] : memref<3x4xf32, #tpu.memory_space<smem>>
    %345 = vector.broadcast %344 : f32 to vector<8x8xf32>
    %346 = arith.mulf %345, %291 : vector<8x8xf32>
    %347 = arith.addf %343, %346 : vector<8x8xf32>
    %c0_78 = arith.constant 0 : index
    %c3_79 = arith.constant 3 : index
    %348 = memref.load %arg6[%c0_78, %c3_79] : memref<3x4xf32, #tpu.memory_space<smem>>
    %349 = vector.broadcast %348 : f32 to vector<8x8xf32>
    %350 = arith.mulf %349, %336 : vector<8x8xf32>
    %351 = arith.addf %347, %350 : vector<8x8xf32>
    %c0_80 = arith.constant 0 : index
    %352 = memref.load %arg7[%c0_80] : memref<3xf32, #tpu.memory_space<smem>>
    %353 = vector.broadcast %352 : f32 to vector<8x8xf32>
    %354 = arith.addf %351, %353 : vector<8x8xf32>
    %c0_81 = arith.constant 0 : index
    %c0_82 = arith.constant 0 : index
    %c0_83 = arith.constant 0 : index
    %c0_84 = arith.constant 0 : index
    %355 = vector.load %arg8[%c0_81, %c0_82, %c0_83, %c0_84] : memref<1x3x8x8xf32, #tpu.memory_space<vmem>>, vector<1x1x8x8xf32>
    %356 = vector.shape_cast %355 : vector<1x1x8x8xf32> to vector<8x8xf32>
    %357 = vector.shape_cast %354 : vector<8x8xf32> to vector<1x1x8x8xf32>
    tpu.vector_store %arg8[%c0_81, %c0_82, %c0_83, %c0_84], %357 {strides = array<i32>} : memref<1x3x8x8xf32, #tpu.memory_space<vmem>>, vector<1x1x8x8xf32>,
    %c1_85 = arith.constant 1 : index
    %c0_86 = arith.constant 0 : index
    %358 = memref.load %arg6[%c1_85, %c0_86] : memref<3x4xf32, #tpu.memory_space<smem>>
    %359 = vector.broadcast %358 : f32 to vector<8x8xf32>
    %360 = arith.mulf %359, %201 : vector<8x8xf32>
    %c1_87 = arith.constant 1 : index
    %c1_88 = arith.constant 1 : index
    %361 = memref.load %arg6[%c1_87, %c1_88] : memref<3x4xf32, #tpu.memory_space<smem>>
    %362 = vector.broadcast %361 : f32 to vector<8x8xf32>
    %363 = arith.mulf %362, %246 : vector<8x8xf32>
    %364 = arith.addf %360, %363 : vector<8x8xf32>
    %c1_89 = arith.constant 1 : index
    %c2_90 = arith.constant 2 : index
    %365 = memref.load %arg6[%c1_89, %c2_90] : memref<3x4xf32, #tpu.memory_space<smem>>
    %366 = vector.broadcast %365 : f32 to vector<8x8xf32>
    %367 = arith.mulf %366, %291 : vector<8x8xf32>
    %368 = arith.addf %364, %367 : vector<8x8xf32>
    %c1_91 = arith.constant 1 : index
    %c3_92 = arith.constant 3 : index
    %369 = memref.load %arg6[%c1_91, %c3_92] : memref<3x4xf32, #tpu.memory_space<smem>>
    %370 = vector.broadcast %369 : f32 to vector<8x8xf32>
    %371 = arith.mulf %370, %336 : vector<8x8xf32>
    %372 = arith.addf %368, %371 : vector<8x8xf32>
    %c1_93 = arith.constant 1 : index
    %373 = memref.load %arg7[%c1_93] : memref<3xf32, #tpu.memory_space<smem>>
    %374 = vector.broadcast %373 : f32 to vector<8x8xf32>
    %375 = arith.addf %372, %374 : vector<8x8xf32>
    %c0_94 = arith.constant 0 : index
    %c1_95 = arith.constant 1 : index
    %c0_96 = arith.constant 0 : index
    %c0_97 = arith.constant 0 : index
    %376 = vector.load %arg8[%c0_94, %c1_95, %c0_96, %c0_97] : memref<1x3x8x8xf32, #tpu.memory_space<vmem>>, vector<1x1x8x8xf32>
    %377 = vector.shape_cast %376 : vector<1x1x8x8xf32> to vector<8x8xf32>
    %378 = vector.shape_cast %375 : vector<8x8xf32> to vector<1x1x8x8xf32>
    tpu.vector_store %arg8[%c0_94, %c1_95, %c0_96, %c0_97], %378 {strides = array<i32>} : memref<1x3x8x8xf32, #tpu.memory_space<vmem>>, vector<1x1x8x8xf32>,
    %c2_98 = arith.constant 2 : index
    %c0_99 = arith.constant 0 : index
    %379 = memref.load %arg6[%c2_98, %c0_99] : memref<3x4xf32, #tpu.memory_space<smem>>
    %380 = vector.broadcast %379 : f32 to vector<8x8xf32>
    %381 = arith.mulf %380, %201 : vector<8x8xf32>
    %c2_100 = arith.constant 2 : index
    %c1_101 = arith.constant 1 : index
    %382 = memref.load %arg6[%c2_100, %c1_101] : memref<3x4xf32, #tpu.memory_space<smem>>
    %383 = vector.broadcast %382 : f32 to vector<8x8xf32>
    %384 = arith.mulf %383, %246 : vector<8x8xf32>
    %385 = arith.addf %381, %384 : vector<8x8xf32>
    %c2_102 = arith.constant 2 : index
    %c2_103 = arith.constant 2 : index
    %386 = memref.load %arg6[%c2_102, %c2_103] : memref<3x4xf32, #tpu.memory_space<smem>>
    %387 = vector.broadcast %386 : f32 to vector<8x8xf32>
    %388 = arith.mulf %387, %291 : vector<8x8xf32>
    %389 = arith.addf %385, %388 : vector<8x8xf32>
    %c2_104 = arith.constant 2 : index
    %c3_105 = arith.constant 3 : index
    %390 = memref.load %arg6[%c2_104, %c3_105] : memref<3x4xf32, #tpu.memory_space<smem>>
    %391 = vector.broadcast %390 : f32 to vector<8x8xf32>
    %392 = arith.mulf %391, %336 : vector<8x8xf32>
    %393 = arith.addf %389, %392 : vector<8x8xf32>
    %c2_106 = arith.constant 2 : index
    %394 = memref.load %arg7[%c2_106] : memref<3xf32, #tpu.memory_space<smem>>
    %395 = vector.broadcast %394 : f32 to vector<8x8xf32>
    %396 = arith.addf %393, %395 : vector<8x8xf32>
    %c0_107 = arith.constant 0 : index
    %c2_108 = arith.constant 2 : index
    %c0_109 = arith.constant 0 : index
    %c0_110 = arith.constant 0 : index
    %397 = vector.load %arg8[%c0_107, %c2_108, %c0_109, %c0_110] : memref<1x3x8x8xf32, #tpu.memory_space<vmem>>, vector<1x1x8x8xf32>
    %398 = vector.shape_cast %397 : vector<1x1x8x8xf32> to vector<8x8xf32>
    %399 = vector.shape_cast %396 : vector<8x8xf32> to vector<1x1x8x8xf32>
    tpu.vector_store %arg8[%c0_107, %c2_108, %c0_109, %c0_110], %399 {strides = array<i32>} : memref<1x3x8x8xf32, #tpu.memory_space<vmem>>, vector<1x1x8x8xf32>,
    return
  }
  func.func @transform_0(%arg0: i32) -> (i32, i32, i32, i32, i32, i32) {
    %c0_i32 = arith.constant 0 : i32
    %c0_i32_0 = arith.constant 0 : i32
    %c0_i32_1 = arith.constant 0 : i32
    %c0_i32_2 = arith.constant 0 : i32
    %c0_i32_3 = arith.constant 0 : i32
    %c0_i32_4 = arith.constant 0 : i32
    return %c0_i32, %c0_i32_0, %c0_i32_1, %arg0, %c0_i32_2, %c0_i32_3 : i32, i32, i32, i32, i32, i32
  }
  func.func @transform_1(%arg0: i32) -> (i32, i32) {
    %c0_i32 = arith.constant 0 : i32
    %c0_i32_0 = arith.constant 0 : i32
    %c0_i32_1 = arith.constant 0 : i32
    return %c0_i32, %c0_i32_0 : i32, i32
  }
  func.func @transform_2(%arg0: i32) -> i32 {
    %c0_i32 = arith.constant 0 : i32
    %c0_i32_0 = arith.constant 0 : i32
    return %c0_i32 : i32
  }
  func.func @transform_3(%arg0: i32) -> i32 {
    %c0_i32 = arith.constant 0 : i32
    %c0_i32_0 = arith.constant 0 : i32
    return %c0_i32 : i32
  }
  func.func @transform_4(%arg0: i32) -> i32 {
    %c0_i32 = arith.constant 0 : i32
    %c0_i32_0 = arith.constant 0 : i32
    return %c0_i32 : i32
  }
  func.func @transform_5(%arg0: i32) -> (i32, i32) {
    %c0_i32 = arith.constant 0 : i32
    %c0_i32_0 = arith.constant 0 : i32
    %c0_i32_1 = arith.constant 0 : i32
    return %c0_i32, %c0_i32_0 : i32, i32
  }
  func.func @transform_6(%arg0: i32) -> i32 {
    %c0_i32 = arith.constant 0 : i32
    %c0_i32_0 = arith.constant 0 : i32
    return %c0_i32 : i32
  }
  func.func @transform_7(%arg0: i32) -> (i32, i32, i32, i32) {
    %c0_i32 = arith.constant 0 : i32
    %c0_i32_0 = arith.constant 0 : i32
    %c0_i32_1 = arith.constant 0 : i32
    %c0_i32_2 = arith.constant 0 : i32
    return %arg0, %c0_i32, %c0_i32_0, %c0_i32_1 : i32, i32, i32, i32
  }
}

</mosaic_0001>

<llo_original>
// kernel: _lambda_.3
$region0: #{_lambda_.3}
  #allocation0 [shape = 'u32[]', space=smem, size = 0x4, offset = 0x4, fixed_abs, tag = 'smem constant byte address 0x4 - core index']
  #allocation1 [shape = 'u32[144,128]{1,0:T(1,128)}', space=vmem, size = 0x12000, scoped, tag = 'internal scratch']
  %s0 = inlined_call_operand.vmem [shape: f32[2,4,8,32], index: 0, kind: input, shape index: {}]
  %s1 = inlined_call_operand.vmem [shape: f32[2,4,8,8], index: 1, kind: input, shape index: {}]
  %s2 = inlined_call_operand.vmem [shape: f32[32,128], index: 2, kind: input, shape index: {}]
  %s3 = inlined_call_operand.vmem [shape: f32[1,128], index: 3, kind: input, shape index: {}]
  %s4 = inlined_call_operand.vmem [shape: f32[5], index: 4, kind: input, shape index: {}]
  %s5 = inlined_call_operand.vmem [shape: f32[5], index: 5, kind: input, shape index: {}]
  %s6 = inlined_call_operand.vmem [shape: f32[4,5,2,8,8], index: 6, kind: output, shape index: {}]
  %s7 = sld [smem:[#allocation0]]
  $region141: #{_lambda_.3} parent=0
    _
  %s9 = ssub.s32 1, %s7
  %s10 = scalar_select 0, %s9, %s7
  $region1: #{_lambda_.3} parent=0
    #allocation2 [shape = 'u8[16384]{0}', space=vmem, size = 0x4000, scoped, tag = 'input window, operand 0']
    #allocation3 [shape = 'u8[16384]{0}', space=vmem, size = 0x4000, scoped, tag = 'input window, operand 1']
    #allocation4 [shape = 'u8[512]{0}', space=smem, size = 0x200, scoped, tag = 'input window, operand 4, single buffered']
    #allocation5 [shape = 's32[2]{0}', space=sflag, size = 0x8, scoped, tag = 'scoped memory for _lambda_.3']
    #allocation6 [shape = 'u8[512]{0}', space=smem, size = 0x200, scoped, tag = 'input window, operand 5, single buffered']
    #allocation7 [shape = 's32[1]{0}', space=sflag, size = 0x4, scoped, tag = 'scoped memory for _lambda_.3']
    %11 = vsyncpa [#allocation5], 0
    %12 = vsyncpa [#allocation7], 0
    loop: start=0, step=1, limit=6
    $region2: #{_lambda_.3} parent=1 // loop_pre_header
      _
    $region3: #{_lambda_.3} parent=1 // loop_header
      %s14 = sphi 0, %s18
      %p15 = scmp.ge.s32.totalorder %s14, 6
      %s24 = sphi 0, %s26
      %s27 = sphi 0, %s24
      %s28 = sphi 0, %s27
      %s44 = sphi 0, %s28
      %s50 = sphi 0, %s52
      %s53 = sphi 0, %s50
      %s54 = sphi 0, %s53
      %s70 = sphi 0, %s54
      %s74 = sphi 0, %s74
      %s76 = sphi 0, %s74
      %s77 = sphi 0, %s76
      %s91 = sphi 0, %s77
      %s95 = sphi 0, %s95
      %s97 = sphi 0, %s95
      %s98 = sphi 0, %s97
      %s112 = sphi 0, %s98
      %s116 = sphi 0, %s116
      %s118 = sphi 0, %s116
      %s119 = sphi 0, %s118
      %s133 = sphi 0, %s119
      %s137 = sphi 0, %s137
      %s139 = sphi 0, %s137
      %s140 = sphi 0, %s139
      %s154 = sphi 0, %s140
      %s160 = sphi 0, %s162
      %s163 = sphi 0, %s160
      %s164 = sphi 0, %s163
      %s180 = sphi 0, %s164
    $region4: #{_lambda_.3} parent=1 // loop_header_branch
      %17 = sbr.rel (%p15) target = $region8
    $region5: #{_lambda_.3} parent=1 // loop_body
      %s19 = ssub.s32 %s14, 1
      %s20 = ssub.s32 %s14, 2
      %s21 = sadd.s32 %s14, 1
      %s22 = ssub.s32 %s14, %s21
      %p23 = scmp.eq.s32.totalorder %s22, 0
      %s25 = sadd.s32 %s24, 1
      %s26 = scalar_select %p23, %s24, %s25
      %p29 = pneg %p23
      %p30 = scmp.eq.s32.totalorder %s14, 3
      %p31 = por %p29, %p30
      %p32 = scmp.ne.s32.totalorder %s24, %s27
      %p33 = scmp.eq.s32.totalorder %s14, 0
      %p34 = por %p32, %p33
      %p35 = scmp.ne.s32.totalorder %s24, %s27
      %p36 = scmp.eq.s32.totalorder %s19, 3
      %p37 = por %p35, %p36
      %p38 = scmp.ne.s32.totalorder %s27, %s28
      %p39 = scmp.eq.s32.totalorder %s19, 0
      %p40 = por %p38, %p39
      %p41 = scmp.ne.s32.totalorder %s27, %s28
      %p42 = scmp.eq.s32.totalorder %s20, 3
      %p43 = por %p41, %p42
      %p45 = scmp.ne.s32.totalorder %s28, %s44
      %p46 = scmp.eq.s32.totalorder %s20, 0
      %p47 = por %p45, %p46
      %s48 = ssub.s32 %s14, %s21
      %p49 = scmp.eq.s32.totalorder %s48, 0
      %s51 = sadd.s32 %s50, 1
      %s52 = scalar_select %p49, %s50, %s51
      %p55 = pneg %p49
      %p56 = scmp.eq.s32.totalorder %s14, 3
      %p57 = por %p55, %p56
      %p58 = scmp.ne.s32.totalorder %s50, %s53
      %p59 = scmp.eq.s32.totalorder %s14, 0
      %p60 = por %p58, %p59
      %p61 = scmp.ne.s32.totalorder %s50, %s53
      %p62 = scmp.eq.s32.totalorder %s19, 3
      %p63 = por %p61, %p62
      %p64 = scmp.ne.s32.totalorder %s53, %s54
      %p65 = scmp.eq.s32.totalorder %s19, 0
      %p66 = por %p64, %p65
      %p67 = scmp.ne.s32.totalorder %s53, %s54
      %p68 = scmp.eq.s32.totalorder %s20, 3
      %p69 = por %p67, %p68
      %p71 = scmp.ne.s32.totalorder %s54, %s70
      %p72 = scmp.eq.s32.totalorder %s20, 0
      %p73 = por %p71, %p72
      %s75 = sadd.s32 %s74, 1
      %p78 = scmp.eq.s32.totalorder %s14, 3
      %p79 = scmp.ne.s32.totalorder %s74, %s76
      %p80 = scmp.eq.s32.totalorder %s14, 0
      %p81 = por %p79, %p80
      %p82 = scmp.ne.s32.totalorder %s74, %s76
      %p83 = scmp.eq.s32.totalorder %s19, 3
      %p84 = por %p82, %p83
      %p85 = scmp.ne.s32.totalorder %s76, %s77
      %p86 = scmp.eq.s32.totalorder %s19, 0
      %p87 = por %p85, %p86
      %p88 = scmp.ne.s32.totalorder %s76, %s77
      %p89 = scmp.eq.s32.totalorder %s20, 3
      %p90 = por %p88, %p89
      %p92 = scmp.ne.s32.totalorder %s77, %s91
      %p93 = scmp.eq.s32.totalorder %s20, 0
      %p94 = por %p92, %p93
      %s96 = sadd.s32 %s95, 1
      %p99 = scmp.eq.s32.totalorder %s14, 3
      %p100 = scmp.ne.s32.totalorder %s95, %s97
      %p101 = scmp.eq.s32.totalorder %s14, 0
      %p102 = por %p100, %p101
      %p103 = scmp.ne.s32.totalorder %s95, %s97
      %p104 = scmp.eq.s32.totalorder %s19, 3
      %p105 = por %p103, %p104
      %p106 = scmp.ne.s32.totalorder %s97, %s98
      %p107 = scmp.eq.s32.totalorder %s19, 0
      %p108 = por %p106, %p107
      %p109 = scmp.ne.s32.totalorder %s97, %s98
      %p110 = scmp.eq.s32.totalorder %s20, 3
      %p111 = por %p109, %p110
      %p113 = scmp.ne.s32.totalorder %s98, %s112
      %p114 = scmp.eq.s32.totalorder %s20, 0
      %p115 = por %p113, %p114
      %s117 = sadd.s32 %s116, 1
      %p120 = scmp.eq.s32.totalorder %s14, 3
      %p121 = scmp.ne.s32.totalorder %s116, %s118
      %p122 = scmp.eq.s32.totalorder %s14, 0
      %p123 = por %p121, %p122
      %p124 = scmp.ne.s32.totalorder %s116, %s118
      %p125 = scmp.eq.s32.totalorder %s19, 3
      %p126 = por %p124, %p125
      %p127 = scmp.ne.s32.totalorder %s118, %s119
      %p128 = scmp.eq.s32.totalorder %s19, 0
      %p129 = por %p127, %p128
      %p130 = scmp.ne.s32.totalorder %s118, %s119
      %p131 = scmp.eq.s32.totalorder %s20, 3
      %p132 = por %p130, %p131
      %p134 = scmp.ne.s32.totalorder %s119, %s133
      %p135 = scmp.eq.s32.totalorder %s20, 0
      %p136 = por %p134, %p135
      %s138 = sadd.s32 %s137, 1
      %p141 = scmp.eq.s32.totalorder %s14, 3
      %p142 = scmp.ne.s32.totalorder %s137, %s139
      %p143 = scmp.eq.s32.totalorder %s14, 0
      %p144 = por %p142, %p143
      %p145 = scmp.ne.s32.totalorder %s137, %s139
      %p146 = scmp.eq.s32.totalorder %s19, 3
      %p147 = por %p145, %p146
      %p148 = scmp.ne.s32.totalorder %s139, %s140
      %p149 = scmp.eq.s32.totalorder %s19, 0
      %p150 = por %p148, %p149
      %p151 = scmp.ne.s32.totalorder %s139, %s140
      %p152 = scmp.eq.s32.totalorder %s20, 3
      %p153 = por %p151, %p152
      %p155 = scmp.ne.s32.totalorder %s140, %s154
      %p156 = scmp.eq.s32.totalorder %s20, 0
      %p157 = por %p155, %p156
      %s158 = ssub.s32 %s14, %s21
      %p159 = scmp.eq.s32.totalorder %s158, 0
      %s161 = sadd.s32 %s160, 1
      %s162 = scalar_select %p159, %s160, %s161
      %p165 = pneg %p159
      %p166 = scmp.eq.s32.totalorder %s14, 3
      %p167 = por %p165, %p166
      %p168 = scmp.ne.s32.totalorder %s160, %s163
      %p169 = scmp.eq.s32.totalorder %s14, 0
      %p170 = por %p168, %p169
      %p171 = scmp.ne.s32.totalorder %s160, %s163
      %p172 = scmp.eq.s32.totalorder %s19, 3
      %p173 = por %p171, %p172
      %p174 = scmp.ne.s32.totalorder %s163, %s164
      %p175 = scmp.eq.s32.totalorder %s19, 0
      %p176 = por %p174, %p175
      %p177 = scmp.ne.s32.totalorder %s163, %s164
      %p178 = scmp.eq.s32.totalorder %s20, 3
      %p179 = por %p177, %p178
      %p181 = scmp.ne.s32.totalorder %s164, %s180
      %p182 = scmp.eq.s32.totalorder %s20, 0
      %p183 = por %p181, %p182
      %p184 = scmp.le.s32.totalorder 1, %s14
      %p185 = scmp.lt.s32.totalorder %s14, 5
      %p186 = pnand %p184, %p185
      %p187 = pneg %p186
      // Predicated region
      $region9: #{_lambda_.3} parent=5 // pred_check
        _
      $region10: #{_lambda_.3} parent=5 // pred_check_branch
        %189 = sbr.rel (%p186) target = $region12
      $region11: #{_lambda_.3} parent=5 // pred_region
        %s190 = ssub.s32 %s14, 1
        // Predicated region
        $region13: #{_lambda_.3} parent=11 // pred_check
          %p191 = pneg %p87
        $region14: #{_lambda_.3} parent=11 // pred_check_branch
          %193 = sbr.rel (%p191) target = $region16
        $region15: #{_lambda_.3} parent=11 // pred_region
          _
        $region16: #{_lambda_.3} parent=11 // pred_fallthru
          _
        // Predicated region
        $region17: #{_lambda_.3} parent=11 // pred_check
          %p194 = pneg %p108
        $region18: #{_lambda_.3} parent=11 // pred_check_branch
          %196 = sbr.rel (%p194) target = $region20
        $region19: #{_lambda_.3} parent=11 // pred_region
          _
        $region20: #{_lambda_.3} parent=11 // pred_fallthru
          _
        // Predicated region
        $region21: #{_lambda_.3} parent=11 // pred_check
          %p197 = pneg %p129
        $region22: #{_lambda_.3} parent=11 // pred_check_branch
          %199 = sbr.rel (%p197) target = $region24
        $region23: #{_lambda_.3} parent=11 // pred_region
          %s201 = ssub.s32 16, 16
          %202 = vsyncadd [#allocation5], %s201
          %s204 = sshll.u32 %s4, 4
          %s205 = int_to_ptr.vmem [resolvable:$true] %s204
          %207 = dma.vmem_to_smem %s205, 16, [#allocation4], [#allocation5]
        $region24: #{_lambda_.3} parent=11 // pred_fallthru
          _
        // Predicated region
        $region25: #{_lambda_.3} parent=11 // pred_check
          %p208 = pneg %p150
        $region26: #{_lambda_.3} parent=11 // pred_check_branch
          %210 = sbr.rel (%p208) target = $region28
        $region27: #{_lambda_.3} parent=11 // pred_region
          %s212 = ssub.s32 16, 16
          %213 = vsyncadd [#allocation7], %s212
          %s215 = sshll.u32 %s5, 4
          %s216 = int_to_ptr.vmem [resolvable:$true] %s215
          %218 = dma.vmem_to_smem %s216, 16, [#allocation6], [#allocation7]
        $region28: #{_lambda_.3} parent=11 // pred_fallthru
          _
      $region12: #{_lambda_.3} parent=5 // pred_fallthru
        _
      %p219 = scmp.lt.s32.totalorder %s14, 4
      // Predicated region
      $region29: #{_lambda_.3} parent=5 // pred_check
        %p220 = pneg %p219
      $region30: #{_lambda_.3} parent=5 // pred_check_branch
        %222 = sbr.rel (%p220) target = $region32
      $region31: #{_lambda_.3} parent=5 // pred_region
        // Predicated region
        $region33: #{_lambda_.3} parent=31 // pred_check
          %p223 = pneg %p34
        $region34: #{_lambda_.3} parent=31 // pred_check_branch
          %225 = sbr.rel (%p223) target = $region36
        $region35: #{_lambda_.3} parent=31 // pred_region
          %s226 = sand.u32 %s24, 1
          %s227 = sand.u32 %s24, 1
          %s228 = smul.addr %s227, 16
          %s229 = scalar_lea.vmem [#allocation2], %s228
          %s230 = smul.addr %s14, 8
          %s231 = scalar_lea.vmem %s0, %s230
          // Predicated region
          $region37: #{_lambda_.3} parent=35 // pred_check
            _
          $region38: #{_lambda_.3} parent=35 // pred_check_branch
            %233 = sbr.rel (0) target = $region40
          $region39: #{_lambda_.3} parent=35 // pred_region
            // Predicated region
            $region41: #{_lambda_.3} parent=39 // pred_check
              _
            $region42: #{_lambda_.3} parent=39 // pred_check_branch
              %235 = sbr.rel (0) target = $region44
            $region43: #{_lambda_.3} parent=39 // pred_region
              // Predicated region
              $region56: #{_lambda_.3} parent=43 // pred_check
                _
              $region57: #{_lambda_.3} parent=43 // pred_check_branch
                %252 = sbr.rel (0) target = $region59
              $region58: #{_lambda_.3} parent=43 // pred_region
                loop: start=0, step=1, limit=1
                $region60: #{_lambda_.3} parent=58 // loop_pre_header
                  _
                $region61: #{_lambda_.3} parent=58 // loop_header
                  %s254 = sphi 0, %s258
                  %p255 = scmp.ge.s32.totalorder %s254, 1
                  %s259 = sphi %s231, %s231
                  %s260 = sphi %s229, %s229
                $region62: #{_lambda_.3} parent=58 // loop_header_branch
                  %257 = sbr.rel (%p255) target = $region66
                $region63: #{_lambda_.3} parent=58 // loop_body
                  %v261 = vld [vmem:[%s259] sm:$0xff]
                  %262 = vst [vmem:[%s260] sm:$0xff] %v261
                  %v263 = vld [vmem:[%s259 + $0x20] sm:$0xff]
                  %264 = vst [vmem:[%s260 + $0x8] sm:$0xff] %v263
                $region64: #{_lambda_.3} parent=58 // loop_footer
                  %s258 = sadd.s32 1, %s254
                $region65: #{_lambda_.3} parent=58 // loop_footer_branch
                  %253 = sbr.rel target = $region61
                $region66: #{_lambda_.3} parent=58 // loop_exit
                  _
              $region59: #{_lambda_.3} parent=43 // pred_fallthru
                _
              // Predicated region
              $region67: #{_lambda_.3} parent=43 // pred_check
                _
              $region68: #{_lambda_.3} parent=43 // pred_check_branch
                %266 = sbr.rel target = $region70
              $region69: #{_lambda_.3} parent=43 // pred_region
                _
              $region70: #{_lambda_.3} parent=43 // pred_fallthru
                _
            $region44: #{_lambda_.3} parent=39 // pred_fallthru
              _
            // Predicated region
            $region45: #{_lambda_.3} parent=39 // pred_check
              _
            $region46: #{_lambda_.3} parent=39 // pred_check_branch
              %237 = sbr.rel target = $region48
            $region47: #{_lambda_.3} parent=39 // pred_region
              loop: start=0, step=1, limit=1
              $region49: #{_lambda_.3} parent=47 // loop_pre_header
                _
              $region50: #{_lambda_.3} parent=47 // loop_header
                %s240 = sphi 0, %s244
                %p241 = scmp.ge.s32.totalorder %s240, 1
                %s245 = sphi %s231, %s231
                %s246 = sphi %s229, %s229
              $region51: #{_lambda_.3} parent=47 // loop_header_branch
                %243 = sbr.rel (%p241) target = $region55
              $region52: #{_lambda_.3} parent=47 // loop_body
                %v247 = vld [vmem:[%s245] sm:$0xff]
                %248 = vst [vmem:[%s246] sm:$0xff] %v247
                %v249 = vld [vmem:[%s245 + $0x20] sm:$0xff]
                %250 = vst [vmem:[%s246 + $0x8] sm:$0xff] %v249
              $region53: #{_lambda_.3} parent=47 // loop_footer
                %s244 = sadd.s32 1, %s240
              $region54: #{_lambda_.3} parent=47 // loop_footer_branch
                %239 = sbr.rel target = $region50
              $region55: #{_lambda_.3} parent=47 // loop_exit
                _
            $region48: #{_lambda_.3} parent=39 // pred_fallthru
              _
          $region40: #{_lambda_.3} parent=35 // pred_fallthru
            _
          %267 = vnop
        $region36: #{_lambda_.3} parent=31 // pred_fallthru
          _
        // Predicated region
        $region71: #{_lambda_.3} parent=31 // pred_check
          %p268 = pneg %p60
        $region72: #{_lambda_.3} parent=31 // pred_check_branch
          %270 = sbr.rel (%p268) target = $region74
        $region73: #{_lambda_.3} parent=31 // pred_region
          %s271 = sand.u32 %s50, 1
          %s272 = sand.u32 %s50, 1
          %s273 = smul.addr %s272, 16
          %s274 = scalar_lea.vmem [#allocation3], %s273
          %s275 = smul.addr %s14, 8
          %s276 = scalar_lea.vmem %s1, %s275
          // Predicated region
          $region75: #{_lambda_.3} parent=73 // pred_check
            _
          $region76: #{_lambda_.3} parent=73 // pred_check_branch
            %278 = sbr.rel (0) target = $region78
          $region77: #{_lambda_.3} parent=73 // pred_region
            // Predicated region
            $region79: #{_lambda_.3} parent=77 // pred_check
              _
            $region80: #{_lambda_.3} parent=77 // pred_check_branch
              %280 = sbr.rel (0) target = $region82
            $region81: #{_lambda_.3} parent=77 // pred_region
              // Predicated region
              $region94: #{_lambda_.3} parent=81 // pred_check
                _
              $region95: #{_lambda_.3} parent=81 // pred_check_branch
                %297 = sbr.rel (0) target = $region97
              $region96: #{_lambda_.3} parent=81 // pred_region
                loop: start=0, step=1, limit=1
                $region98: #{_lambda_.3} parent=96 // loop_pre_header
                  _
                $region99: #{_lambda_.3} parent=96 // loop_header
                  %s299 = sphi 0, %s303
                  %p300 = scmp.ge.s32.totalorder %s299, 1
                  %s304 = sphi %s276, %s276
                  %s305 = sphi %s274, %s274
                $region100: #{_lambda_.3} parent=96 // loop_header_branch
                  %302 = sbr.rel (%p300) target = $region104
                $region101: #{_lambda_.3} parent=96 // loop_body
                  %v306 = vld [vmem:[%s304] sm:$0xff]
                  %307 = vst [vmem:[%s305] sm:$0xff] %v306
                  %v308 = vld [vmem:[%s304 + $0x20] sm:$0xff]
                  %309 = vst [vmem:[%s305 + $0x8] sm:$0xff] %v308
                $region102: #{_lambda_.3} parent=96 // loop_footer
                  %s303 = sadd.s32 1, %s299
                $region103: #{_lambda_.3} parent=96 // loop_footer_branch
                  %298 = sbr.rel target = $region99
                $region104: #{_lambda_.3} parent=96 // loop_exit
                  _
              $region97: #{_lambda_.3} parent=81 // pred_fallthru
                _
              // Predicated region
              $region105: #{_lambda_.3} parent=81 // pred_check
                _
              $region106: #{_lambda_.3} parent=81 // pred_check_branch
                %311 = sbr.rel target = $region108
              $region107: #{_lambda_.3} parent=81 // pred_region
                _
              $region108: #{_lambda_.3} parent=81 // pred_fallthru
                _
            $region82: #{_lambda_.3} parent=77 // pred_fallthru
              _
            // Predicated region
            $region83: #{_lambda_.3} parent=77 // pred_check
              _
            $region84: #{_lambda_.3} parent=77 // pred_check_branch
              %282 = sbr.rel target = $region86
            $region85: #{_lambda_.3} parent=77 // pred_region
              loop: start=0, step=1, limit=1
              $region87: #{_lambda_.3} parent=85 // loop_pre_header
                _
              $region88: #{_lambda_.3} parent=85 // loop_header
                %s285 = sphi 0, %s289
                %p286 = scmp.ge.s32.totalorder %s285, 1
                %s290 = sphi %s276, %s276
                %s291 = sphi %s274, %s274
              $region89: #{_lambda_.3} parent=85 // loop_header_branch
                %288 = sbr.rel (%p286) target = $region93
              $region90: #{_lambda_.3} parent=85 // loop_body
                %v292 = vld [vmem:[%s290] sm:$0xff]
                %293 = vst [vmem:[%s291] sm:$0xff] %v292
                %v294 = vld [vmem:[%s290 + $0x20] sm:$0xff]
                %295 = vst [vmem:[%s291 + $0x8] sm:$0xff] %v294
              $region91: #{_lambda_.3} parent=85 // loop_footer
                %s289 = sadd.s32 1, %s285
              $region92: #{_lambda_.3} parent=85 // loop_footer_branch
                %284 = sbr.rel target = $region88
              $region93: #{_lambda_.3} parent=85 // loop_exit
                _
            $region86: #{_lambda_.3} parent=77 // pred_fallthru
              _
          $region78: #{_lambda_.3} parent=73 // pred_fallthru
            _
          %312 = vnop
        $region74: #{_lambda_.3} parent=31 // pred_fallthru
          _
      $region32: #{_lambda_.3} parent=5 // pred_fallthru
        _
      %p313 = scmp.le.s32.totalorder 1, %s14
      %p314 = scmp.lt.s32.totalorder %s14, 5
      %p315 = pnand %p313, %p314
      %p316 = pneg %p315
      // Predicated region
      $region109: #{_lambda_.3} parent=5 // pred_check
        _
      $region110: #{_lambda_.3} parent=5 // pred_check_branch
        %318 = sbr.rel (%p315) target = $region112
      $region111: #{_lambda_.3} parent=5 // pred_region
        %s319 = ssub.s32 %s14, 1
        %s320 = sand.u32 %s27, 1
        %s321 = sand.u32 %s27, 1
        %s322 = smul.addr %s321, 16
        %s323 = scalar_lea.vmem [#allocation2], %s322
        // Predicated region
        $region113: #{_lambda_.3} parent=111 // pred_check
          %p324 = pneg %p40
        $region114: #{_lambda_.3} parent=111 // pred_check_branch
          %326 = sbr.rel (%p324) target = $region116
        $region115: #{_lambda_.3} parent=111 // pred_region
          _
        $region116: #{_lambda_.3} parent=111 // pred_fallthru
          _
        %s327 = sand.u32 %s53, 1
        %s328 = sand.u32 %s53, 1
        %s329 = smul.addr %s328, 16
        %s330 = scalar_lea.vmem [#allocation3], %s329
        // Predicated region
        $region117: #{_lambda_.3} parent=111 // pred_check
          %p331 = pneg %p66
        $region118: #{_lambda_.3} parent=111 // pred_check_branch
          %333 = sbr.rel (%p331) target = $region120
        $region119: #{_lambda_.3} parent=111 // pred_region
          _
        $region120: #{_lambda_.3} parent=111 // pred_fallthru
          _
        // Predicated region
        $region121: #{_lambda_.3} parent=111 // pred_check
          %p334 = pneg %p129
        $region122: #{_lambda_.3} parent=111 // pred_check_branch
          %336 = sbr.rel (%p334) target = $region124
        $region123: #{_lambda_.3} parent=111 // pred_region
          %337 = dma.done [#allocation5], 16
        $region124: #{_lambda_.3} parent=111 // pred_fallthru
          _
        // Predicated region
        $region125: #{_lambda_.3} parent=111 // pred_check
          %p338 = pneg %p150
        $region126: #{_lambda_.3} parent=111 // pred_check_branch
          %340 = sbr.rel (%p338) target = $region128
        $region127: #{_lambda_.3} parent=111 // pred_region
          %341 = dma.done [#allocation7], 16
        $region128: #{_lambda_.3} parent=111 // pred_fallthru
          _
        %342 = sfence
        %s343 = sand.u32 %s27, 1
        %s344 = sand.u32 %s27, 1
        %s345 = smul.addr %s344, 16
        %s346 = scalar_lea.vmem [#allocation2], %s345
        %p347 = pneg %p40
        %p348 = pneg %p37
        %s349 = sand.u32 %s53, 1
        %s350 = sand.u32 %s53, 1
        %s351 = smul.addr %s350, 16
        %s352 = scalar_lea.vmem [#allocation3], %s351
        %p353 = pneg %p66
        %p354 = pneg %p63
        %p355 = pneg %p87
        %p356 = pneg %p84
        %p357 = pneg %p108
        %p358 = pneg %p105
        %p359 = pneg %p129
        %p360 = pneg %p126
        %p361 = pneg %p150
        %p362 = pneg %p147
        %p363 = pneg %p176
        %p364 = pneg %p173
        %p365 = scmp.lt.s32.totalorder %s19, 3
        %s366 = scalar_select %p365, %s19, 3
        %s367 = smul.addr %s366, 10
        %s368 = smul.addr %s367, 8
        %s369 = scalar_lea.vmem %s6, %s368
        %p370 = scmp.lt.s32.totalorder %s19, 3
        %s371 = scalar_select %p370, %s19, 3
        %s372 = smul.addr %s371, 10
        %s373 = smul.addr %s372, 8
        %s374 = scalar_lea.vmem %s6, %s373
        %v375 = vld [vmem:[%s323] sm:$0xff]
        %v376 = vld [vmem:[%s323 + $0x8] sm:$0xff]
        %v377 = vld [vmem:[%s2] sm:$0xff]
        %v378 = vld [vmem:[%s2 + $0x8] sm:$0xff]
        %v379 = vld [vmem:[%s2 + $0x10] sm:$0xff]
        %v380 = vld [vmem:[%s2 + $0x18] sm:$0xff]
        %v381 = vld [vmem:[%s3] sm:$0x1]
        %v383 = vlaneseq
        %v384 = vshrl.u32 %v383, 7
        %v385 = vsub.s32 0, %v384
        %v386 = vrot.slane %v381, %v385
        %vm388 = vcmask 261120
        %v390 = vsel %vm388, %v375, 0
        %v393 = vsel %vm388, %v376, 0
        %395 = vmatprep.subr.mxu0 0.0
        %396 = vmatpush1.msra.mxu0 %v377
        %397 = vmatprep.subr.mxu0 0.0
        %398 = vmatpush1.msra.mxu0 %v378
        %399 = vmatprep.subr.mxu0 0.0
        %400 = vmatpush1.msra.mxu0 %v379
        %401 = vmatprep.subr.mxu0 0.0
        %402 = vmatpush1.msra.mxu0 %v380
        %403 = vmatprep.subr.mxu0 0.0
        %404 = vmatpush1.msra.mxu0 0.0
        %405 = vmatprep.subr.mxu0 0.0
        %406 = vmatpush1.msra.mxu0 0.0
        %407 = vmatprep.subr.mxu0 0.0
        %408 = vmatpush1.msra.mxu0 0.0
        %409 = vmatprep.subr.mxu0 0.0
        %410 = vmatpush1.msra.mxu0 0.0
        %411 = vmatprep.subr.mxu0 0.0
        %412 = vmatpush1.msra.mxu0 0.0
        %413 = vmatprep.subr.mxu0 0.0
        %414 = vmatpush1.msra.mxu0 0.0
        %415 = vmatprep.subr.mxu0 0.0
        %416 = vmatpush1.msra.mxu0 0.0
        %417 = vmatprep.subr.mxu0 0.0
        %418 = vmatpush1.msra.mxu0 0.0
        %419 = vmatprep.subr.mxu0 0.0
        %420 = vmatpush1.msra.mxu0 0.0
        %421 = vmatprep.subr.mxu0 0.0
        %422 = vmatpush1.msra.mxu0 0.0
        %423 = vmatprep.subr.mxu0 0.0
        %424 = vmatpush1.msra.mxu0 0.0
        %425 = vmatprep.subr.mxu0 0.0
        %426 = vmatpush1.msra.mxu0 0.0
        %427 = vmatprep.subr.mxu0 0.0
        %428 = vmatpush1.msra.mxu0 0.0
        %429 = vmatprep.subr.mxu0 0.0
        %430 = vmatpush1.msra.mxu0 0.0
        %431 = vmatprep.subr.mxu0 0.0
        %432 = vmatpush1.msra.mxu0 0.0
        %433 = vmatprep.subr.mxu0 0.0
        %434 = vmatpush1.msra.mxu0 0.0
        %435 = vmatprep.subr.mxu0 0.0
        %436 = vmatpush1.msra.mxu0 0.0
        %437 = vmatprep.subr.mxu0 0.0
        %438 = vmatpush1.msra.mxu0 0.0
        %439 = vmatprep.subr.mxu0 0.0
        %440 = vmatpush1.msra.mxu0 0.0
        %441 = vmatprep.subr.mxu0 0.0
        %442 = vmatpush1.msra.mxu0 0.0
        %443 = vmatprep.subr.mxu0 0.0
        %444 = vmatpush1.msra.mxu0 0.0
        %445 = vmatprep.subr.mxu0 0.0
        %446 = vmatpush1.msra.mxu0 0.0
        %447 = vmatprep.subr.mxu0 0.0
        %448 = vmatpush1.msra.mxu0 0.0
        %449 = vmatprep.subr.mxu0 0.0
        %450 = vmatpush1.msra.mxu0 0.0
        %451 = vmatprep.subr.mxu0 0.0
        %452 = vmatpush1.msra.mxu0 0.0
        %453 = vmatprep.subr.mxu0 0.0
        %454 = vmatpush1.msra.mxu0 0.0
        %455 = vmatprep.subr.mxu0 0.0
        %456 = vmatpush1.msra.mxu0 0.0
        %457 = vmatprep.subr.mxu0 0.0
        %458 = vmatpush1.msra.mxu0 0.0
        %459 = vmatprep.mubr.f32.mxu0 0.0
        %460 = vmatmul.mubr.f32.gmra.mrb[0].mxu0 %v390
        %v461 = vpop.f32.mrb[0].mxu0
        %v462 = vadd.f32 %v386, %v461
        %v463 = vpop.f32.mrb[0].mxu0
        %464 = vmatprep.mubr.f32.mxu0 0.0
        %465 = vmatmul.mubr.f32.gmra.mrb[0].mxu0 %v393
        %v466 = vpop.f32.mrb[0].mxu0
        %v467 = vadd.f32 %v386, %v466
        %v468 = vpop.f32.mrb[0].mxu0
        %469 = vdwg.mxu0
        %v471 = vsel %vm388, %v462, 0
        %473 = vmatprep.subr.mxu0 0.0
        %474 = vmatpush1.xpose.msra.mxu0 %v471
        %475 = vmatprep.subr.mxu0 0.0
        %476 = vmatpush1.xpose.msra.mxu0 0.0
        %477 = vmatprep.subr.mxu0 0.0
        %478 = vmatpush1.xpose.msra.mxu0 0.0
        %479 = vmatprep.subr.mxu0 0.0
        %480 = vmatpush1.xpose.msra.mxu0 0.0
        %481 = vmatprep.subr.mxu0 0.0
        %482 = vmatpush1.xpose.msra.mxu0 0.0
        %483 = vmatprep.subr.mxu0 0.0
        %484 = vmatpush1.xpose.msra.mxu0 0.0
        %485 = vmatprep.subr.mxu0 0.0
        %486 = vmatpush1.xpose.msra.mxu0 0.0
        %487 = vmatprep.subr.mxu0 0.0
        %488 = vmatpush1.xpose.msra.mxu0 0.0
        %489 = vmatprep.subr.mxu0 0.0
        %490 = vmatpush1.xpose.msra.mxu0 0.0
        %491 = vmatprep.subr.mxu0 0.0
        %492 = vmatpush1.xpose.msra.mxu0 0.0
        %493 = vmatprep.subr.mxu0 0.0
        %494 = vmatpush1.xpose.msra.mxu0 0.0
        %495 = vmatprep.subr.mxu0 0.0
        %496 = vmatpush1.xpose.msra.mxu0 0.0
        %497 = vmatprep.subr.mxu0 0.0
        %498 = vmatpush1.xpose.msra.mxu0 0.0
        %499 = vmatprep.subr.mxu0 0.0
        %500 = vmatpush1.xpose.msra.mxu0 0.0
        %501 = vmatprep.subr.mxu0 0.0
        %502 = vmatpush1.xpose.msra.mxu0 0.0
        %503 = vmatprep.subr.mxu0 0.0
        %504 = vmatpush1.xpose.msra.mxu0 0.0
        %505 = vmatprep.subr.mxu0 0.0
        %506 = vmatpush1.xpose.msra.mxu0 0.0
        %507 = vmatprep.subr.mxu0 0.0
        %508 = vmatpush1.xpose.msra.mxu0 0.0
        %509 = vmatprep.subr.mxu0 0.0
        %510 = vmatpush1.xpose.msra.mxu0 0.0
        %511 = vmatprep.subr.mxu0 0.0
        %512 = vmatpush1.xpose.msra.mxu0 0.0
        %513 = vmatprep.subr.mxu0 0.0
        %514 = vmatpush1.xpose.msra.mxu0 0.0
        %515 = vmatprep.subr.mxu0 0.0
        %516 = vmatpush1.xpose.msra.mxu0 0.0
        %517 = vmatprep.subr.mxu0 0.0
        %518 = vmatpush1.xpose.msra.mxu0 0.0
        %519 = vmatprep.subr.mxu0 0.0
        %520 = vmatpush1.xpose.msra.mxu0 0.0
        %521 = vmatprep.subr.mxu0 0.0
        %522 = vmatpush1.xpose.msra.mxu0 0.0
        %523 = vmatprep.subr.mxu0 0.0
        %524 = vmatpush1.xpose.msra.mxu0 0.0
        %525 = vmatprep.subr.mxu0 0.0
        %526 = vmatpush1.xpose.msra.mxu0 0.0
        %527 = vmatprep.subr.mxu0 0.0
        %528 = vmatpush1.xpose.msra.mxu0 0.0
        %529 = vmatprep.subr.mxu0 0.0
        %530 = vmatpush1.xpose.msra.mxu0 0.0
        %531 = vmatprep.subr.mxu0 0.0
        %532 = vmatpush1.xpose.msra.mxu0 0.0
        %533 = vmatprep.subr.mxu0 0.0
        %534 = vmatpush1.xpose.msra.mxu0 0.0
        %535 = vmatprep.subr.mxu0 0.0
        %536 = vmatpush1.xpose.msra.mxu0 0.0
        %537 = vmatprep.mubr.f32.mxu0 0.0
        %538 = vmatmul.mubr.f32.gmra.mrb[0].mxu0 %v471
        %v539 = vpop.f32.mrb[0].mxu0
        %v540 = vadd.f32 0.0, %v539
        %v541 = vpop.f32.mrb[0].mxu0
        %542 = vdwg.mxu0
        %v544 = vsel %vm388, %v467, 0
        %546 = vmatprep.subr.mxu0 0.0
        %547 = vmatpush1.xpose.msra.mxu0 %v544
        %548 = vmatprep.subr.mxu0 0.0
        %549 = vmatpush1.xpose.msra.mxu0 0.0
        %550 = vmatprep.subr.mxu0 0.0
        %551 = vmatpush1.xpose.msra.mxu0 0.0
        %552 = vmatprep.subr.mxu0 0.0
        %553 = vmatpush1.xpose.msra.mxu0 0.0
        %554 = vmatprep.subr.mxu0 0.0
        %555 = vmatpush1.xpose.msra.mxu0 0.0
        %556 = vmatprep.subr.mxu0 0.0
        %557 = vmatpush1.xpose.msra.mxu0 0.0
        %558 = vmatprep.subr.mxu0 0.0
        %559 = vmatpush1.xpose.msra.mxu0 0.0
        %560 = vmatprep.subr.mxu0 0.0
        %561 = vmatpush1.xpose.msra.mxu0 0.0
        %562 = vmatprep.subr.mxu0 0.0
        %563 = vmatpush1.xpose.msra.mxu0 0.0
        %564 = vmatprep.subr.mxu0 0.0
        %565 = vmatpush1.xpose.msra.mxu0 0.0
        %566 = vmatprep.subr.mxu0 0.0
        %567 = vmatpush1.xpose.msra.mxu0 0.0
        %568 = vmatprep.subr.mxu0 0.0
        %569 = vmatpush1.xpose.msra.mxu0 0.0
        %570 = vmatprep.subr.mxu0 0.0
        %571 = vmatpush1.xpose.msra.mxu0 0.0
        %572 = vmatprep.subr.mxu0 0.0
        %573 = vmatpush1.xpose.msra.mxu0 0.0
        %574 = vmatprep.subr.mxu0 0.0
        %575 = vmatpush1.xpose.msra.mxu0 0.0
        %576 = vmatprep.subr.mxu0 0.0
        %577 = vmatpush1.xpose.msra.mxu0 0.0
        %578 = vmatprep.subr.mxu0 0.0
        %579 = vmatpush1.xpose.msra.mxu0 0.0
        %580 = vmatprep.subr.mxu0 0.0
        %581 = vmatpush1.xpose.msra.mxu0 0.0
        %582 = vmatprep.subr.mxu0 0.0
        %583 = vmatpush1.xpose.msra.mxu0 0.0
        %584 = vmatprep.subr.mxu0 0.0
        %585 = vmatpush1.xpose.msra.mxu0 0.0
        %586 = vmatprep.subr.mxu0 0.0
        %587 = vmatpush1.xpose.msra.mxu0 0.0
        %588 = vmatprep.subr.mxu0 0.0
        %589 = vmatpush1.xpose.msra.mxu0 0.0
        %590 = vmatprep.subr.mxu0 0.0
        %591 = vmatpush1.xpose.msra.mxu0 0.0
        %592 = vmatprep.subr.mxu0 0.0
        %593 = vmatpush1.xpose.msra.mxu0 0.0
        %594 = vmatprep.subr.mxu0 0.0
        %595 = vmatpush1.xpose.msra.mxu0 0.0
        %596 = vmatprep.subr.mxu0 0.0
        %597 = vmatpush1.xpose.msra.mxu0 0.0
        %598 = vmatprep.subr.mxu0 0.0
        %599 = vmatpush1.xpose.msra.mxu0 0.0
        %600 = vmatprep.subr.mxu0 0.0
        %601 = vmatpush1.xpose.msra.mxu0 0.0
        %602 = vmatprep.subr.mxu0 0.0
        %603 = vmatpush1.xpose.msra.mxu0 0.0
        %604 = vmatprep.subr.mxu0 0.0
        %605 = vmatpush1.xpose.msra.mxu0 0.0
        %606 = vmatprep.subr.mxu0 0.0
        %607 = vmatpush1.xpose.msra.mxu0 0.0
        %608 = vmatprep.subr.mxu0 0.0
        %609 = vmatpush1.xpose.msra.mxu0 0.0
        %610 = vmatprep.mubr.f32.mxu0 0.0
        %611 = vmatmul.mubr.f32.gmra.mrb[0].mxu0 %v544
        %v612 = vpop.f32.mrb[0].mxu0
        %v613 = vadd.f32 0.0, %v612
        %v614 = vpop.f32.mrb[0].mxu0
        %615 = vdwg.mxu0
        %v616 = vmul.f32 %v540, 0.17677669
        %v617 = vmul.f32 %v613, 0.17677669
        %618 = vrot.lane.b32.xlu0 %v462, 96
        %v619 = vpop.permute.xlu0 %618
        %v620 = vsel %vm388, %v619, 0
        %622 = vmatprep.subr.mxu0 0.0
        %623 = vmatpush1.xpose.msra.mxu0 %v620
        %624 = vmatprep.subr.mxu0 0.0
        %625 = vmatpush1.xpose.msra.mxu0 0.0
        %626 = vmatprep.subr.mxu0 0.0
        %627 = vmatpush1.xpose.msra.mxu0 0.0
        %628 = vmatprep.subr.mxu0 0.0
        %629 = vmatpush1.xpose.msra.mxu0 0.0
        %630 = vmatprep.subr.mxu0 0.0
        %631 = vmatpush1.xpose.msra.mxu0 0.0
        %632 = vmatprep.subr.mxu0 0.0
        %633 = vmatpush1.xpose.msra.mxu0 0.0
        %634 = vmatprep.subr.mxu0 0.0
        %635 = vmatpush1.xpose.msra.mxu0 0.0
        %636 = vmatprep.subr.mxu0 0.0
        %637 = vmatpush1.xpose.msra.mxu0 0.0
        %638 = vmatprep.subr.mxu0 0.0
        %639 = vmatpush1.xpose.msra.mxu0 0.0
        %640 = vmatprep.subr.mxu0 0.0
        %641 = vmatpush1.xpose.msra.mxu0 0.0
        %642 = vmatprep.subr.mxu0 0.0
        %643 = vmatpush1.xpose.msra.mxu0 0.0
        %644 = vmatprep.subr.mxu0 0.0
        %645 = vmatpush1.xpose.msra.mxu0 0.0
        %646 = vmatprep.subr.mxu0 0.0
        %647 = vmatpush1.xpose.msra.mxu0 0.0
        %648 = vmatprep.subr.mxu0 0.0
        %649 = vmatpush1.xpose.msra.mxu0 0.0
        %650 = vmatprep.subr.mxu0 0.0
        %651 = vmatpush1.xpose.msra.mxu0 0.0
        %652 = vmatprep.subr.mxu0 0.0
        %653 = vmatpush1.xpose.msra.mxu0 0.0
        %654 = vmatprep.subr.mxu0 0.0
        %655 = vmatpush1.xpose.msra.mxu0 0.0
        %656 = vmatprep.subr.mxu0 0.0
        %657 = vmatpush1.xpose.msra.mxu0 0.0
        %658 = vmatprep.subr.mxu0 0.0
        %659 = vmatpush1.xpose.msra.mxu0 0.0
        %660 = vmatprep.subr.mxu0 0.0
        %661 = vmatpush1.xpose.msra.mxu0 0.0
        %662 = vmatprep.subr.mxu0 0.0
        %663 = vmatpush1.xpose.msra.mxu0 0.0
        %664 = vmatprep.subr.mxu0 0.0
        %665 = vmatpush1.xpose.msra.mxu0 0.0
        %666 = vmatprep.subr.mxu0 0.0
        %667 = vmatpush1.xpose.msra.mxu0 0.0
        %668 = vmatprep.subr.mxu0 0.0
        %669 = vmatpush1.xpose.msra.mxu0 0.0
        %670 = vmatprep.subr.mxu0 0.0
        %671 = vmatpush1.xpose.msra.mxu0 0.0
        %672 = vmatprep.subr.mxu0 0.0
        %673 = vmatpush1.xpose.msra.mxu0 0.0
        %674 = vmatprep.subr.mxu0 0.0
        %675 = vmatpush1.xpose.msra.mxu0 0.0
        %676 = vmatprep.subr.mxu0 0.0
        %677 = vmatpush1.xpose.msra.mxu0 0.0
        %678 = vmatprep.subr.mxu0 0.0
        %679 = vmatpush1.xpose.msra.mxu0 0.0
        %680 = vmatprep.subr.mxu0 0.0
        %681 = vmatpush1.xpose.msra.mxu0 0.0
        %682 = vmatprep.subr.mxu0 0.0
        %683 = vmatpush1.xpose.msra.mxu0 0.0
        %684 = vmatprep.subr.mxu0 0.0
        %685 = vmatpush1.xpose.msra.mxu0 0.0
        %686 = vmatprep.mubr.f32.mxu0 0.0
        %687 = vmatmul.mubr.f32.gmra.mrb[0].mxu0 %v620
        %v688 = vpop.f32.mrb[0].mxu0
        %v689 = vadd.f32 0.0, %v688
        %v690 = vpop.f32.mrb[0].mxu0
        %691 = vdwg.mxu0
        %692 = vrot.lane.b32.xlu0 %v467, 96
        %v693 = vpop.permute.xlu0 %692
        %v694 = vsel %vm388, %v693, 0
        %696 = vmatprep.subr.mxu0 0.0
        %697 = vmatpush1.xpose.msra.mxu0 %v694
        %698 = vmatprep.subr.mxu0 0.0
        %699 = vmatpush1.xpose.msra.mxu0 0.0
        %700 = vmatprep.subr.mxu0 0.0
        %701 = vmatpush1.xpose.msra.mxu0 0.0
        %702 = vmatprep.subr.mxu0 0.0
        %703 = vmatpush1.xpose.msra.mxu0 0.0
        %704 = vmatprep.subr.mxu0 0.0
        %705 = vmatpush1.xpose.msra.mxu0 0.0
        %706 = vmatprep.subr.mxu0 0.0
        %707 = vmatpush1.xpose.msra.mxu0 0.0
        %708 = vmatprep.subr.mxu0 0.0
        %709 = vmatpush1.xpose.msra.mxu0 0.0
        %710 = vmatprep.subr.mxu0 0.0
        %711 = vmatpush1.xpose.msra.mxu0 0.0
        %712 = vmatprep.subr.mxu0 0.0
        %713 = vmatpush1.xpose.msra.mxu0 0.0
        %714 = vmatprep.subr.mxu0 0.0
        %715 = vmatpush1.xpose.msra.mxu0 0.0
        %716 = vmatprep.subr.mxu0 0.0
        %717 = vmatpush1.xpose.msra.mxu0 0.0
        %718 = vmatprep.subr.mxu0 0.0
        %719 = vmatpush1.xpose.msra.mxu0 0.0
        %720 = vmatprep.subr.mxu0 0.0
        %721 = vmatpush1.xpose.msra.mxu0 0.0
        %722 = vmatprep.subr.mxu0 0.0
        %723 = vmatpush1.xpose.msra.mxu0 0.0
        %724 = vmatprep.subr.mxu0 0.0
        %725 = vmatpush1.xpose.msra.mxu0 0.0
        %726 = vmatprep.subr.mxu0 0.0
        %727 = vmatpush1.xpose.msra.mxu0 0.0
        %728 = vmatprep.subr.mxu0 0.0
        %729 = vmatpush1.xpose.msra.mxu0 0.0
        %730 = vmatprep.subr.mxu0 0.0
        %731 = vmatpush1.xpose.msra.mxu0 0.0
        %732 = vmatprep.subr.mxu0 0.0
        %733 = vmatpush1.xpose.msra.mxu0 0.0
        %734 = vmatprep.subr.mxu0 0.0
        %735 = vmatpush1.xpose.msra.mxu0 0.0
        %736 = vmatprep.subr.mxu0 0.0
        %737 = vmatpush1.xpose.msra.mxu0 0.0
        %738 = vmatprep.subr.mxu0 0.0
        %739 = vmatpush1.xpose.msra.mxu0 0.0
        %740 = vmatprep.subr.mxu0 0.0
        %741 = vmatpush1.xpose.msra.mxu0 0.0
        %742 = vmatprep.subr.mxu0 0.0
        %743 = vmatpush1.xpose.msra.mxu0 0.0
        %744 = vmatprep.subr.mxu0 0.0
        %745 = vmatpush1.xpose.msra.mxu0 0.0
        %746 = vmatprep.subr.mxu0 0.0
        %747 = vmatpush1.xpose.msra.mxu0 0.0
        %748 = vmatprep.subr.mxu0 0.0
        %749 = vmatpush1.xpose.msra.mxu0 0.0
        %750 = vmatprep.subr.mxu0 0.0
        %751 = vmatpush1.xpose.msra.mxu0 0.0
        %752 = vmatprep.subr.mxu0 0.0
        %753 = vmatpush1.xpose.msra.mxu0 0.0
        %754 = vmatprep.subr.mxu0 0.0
        %755 = vmatpush1.xpose.msra.mxu0 0.0
        %756 = vmatprep.subr.mxu0 0.0
        %757 = vmatpush1.xpose.msra.mxu0 0.0
        %758 = vmatprep.subr.mxu0 0.0
        %759 = vmatpush1.xpose.msra.mxu0 0.0
        %760 = vmatprep.mubr.f32.mxu0 0.0
        %761 = vmatmul.mubr.f32.gmra.mrb[0].mxu0 %v694
        %v762 = vpop.f32.mrb[0].mxu0
        %v763 = vadd.f32 0.0, %v762
        %v764 = vpop.f32.mrb[0].mxu0
        %765 = vdwg.mxu0
        %v766 = vmul.f32 %v689, 0.17677669
        %v767 = vmul.f32 %v763, 0.17677669
        %768 = vrot.lane.b32.xlu0 %v462, 64
        %v769 = vpop.permute.xlu0 %768
        %v770 = vsel %vm388, %v769, 0
        %772 = vmatprep.subr.mxu0 0.0
        %773 = vmatpush1.xpose.msra.mxu0 %v770
        %774 = vmatprep.subr.mxu0 0.0
        %775 = vmatpush1.xpose.msra.mxu0 0.0
        %776 = vmatprep.subr.mxu0 0.0
        %777 = vmatpush1.xpose.msra.mxu0 0.0
        %778 = vmatprep.subr.mxu0 0.0
        %779 = vmatpush1.xpose.msra.mxu0 0.0
        %780 = vmatprep.subr.mxu0 0.0
        %781 = vmatpush1.xpose.msra.mxu0 0.0
        %782 = vmatprep.subr.mxu0 0.0
        %783 = vmatpush1.xpose.msra.mxu0 0.0
        %784 = vmatprep.subr.mxu0 0.0
        %785 = vmatpush1.xpose.msra.mxu0 0.0
        %786 = vmatprep.subr.mxu0 0.0
        %787 = vmatpush1.xpose.msra.mxu0 0.0
        %788 = vmatprep.subr.mxu0 0.0
        %789 = vmatpush1.xpose.msra.mxu0 0.0
        %790 = vmatprep.subr.mxu0 0.0
        %791 = vmatpush1.xpose.msra.mxu0 0.0
        %792 = vmatprep.subr.mxu0 0.0
        %793 = vmatpush1.xpose.msra.mxu0 0.0
        %794 = vmatprep.subr.mxu0 0.0
        %795 = vmatpush1.xpose.msra.mxu0 0.0
        %796 = vmatprep.subr.mxu0 0.0
        %797 = vmatpush1.xpose.msra.mxu0 0.0
        %798 = vmatprep.subr.mxu0 0.0
        %799 = vmatpush1.xpose.msra.mxu0 0.0
        %800 = vmatprep.subr.mxu0 0.0
        %801 = vmatpush1.xpose.msra.mxu0 0.0
        %802 = vmatprep.subr.mxu0 0.0
        %803 = vmatpush1.xpose.msra.mxu0 0.0
        %804 = vmatprep.subr.mxu0 0.0
        %805 = vmatpush1.xpose.msra.mxu0 0.0
        %806 = vmatprep.subr.mxu0 0.0
        %807 = vmatpush1.xpose.msra.mxu0 0.0
        %808 = vmatprep.subr.mxu0 0.0
        %809 = vmatpush1.xpose.msra.mxu0 0.0
        %810 = vmatprep.subr.mxu0 0.0
        %811 = vmatpush1.xpose.msra.mxu0 0.0
        %812 = vmatprep.subr.mxu0 0.0
        %813 = vmatpush1.xpose.msra.mxu0 0.0
        %814 = vmatprep.subr.mxu0 0.0
        %815 = vmatpush1.xpose.msra.mxu0 0.0
        %816 = vmatprep.subr.mxu0 0.0
        %817 = vmatpush1.xpose.msra.mxu0 0.0
        %818 = vmatprep.subr.mxu0 0.0
        %819 = vmatpush1.xpose.msra.mxu0 0.0
        %820 = vmatprep.subr.mxu0 0.0
        %821 = vmatpush1.xpose.msra.mxu0 0.0
        %822 = vmatprep.subr.mxu0 0.0
        %823 = vmatpush1.xpose.msra.mxu0 0.0
        %824 = vmatprep.subr.mxu0 0.0
        %825 = vmatpush1.xpose.msra.mxu0 0.0
        %826 = vmatprep.subr.mxu0 0.0
        %827 = vmatpush1.xpose.msra.mxu0 0.0
        %828 = vmatprep.subr.mxu0 0.0
        %829 = vmatpush1.xpose.msra.mxu0 0.0
        %830 = vmatprep.subr.mxu0 0.0
        %831 = vmatpush1.xpose.msra.mxu0 0.0
        %832 = vmatprep.subr.mxu0 0.0
        %833 = vmatpush1.xpose.msra.mxu0 0.0
        %834 = vmatprep.subr.mxu0 0.0
        %835 = vmatpush1.xpose.msra.mxu0 0.0
        %836 = vmatprep.mubr.f32.mxu0 0.0
        %837 = vmatmul.mubr.f32.gmra.mrb[0].mxu0 %v770
        %v838 = vpop.f32.mrb[0].mxu0
        %v839 = vadd.f32 0.0, %v838
        %v840 = vpop.f32.mrb[0].mxu0
        %841 = vdwg.mxu0
        %842 = vrot.lane.b32.xlu0 %v467, 64
        %v843 = vpop.permute.xlu0 %842
        %v844 = vsel %vm388, %v843, 0
        %846 = vmatprep.subr.mxu0 0.0
        %847 = vmatpush1.xpose.msra.mxu0 %v844
        %848 = vmatprep.subr.mxu0 0.0
        %849 = vmatpush1.xpose.msra.mxu0 0.0
        %850 = vmatprep.subr.mxu0 0.0
        %851 = vmatpush1.xpose.msra.mxu0 0.0
        %852 = vmatprep.subr.mxu0 0.0
        %853 = vmatpush1.xpose.msra.mxu0 0.0
        %854 = vmatprep.subr.mxu0 0.0
        %855 = vmatpush1.xpose.msra.mxu0 0.0
        %856 = vmatprep.subr.mxu0 0.0
        %857 = vmatpush1.xpose.msra.mxu0 0.0
        %858 = vmatprep.subr.mxu0 0.0
        %859 = vmatpush1.xpose.msra.mxu0 0.0
        %860 = vmatprep.subr.mxu0 0.0
        %861 = vmatpush1.xpose.msra.mxu0 0.0
        %862 = vmatprep.subr.mxu0 0.0
        %863 = vmatpush1.xpose.msra.mxu0 0.0
        %864 = vmatprep.subr.mxu0 0.0
        %865 = vmatpush1.xpose.msra.mxu0 0.0
        %866 = vmatprep.subr.mxu0 0.0
        %867 = vmatpush1.xpose.msra.mxu0 0.0
        %868 = vmatprep.subr.mxu0 0.0
        %869 = vmatpush1.xpose.msra.mxu0 0.0
        %870 = vmatprep.subr.mxu0 0.0
        %871 = vmatpush1.xpose.msra.mxu0 0.0
        %872 = vmatprep.subr.mxu0 0.0
        %873 = vmatpush1.xpose.msra.mxu0 0.0
        %874 = vmatprep.subr.mxu0 0.0
        %875 = vmatpush1.xpose.msra.mxu0 0.0
        %876 = vmatprep.subr.mxu0 0.0
        %877 = vmatpush1.xpose.msra.mxu0 0.0
        %878 = vmatprep.subr.mxu0 0.0
        %879 = vmatpush1.xpose.msra.mxu0 0.0
        %880 = vmatprep.subr.mxu0 0.0
        %881 = vmatpush1.xpose.msra.mxu0 0.0
        %882 = vmatprep.subr.mxu0 0.0
        %883 = vmatpush1.xpose.msra.mxu0 0.0
        %884 = vmatprep.subr.mxu0 0.0
        %885 = vmatpush1.xpose.msra.mxu0 0.0
        %886 = vmatprep.subr.mxu0 0.0
        %887 = vmatpush1.xpose.msra.mxu0 0.0
        %888 = vmatprep.subr.mxu0 0.0
        %889 = vmatpush1.xpose.msra.mxu0 0.0
        %890 = vmatprep.subr.mxu0 0.0
        %891 = vmatpush1.xpose.msra.mxu0 0.0
        %892 = vmatprep.subr.mxu0 0.0
        %893 = vmatpush1.xpose.msra.mxu0 0.0
        %894 = vmatprep.subr.mxu0 0.0
        %895 = vmatpush1.xpose.msra.mxu0 0.0
        %896 = vmatprep.subr.mxu0 0.0
        %897 = vmatpush1.xpose.msra.mxu0 0.0
        %898 = vmatprep.subr.mxu0 0.0
        %899 = vmatpush1.xpose.msra.mxu0 0.0
        %900 = vmatprep.subr.mxu0 0.0
        %901 = vmatpush1.xpose.msra.mxu0 0.0
        %902 = vmatprep.subr.mxu0 0.0
        %903 = vmatpush1.xpose.msra.mxu0 0.0
        %904 = vmatprep.subr.mxu0 0.0
        %905 = vmatpush1.xpose.msra.mxu0 0.0
        %906 = vmatprep.subr.mxu0 0.0
        %907 = vmatpush1.xpose.msra.mxu0 0.0
        %908 = vmatprep.subr.mxu0 0.0
        %909 = vmatpush1.xpose.msra.mxu0 0.0
        %910 = vmatprep.mubr.f32.mxu0 0.0
        %911 = vmatmul.mubr.f32.gmra.mrb[0].mxu0 %v844
        %v912 = vpop.f32.mrb[0].mxu0
        %v913 = vadd.f32 0.0, %v912
        %v914 = vpop.f32.mrb[0].mxu0
        %915 = vdwg.mxu0
        %v916 = vmul.f32 %v839, 0.17677669
        %v917 = vmul.f32 %v913, 0.17677669
        %918 = vrot.lane.b32.xlu0 %v462, 32
        %v919 = vpop.permute.xlu0 %918
        %v920 = vsel %vm388, %v919, 0
        %922 = vmatprep.subr.mxu0 0.0
        %923 = vmatpush1.xpose.msra.mxu0 %v920
        %924 = vmatprep.subr.mxu0 0.0
        %925 = vmatpush1.xpose.msra.mxu0 0.0
        %926 = vmatprep.subr.mxu0 0.0
        %927 = vmatpush1.xpose.msra.mxu0 0.0
        %928 = vmatprep.subr.mxu0 0.0
        %929 = vmatpush1.xpose.msra.mxu0 0.0
        %930 = vmatprep.subr.mxu0 0.0
        %931 = vmatpush1.xpose.msra.mxu0 0.0
        %932 = vmatprep.subr.mxu0 0.0
        %933 = vmatpush1.xpose.msra.mxu0 0.0
        %934 = vmatprep.subr.mxu0 0.0
        %935 = vmatpush1.xpose.msra.mxu0 0.0
        %936 = vmatprep.subr.mxu0 0.0
        %937 = vmatpush1.xpose.msra.mxu0 0.0
        %938 = vmatprep.subr.mxu0 0.0
        %939 = vmatpush1.xpose.msra.mxu0 0.0
        %940 = vmatprep.subr.mxu0 0.0
        %941 = vmatpush1.xpose.msra.mxu0 0.0
        %942 = vmatprep.subr.mxu0 0.0
        %943 = vmatpush1.xpose.msra.mxu0 0.0
        %944 = vmatprep.subr.mxu0 0.0
        %945 = vmatpush1.xpose.msra.mxu0 0.0
        %946 = vmatprep.subr.mxu0 0.0
        %947 = vmatpush1.xpose.msra.mxu0 0.0
        %948 = vmatprep.subr.mxu0 0.0
        %949 = vmatpush1.xpose.msra.mxu0 0.0
        %950 = vmatprep.subr.mxu0 0.0
        %951 = vmatpush1.xpose.msra.mxu0 0.0
        %952 = vmatprep.subr.mxu0 0.0
        %953 = vmatpush1.xpose.msra.mxu0 0.0
        %954 = vmatprep.subr.mxu0 0.0
        %955 = vmatpush1.xpose.msra.mxu0 0.0
        %956 = vmatprep.subr.mxu0 0.0
        %957 = vmatpush1.xpose.msra.mxu0 0.0
        %958 = vmatprep.subr.mxu0 0.0
        %959 = vmatpush1.xpose.msra.mxu0 0.0
        %960 = vmatprep.subr.mxu0 0.0
        %961 = vmatpush1.xpose.msra.mxu0 0.0
        %962 = vmatprep.subr.mxu0 0.0
        %963 = vmatpush1.xpose.msra.mxu0 0.0
        %964 = vmatprep.subr.mxu0 0.0
        %965 = vmatpush1.xpose.msra.mxu0 0.0
        %966 = vmatprep.subr.mxu0 0.0
        %967 = vmatpush1.xpose.msra.mxu0 0.0
        %968 = vmatprep.subr.mxu0 0.0
        %969 = vmatpush1.xpose.msra.mxu0 0.0
        %970 = vmatprep.subr.mxu0 0.0
        %971 = vmatpush1.xpose.msra.mxu0 0.0
        %972 = vmatprep.subr.mxu0 0.0
        %973 = vmatpush1.xpose.msra.mxu0 0.0
        %974 = vmatprep.subr.mxu0 0.0
        %975 = vmatpush1.xpose.msra.mxu0 0.0
        %976 = vmatprep.subr.mxu0 0.0
        %977 = vmatpush1.xpose.msra.mxu0 0.0
        %978 = vmatprep.subr.mxu0 0.0
        %979 = vmatpush1.xpose.msra.mxu0 0.0
        %980 = vmatprep.subr.mxu0 0.0
        %981 = vmatpush1.xpose.msra.mxu0 0.0
        %982 = vmatprep.subr.mxu0 0.0
        %983 = vmatpush1.xpose.msra.mxu0 0.0
        %984 = vmatprep.subr.mxu0 0.0
        %985 = vmatpush1.xpose.msra.mxu0 0.0
        %986 = vmatprep.mubr.f32.mxu0 0.0
        %987 = vmatmul.mubr.f32.gmra.mrb[0].mxu0 %v920
        %v988 = vpop.f32.mrb[0].mxu0
        %v989 = vadd.f32 0.0, %v988
        %v990 = vpop.f32.mrb[0].mxu0
        %991 = vdwg.mxu0
        %992 = vrot.lane.b32.xlu0 %v467, 32
        %v993 = vpop.permute.xlu0 %992
        %v994 = vsel %vm388, %v993, 0
        %996 = vmatprep.subr.mxu0 0.0
        %997 = vmatpush1.xpose.msra.mxu0 %v994
        %998 = vmatprep.subr.mxu0 0.0
        %999 = vmatpush1.xpose.msra.mxu0 0.0
        %1000 = vmatprep.subr.mxu0 0.0
        %1001 = vmatpush1.xpose.msra.mxu0 0.0
        %1002 = vmatprep.subr.mxu0 0.0
        %1003 = vmatpush1.xpose.msra.mxu0 0.0
        %1004 = vmatprep.subr.mxu0 0.0
        %1005 = vmatpush1.xpose.msra.mxu0 0.0
        %1006 = vmatprep.subr.mxu0 0.0
        %1007 = vmatpush1.xpose.msra.mxu0 0.0
        %1008 = vmatprep.subr.mxu0 0.0
        %1009 = vmatpush1.xpose.msra.mxu0 0.0
        %1010 = vmatprep.subr.mxu0 0.0
        %1011 = vmatpush1.xpose.msra.mxu0 0.0
        %1012 = vmatprep.subr.mxu0 0.0
        %1013 = vmatpush1.xpose.msra.mxu0 0.0
        %1014 = vmatprep.subr.mxu0 0.0
        %1015 = vmatpush1.xpose.msra.mxu0 0.0
        %1016 = vmatprep.subr.mxu0 0.0
        %1017 = vmatpush1.xpose.msra.mxu0 0.0
        %1018 = vmatprep.subr.mxu0 0.0
        %1019 = vmatpush1.xpose.msra.mxu0 0.0
        %1020 = vmatprep.subr.mxu0 0.0
        %1021 = vmatpush1.xpose.msra.mxu0 0.0
        %1022 = vmatprep.subr.mxu0 0.0
        %1023 = vmatpush1.xpose.msra.mxu0 0.0
        %1024 = vmatprep.subr.mxu0 0.0
        %1025 = vmatpush1.xpose.msra.mxu0 0.0
        %1026 = vmatprep.subr.mxu0 0.0
        %1027 = vmatpush1.xpose.msra.mxu0 0.0
        %1028 = vmatprep.subr.mxu0 0.0
        %1029 = vmatpush1.xpose.msra.mxu0 0.0
        %1030 = vmatprep.subr.mxu0 0.0
        %1031 = vmatpush1.xpose.msra.mxu0 0.0
        %1032 = vmatprep.subr.mxu0 0.0
        %1033 = vmatpush1.xpose.msra.mxu0 0.0
        %1034 = vmatprep.subr.mxu0 0.0
        %1035 = vmatpush1.xpose.msra.mxu0 0.0
        %1036 = vmatprep.subr.mxu0 0.0
        %1037 = vmatpush1.xpose.msra.mxu0 0.0
        %1038 = vmatprep.subr.mxu0 0.0
        %1039 = vmatpush1.xpose.msra.mxu0 0.0
        %1040 = vmatprep.subr.mxu0 0.0
        %1041 = vmatpush1.xpose.msra.mxu0 0.0
        %1042 = vmatprep.subr.mxu0 0.0
        %1043 = vmatpush1.xpose.msra.mxu0 0.0
        %1044 = vmatprep.subr.mxu0 0.0
        %1045 = vmatpush1.xpose.msra.mxu0 0.0
        %1046 = vmatprep.subr.mxu0 0.0
        %1047 = vmatpush1.xpose.msra.mxu0 0.0
        %1048 = vmatprep.subr.mxu0 0.0
        %1049 = vmatpush1.xpose.msra.mxu0 0.0
        %1050 = vmatprep.subr.mxu0 0.0
        %1051 = vmatpush1.xpose.msra.mxu0 0.0
        %1052 = vmatprep.subr.mxu0 0.0
        %1053 = vmatpush1.xpose.msra.mxu0 0.0
        %1054 = vmatprep.subr.mxu0 0.0
        %1055 = vmatpush1.xpose.msra.mxu0 0.0
        %1056 = vmatprep.subr.mxu0 0.0
        %1057 = vmatpush1.xpose.msra.mxu0 0.0
        %1058 = vmatprep.subr.mxu0 0.0
        %1059 = vmatpush1.xpose.msra.mxu0 0.0
        %1060 = vmatprep.mubr.f32.mxu0 0.0
        %1061 = vmatmul.mubr.f32.gmra.mrb[0].mxu0 %v994
        %v1062 = vpop.f32.mrb[0].mxu0
        %v1063 = vadd.f32 0.0, %v1062
        %v1064 = vpop.f32.mrb[0].mxu0
        %1065 = vdwg.mxu0
        %v1066 = vmul.f32 %v989, 0.17677669
        %v1067 = vmul.f32 %v1063, 0.17677669
        %v1068 = vld [vmem:[%s330] sm:$0xff]
        %v1069 = vld [vmem:[%s330 + $0x8] sm:$0xff]
        %v1070 = vadd.f32 %v616, %v766
        %v1071 = vadd.f32 %v617, %v767
        %v1072 = vadd.f32 %v1070, %v916
        %v1073 = vadd.f32 %v1071, %v917
        %v1074 = vadd.f32 %v1072, %v1066
        %v1075 = vadd.f32 %v1073, %v1067
        %v1076 = vadd.f32 %v1074, %v1068
        %v1077 = vadd.f32 %v1075, %v1069
        %v1078 = vmul.f32 %v1076, 0.2
        %v1079 = vmul.f32 %v1077, 0.2
        %v1080 = vsub.f32 %v616, %v1078
        %v1081 = vsub.f32 %v617, %v1079
        %v1082 = vmul.f32 %v1080, %v1080
        %v1083 = vmul.f32 %v1081, %v1081
        %v1084 = vsub.f32 %v766, %v1078
        %v1085 = vsub.f32 %v767, %v1079
        %v1086 = vmul.f32 %v1084, %v1084
        %v1087 = vmul.f32 %v1085, %v1085
        %v1088 = vadd.f32 %v1082, %v1086
        %v1089 = vadd.f32 %v1083, %v1087
        %v1090 = vsub.f32 %v916, %v1078
        %v1091 = vsub.f32 %v917, %v1079
        %v1092 = vmul.f32 %v1090, %v1090
        %v1093 = vmul.f32 %v1091, %v1091
        %v1094 = vadd.f32 %v1088, %v1092
        %v1095 = vadd.f32 %v1089, %v1093
        %v1096 = vsub.f32 %v1066, %v1078
        %v1097 = vsub.f32 %v1067, %v1079
        %v1098 = vmul.f32 %v1096, %v1096
        %v1099 = vmul.f32 %v1097, %v1097
        %v1100 = vadd.f32 %v1094, %v1098
        %v1101 = vadd.f32 %v1095, %v1099
        %v1102 = vsub.f32 %v1068, %v1078
        %v1103 = vsub.f32 %v1069, %v1079
        %v1104 = vmul.f32 %v1102, %v1102
        %v1105 = vmul.f32 %v1103, %v1103
        %v1106 = vadd.f32 %v1100, %v1104
        %v1107 = vadd.f32 %v1101, %v1105
        %v1108 = vmul.f32 %v1106, 0.2
        %v1109 = vmul.f32 %v1107, 0.2
        %v1110 = vadd.f32 %v1108, 1e-05
        %v1111 = vadd.f32 %v1109, 1e-05
        %v1112 = vrsqrt.pop %v1110
        %v1113 = vrsqrt.pop %v1111
        %v1114 = vmul.f32 %v1080, %v1112
        %v1115 = vmul.f32 %v1081, %v1113
        %s1116 = sld [smem:[#allocation4]]
        %v1117 = vstv %s1116
        %v1118 = vmul.f32 %v1114, %v1117
        %v1119 = vmul.f32 %v1115, %v1117
        %s1120 = sld [smem:[#allocation6]]
        %v1121 = vstv %s1120
        %v1122 = vadd.f32 %v1118, %v1121
        %v1123 = vadd.f32 %v1119, %v1121
        %vm1124 = vcmask 64512
        %1125 = vst.msk [vmem:[%s374] sm:$0xff] %vm1124, %v1122
        %1126 = vst.msk [vmem:[%s374 + $0x8] sm:$0xff] %vm1124, %v1123
        %v1127 = vmul.f32 %v1084, %v1112
        %v1128 = vmul.f32 %v1085, %v1113
        %s1129 = sld [smem:[#allocation4 + $0x1]]
        %v1130 = vstv %s1129
        %v1131 = vmul.f32 %v1127, %v1130
        %v1132 = vmul.f32 %v1128, %v1130
        %s1133 = sld [smem:[#allocation6 + $0x1]]
        %v1134 = vstv %s1133
        %v1135 = vadd.f32 %v1131, %v1134
        %v1136 = vadd.f32 %v1132, %v1134
        %s1137 = scalar_lea.vmem %s374, 16
        %1138 = vst.msk [vmem:[%s1137] sm:$0xff] %vm1124, %v1135
        %1139 = vst.msk [vmem:[%s1137 + $0x8] sm:$0xff] %vm1124, %v1136
        %v1140 = vmul.f32 %v1090, %v1112
        %v1141 = vmul.f32 %v1091, %v1113
        %s1142 = sld [smem:[#allocation4 + $0x2]]
        %v1143 = vstv %s1142
        %v1144 = vmul.f32 %v1140, %v1143
        %v1145 = vmul.f32 %v1141, %v1143
        %s1146 = sld [smem:[#allocation6 + $0x2]]
        %v1147 = vstv %s1146
        %v1148 = vadd.f32 %v1144, %v1147
        %v1149 = vadd.f32 %v1145, %v1147
        %s1150 = scalar_lea.vmem %s374, 32
        %1151 = vst.msk [vmem:[%s1150] sm:$0xff] %vm1124, %v1148
        %1152 = vst.msk [vmem:[%s1150 + $0x8] sm:$0xff] %vm1124, %v1149
        %v1153 = vmul.f32 %v1096, %v1112
        %v1154 = vmul.f32 %v1097, %v1113
        %s1155 = sld [smem:[#allocation4 + $0x3]]
        %v1156 = vstv %s1155
        %v1157 = vmul.f32 %v1153, %v1156
        %v1158 = vmul.f32 %v1154, %v1156
        %s1159 = sld [smem:[#allocation6 + $0x3]]
        %v1160 = vstv %s1159
        %v1161 = vadd.f32 %v1157, %v1160
        %v1162 = vadd.f32 %v1158, %v1160
        %s1163 = scalar_lea.vmem %s374, 48
        %1164 = vst.msk [vmem:[%s1163] sm:$0xff] %vm1124, %v1161
        %1165 = vst.msk [vmem:[%s1163 + $0x8] sm:$0xff] %vm1124, %v1162
        %v1166 = vmul.f32 %v1102, %v1112
        %v1167 = vmul.f32 %v1103, %v1113
        %s1168 = sld [smem:[#allocation4 + $0x4]]
        %v1169 = vstv %s1168
        %v1170 = vmul.f32 %v1166, %v1169
        %v1171 = vmul.f32 %v1167, %v1169
        %s1172 = sld [smem:[#allocation6 + $0x4]]
        %v1173 = vstv %s1172
        %v1174 = vadd.f32 %v1170, %v1173
        %v1175 = vadd.f32 %v1171, %v1173
        %s1176 = scalar_lea.vmem %s374, 64
        %1177 = vst.msk [vmem:[%s1176] sm:$0xff] %vm1124, %v1174
        %1178 = vst.msk [vmem:[%s1176 + $0x8] sm:$0xff] %vm1124, %v1175
        %p1179 = scmp.lt.s32.totalorder %s19, 3
        %s1180 = scalar_select %p1179, %s19, 3
        %s1181 = smul.addr %s1180, 10
        %s1182 = smul.addr %s1181, 8
        %s1183 = scalar_lea.vmem %s6, %s1182
        // Predicated region
        $region129: #{_lambda_.3} parent=111 // pred_check
          %p1184 = pneg %p173
        $region130: #{_lambda_.3} parent=111 // pred_check_branch
          %1186 = sbr.rel (%p1184) target = $region132
        $region131: #{_lambda_.3} parent=111 // pred_region
          _
        $region132: #{_lambda_.3} parent=111 // pred_fallthru
          _
      $region112: #{_lambda_.3} parent=5 // pred_fallthru
        _
      %p1187 = scmp.le.s32.totalorder 2, %s14
      // Predicated region
      $region133: #{_lambda_.3} parent=5 // pred_check
        %p1188 = pneg %p1187
      $region134: #{_lambda_.3} parent=5 // pred_check_branch
        %1190 = sbr.rel (%p1188) target = $region136
      $region135: #{_lambda_.3} parent=5 // pred_region
        %s1191 = ssub.s32 %s14, 2
        // Predicated region
        $region137: #{_lambda_.3} parent=135 // pred_check
          %p1192 = pneg %p179
        $region138: #{_lambda_.3} parent=135 // pred_check_branch
          %1194 = sbr.rel (%p1192) target = $region140
        $region139: #{_lambda_.3} parent=135 // pred_region
          %p1195 = scmp.lt.s32.totalorder %s20, 3
          %s1196 = scalar_select %p1195, %s20, 3
          %s1197 = smul.addr %s1196, 10
          %s1198 = smul.addr %s1197, 8
          %s1199 = scalar_lea.vmem %s6, %s1198
        $region140: #{_lambda_.3} parent=135 // pred_fallthru
          _
      $region136: #{_lambda_.3} parent=5 // pred_fallthru
        _
    $region6: #{_lambda_.3} parent=1 // loop_footer
      %s18 = sadd.s32 1, %s14
    $region7: #{_lambda_.3} parent=1 // loop_footer_branch
      %13 = sbr.rel target = $region3
    $region8: #{_lambda_.3} parent=1 // loop_exit
      _
    %1200 = vsyncpa [#allocation5], 1
    %s1201 = scalar_lea.sflag [#allocation5], 1
    %1202 = vsyncpa %s1201, 1
    %1203 = vsyncpa [#allocation7], 1

// kernel: _lambda_.4
$region0: #{_lambda_.4}
  #allocation0 [shape = 'u32[]', space=smem, size = 0x4, offset = 0x4, fixed_abs, tag = 'smem constant byte address 0x4 - core index']
  #allocation1 [shape = 'u32[144,128]{1,0:T(1,128)}', space=vmem, size = 0x12000, scoped, tag = 'internal scratch']
  %s0 = inlined_call_operand.vmem [shape: f32[4,5,128], index: 0, kind: input, shape index: {}]
  %s1 = inlined_call_operand.vmem [shape: f32[2,5,128], index: 1, kind: input, shape index: {}]
  %s2 = inlined_call_operand.vmem [shape: f32[2,20,5], index: 2, kind: input, shape index: {}]
  %s3 = inlined_call_operand.vmem [shape: f32[2,20,5], index: 3, kind: input, shape index: {}]
  %s4 = inlined_call_operand.vmem [shape: f32[2,20,1], index: 4, kind: input, shape index: {}]
  %s5 = inlined_call_operand.vmem [shape: f32[2,4,5,128], index: 5, kind: output, shape index: {}]
  %s6 = sld [smem:[#allocation0]]
  $region61: #{_lambda_.4} parent=0
    _
  %s8 = ssub.s32 1, %s6
  %s9 = scalar_select 0, %s8, %s6
  loop: start=0, step=1, limit=4
  $region2: #{_lambda_.4} parent=0 // loop_pre_header
    _
  $region3: #{_lambda_.4} parent=0 // loop_header
    %s11 = sphi 0, %s15
    %p12 = scmp.ge.s32.totalorder %s11, 4
    %s19 = sphi 0, %s19
    %s21 = sphi 0, %s19
    %s22 = sphi 0, %s21
    %s36 = sphi 0, %s22
    %s42 = sphi 0, %s44
    %s45 = sphi 0, %s42
    %s46 = sphi 0, %s45
    %s62 = sphi 0, %s46
    %s68 = sphi 0, %s70
    %s71 = sphi 0, %s68
    %s72 = sphi 0, %s71
    %s88 = sphi 0, %s72
    %s94 = sphi 0, %s96
    %s97 = sphi 0, %s94
    %s98 = sphi 0, %s97
    %s114 = sphi 0, %s98
    %s120 = sphi 0, %s122
    %s123 = sphi 0, %s120
    %s124 = sphi 0, %s123
    %s140 = sphi 0, %s124
    %s146 = sphi 0, %s148
    %s149 = sphi 0, %s146
    %s150 = sphi 0, %s149
    %s166 = sphi 0, %s150
  $region4: #{_lambda_.4} parent=0 // loop_header_branch
    %14 = sbr.rel (%p12) target = $region8
  $region5: #{_lambda_.4} parent=0 // loop_body
    %s16 = ssub.s32 %s11, 1
    %s17 = ssub.s32 %s11, 2
    %s18 = sadd.s32 %s11, 1
    %s20 = sadd.s32 %s19, 1
    %p23 = scmp.eq.s32.totalorder %s11, 1
    %p24 = scmp.ne.s32.totalorder %s19, %s21
    %p25 = scmp.eq.s32.totalorder %s11, 0
    %p26 = por %p24, %p25
    %p27 = scmp.ne.s32.totalorder %s19, %s21
    %p28 = scmp.eq.s32.totalorder %s16, 1
    %p29 = por %p27, %p28
    %p30 = scmp.ne.s32.totalorder %s21, %s22
    %p31 = scmp.eq.s32.totalorder %s16, 0
    %p32 = por %p30, %p31
    %p33 = scmp.ne.s32.totalorder %s21, %s22
    %p34 = scmp.eq.s32.totalorder %s17, 1
    %p35 = por %p33, %p34
    %p37 = scmp.ne.s32.totalorder %s22, %s36
    %p38 = scmp.eq.s32.totalorder %s17, 0
    %p39 = por %p37, %p38
    %s40 = ssub.s32 %s11, %s18
    %p41 = scmp.eq.s32.totalorder %s40, 0
    %s43 = sadd.s32 %s42, 1
    %s44 = scalar_select %p41, %s42, %s43
    %p47 = pneg %p41
    %p48 = scmp.eq.s32.totalorder %s11, 1
    %p49 = por %p47, %p48
    %p50 = scmp.ne.s32.totalorder %s42, %s45
    %p51 = scmp.eq.s32.totalorder %s11, 0
    %p52 = por %p50, %p51
    %p53 = scmp.ne.s32.totalorder %s42, %s45
    %p54 = scmp.eq.s32.totalorder %s16, 1
    %p55 = por %p53, %p54
    %p56 = scmp.ne.s32.totalorder %s45, %s46
    %p57 = scmp.eq.s32.totalorder %s16, 0
    %p58 = por %p56, %p57
    %p59 = scmp.ne.s32.totalorder %s45, %s46
    %p60 = scmp.eq.s32.totalorder %s17, 1
    %p61 = por %p59, %p60
    %p63 = scmp.ne.s32.totalorder %s46, %s62
    %p64 = scmp.eq.s32.totalorder %s17, 0
    %p65 = por %p63, %p64
    %s66 = ssub.s32 %s11, %s18
    %p67 = scmp.eq.s32.totalorder %s66, 0
    %s69 = sadd.s32 %s68, 1
    %s70 = scalar_select %p67, %s68, %s69
    %p73 = pneg %p67
    %p74 = scmp.eq.s32.totalorder %s11, 1
    %p75 = por %p73, %p74
    %p76 = scmp.ne.s32.totalorder %s68, %s71
    %p77 = scmp.eq.s32.totalorder %s11, 0
    %p78 = por %p76, %p77
    %p79 = scmp.ne.s32.totalorder %s68, %s71
    %p80 = scmp.eq.s32.totalorder %s16, 1
    %p81 = por %p79, %p80
    %p82 = scmp.ne.s32.totalorder %s71, %s72
    %p83 = scmp.eq.s32.totalorder %s16, 0
    %p84 = por %p82, %p83
    %p85 = scmp.ne.s32.totalorder %s71, %s72
    %p86 = scmp.eq.s32.totalorder %s17, 1
    %p87 = por %p85, %p86
    %p89 = scmp.ne.s32.totalorder %s72, %s88
    %p90 = scmp.eq.s32.totalorder %s17, 0
    %p91 = por %p89, %p90
    %s92 = ssub.s32 %s11, %s18
    %p93 = scmp.eq.s32.totalorder %s92, 0
    %s95 = sadd.s32 %s94, 1
    %s96 = scalar_select %p93, %s94, %s95
    %p99 = pneg %p93
    %p100 = scmp.eq.s32.totalorder %s11, 1
    %p101 = por %p99, %p100
    %p102 = scmp.ne.s32.totalorder %s94, %s97
    %p103 = scmp.eq.s32.totalorder %s11, 0
    %p104 = por %p102, %p103
    %p105 = scmp.ne.s32.totalorder %s94, %s97
    %p106 = scmp.eq.s32.totalorder %s16, 1
    %p107 = por %p105, %p106
    %p108 = scmp.ne.s32.totalorder %s97, %s98
    %p109 = scmp.eq.s32.totalorder %s16, 0
    %p110 = por %p108, %p109
    %p111 = scmp.ne.s32.totalorder %s97, %s98
    %p112 = scmp.eq.s32.totalorder %s17, 1
    %p113 = por %p111, %p112
    %p115 = scmp.ne.s32.totalorder %s98, %s114
    %p116 = scmp.eq.s32.totalorder %s17, 0
    %p117 = por %p115, %p116
    %s118 = ssub.s32 %s11, %s18
    %p119 = scmp.eq.s32.totalorder %s118, 0
    %s121 = sadd.s32 %s120, 1
    %s122 = scalar_select %p119, %s120, %s121
    %p125 = pneg %p119
    %p126 = scmp.eq.s32.totalorder %s11, 1
    %p127 = por %p125, %p126
    %p128 = scmp.ne.s32.totalorder %s120, %s123
    %p129 = scmp.eq.s32.totalorder %s11, 0
    %p130 = por %p128, %p129
    %p131 = scmp.ne.s32.totalorder %s120, %s123
    %p132 = scmp.eq.s32.totalorder %s16, 1
    %p133 = por %p131, %p132
    %p134 = scmp.ne.s32.totalorder %s123, %s124
    %p135 = scmp.eq.s32.totalorder %s16, 0
    %p136 = por %p134, %p135
    %p137 = scmp.ne.s32.totalorder %s123, %s124
    %p138 = scmp.eq.s32.totalorder %s17, 1
    %p139 = por %p137, %p138
    %p141 = scmp.ne.s32.totalorder %s124, %s140
    %p142 = scmp.eq.s32.totalorder %s17, 0
    %p143 = por %p141, %p142
    %s144 = ssub.s32 %s11, %s18
    %p145 = scmp.eq.s32.totalorder %s144, 0
    %s147 = sadd.s32 %s146, 1
    %s148 = scalar_select %p145, %s146, %s147
    %p151 = pneg %p145
    %p152 = scmp.eq.s32.totalorder %s11, 1
    %p153 = por %p151, %p152
    %p154 = scmp.ne.s32.totalorder %s146, %s149
    %p155 = scmp.eq.s32.totalorder %s11, 0
    %p156 = por %p154, %p155
    %p157 = scmp.ne.s32.totalorder %s146, %s149
    %p158 = scmp.eq.s32.totalorder %s16, 1
    %p159 = por %p157, %p158
    %p160 = scmp.ne.s32.totalorder %s149, %s150
    %p161 = scmp.eq.s32.totalorder %s16, 0
    %p162 = por %p160, %p161
    %p163 = scmp.ne.s32.totalorder %s149, %s150
    %p164 = scmp.eq.s32.totalorder %s17, 1
    %p165 = por %p163, %p164
    %p167 = scmp.ne.s32.totalorder %s150, %s166
    %p168 = scmp.eq.s32.totalorder %s17, 0
    %p169 = por %p167, %p168
    %p170 = scmp.le.s32.totalorder 1, %s11
    %p171 = scmp.lt.s32.totalorder %s11, 3
    %p172 = pnand %p170, %p171
    %p173 = pneg %p172
    // Predicated region
    $region9: #{_lambda_.4} parent=5 // pred_check
      _
    $region10: #{_lambda_.4} parent=5 // pred_check_branch
      %175 = sbr.rel (%p172) target = $region12
    $region11: #{_lambda_.4} parent=5 // pred_region
      %s176 = ssub.s32 %s11, 1
      // Predicated region
      $region13: #{_lambda_.4} parent=11 // pred_check
        %p177 = pneg %p32
      $region14: #{_lambda_.4} parent=11 // pred_check_branch
        %179 = sbr.rel (%p177) target = $region16
      $region15: #{_lambda_.4} parent=11 // pred_region
        _
      $region16: #{_lambda_.4} parent=11 // pred_fallthru
        _
    $region12: #{_lambda_.4} parent=5 // pred_fallthru
      _
    %p180 = scmp.lt.s32.totalorder %s11, 2
    // Predicated region
    $region17: #{_lambda_.4} parent=5 // pred_check
      %p181 = pneg %p180
    $region18: #{_lambda_.4} parent=5 // pred_check_branch
      %183 = sbr.rel (%p181) target = $region20
    $region19: #{_lambda_.4} parent=5 // pred_region
      // Predicated region
      $region21: #{_lambda_.4} parent=19 // pred_check
        %p184 = pneg %p52
      $region22: #{_lambda_.4} parent=19 // pred_check_branch
        %186 = sbr.rel (%p184) target = $region24
      $region23: #{_lambda_.4} parent=19 // pred_region
        %p187 = scmp.lt.s32.totalorder %s11, 1
        %s188 = scalar_select %p187, %s11, 1
        %s189 = smul.addr %s188, 8
        %s190 = scalar_lea.vmem %s1, %s189
      $region24: #{_lambda_.4} parent=19 // pred_fallthru
        _
      // Predicated region
      $region25: #{_lambda_.4} parent=19 // pred_check
        %p191 = pneg %p78
      $region26: #{_lambda_.4} parent=19 // pred_check_branch
        %193 = sbr.rel (%p191) target = $region28
      $region27: #{_lambda_.4} parent=19 // pred_region
        %p194 = scmp.lt.s32.totalorder %s11, 1
        %s195 = scalar_select %p194, %s11, 1
        %s196 = smul.addr %s195, 3
        %s197 = smul.addr %s196, 8
        %s198 = scalar_lea.vmem %s2, %s197
      $region28: #{_lambda_.4} parent=19 // pred_fallthru
        _
      // Predicated region
      $region29: #{_lambda_.4} parent=19 // pred_check
        %p199 = pneg %p104
      $region30: #{_lambda_.4} parent=19 // pred_check_branch
        %201 = sbr.rel (%p199) target = $region32
      $region31: #{_lambda_.4} parent=19 // pred_region
        %p202 = scmp.lt.s32.totalorder %s11, 1
        %s203 = scalar_select %p202, %s11, 1
        %s204 = smul.addr %s203, 3
        %s205 = smul.addr %s204, 8
        %s206 = scalar_lea.vmem %s3, %s205
      $region32: #{_lambda_.4} parent=19 // pred_fallthru
        _
      // Predicated region
      $region33: #{_lambda_.4} parent=19 // pred_check
        %p207 = pneg %p130
      $region34: #{_lambda_.4} parent=19 // pred_check_branch
        %209 = sbr.rel (%p207) target = $region36
      $region35: #{_lambda_.4} parent=19 // pred_region
        %p210 = scmp.lt.s32.totalorder %s11, 1
        %s211 = scalar_select %p210, %s11, 1
        %s212 = smul.addr %s211, 3
        %s213 = smul.addr %s212, 8
        %s214 = scalar_lea.vmem %s4, %s213
      $region36: #{_lambda_.4} parent=19 // pred_fallthru
        _
    $region20: #{_lambda_.4} parent=5 // pred_fallthru
      _
    %p215 = scmp.le.s32.totalorder 1, %s11
    %p216 = scmp.lt.s32.totalorder %s11, 3
    %p217 = pnand %p215, %p216
    %p218 = pneg %p217
    // Predicated region
    $region37: #{_lambda_.4} parent=5 // pred_check
      _
    $region38: #{_lambda_.4} parent=5 // pred_check_branch
      %220 = sbr.rel (%p217) target = $region40
    $region39: #{_lambda_.4} parent=5 // pred_region
      %s221 = ssub.s32 %s11, 1
      %p222 = pneg %p32
      %p223 = pneg %p29
      %p224 = scmp.lt.s32.totalorder %s16, 1
      %s225 = scalar_select %p224, %s16, 1
      %s226 = smul.addr %s225, 8
      %s227 = scalar_lea.vmem %s1, %s226
      %p228 = pneg %p58
      %p229 = pneg %p55
      %p230 = scmp.lt.s32.totalorder %s16, 1
      %s231 = scalar_select %p230, %s16, 1
      %s232 = smul.addr %s231, 3
      %s233 = smul.addr %s232, 8
      %s234 = scalar_lea.vmem %s2, %s233
      %p235 = pneg %p84
      %p236 = pneg %p81
      %p237 = scmp.lt.s32.totalorder %s16, 1
      %s238 = scalar_select %p237, %s16, 1
      %s239 = smul.addr %s238, 3
      %s240 = smul.addr %s239, 8
      %s241 = scalar_lea.vmem %s3, %s240
      %p242 = pneg %p110
      %p243 = pneg %p107
      %p244 = scmp.lt.s32.totalorder %s16, 1
      %s245 = scalar_select %p244, %s16, 1
      %s246 = smul.addr %s245, 3
      %s247 = smul.addr %s246, 8
      %s248 = scalar_lea.vmem %s4, %s247
      %p249 = pneg %p136
      %p250 = pneg %p133
      %p251 = pneg %p162
      %p252 = pneg %p159
      %p253 = scmp.lt.s32.totalorder %s16, 1
      %s254 = scalar_select %p253, %s16, 1
      %s255 = smul.addr %s254, 4
      %s256 = smul.addr %s255, 8
      %s257 = scalar_lea.vmem %s5, %s256
      %p258 = scmp.lt.s32.totalorder %s16, 1
      %s259 = scalar_select %p258, %s16, 1
      %s260 = smul.addr %s259, 8
      %s261 = scalar_lea.vmem %s1, %s260
      %p262 = scmp.lt.s32.totalorder %s16, 1
      %s263 = scalar_select %p262, %s16, 1
      %s264 = smul.addr %s263, 3
      %s265 = smul.addr %s264, 8
      %s266 = scalar_lea.vmem %s2, %s265
      %p267 = scmp.lt.s32.totalorder %s16, 1
      %s268 = scalar_select %p267, %s16, 1
      %s269 = smul.addr %s268, 3
      %s270 = smul.addr %s269, 8
      %s271 = scalar_lea.vmem %s3, %s270
      %p272 = scmp.lt.s32.totalorder %s16, 1
      %s273 = scalar_select %p272, %s16, 1
      %s274 = smul.addr %s273, 3
      %s275 = smul.addr %s274, 8
      %s276 = scalar_lea.vmem %s4, %s275
      %p277 = scmp.lt.s32.totalorder %s16, 1
      %s278 = scalar_select %p277, %s16, 1
      %s279 = smul.addr %s278, 4
      %s280 = smul.addr %s279, 8
      %s281 = scalar_lea.vmem %s5, %s280
      %v282 = vld [vmem:[%s266] sm:$0xff]
      %v283 = vld [vmem:[%s266 + $0x8] sm:$0xff]
      %v284 = vld [vmem:[%s266 + $0x10] sm:$0xf]
      %v285 = vld [vmem:[%s271] sm:$0xff]
      %v286 = vld [vmem:[%s271 + $0x8] sm:$0xff]
      %v287 = vld [vmem:[%s271 + $0x10] sm:$0xf]
      %v288 = vld [vmem:[%s276] sm:$0xff]
      %v289 = vld [vmem:[%s276 + $0x8] sm:$0xff]
      %v290 = vld [vmem:[%s276 + $0x10] sm:$0xf]
      %p291 = scmp.eq.s32.totalorder %s16, 0
      // Predicated region
      $region41: #{_lambda_.4} parent=39 // pred_check
        %p292 = pneg %p291
      $region42: #{_lambda_.4} parent=39 // pred_check_branch
        %294 = sbr.rel (%p292) target = $region44
      $region43: #{_lambda_.4} parent=39 // pred_region
        %v295 = vld [vmem:[%s261] sm:$0x1f]
        %v296 = vld [vmem:[%s0] sm:$0x1f]
        %vm297 = vcmask 39936
        %v299 = vsel %vm297, %v285, 0
        %v302 = vsel %vm297, %v286, 0
        %v305 = vsel %vm297, %v287, 0
        %vm307 = vcmask 1044480
        %v309 = vsel %vm307, %v295, 0
        %311 = vmatprep.subr.mxu0 0.0
        %312 = vmatpush1.msra.mxu0 %v309
        %313 = vmatprep.subr.mxu0 0.0
        %314 = vmatpush1.msra.mxu0 0.0
        %315 = vmatprep.subr.mxu0 0.0
        %316 = vmatpush1.msra.mxu0 0.0
        %317 = vmatprep.subr.mxu0 0.0
        %318 = vmatpush1.msra.mxu0 0.0
        %319 = vmatprep.subr.mxu0 0.0
        %320 = vmatpush1.msra.mxu0 0.0
        %321 = vmatprep.subr.mxu0 0.0
        %322 = vmatpush1.msra.mxu0 0.0
        %323 = vmatprep.subr.mxu0 0.0
        %324 = vmatpush1.msra.mxu0 0.0
        %325 = vmatprep.subr.mxu0 0.0
        %326 = vmatpush1.msra.mxu0 0.0
        %327 = vmatprep.subr.mxu0 0.0
        %328 = vmatpush1.msra.mxu0 0.0
        %329 = vmatprep.subr.mxu0 0.0
        %330 = vmatpush1.msra.mxu0 0.0
        %331 = vmatprep.subr.mxu0 0.0
        %332 = vmatpush1.msra.mxu0 0.0
        %333 = vmatprep.subr.mxu0 0.0
        %334 = vmatpush1.msra.mxu0 0.0
        %335 = vmatprep.subr.mxu0 0.0
        %336 = vmatpush1.msra.mxu0 0.0
        %337 = vmatprep.subr.mxu0 0.0
        %338 = vmatpush1.msra.mxu0 0.0
        %339 = vmatprep.subr.mxu0 0.0
        %340 = vmatpush1.msra.mxu0 0.0
        %341 = vmatprep.subr.mxu0 0.0
        %342 = vmatpush1.msra.mxu0 0.0
        %343 = vmatprep.subr.mxu0 0.0
        %344 = vmatpush1.msra.mxu0 0.0
        %345 = vmatprep.subr.mxu0 0.0
        %346 = vmatpush1.msra.mxu0 0.0
        %347 = vmatprep.subr.mxu0 0.0
        %348 = vmatpush1.msra.mxu0 0.0
        %349 = vmatprep.subr.mxu0 0.0
        %350 = vmatpush1.msra.mxu0 0.0
        %351 = vmatprep.subr.mxu0 0.0
        %352 = vmatpush1.msra.mxu0 0.0
        %353 = vmatprep.subr.mxu0 0.0
        %354 = vmatpush1.msra.mxu0 0.0
        %355 = vmatprep.subr.mxu0 0.0
        %356 = vmatpush1.msra.mxu0 0.0
        %357 = vmatprep.subr.mxu0 0.0
        %358 = vmatpush1.msra.mxu0 0.0
        %359 = vmatprep.subr.mxu0 0.0
        %360 = vmatpush1.msra.mxu0 0.0
        %361 = vmatprep.subr.mxu0 0.0
        %362 = vmatpush1.msra.mxu0 0.0
        %363 = vmatprep.subr.mxu0 0.0
        %364 = vmatpush1.msra.mxu0 0.0
        %365 = vmatprep.subr.mxu0 0.0
        %366 = vmatpush1.msra.mxu0 0.0
        %367 = vmatprep.subr.mxu0 0.0
        %368 = vmatpush1.msra.mxu0 0.0
        %369 = vmatprep.subr.mxu0 0.0
        %370 = vmatpush1.msra.mxu0 0.0
        %371 = vmatprep.subr.mxu0 0.0
        %372 = vmatpush1.msra.mxu0 0.0
        %373 = vmatprep.subr.mxu0 0.0
        %374 = vmatpush1.msra.mxu0 0.0
        %375 = vmatprep.mubr.f32.mxu0 0.0
        %376 = vmatmul.mubr.f32.gmra.mrb[0].mxu0 %v299
        %v377 = vpop.f32.mrb[0].mxu0
        %v378 = vadd.f32 0.0, %v377
        %v379 = vpop.f32.mrb[0].mxu0
        %380 = vmatprep.mubr.f32.mxu0 0.0
        %381 = vmatmul.mubr.f32.gmra.mrb[0].mxu0 %v302
        %v382 = vpop.f32.mrb[0].mxu0
        %v383 = vadd.f32 0.0, %v382
        %v384 = vpop.f32.mrb[0].mxu0
        %385 = vmatprep.mubr.f32.mxu0 0.0
        %386 = vmatmul.mubr.f32.gmra.mrb[0].mxu0 %v305
        %v387 = vpop.f32.mrb[0].mxu0
        %v388 = vadd.f32 0.0, %v387
        %v389 = vpop.f32.mrb[0].mxu0
        %390 = vdwg.mxu0
        %v392 = vsel %vm297, %v282, 0
        %v395 = vsel %vm297, %v283, 0
        %v398 = vsel %vm297, %v284, 0
        %v401 = vsel %vm307, %v296, 0
        %403 = vmatprep.subr.mxu0 0.0
        %404 = vmatpush1.msra.mxu0 %v401
        %405 = vmatprep.subr.mxu0 0.0
        %406 = vmatpush1.msra.mxu0 0.0
        %407 = vmatprep.subr.mxu0 0.0
        %408 = vmatpush1.msra.mxu0 0.0
        %409 = vmatprep.subr.mxu0 0.0
        %410 = vmatpush1.msra.mxu0 0.0
        %411 = vmatprep.subr.mxu0 0.0
        %412 = vmatpush1.msra.mxu0 0.0
        %413 = vmatprep.subr.mxu0 0.0
        %414 = vmatpush1.msra.mxu0 0.0
        %415 = vmatprep.subr.mxu0 0.0
        %416 = vmatpush1.msra.mxu0 0.0
        %417 = vmatprep.subr.mxu0 0.0
        %418 = vmatpush1.msra.mxu0 0.0
        %419 = vmatprep.subr.mxu0 0.0
        %420 = vmatpush1.msra.mxu0 0.0
        %421 = vmatprep.subr.mxu0 0.0
        %422 = vmatpush1.msra.mxu0 0.0
        %423 = vmatprep.subr.mxu0 0.0
        %424 = vmatpush1.msra.mxu0 0.0
        %425 = vmatprep.subr.mxu0 0.0
        %426 = vmatpush1.msra.mxu0 0.0
        %427 = vmatprep.subr.mxu0 0.0
        %428 = vmatpush1.msra.mxu0 0.0
        %429 = vmatprep.subr.mxu0 0.0
        %430 = vmatpush1.msra.mxu0 0.0
        %431 = vmatprep.subr.mxu0 0.0
        %432 = vmatpush1.msra.mxu0 0.0
        %433 = vmatprep.subr.mxu0 0.0
        %434 = vmatpush1.msra.mxu0 0.0
        %435 = vmatprep.subr.mxu0 0.0
        %436 = vmatpush1.msra.mxu0 0.0
        %437 = vmatprep.subr.mxu0 0.0
        %438 = vmatpush1.msra.mxu0 0.0
        %439 = vmatprep.subr.mxu0 0.0
        %440 = vmatpush1.msra.mxu0 0.0
        %441 = vmatprep.subr.mxu0 0.0
        %442 = vmatpush1.msra.mxu0 0.0
        %443 = vmatprep.subr.mxu0 0.0
        %444 = vmatpush1.msra.mxu0 0.0
        %445 = vmatprep.subr.mxu0 0.0
        %446 = vmatpush1.msra.mxu0 0.0
        %447 = vmatprep.subr.mxu0 0.0
        %448 = vmatpush1.msra.mxu0 0.0
        %449 = vmatprep.subr.mxu0 0.0
        %450 = vmatpush1.msra.mxu0 0.0
        %451 = vmatprep.subr.mxu0 0.0
        %452 = vmatpush1.msra.mxu0 0.0
        %453 = vmatprep.subr.mxu0 0.0
        %454 = vmatpush1.msra.mxu0 0.0
        %455 = vmatprep.subr.mxu0 0.0
        %456 = vmatpush1.msra.mxu0 0.0
        %457 = vmatprep.subr.mxu0 0.0
        %458 = vmatpush1.msra.mxu0 0.0
        %459 = vmatprep.subr.mxu0 0.0
        %460 = vmatpush1.msra.mxu0 0.0
        %461 = vmatprep.subr.mxu0 0.0
        %462 = vmatpush1.msra.mxu0 0.0
        %463 = vmatprep.subr.mxu0 0.0
        %464 = vmatpush1.msra.mxu0 0.0
        %465 = vmatprep.subr.mxu0 0.0
        %466 = vmatpush1.msra.mxu0 0.0
        %467 = vmatprep.mubr.f32.mxu0 0.0
        %468 = vmatmul.mubr.f32.gmra.mrb[0].mxu0 %v392
        %v469 = vpop.f32.mrb[0].mxu0
        %v470 = vadd.f32 %v378, %v469
        %v471 = vpop.f32.mrb[0].mxu0
        %472 = vmatprep.mubr.f32.mxu0 0.0
        %473 = vmatmul.mubr.f32.gmra.mrb[0].mxu0 %v395
        %v474 = vpop.f32.mrb[0].mxu0
        %v475 = vadd.f32 %v383, %v474
        %v476 = vpop.f32.mrb[0].mxu0
        %477 = vmatprep.mubr.f32.mxu0 0.0
        %478 = vmatmul.mubr.f32.gmra.mrb[0].mxu0 %v398
        %v479 = vpop.f32.mrb[0].mxu0
        %v480 = vadd.f32 %v388, %v479
        %v481 = vpop.f32.mrb[0].mxu0
        %482 = vdwg.mxu0
        %484 = vset.pattern.permute.xlu0 0
        %485 = vperm.xlu0 %484, %v288
        %v486 = vpop.permute.xlu0 %485
        %489 = vset.pattern.permute.xlu0 0
        %490 = vperm.xlu0 %489, %v289
        %v491 = vpop.permute.xlu0 %490
        %494 = vset.pattern.permute.xlu0 0
        %495 = vperm.xlu0 %494, %v290
        %v496 = vpop.permute.xlu0 %495
        %v498 = vadd.f32 %v470, %v486
        %v499 = vadd.f32 %v475, %v491
        %v500 = vadd.f32 %v480, %v496
        %v501 = vsub.f32 0.0, %v498
        %v502 = vmul.f32 %v501, 1.442695
        %v503 = vpow.pop %v502
        %v504 = vadd.f32 %v503, 1.0
        %v505 = vrcp.pop %v504
        %v506 = vmul.f32 1.0, %v505
        %v507 = vsub.f32 0.0, %v499
        %v508 = vmul.f32 %v507, 1.442695
        %v509 = vpow.pop %v508
        %v510 = vadd.f32 %v509, 1.0
        %v511 = vrcp.pop %v510
        %v512 = vmul.f32 1.0, %v511
        %vm515 = vcmask 1040384
        %v516 = vrot.slane %v499, 7
        %v517 = vrot.slane %v500, 7
        %v518 = vsel %vm515, %v516, %v517
        %v520 = vmul.f32 %v506, %v518
        %v522 = vrot.slane %v520, 6
        %v524 = vadd.f32 %v499, %v522
        %v525 = vtanh.pop %v524
        %v526 = vsub.f32 1.0, %v506
        %v527 = vsub.f32 1.0, %v512
        %v529 = vrot.slane %v525, 5
        %v531 = vmul.f32 %v526, %v529
        %v532 = vmul.f32 %v527, %v529
        %v533 = vrot.slane %v295, 3
        %v535 = vmul.f32 %v506, %v533
        %v536 = vmul.f32 %v512, %v533
        %v537 = vadd.f32 %v531, %v535
        %v538 = vadd.f32 %v532, %v536
        %539 = vst [vmem:[%s281 - $0x5] sm:$0xe0] %v537
        %540 = vst [vmem:[%s281 + $0x3] sm:$0x3] %v538
        %s541 = scalar_lea.vmem %s0, 8
        %v542 = vld [vmem:[%s541] sm:$0x1f]
        %vm545 = vcmask 1042432
        %v546 = vrot.slane %v537, 5
        %v547 = vrot.slane %v538, 5
        %v548 = vsel %vm545, %v546, %v547
        %v549 = vsel %vm307, %v548, 0
        %551 = vmatprep.subr.mxu0 0.0
        %552 = vmatpush1.msra.mxu0 %v549
        %553 = vmatprep.subr.mxu0 0.0
        %554 = vmatpush1.msra.mxu0 0.0
        %555 = vmatprep.subr.mxu0 0.0
        %556 = vmatpush1.msra.mxu0 0.0
        %557 = vmatprep.subr.mxu0 0.0
        %558 = vmatpush1.msra.mxu0 0.0
        %559 = vmatprep.subr.mxu0 0.0
        %560 = vmatpush1.msra.mxu0 0.0
        %561 = vmatprep.subr.mxu0 0.0
        %562 = vmatpush1.msra.mxu0 0.0
        %563 = vmatprep.subr.mxu0 0.0
        %564 = vmatpush1.msra.mxu0 0.0
        %565 = vmatprep.subr.mxu0 0.0
        %566 = vmatpush1.msra.mxu0 0.0
        %567 = vmatprep.subr.mxu0 0.0
        %568 = vmatpush1.msra.mxu0 0.0
        %569 = vmatprep.subr.mxu0 0.0
        %570 = vmatpush1.msra.mxu0 0.0
        %571 = vmatprep.subr.mxu0 0.0
        %572 = vmatpush1.msra.mxu0 0.0
        %573 = vmatprep.subr.mxu0 0.0
        %574 = vmatpush1.msra.mxu0 0.0
        %575 = vmatprep.subr.mxu0 0.0
        %576 = vmatpush1.msra.mxu0 0.0
        %577 = vmatprep.subr.mxu0 0.0
        %578 = vmatpush1.msra.mxu0 0.0
        %579 = vmatprep.subr.mxu0 0.0
        %580 = vmatpush1.msra.mxu0 0.0
        %581 = vmatprep.subr.mxu0 0.0
        %582 = vmatpush1.msra.mxu0 0.0
        %583 = vmatprep.subr.mxu0 0.0
        %584 = vmatpush1.msra.mxu0 0.0
        %585 = vmatprep.subr.mxu0 0.0
        %586 = vmatpush1.msra.mxu0 0.0
        %587 = vmatprep.subr.mxu0 0.0
        %588 = vmatpush1.msra.mxu0 0.0
        %589 = vmatprep.subr.mxu0 0.0
        %590 = vmatpush1.msra.mxu0 0.0
        %591 = vmatprep.subr.mxu0 0.0
        %592 = vmatpush1.msra.mxu0 0.0
        %593 = vmatprep.subr.mxu0 0.0
        %594 = vmatpush1.msra.mxu0 0.0
        %595 = vmatprep.subr.mxu0 0.0
        %596 = vmatpush1.msra.mxu0 0.0
        %597 = vmatprep.subr.mxu0 0.0
        %598 = vmatpush1.msra.mxu0 0.0
        %599 = vmatprep.subr.mxu0 0.0
        %600 = vmatpush1.msra.mxu0 0.0
        %601 = vmatprep.subr.mxu0 0.0
        %602 = vmatpush1.msra.mxu0 0.0
        %603 = vmatprep.subr.mxu0 0.0
        %604 = vmatpush1.msra.mxu0 0.0
        %605 = vmatprep.subr.mxu0 0.0
        %606 = vmatpush1.msra.mxu0 0.0
        %607 = vmatprep.subr.mxu0 0.0
        %608 = vmatpush1.msra.mxu0 0.0
        %609 = vmatprep.subr.mxu0 0.0
        %610 = vmatpush1.msra.mxu0 0.0
        %611 = vmatprep.subr.mxu0 0.0
        %612 = vmatpush1.msra.mxu0 0.0
        %613 = vmatprep.subr.mxu0 0.0
        %614 = vmatpush1.msra.mxu0 0.0
        %615 = vmatprep.mubr.f32.mxu0 0.0
        %616 = vmatmul.mubr.f32.gmra.mrb[0].mxu0 %v299
        %v617 = vpop.f32.mrb[0].mxu0
        %v618 = vadd.f32 0.0, %v617
        %v619 = vpop.f32.mrb[0].mxu0
        %620 = vmatprep.mubr.f32.mxu0 0.0
        %621 = vmatmul.mubr.f32.gmra.mrb[0].mxu0 %v302
        %v622 = vpop.f32.mrb[0].mxu0
        %v623 = vadd.f32 0.0, %v622
        %v624 = vpop.f32.mrb[0].mxu0
        %625 = vmatprep.mubr.f32.mxu0 0.0
        %626 = vmatmul.mubr.f32.gmra.mrb[0].mxu0 %v305
        %v627 = vpop.f32.mrb[0].mxu0
        %v628 = vadd.f32 0.0, %v627
        %v629 = vpop.f32.mrb[0].mxu0
        %630 = vdwg.mxu0
        %v632 = vsel %vm307, %v542, 0
        %634 = vmatprep.subr.mxu0 0.0
        %635 = vmatpush1.msra.mxu0 %v632
        %636 = vmatprep.subr.mxu0 0.0
        %637 = vmatpush1.msra.mxu0 0.0
        %638 = vmatprep.subr.mxu0 0.0
        %639 = vmatpush1.msra.mxu0 0.0
        %640 = vmatprep.subr.mxu0 0.0
        %641 = vmatpush1.msra.mxu0 0.0
        %642 = vmatprep.subr.mxu0 0.0
        %643 = vmatpush1.msra.mxu0 0.0
        %644 = vmatprep.subr.mxu0 0.0
        %645 = vmatpush1.msra.mxu0 0.0
        %646 = vmatprep.subr.mxu0 0.0
        %647 = vmatpush1.msra.mxu0 0.0
        %648 = vmatprep.subr.mxu0 0.0
        %649 = vmatpush1.msra.mxu0 0.0
        %650 = vmatprep.subr.mxu0 0.0
        %651 = vmatpush1.msra.mxu0 0.0
        %652 = vmatprep.subr.mxu0 0.0
        %653 = vmatpush1.msra.mxu0 0.0
        %654 = vmatprep.subr.mxu0 0.0
        %655 = vmatpush1.msra.mxu0 0.0
        %656 = vmatprep.subr.mxu0 0.0
        %657 = vmatpush1.msra.mxu0 0.0
        %658 = vmatprep.subr.mxu0 0.0
        %659 = vmatpush1.msra.mxu0 0.0
        %660 = vmatprep.subr.mxu0 0.0
        %661 = vmatpush1.msra.mxu0 0.0
        %662 = vmatprep.subr.mxu0 0.0
        %663 = vmatpush1.msra.mxu0 0.0
        %664 = vmatprep.subr.mxu0 0.0
        %665 = vmatpush1.msra.mxu0 0.0
        %666 = vmatprep.subr.mxu0 0.0
        %667 = vmatpush1.msra.mxu0 0.0
        %668 = vmatprep.subr.mxu0 0.0
        %669 = vmatpush1.msra.mxu0 0.0
        %670 = vmatprep.subr.mxu0 0.0
        %671 = vmatpush1.msra.mxu0 0.0
        %672 = vmatprep.subr.mxu0 0.0
        %673 = vmatpush1.msra.mxu0 0.0
        %674 = vmatprep.subr.mxu0 0.0
        %675 = vmatpush1.msra.mxu0 0.0
        %676 = vmatprep.subr.mxu0 0.0
        %677 = vmatpush1.msra.mxu0 0.0
        %678 = vmatprep.subr.mxu0 0.0
        %679 = vmatpush1.msra.mxu0 0.0
        %680 = vmatprep.subr.mxu0 0.0
        %681 = vmatpush1.msra.mxu0 0.0
        %682 = vmatprep.subr.mxu0 0.0
        %683 = vmatpush1.msra.mxu0 0.0
        %684 = vmatprep.subr.mxu0 0.0
        %685 = vmatpush1.msra.mxu0 0.0
        %686 = vmatprep.subr.mxu0 0.0
        %687 = vmatpush1.msra.mxu0 0.0
        %688 = vmatprep.subr.mxu0 0.0
        %689 = vmatpush1.msra.mxu0 0.0
        %690 = vmatprep.subr.mxu0 0.0
        %691 = vmatpush1.msra.mxu0 0.0
        %692 = vmatprep.subr.mxu0 0.0
        %693 = vmatpush1.msra.mxu0 0.0
        %694 = vmatprep.subr.mxu0 0.0
        %695 = vmatpush1.msra.mxu0 0.0
        %696 = vmatprep.subr.mxu0 0.0
        %697 = vmatpush1.msra.mxu0 0.0
        %698 = vmatprep.mubr.f32.mxu0 0.0
        %699 = vmatmul.mubr.f32.gmra.mrb[0].mxu0 %v392
        %v700 = vpop.f32.mrb[0].mxu0
        %v701 = vadd.f32 %v618, %v700
        %v702 = vpop.f32.mrb[0].mxu0
        %703 = vmatprep.mubr.f32.mxu0 0.0
        %704 = vmatmul.mubr.f32.gmra.mrb[0].mxu0 %v395
        %v705 = vpop.f32.mrb[0].mxu0
        %v706 = vadd.f32 %v623, %v705
        %v707 = vpop.f32.mrb[0].mxu0
        %708 = vmatprep.mubr.f32.mxu0 0.0
        %709 = vmatmul.mubr.f32.gmra.mrb[0].mxu0 %v398
        %v710 = vpop.f32.mrb[0].mxu0
        %v711 = vadd.f32 %v628, %v710
        %v712 = vpop.f32.mrb[0].mxu0
        %713 = vdwg.mxu0
        %v714 = vadd.f32 %v701, %v486
        %v715 = vadd.f32 %v706, %v491
        %v716 = vadd.f32 %v711, %v496
        %v717 = vsub.f32 0.0, %v714
        %v718 = vmul.f32 %v717, 1.442695
        %v719 = vpow.pop %v718
        %v720 = vadd.f32 %v719, 1.0
        %v721 = vrcp.pop %v720
        %v722 = vmul.f32 1.0, %v721
        %v723 = vsub.f32 0.0, %v715
        %v724 = vmul.f32 %v723, 1.442695
        %v725 = vpow.pop %v724
        %v726 = vadd.f32 %v725, 1.0
        %v727 = vrcp.pop %v726
        %v728 = vmul.f32 1.0, %v727
        %v731 = vrot.slane %v715, 7
        %v732 = vrot.slane %v716, 7
        %v733 = vsel %vm515, %v731, %v732
        %v735 = vmul.f32 %v722, %v733
        %v737 = vrot.slane %v735, 6
        %v739 = vadd.f32 %v715, %v737
        %v740 = vtanh.pop %v739
        %v741 = vsub.f32 1.0, %v722
        %v742 = vsub.f32 1.0, %v728
        %v744 = vrot.slane %v740, 5
        %v746 = vmul.f32 %v741, %v744
        %v747 = vmul.f32 %v742, %v744
        %v748 = vmul.f32 %v722, %v537
        %v749 = vmul.f32 %v728, %v538
        %v750 = vadd.f32 %v746, %v748
        %v751 = vadd.f32 %v747, %v749
        %s752 = scalar_lea.vmem %s281, 8
        %753 = vst [vmem:[%s752 - $0x5] sm:$0xe0] %v750
        %754 = vst [vmem:[%s752 + $0x3] sm:$0x3] %v751
        %s755 = scalar_lea.vmem %s0, 16
        %v756 = vld [vmem:[%s755] sm:$0x1f]
        %v759 = vrot.slane %v750, 5
        %v760 = vrot.slane %v751, 5
        %v761 = vsel %vm545, %v759, %v760
        %v762 = vsel %vm307, %v761, 0
        %764 = vmatprep.subr.mxu0 0.0
        %765 = vmatpush1.msra.mxu0 %v762
        %766 = vmatprep.subr.mxu0 0.0
        %767 = vmatpush1.msra.mxu0 0.0
        %768 = vmatprep.subr.mxu0 0.0
        %769 = vmatpush1.msra.mxu0 0.0
        %770 = vmatprep.subr.mxu0 0.0
        %771 = vmatpush1.msra.mxu0 0.0
        %772 = vmatprep.subr.mxu0 0.0
        %773 = vmatpush1.msra.mxu0 0.0
        %774 = vmatprep.subr.mxu0 0.0
        %775 = vmatpush1.msra.mxu0 0.0
        %776 = vmatprep.subr.mxu0 0.0
        %777 = vmatpush1.msra.mxu0 0.0
        %778 = vmatprep.subr.mxu0 0.0
        %779 = vmatpush1.msra.mxu0 0.0
        %780 = vmatprep.subr.mxu0 0.0
        %781 = vmatpush1.msra.mxu0 0.0
        %782 = vmatprep.subr.mxu0 0.0
        %783 = vmatpush1.msra.mxu0 0.0
        %784 = vmatprep.subr.mxu0 0.0
        %785 = vmatpush1.msra.mxu0 0.0
        %786 = vmatprep.subr.mxu0 0.0
        %787 = vmatpush1.msra.mxu0 0.0
        %788 = vmatprep.subr.mxu0 0.0
        %789 = vmatpush1.msra.mxu0 0.0
        %790 = vmatprep.subr.mxu0 0.0
        %791 = vmatpush1.msra.mxu0 0.0
        %792 = vmatprep.subr.mxu0 0.0
        %793 = vmatpush1.msra.mxu0 0.0
        %794 = vmatprep.subr.mxu0 0.0
        %795 = vmatpush1.msra.mxu0 0.0
        %796 = vmatprep.subr.mxu0 0.0
        %797 = vmatpush1.msra.mxu0 0.0
        %798 = vmatprep.subr.mxu0 0.0
        %799 = vmatpush1.msra.mxu0 0.0
        %800 = vmatprep.subr.mxu0 0.0
        %801 = vmatpush1.msra.mxu0 0.0
        %802 = vmatprep.subr.mxu0 0.0
        %803 = vmatpush1.msra.mxu0 0.0
        %804 = vmatprep.subr.mxu0 0.0
        %805 = vmatpush1.msra.mxu0 0.0
        %806 = vmatprep.subr.mxu0 0.0
        %807 = vmatpush1.msra.mxu0 0.0
        %808 = vmatprep.subr.mxu0 0.0
        %809 = vmatpush1.msra.mxu0 0.0
        %810 = vmatprep.subr.mxu0 0.0
        %811 = vmatpush1.msra.mxu0 0.0
        %812 = vmatprep.subr.mxu0 0.0
        %813 = vmatpush1.msra.mxu0 0.0
        %814 = vmatprep.subr.mxu0 0.0
        %815 = vmatpush1.msra.mxu0 0.0
        %816 = vmatprep.subr.mxu0 0.0
        %817 = vmatpush1.msra.mxu0 0.0
        %818 = vmatprep.subr.mxu0 0.0
        %819 = vmatpush1.msra.mxu0 0.0
        %820 = vmatprep.subr.mxu0 0.0
        %821 = vmatpush1.msra.mxu0 0.0
        %822 = vmatprep.subr.mxu0 0.0
        %823 = vmatpush1.msra.mxu0 0.0
        %824 = vmatprep.subr.mxu0 0.0
        %825 = vmatpush1.msra.mxu0 0.0
        %826 = vmatprep.subr.mxu0 0.0
        %827 = vmatpush1.msra.mxu0 0.0
        %828 = vmatprep.mubr.f32.mxu0 0.0
        %829 = vmatmul.mubr.f32.gmra.mrb[0].mxu0 %v299
        %v830 = vpop.f32.mrb[0].mxu0
        %v831 = vadd.f32 0.0, %v830
        %v832 = vpop.f32.mrb[0].mxu0
        %833 = vmatprep.mubr.f32.mxu0 0.0
        %834 = vmatmul.mubr.f32.gmra.mrb[0].mxu0 %v302
        %v835 = vpop.f32.mrb[0].mxu0
        %v836 = vadd.f32 0.0, %v835
        %v837 = vpop.f32.mrb[0].mxu0
        %838 = vmatprep.mubr.f32.mxu0 0.0
        %839 = vmatmul.mubr.f32.gmra.mrb[0].mxu0 %v305
        %v840 = vpop.f32.mrb[0].mxu0
        %v841 = vadd.f32 0.0, %v840
        %v842 = vpop.f32.mrb[0].mxu0
        %843 = vdwg.mxu0
        %v845 = vsel %vm307, %v756, 0
        %847 = vmatprep.subr.mxu0 0.0
        %848 = vmatpush1.msra.mxu0 %v845
        %849 = vmatprep.subr.mxu0 0.0
        %850 = vmatpush1.msra.mxu0 0.0
        %851 = vmatprep.subr.mxu0 0.0
        %852 = vmatpush1.msra.mxu0 0.0
        %853 = vmatprep.subr.mxu0 0.0
        %854 = vmatpush1.msra.mxu0 0.0
        %855 = vmatprep.subr.mxu0 0.0
        %856 = vmatpush1.msra.mxu0 0.0
        %857 = vmatprep.subr.mxu0 0.0
        %858 = vmatpush1.msra.mxu0 0.0
        %859 = vmatprep.subr.mxu0 0.0
        %860 = vmatpush1.msra.mxu0 0.0
        %861 = vmatprep.subr.mxu0 0.0
        %862 = vmatpush1.msra.mxu0 0.0
        %863 = vmatprep.subr.mxu0 0.0
        %864 = vmatpush1.msra.mxu0 0.0
        %865 = vmatprep.subr.mxu0 0.0
        %866 = vmatpush1.msra.mxu0 0.0
        %867 = vmatprep.subr.mxu0 0.0
        %868 = vmatpush1.msra.mxu0 0.0
        %869 = vmatprep.subr.mxu0 0.0
        %870 = vmatpush1.msra.mxu0 0.0
        %871 = vmatprep.subr.mxu0 0.0
        %872 = vmatpush1.msra.mxu0 0.0
        %873 = vmatprep.subr.mxu0 0.0
        %874 = vmatpush1.msra.mxu0 0.0
        %875 = vmatprep.subr.mxu0 0.0
        %876 = vmatpush1.msra.mxu0 0.0
        %877 = vmatprep.subr.mxu0 0.0
        %878 = vmatpush1.msra.mxu0 0.0
        %879 = vmatprep.subr.mxu0 0.0
        %880 = vmatpush1.msra.mxu0 0.0
        %881 = vmatprep.subr.mxu0 0.0
        %882 = vmatpush1.msra.mxu0 0.0
        %883 = vmatprep.subr.mxu0 0.0
        %884 = vmatpush1.msra.mxu0 0.0
        %885 = vmatprep.subr.mxu0 0.0
        %886 = vmatpush1.msra.mxu0 0.0
        %887 = vmatprep.subr.mxu0 0.0
        %888 = vmatpush1.msra.mxu0 0.0
        %889 = vmatprep.subr.mxu0 0.0
        %890 = vmatpush1.msra.mxu0 0.0
        %891 = vmatprep.subr.mxu0 0.0
        %892 = vmatpush1.msra.mxu0 0.0
        %893 = vmatprep.subr.mxu0 0.0
        %894 = vmatpush1.msra.mxu0 0.0
        %895 = vmatprep.subr.mxu0 0.0
        %896 = vmatpush1.msra.mxu0 0.0
        %897 = vmatprep.subr.mxu0 0.0
        %898 = vmatpush1.msra.mxu0 0.0
        %899 = vmatprep.subr.mxu0 0.0
        %900 = vmatpush1.msra.mxu0 0.0
        %901 = vmatprep.subr.mxu0 0.0
        %902 = vmatpush1.msra.mxu0 0.0
        %903 = vmatprep.subr.mxu0 0.0
        %904 = vmatpush1.msra.mxu0 0.0
        %905 = vmatprep.subr.mxu0 0.0
        %906 = vmatpush1.msra.mxu0 0.0
        %907 = vmatprep.subr.mxu0 0.0
        %908 = vmatpush1.msra.mxu0 0.0
        %909 = vmatprep.subr.mxu0 0.0
        %910 = vmatpush1.msra.mxu0 0.0
        %911 = vmatprep.mubr.f32.mxu0 0.0
        %912 = vmatmul.mubr.f32.gmra.mrb[0].mxu0 %v392
        %v913 = vpop.f32.mrb[0].mxu0
        %v914 = vadd.f32 %v831, %v913
        %v915 = vpop.f32.mrb[0].mxu0
        %916 = vmatprep.mubr.f32.mxu0 0.0
        %917 = vmatmul.mubr.f32.gmra.mrb[0].mxu0 %v395
        %v918 = vpop.f32.mrb[0].mxu0
        %v919 = vadd.f32 %v836, %v918
        %v920 = vpop.f32.mrb[0].mxu0
        %921 = vmatprep.mubr.f32.mxu0 0.0
        %922 = vmatmul.mubr.f32.gmra.mrb[0].mxu0 %v398
        %v923 = vpop.f32.mrb[0].mxu0
        %v924 = vadd.f32 %v841, %v923
        %v925 = vpop.f32.mrb[0].mxu0
        %926 = vdwg.mxu0
        %v927 = vadd.f32 %v914, %v486
        %v928 = vadd.f32 %v919, %v491
        %v929 = vadd.f32 %v924, %v496
        %v930 = vsub.f32 0.0, %v927
        %v931 = vmul.f32 %v930, 1.442695
        %v932 = vpow.pop %v931
        %v933 = vadd.f32 %v932, 1.0
        %v934 = vrcp.pop %v933
        %v935 = vmul.f32 1.0, %v934
        %v936 = vsub.f32 0.0, %v928
        %v937 = vmul.f32 %v936, 1.442695
        %v938 = vpow.pop %v937
        %v939 = vadd.f32 %v938, 1.0
        %v940 = vrcp.pop %v939
        %v941 = vmul.f32 1.0, %v940
        %v944 = vrot.slane %v928, 7
        %v945 = vrot.slane %v929, 7
        %v946 = vsel %vm515, %v944, %v945
        %v948 = vmul.f32 %v935, %v946
        %v950 = vrot.slane %v948, 6
        %v952 = vadd.f32 %v928, %v950
        %v953 = vtanh.pop %v952
        %v954 = vsub.f32 1.0, %v935
        %v955 = vsub.f32 1.0, %v941
        %v957 = vrot.slane %v953, 5
        %v959 = vmul.f32 %v954, %v957
        %v960 = vmul.f32 %v955, %v957
        %v961 = vmul.f32 %v935, %v750
        %v962 = vmul.f32 %v941, %v751
        %v963 = vadd.f32 %v959, %v961
        %v964 = vadd.f32 %v960, %v962
        %s965 = scalar_lea.vmem %s281, 16
        %966 = vst [vmem:[%s965 - $0x5] sm:$0xe0] %v963
        %967 = vst [vmem:[%s965 + $0x3] sm:$0x3] %v964
        %s968 = scalar_lea.vmem %s0, 24
        %v969 = vld [vmem:[%s968] sm:$0x1f]
        %v972 = vrot.slane %v963, 5
        %v973 = vrot.slane %v964, 5
        %v974 = vsel %vm545, %v972, %v973
        %v975 = vsel %vm307, %v974, 0
        %977 = vmatprep.subr.mxu0 0.0
        %978 = vmatpush1.msra.mxu0 %v975
        %979 = vmatprep.subr.mxu0 0.0
        %980 = vmatpush1.msra.mxu0 0.0
        %981 = vmatprep.subr.mxu0 0.0
        %982 = vmatpush1.msra.mxu0 0.0
        %983 = vmatprep.subr.mxu0 0.0
        %984 = vmatpush1.msra.mxu0 0.0
        %985 = vmatprep.subr.mxu0 0.0
        %986 = vmatpush1.msra.mxu0 0.0
        %987 = vmatprep.subr.mxu0 0.0
        %988 = vmatpush1.msra.mxu0 0.0
        %989 = vmatprep.subr.mxu0 0.0
        %990 = vmatpush1.msra.mxu0 0.0
        %991 = vmatprep.subr.mxu0 0.0
        %992 = vmatpush1.msra.mxu0 0.0
        %993 = vmatprep.subr.mxu0 0.0
        %994 = vmatpush1.msra.mxu0 0.0
        %995 = vmatprep.subr.mxu0 0.0
        %996 = vmatpush1.msra.mxu0 0.0
        %997 = vmatprep.subr.mxu0 0.0
        %998 = vmatpush1.msra.mxu0 0.0
        %999 = vmatprep.subr.mxu0 0.0
        %1000 = vmatpush1.msra.mxu0 0.0
        %1001 = vmatprep.subr.mxu0 0.0
        %1002 = vmatpush1.msra.mxu0 0.0
        %1003 = vmatprep.subr.mxu0 0.0
        %1004 = vmatpush1.msra.mxu0 0.0
        %1005 = vmatprep.subr.mxu0 0.0
        %1006 = vmatpush1.msra.mxu0 0.0
        %1007 = vmatprep.subr.mxu0 0.0
        %1008 = vmatpush1.msra.mxu0 0.0
        %1009 = vmatprep.subr.mxu0 0.0
        %1010 = vmatpush1.msra.mxu0 0.0
        %1011 = vmatprep.subr.mxu0 0.0
        %1012 = vmatpush1.msra.mxu0 0.0
        %1013 = vmatprep.subr.mxu0 0.0
        %1014 = vmatpush1.msra.mxu0 0.0
        %1015 = vmatprep.subr.mxu0 0.0
        %1016 = vmatpush1.msra.mxu0 0.0
        %1017 = vmatprep.subr.mxu0 0.0
        %1018 = vmatpush1.msra.mxu0 0.0
        %1019 = vmatprep.subr.mxu0 0.0
        %1020 = vmatpush1.msra.mxu0 0.0
        %1021 = vmatprep.subr.mxu0 0.0
        %1022 = vmatpush1.msra.mxu0 0.0
        %1023 = vmatprep.subr.mxu0 0.0
        %1024 = vmatpush1.msra.mxu0 0.0
        %1025 = vmatprep.subr.mxu0 0.0
        %1026 = vmatpush1.msra.mxu0 0.0
        %1027 = vmatprep.subr.mxu0 0.0
        %1028 = vmatpush1.msra.mxu0 0.0
        %1029 = vmatprep.subr.mxu0 0.0
        %1030 = vmatpush1.msra.mxu0 0.0
        %1031 = vmatprep.subr.mxu0 0.0
        %1032 = vmatpush1.msra.mxu0 0.0
        %1033 = vmatprep.subr.mxu0 0.0
        %1034 = vmatpush1.msra.mxu0 0.0
        %1035 = vmatprep.subr.mxu0 0.0
        %1036 = vmatpush1.msra.mxu0 0.0
        %1037 = vmatprep.subr.mxu0 0.0
        %1038 = vmatpush1.msra.mxu0 0.0
        %1039 = vmatprep.subr.mxu0 0.0
        %1040 = vmatpush1.msra.mxu0 0.0
        %1041 = vmatprep.mubr.f32.mxu0 0.0
        %1042 = vmatmul.mubr.f32.gmra.mrb[0].mxu0 %v299
        %v1043 = vpop.f32.mrb[0].mxu0
        %v1044 = vadd.f32 0.0, %v1043
        %v1045 = vpop.f32.mrb[0].mxu0
        %1046 = vmatprep.mubr.f32.mxu0 0.0
        %1047 = vmatmul.mubr.f32.gmra.mrb[0].mxu0 %v302
        %v1048 = vpop.f32.mrb[0].mxu0
        %v1049 = vadd.f32 0.0, %v1048
        %v1050 = vpop.f32.mrb[0].mxu0
        %1051 = vmatprep.mubr.f32.mxu0 0.0
        %1052 = vmatmul.mubr.f32.gmra.mrb[0].mxu0 %v305
        %v1053 = vpop.f32.mrb[0].mxu0
        %v1054 = vadd.f32 0.0, %v1053
        %v1055 = vpop.f32.mrb[0].mxu0
        %1056 = vdwg.mxu0
        %v1058 = vsel %vm307, %v969, 0
        %1060 = vmatprep.subr.mxu0 0.0
        %1061 = vmatpush1.msra.mxu0 %v1058
        %1062 = vmatprep.subr.mxu0 0.0
        %1063 = vmatpush1.msra.mxu0 0.0
        %1064 = vmatprep.subr.mxu0 0.0
        %1065 = vmatpush1.msra.mxu0 0.0
        %1066 = vmatprep.subr.mxu0 0.0
        %1067 = vmatpush1.msra.mxu0 0.0
        %1068 = vmatprep.subr.mxu0 0.0
        %1069 = vmatpush1.msra.mxu0 0.0
        %1070 = vmatprep.subr.mxu0 0.0
        %1071 = vmatpush1.msra.mxu0 0.0
        %1072 = vmatprep.subr.mxu0 0.0
        %1073 = vmatpush1.msra.mxu0 0.0
        %1074 = vmatprep.subr.mxu0 0.0
        %1075 = vmatpush1.msra.mxu0 0.0
        %1076 = vmatprep.subr.mxu0 0.0
        %1077 = vmatpush1.msra.mxu0 0.0
        %1078 = vmatprep.subr.mxu0 0.0
        %1079 = vmatpush1.msra.mxu0 0.0
        %1080 = vmatprep.subr.mxu0 0.0
        %1081 = vmatpush1.msra.mxu0 0.0
        %1082 = vmatprep.subr.mxu0 0.0
        %1083 = vmatpush1.msra.mxu0 0.0
        %1084 = vmatprep.subr.mxu0 0.0
        %1085 = vmatpush1.msra.mxu0 0.0
        %1086 = vmatprep.subr.mxu0 0.0
        %1087 = vmatpush1.msra.mxu0 0.0
        %1088 = vmatprep.subr.mxu0 0.0
        %1089 = vmatpush1.msra.mxu0 0.0
        %1090 = vmatprep.subr.mxu0 0.0
        %1091 = vmatpush1.msra.mxu0 0.0
        %1092 = vmatprep.subr.mxu0 0.0
        %1093 = vmatpush1.msra.mxu0 0.0
        %1094 = vmatprep.subr.mxu0 0.0
        %1095 = vmatpush1.msra.mxu0 0.0
        %1096 = vmatprep.subr.mxu0 0.0
        %1097 = vmatpush1.msra.mxu0 0.0
        %1098 = vmatprep.subr.mxu0 0.0
        %1099 = vmatpush1.msra.mxu0 0.0
        %1100 = vmatprep.subr.mxu0 0.0
        %1101 = vmatpush1.msra.mxu0 0.0
        %1102 = vmatprep.subr.mxu0 0.0
        %1103 = vmatpush1.msra.mxu0 0.0
        %1104 = vmatprep.subr.mxu0 0.0
        %1105 = vmatpush1.msra.mxu0 0.0
        %1106 = vmatprep.subr.mxu0 0.0
        %1107 = vmatpush1.msra.mxu0 0.0
        %1108 = vmatprep.subr.mxu0 0.0
        %1109 = vmatpush1.msra.mxu0 0.0
        %1110 = vmatprep.subr.mxu0 0.0
        %1111 = vmatpush1.msra.mxu0 0.0
        %1112 = vmatprep.subr.mxu0 0.0
        %1113 = vmatpush1.msra.mxu0 0.0
        %1114 = vmatprep.subr.mxu0 0.0
        %1115 = vmatpush1.msra.mxu0 0.0
        %1116 = vmatprep.subr.mxu0 0.0
        %1117 = vmatpush1.msra.mxu0 0.0
        %1118 = vmatprep.subr.mxu0 0.0
        %1119 = vmatpush1.msra.mxu0 0.0
        %1120 = vmatprep.subr.mxu0 0.0
        %1121 = vmatpush1.msra.mxu0 0.0
        %1122 = vmatprep.subr.mxu0 0.0
        %1123 = vmatpush1.msra.mxu0 0.0
        %1124 = vmatprep.mubr.f32.mxu0 0.0
        %1125 = vmatmul.mubr.f32.gmra.mrb[0].mxu0 %v392
        %v1126 = vpop.f32.mrb[0].mxu0
        %v1127 = vadd.f32 %v1044, %v1126
        %v1128 = vpop.f32.mrb[0].mxu0
        %1129 = vmatprep.mubr.f32.mxu0 0.0
        %1130 = vmatmul.mubr.f32.gmra.mrb[0].mxu0 %v395
        %v1131 = vpop.f32.mrb[0].mxu0
        %v1132 = vadd.f32 %v1049, %v1131
        %v1133 = vpop.f32.mrb[0].mxu0
        %1134 = vmatprep.mubr.f32.mxu0 0.0
        %1135 = vmatmul.mubr.f32.gmra.mrb[0].mxu0 %v398
        %v1136 = vpop.f32.mrb[0].mxu0
        %v1137 = vadd.f32 %v1054, %v1136
        %v1138 = vpop.f32.mrb[0].mxu0
        %1139 = vdwg.mxu0
        %v1140 = vadd.f32 %v1127, %v486
        %v1141 = vadd.f32 %v1132, %v491
        %v1142 = vadd.f32 %v1137, %v496
        %v1143 = vsub.f32 0.0, %v1140
        %v1144 = vmul.f32 %v1143, 1.442695
        %v1145 = vpow.pop %v1144
        %v1146 = vadd.f32 %v1145, 1.0
        %v1147 = vrcp.pop %v1146
        %v1148 = vmul.f32 1.0, %v1147
        %v1149 = vsub.f32 0.0, %v1141
        %v1150 = vmul.f32 %v1149, 1.442695
        %v1151 = vpow.pop %v1150
        %v1152 = vadd.f32 %v1151, 1.0
        %v1153 = vrcp.pop %v1152
        %v1154 = vmul.f32 1.0, %v1153
        %v1157 = vrot.slane %v1141, 7
        %v1158 = vrot.slane %v1142, 7
        %v1159 = vsel %vm515, %v1157, %v1158
        %v1161 = vmul.f32 %v1148, %v1159
        %v1163 = vrot.slane %v1161, 6
        %v1165 = vadd.f32 %v1141, %v1163
        %v1166 = vtanh.pop %v1165
        %v1167 = vsub.f32 1.0, %v1148
        %v1168 = vsub.f32 1.0, %v1154
        %v1170 = vrot.slane %v1166, 5
        %v1172 = vmul.f32 %v1167, %v1170
        %v1173 = vmul.f32 %v1168, %v1170
        %v1174 = vmul.f32 %v1148, %v963
        %v1175 = vmul.f32 %v1154, %v964
        %v1176 = vadd.f32 %v1172, %v1174
        %v1177 = vadd.f32 %v1173, %v1175
        %s1178 = scalar_lea.vmem %s281, 24
        %1179 = vst [vmem:[%s1178 - $0x5] sm:$0xe0] %v1176
        %1180 = vst [vmem:[%s1178 + $0x3] sm:$0x3] %v1177
      $region44: #{_lambda_.4} parent=39 // pred_fallthru
        _
      %p1181 = scmp.eq.s32.totalorder %s16, 1
      // Predicated region
      $region45: #{_lambda_.4} parent=39 // pred_check
        %p1182 = pneg %p1181
      $region46: #{_lambda_.4} parent=39 // pred_check_branch
        %1184 = sbr.rel (%p1182) target = $region48
      $region47: #{_lambda_.4} parent=39 // pred_region
        %v1185 = vld [vmem:[%s261] sm:$0x1f]
        %s1186 = scalar_lea.vmem %s0, 24
        %v1187 = vld [vmem:[%s1186] sm:$0x1f]
        %vm1188 = vcmask 39936
        %v1190 = vsel %vm1188, %v285, 0
        %v1193 = vsel %vm1188, %v286, 0
        %v1196 = vsel %vm1188, %v287, 0
        %vm1198 = vcmask 1044480
        %v1200 = vsel %vm1198, %v1185, 0
        %1202 = vmatprep.subr.mxu0 0.0
        %1203 = vmatpush1.msra.mxu0 %v1200
        %1204 = vmatprep.subr.mxu0 0.0
        %1205 = vmatpush1.msra.mxu0 0.0
        %1206 = vmatprep.subr.mxu0 0.0
        %1207 = vmatpush1.msra.mxu0 0.0
        %1208 = vmatprep.subr.mxu0 0.0
        %1209 = vmatpush1.msra.mxu0 0.0
        %1210 = vmatprep.subr.mxu0 0.0
        %1211 = vmatpush1.msra.mxu0 0.0
        %1212 = vmatprep.subr.mxu0 0.0
        %1213 = vmatpush1.msra.mxu0 0.0
        %1214 = vmatprep.subr.mxu0 0.0
        %1215 = vmatpush1.msra.mxu0 0.0
        %1216 = vmatprep.subr.mxu0 0.0
        %1217 = vmatpush1.msra.mxu0 0.0
        %1218 = vmatprep.subr.mxu0 0.0
        %1219 = vmatpush1.msra.mxu0 0.0
        %1220 = vmatprep.subr.mxu0 0.0
        %1221 = vmatpush1.msra.mxu0 0.0
        %1222 = vmatprep.subr.mxu0 0.0
        %1223 = vmatpush1.msra.mxu0 0.0
        %1224 = vmatprep.subr.mxu0 0.0
        %1225 = vmatpush1.msra.mxu0 0.0
        %1226 = vmatprep.subr.mxu0 0.0
        %1227 = vmatpush1.msra.mxu0 0.0
        %1228 = vmatprep.subr.mxu0 0.0
        %1229 = vmatpush1.msra.mxu0 0.0
        %1230 = vmatprep.subr.mxu0 0.0
        %1231 = vmatpush1.msra.mxu0 0.0
        %1232 = vmatprep.subr.mxu0 0.0
        %1233 = vmatpush1.msra.mxu0 0.0
        %1234 = vmatprep.subr.mxu0 0.0
        %1235 = vmatpush1.msra.mxu0 0.0
        %1236 = vmatprep.subr.mxu0 0.0
        %1237 = vmatpush1.msra.mxu0 0.0
        %1238 = vmatprep.subr.mxu0 0.0
        %1239 = vmatpush1.msra.mxu0 0.0
        %1240 = vmatprep.subr.mxu0 0.0
        %1241 = vmatpush1.msra.mxu0 0.0
        %1242 = vmatprep.subr.mxu0 0.0
        %1243 = vmatpush1.msra.mxu0 0.0
        %1244 = vmatprep.subr.mxu0 0.0
        %1245 = vmatpush1.msra.mxu0 0.0
        %1246 = vmatprep.subr.mxu0 0.0
        %1247 = vmatpush1.msra.mxu0 0.0
        %1248 = vmatprep.subr.mxu0 0.0
        %1249 = vmatpush1.msra.mxu0 0.0
        %1250 = vmatprep.subr.mxu0 0.0
        %1251 = vmatpush1.msra.mxu0 0.0
        %1252 = vmatprep.subr.mxu0 0.0
        %1253 = vmatpush1.msra.mxu0 0.0
        %1254 = vmatprep.subr.mxu0 0.0
        %1255 = vmatpush1.msra.mxu0 0.0
        %1256 = vmatprep.subr.mxu0 0.0
        %1257 = vmatpush1.msra.mxu0 0.0
        %1258 = vmatprep.subr.mxu0 0.0
        %1259 = vmatpush1.msra.mxu0 0.0
        %1260 = vmatprep.subr.mxu0 0.0
        %1261 = vmatpush1.msra.mxu0 0.0
        %1262 = vmatprep.subr.mxu0 0.0
        %1263 = vmatpush1.msra.mxu0 0.0
        %1264 = vmatprep.subr.mxu0 0.0
        %1265 = vmatpush1.msra.mxu0 0.0
        %1266 = vmatprep.mubr.f32.mxu0 0.0
        %1267 = vmatmul.mubr.f32.gmra.mrb[0].mxu0 %v1190
        %v1268 = vpop.f32.mrb[0].mxu0
        %v1269 = vadd.f32 0.0, %v1268
        %v1270 = vpop.f32.mrb[0].mxu0
        %1271 = vmatprep.mubr.f32.mxu0 0.0
        %1272 = vmatmul.mubr.f32.gmra.mrb[0].mxu0 %v1193
        %v1273 = vpop.f32.mrb[0].mxu0
        %v1274 = vadd.f32 0.0, %v1273
        %v1275 = vpop.f32.mrb[0].mxu0
        %1276 = vmatprep.mubr.f32.mxu0 0.0
        %1277 = vmatmul.mubr.f32.gmra.mrb[0].mxu0 %v1196
        %v1278 = vpop.f32.mrb[0].mxu0
        %v1279 = vadd.f32 0.0, %v1278
        %v1280 = vpop.f32.mrb[0].mxu0
        %1281 = vdwg.mxu0
        %v1283 = vsel %vm1188, %v282, 0
        %v1286 = vsel %vm1188, %v283, 0
        %v1289 = vsel %vm1188, %v284, 0
        %v1292 = vsel %vm1198, %v1187, 0
        %1294 = vmatprep.subr.mxu0 0.0
        %1295 = vmatpush1.msra.mxu0 %v1292
        %1296 = vmatprep.subr.mxu0 0.0
        %1297 = vmatpush1.msra.mxu0 0.0
        %1298 = vmatprep.subr.mxu0 0.0
        %1299 = vmatpush1.msra.mxu0 0.0
        %1300 = vmatprep.subr.mxu0 0.0
        %1301 = vmatpush1.msra.mxu0 0.0
        %1302 = vmatprep.subr.mxu0 0.0
        %1303 = vmatpush1.msra.mxu0 0.0
        %1304 = vmatprep.subr.mxu0 0.0
        %1305 = vmatpush1.msra.mxu0 0.0
        %1306 = vmatprep.subr.mxu0 0.0
        %1307 = vmatpush1.msra.mxu0 0.0
        %1308 = vmatprep.subr.mxu0 0.0
        %1309 = vmatpush1.msra.mxu0 0.0
        %1310 = vmatprep.subr.mxu0 0.0
        %1311 = vmatpush1.msra.mxu0 0.0
        %1312 = vmatprep.subr.mxu0 0.0
        %1313 = vmatpush1.msra.mxu0 0.0
        %1314 = vmatprep.subr.mxu0 0.0
        %1315 = vmatpush1.msra.mxu0 0.0
        %1316 = vmatprep.subr.mxu0 0.0
        %1317 = vmatpush1.msra.mxu0 0.0
        %1318 = vmatprep.subr.mxu0 0.0
        %1319 = vmatpush1.msra.mxu0 0.0
        %1320 = vmatprep.subr.mxu0 0.0
        %1321 = vmatpush1.msra.mxu0 0.0
        %1322 = vmatprep.subr.mxu0 0.0
        %1323 = vmatpush1.msra.mxu0 0.0
        %1324 = vmatprep.subr.mxu0 0.0
        %1325 = vmatpush1.msra.mxu0 0.0
        %1326 = vmatprep.subr.mxu0 0.0
        %1327 = vmatpush1.msra.mxu0 0.0
        %1328 = vmatprep.subr.mxu0 0.0
        %1329 = vmatpush1.msra.mxu0 0.0
        %1330 = vmatprep.subr.mxu0 0.0
        %1331 = vmatpush1.msra.mxu0 0.0
        %1332 = vmatprep.subr.mxu0 0.0
        %1333 = vmatpush1.msra.mxu0 0.0
        %1334 = vmatprep.subr.mxu0 0.0
        %1335 = vmatpush1.msra.mxu0 0.0
        %1336 = vmatprep.subr.mxu0 0.0
        %1337 = vmatpush1.msra.mxu0 0.0
        %1338 = vmatprep.subr.mxu0 0.0
        %1339 = vmatpush1.msra.mxu0 0.0
        %1340 = vmatprep.subr.mxu0 0.0
        %1341 = vmatpush1.msra.mxu0 0.0
        %1342 = vmatprep.subr.mxu0 0.0
        %1343 = vmatpush1.msra.mxu0 0.0
        %1344 = vmatprep.subr.mxu0 0.0
        %1345 = vmatpush1.msra.mxu0 0.0
        %1346 = vmatprep.subr.mxu0 0.0
        %1347 = vmatpush1.msra.mxu0 0.0
        %1348 = vmatprep.subr.mxu0 0.0
        %1349 = vmatpush1.msra.mxu0 0.0
        %1350 = vmatprep.subr.mxu0 0.0
        %1351 = vmatpush1.msra.mxu0 0.0
        %1352 = vmatprep.subr.mxu0 0.0
        %1353 = vmatpush1.msra.mxu0 0.0
        %1354 = vmatprep.subr.mxu0 0.0
        %1355 = vmatpush1.msra.mxu0 0.0
        %1356 = vmatprep.subr.mxu0 0.0
        %1357 = vmatpush1.msra.mxu0 0.0
        %1358 = vmatprep.mubr.f32.mxu0 0.0
        %1359 = vmatmul.mubr.f32.gmra.mrb[0].mxu0 %v1283
        %v1360 = vpop.f32.mrb[0].mxu0
        %v1361 = vadd.f32 %v1269, %v1360
        %v1362 = vpop.f32.mrb[0].mxu0
        %1363 = vmatprep.mubr.f32.mxu0 0.0
        %1364 = vmatmul.mubr.f32.gmra.mrb[0].mxu0 %v1286
        %v1365 = vpop.f32.mrb[0].mxu0
        %v1366 = vadd.f32 %v1274, %v1365
        %v1367 = vpop.f32.mrb[0].mxu0
        %1368 = vmatprep.mubr.f32.mxu0 0.0
        %1369 = vmatmul.mubr.f32.gmra.mrb[0].mxu0 %v1289
        %v1370 = vpop.f32.mrb[0].mxu0
        %v1371 = vadd.f32 %v1279, %v1370
        %v1372 = vpop.f32.mrb[0].mxu0
        %1373 = vdwg.mxu0
        %1375 = vset.pattern.permute.xlu0 0
        %1376 = vperm.xlu0 %1375, %v288
        %v1377 = vpop.permute.xlu0 %1376
        %1380 = vset.pattern.permute.xlu0 0
        %1381 = vperm.xlu0 %1380, %v289
        %v1382 = vpop.permute.xlu0 %1381
        %1385 = vset.pattern.permute.xlu0 0
        %1386 = vperm.xlu0 %1385, %v290
        %v1387 = vpop.permute.xlu0 %1386
        %v1389 = vadd.f32 %v1361, %v1377
        %v1390 = vadd.f32 %v1366, %v1382
        %v1391 = vadd.f32 %v1371, %v1387
        %v1392 = vsub.f32 0.0, %v1389
        %v1393 = vmul.f32 %v1392, 1.442695
        %v1394 = vpow.pop %v1393
        %v1395 = vadd.f32 %v1394, 1.0
        %v1396 = vrcp.pop %v1395
        %v1397 = vmul.f32 1.0, %v1396
        %v1398 = vsub.f32 0.0, %v1390
        %v1399 = vmul.f32 %v1398, 1.442695
        %v1400 = vpow.pop %v1399
        %v1401 = vadd.f32 %v1400, 1.0
        %v1402 = vrcp.pop %v1401
        %v1403 = vmul.f32 1.0, %v1402
        %vm1406 = vcmask 1040384
        %v1407 = vrot.slane %v1390, 7
        %v1408 = vrot.slane %v1391, 7
        %v1409 = vsel %vm1406, %v1407, %v1408
        %v1411 = vmul.f32 %v1397, %v1409
        %v1413 = vrot.slane %v1411, 6
        %v1415 = vadd.f32 %v1390, %v1413
        %v1416 = vtanh.pop %v1415
        %v1417 = vsub.f32 1.0, %v1397
        %v1418 = vsub.f32 1.0, %v1403
        %v1420 = vrot.slane %v1416, 5
        %v1422 = vmul.f32 %v1417, %v1420
        %v1423 = vmul.f32 %v1418, %v1420
        %v1424 = vrot.slane %v1185, 3
        %v1426 = vmul.f32 %v1397, %v1424
        %v1427 = vmul.f32 %v1403, %v1424
        %v1428 = vadd.f32 %v1422, %v1426
        %v1429 = vadd.f32 %v1423, %v1427
        %s1430 = scalar_lea.vmem %s281, 24
        %1431 = vst [vmem:[%s1430 - $0x5] sm:$0xe0] %v1428
        %1432 = vst [vmem:[%s1430 + $0x3] sm:$0x3] %v1429
        %s1433 = scalar_lea.vmem %s0, 16
        %v1434 = vld [vmem:[%s1433] sm:$0x1f]
        %vm1437 = vcmask 1042432
        %v1438 = vrot.slane %v1428, 5
        %v1439 = vrot.slane %v1429, 5
        %v1440 = vsel %vm1437, %v1438, %v1439
        %v1441 = vsel %vm1198, %v1440, 0
        %1443 = vmatprep.subr.mxu0 0.0
        %1444 = vmatpush1.msra.mxu0 %v1441
        %1445 = vmatprep.subr.mxu0 0.0
        %1446 = vmatpush1.msra.mxu0 0.0
        %1447 = vmatprep.subr.mxu0 0.0
        %1448 = vmatpush1.msra.mxu0 0.0
        %1449 = vmatprep.subr.mxu0 0.0
        %1450 = vmatpush1.msra.mxu0 0.0
        %1451 = vmatprep.subr.mxu0 0.0
        %1452 = vmatpush1.msra.mxu0 0.0
        %1453 = vmatprep.subr.mxu0 0.0
        %1454 = vmatpush1.msra.mxu0 0.0
        %1455 = vmatprep.subr.mxu0 0.0
        %1456 = vmatpush1.msra.mxu0 0.0
        %1457 = vmatprep.subr.mxu0 0.0
        %1458 = vmatpush1.msra.mxu0 0.0
        %1459 = vmatprep.subr.mxu0 0.0
        %1460 = vmatpush1.msra.mxu0 0.0
        %1461 = vmatprep.subr.mxu0 0.0
        %1462 = vmatpush1.msra.mxu0 0.0
        %1463 = vmatprep.subr.mxu0 0.0
        %1464 = vmatpush1.msra.mxu0 0.0
        %1465 = vmatprep.subr.mxu0 0.0
        %1466 = vmatpush1.msra.mxu0 0.0
        %1467 = vmatprep.subr.mxu0 0.0
        %1468 = vmatpush1.msra.mxu0 0.0
        %1469 = vmatprep.subr.mxu0 0.0
        %1470 = vmatpush1.msra.mxu0 0.0
        %1471 = vmatprep.subr.mxu0 0.0
        %1472 = vmatpush1.msra.mxu0 0.0
        %1473 = vmatprep.subr.mxu0 0.0
        %1474 = vmatpush1.msra.mxu0 0.0
        %1475 = vmatprep.subr.mxu0 0.0
        %1476 = vmatpush1.msra.mxu0 0.0
        %1477 = vmatprep.subr.mxu0 0.0
        %1478 = vmatpush1.msra.mxu0 0.0
        %1479 = vmatprep.subr.mxu0 0.0
        %1480 = vmatpush1.msra.mxu0 0.0
        %1481 = vmatprep.subr.mxu0 0.0
        %1482 = vmatpush1.msra.mxu0 0.0
        %1483 = vmatprep.subr.mxu0 0.0
        %1484 = vmatpush1.msra.mxu0 0.0
        %1485 = vmatprep.subr.mxu0 0.0
        %1486 = vmatpush1.msra.mxu0 0.0
        %1487 = vmatprep.subr.mxu0 0.0
        %1488 = vmatpush1.msra.mxu0 0.0
        %1489 = vmatprep.subr.mxu0 0.0
        %1490 = vmatpush1.msra.mxu0 0.0
        %1491 = vmatprep.subr.mxu0 0.0
        %1492 = vmatpush1.msra.mxu0 0.0
        %1493 = vmatprep.subr.mxu0 0.0
        %1494 = vmatpush1.msra.mxu0 0.0
        %1495 = vmatprep.subr.mxu0 0.0
        %1496 = vmatpush1.msra.mxu0 0.0
        %1497 = vmatprep.subr.mxu0 0.0
        %1498 = vmatpush1.msra.mxu0 0.0
        %1499 = vmatprep.subr.mxu0 0.0
        %1500 = vmatpush1.msra.mxu0 0.0
        %1501 = vmatprep.subr.mxu0 0.0
        %1502 = vmatpush1.msra.mxu0 0.0
        %1503 = vmatprep.subr.mxu0 0.0
        %1504 = vmatpush1.msra.mxu0 0.0
        %1505 = vmatprep.subr.mxu0 0.0
        %1506 = vmatpush1.msra.mxu0 0.0
        %1507 = vmatprep.mubr.f32.mxu0 0.0
        %1508 = vmatmul.mubr.f32.gmra.mrb[0].mxu0 %v1190
        %v1509 = vpop.f32.mrb[0].mxu0
        %v1510 = vadd.f32 0.0, %v1509
        %v1511 = vpop.f32.mrb[0].mxu0
        %1512 = vmatprep.mubr.f32.mxu0 0.0
        %1513 = vmatmul.mubr.f32.gmra.mrb[0].mxu0 %v1193
        %v1514 = vpop.f32.mrb[0].mxu0
        %v1515 = vadd.f32 0.0, %v1514
        %v1516 = vpop.f32.mrb[0].mxu0
        %1517 = vmatprep.mubr.f32.mxu0 0.0
        %1518 = vmatmul.mubr.f32.gmra.mrb[0].mxu0 %v1196
        %v1519 = vpop.f32.mrb[0].mxu0
        %v1520 = vadd.f32 0.0, %v1519
        %v1521 = vpop.f32.mrb[0].mxu0
        %1522 = vdwg.mxu0
        %v1524 = vsel %vm1198, %v1434, 0
        %1526 = vmatprep.subr.mxu0 0.0
        %1527 = vmatpush1.msra.mxu0 %v1524
        %1528 = vmatprep.subr.mxu0 0.0
        %1529 = vmatpush1.msra.mxu0 0.0
        %1530 = vmatprep.subr.mxu0 0.0
        %1531 = vmatpush1.msra.mxu0 0.0
        %1532 = vmatprep.subr.mxu0 0.0
        %1533 = vmatpush1.msra.mxu0 0.0
        %1534 = vmatprep.subr.mxu0 0.0
        %1535 = vmatpush1.msra.mxu0 0.0
        %1536 = vmatprep.subr.mxu0 0.0
        %1537 = vmatpush1.msra.mxu0 0.0
        %1538 = vmatprep.subr.mxu0 0.0
        %1539 = vmatpush1.msra.mxu0 0.0
        %1540 = vmatprep.subr.mxu0 0.0
        %1541 = vmatpush1.msra.mxu0 0.0
        %1542 = vmatprep.subr.mxu0 0.0
        %1543 = vmatpush1.msra.mxu0 0.0
        %1544 = vmatprep.subr.mxu0 0.0
        %1545 = vmatpush1.msra.mxu0 0.0
        %1546 = vmatprep.subr.mxu0 0.0
        %1547 = vmatpush1.msra.mxu0 0.0
        %1548 = vmatprep.subr.mxu0 0.0
        %1549 = vmatpush1.msra.mxu0 0.0
        %1550 = vmatprep.subr.mxu0 0.0
        %1551 = vmatpush1.msra.mxu0 0.0
        %1552 = vmatprep.subr.mxu0 0.0
        %1553 = vmatpush1.msra.mxu0 0.0
        %1554 = vmatprep.subr.mxu0 0.0
        %1555 = vmatpush1.msra.mxu0 0.0
        %1556 = vmatprep.subr.mxu0 0.0
        %1557 = vmatpush1.msra.mxu0 0.0
        %1558 = vmatprep.subr.mxu0 0.0
        %1559 = vmatpush1.msra.mxu0 0.0
        %1560 = vmatprep.subr.mxu0 0.0
        %1561 = vmatpush1.msra.mxu0 0.0
        %1562 = vmatprep.subr.mxu0 0.0
        %1563 = vmatpush1.msra.mxu0 0.0
        %1564 = vmatprep.subr.mxu0 0.0
        %1565 = vmatpush1.msra.mxu0 0.0
        %1566 = vmatprep.subr.mxu0 0.0
        %1567 = vmatpush1.msra.mxu0 0.0
        %1568 = vmatprep.subr.mxu0 0.0
        %1569 = vmatpush1.msra.mxu0 0.0
        %1570 = vmatprep.subr.mxu0 0.0
        %1571 = vmatpush1.msra.mxu0 0.0
        %1572 = vmatprep.subr.mxu0 0.0
        %1573 = vmatpush1.msra.mxu0 0.0
        %1574 = vmatprep.subr.mxu0 0.0
        %1575 = vmatpush1.msra.mxu0 0.0
        %1576 = vmatprep.subr.mxu0 0.0
        %1577 = vmatpush1.msra.mxu0 0.0
        %1578 = vmatprep.subr.mxu0 0.0
        %1579 = vmatpush1.msra.mxu0 0.0
        %1580 = vmatprep.subr.mxu0 0.0
        %1581 = vmatpush1.msra.mxu0 0.0
        %1582 = vmatprep.subr.mxu0 0.0
        %1583 = vmatpush1.msra.mxu0 0.0
        %1584 = vmatprep.subr.mxu0 0.0
        %1585 = vmatpush1.msra.mxu0 0.0
        %1586 = vmatprep.subr.mxu0 0.0
        %1587 = vmatpush1.msra.mxu0 0.0
        %1588 = vmatprep.subr.mxu0 0.0
        %1589 = vmatpush1.msra.mxu0 0.0
        %1590 = vmatprep.mubr.f32.mxu0 0.0
        %1591 = vmatmul.mubr.f32.gmra.mrb[0].mxu0 %v1283
        %v1592 = vpop.f32.mrb[0].mxu0
        %v1593 = vadd.f32 %v1510, %v1592
        %v1594 = vpop.f32.mrb[0].mxu0
        %1595 = vmatprep.mubr.f32.mxu0 0.0
        %1596 = vmatmul.mubr.f32.gmra.mrb[0].mxu0 %v1286
        %v1597 = vpop.f32.mrb[0].mxu0
        %v1598 = vadd.f32 %v1515, %v1597
        %v1599 = vpop.f32.mrb[0].mxu0
        %1600 = vmatprep.mubr.f32.mxu0 0.0
        %1601 = vmatmul.mubr.f32.gmra.mrb[0].mxu0 %v1289
        %v1602 = vpop.f32.mrb[0].mxu0
        %v1603 = vadd.f32 %v1520, %v1602
        %v1604 = vpop.f32.mrb[0].mxu0
        %1605 = vdwg.mxu0
        %v1606 = vadd.f32 %v1593, %v1377
        %v1607 = vadd.f32 %v1598, %v1382
        %v1608 = vadd.f32 %v1603, %v1387
        %v1609 = vsub.f32 0.0, %v1606
        %v1610 = vmul.f32 %v1609, 1.442695
        %v1611 = vpow.pop %v1610
        %v1612 = vadd.f32 %v1611, 1.0
        %v1613 = vrcp.pop %v1612
        %v1614 = vmul.f32 1.0, %v1613
        %v1615 = vsub.f32 0.0, %v1607
        %v1616 = vmul.f32 %v1615, 1.442695
        %v1617 = vpow.pop %v1616
        %v1618 = vadd.f32 %v1617, 1.0
        %v1619 = vrcp.pop %v1618
        %v1620 = vmul.f32 1.0, %v1619
        %v1623 = vrot.slane %v1607, 7
        %v1624 = vrot.slane %v1608, 7
        %v1625 = vsel %vm1406, %v1623, %v1624
        %v1627 = vmul.f32 %v1614, %v1625
        %v1629 = vrot.slane %v1627, 6
        %v1631 = vadd.f32 %v1607, %v1629
        %v1632 = vtanh.pop %v1631
        %v1633 = vsub.f32 1.0, %v1614
        %v1634 = vsub.f32 1.0, %v1620
        %v1636 = vrot.slane %v1632, 5
        %v1638 = vmul.f32 %v1633, %v1636
        %v1639 = vmul.f32 %v1634, %v1636
        %v1640 = vmul.f32 %v1614, %v1428
        %v1641 = vmul.f32 %v1620, %v1429
        %v1642 = vadd.f32 %v1638, %v1640
        %v1643 = vadd.f32 %v1639, %v1641
        %s1644 = scalar_lea.vmem %s281, 16
        %1645 = vst [vmem:[%s1644 - $0x5] sm:$0xe0] %v1642
        %1646 = vst [vmem:[%s1644 + $0x3] sm:$0x3] %v1643
        %s1647 = scalar_lea.vmem %s0, 8
        %v1648 = vld [vmem:[%s1647] sm:$0x1f]
        %v1651 = vrot.slane %v1642, 5
        %v1652 = vrot.slane %v1643, 5
        %v1653 = vsel %vm1437, %v1651, %v1652
        %v1654 = vsel %vm1198, %v1653, 0
        %1656 = vmatprep.subr.mxu0 0.0
        %1657 = vmatpush1.msra.mxu0 %v1654
        %1658 = vmatprep.subr.mxu0 0.0
        %1659 = vmatpush1.msra.mxu0 0.0
        %1660 = vmatprep.subr.mxu0 0.0
        %1661 = vmatpush1.msra.mxu0 0.0
        %1662 = vmatprep.subr.mxu0 0.0
        %1663 = vmatpush1.msra.mxu0 0.0
        %1664 = vmatprep.subr.mxu0 0.0
        %1665 = vmatpush1.msra.mxu0 0.0
        %1666 = vmatprep.subr.mxu0 0.0
        %1667 = vmatpush1.msra.mxu0 0.0
        %1668 = vmatprep.subr.mxu0 0.0
        %1669 = vmatpush1.msra.mxu0 0.0
        %1670 = vmatprep.subr.mxu0 0.0
        %1671 = vmatpush1.msra.mxu0 0.0
        %1672 = vmatprep.subr.mxu0 0.0
        %1673 = vmatpush1.msra.mxu0 0.0
        %1674 = vmatprep.subr.mxu0 0.0
        %1675 = vmatpush1.msra.mxu0 0.0
        %1676 = vmatprep.subr.mxu0 0.0
        %1677 = vmatpush1.msra.mxu0 0.0
        %1678 = vmatprep.subr.mxu0 0.0
        %1679 = vmatpush1.msra.mxu0 0.0
        %1680 = vmatprep.subr.mxu0 0.0
        %1681 = vmatpush1.msra.mxu0 0.0
        %1682 = vmatprep.subr.mxu0 0.0
        %1683 = vmatpush1.msra.mxu0 0.0
        %1684 = vmatprep.subr.mxu0 0.0
        %1685 = vmatpush1.msra.mxu0 0.0
        %1686 = vmatprep.subr.mxu0 0.0
        %1687 = vmatpush1.msra.mxu0 0.0
        %1688 = vmatprep.subr.mxu0 0.0
        %1689 = vmatpush1.msra.mxu0 0.0
        %1690 = vmatprep.subr.mxu0 0.0
        %1691 = vmatpush1.msra.mxu0 0.0
        %1692 = vmatprep.subr.mxu0 0.0
        %1693 = vmatpush1.msra.mxu0 0.0
        %1694 = vmatprep.subr.mxu0 0.0
        %1695 = vmatpush1.msra.mxu0 0.0
        %1696 = vmatprep.subr.mxu0 0.0
        %1697 = vmatpush1.msra.mxu0 0.0
        %1698 = vmatprep.subr.mxu0 0.0
        %1699 = vmatpush1.msra.mxu0 0.0
        %1700 = vmatprep.subr.mxu0 0.0
        %1701 = vmatpush1.msra.mxu0 0.0
        %1702 = vmatprep.subr.mxu0 0.0
        %1703 = vmatpush1.msra.mxu0 0.0
        %1704 = vmatprep.subr.mxu0 0.0
        %1705 = vmatpush1.msra.mxu0 0.0
        %1706 = vmatprep.subr.mxu0 0.0
        %1707 = vmatpush1.msra.mxu0 0.0
        %1708 = vmatprep.subr.mxu0 0.0
        %1709 = vmatpush1.msra.mxu0 0.0
        %1710 = vmatprep.subr.mxu0 0.0
        %1711 = vmatpush1.msra.mxu0 0.0
        %1712 = vmatprep.subr.mxu0 0.0
        %1713 = vmatpush1.msra.mxu0 0.0
        %1714 = vmatprep.subr.mxu0 0.0
        %1715 = vmatpush1.msra.mxu0 0.0
        %1716 = vmatprep.subr.mxu0 0.0
        %1717 = vmatpush1.msra.mxu0 0.0
        %1718 = vmatprep.subr.mxu0 0.0
        %1719 = vmatpush1.msra.mxu0 0.0
        %1720 = vmatprep.mubr.f32.mxu0 0.0
        %1721 = vmatmul.mubr.f32.gmra.mrb[0].mxu0 %v1190
        %v1722 = vpop.f32.mrb[0].mxu0
        %v1723 = vadd.f32 0.0, %v1722
        %v1724 = vpop.f32.mrb[0].mxu0
        %1725 = vmatprep.mubr.f32.mxu0 0.0
        %1726 = vmatmul.mubr.f32.gmra.mrb[0].mxu0 %v1193
        %v1727 = vpop.f32.mrb[0].mxu0
        %v1728 = vadd.f32 0.0, %v1727
        %v1729 = vpop.f32.mrb[0].mxu0
        %1730 = vmatprep.mubr.f32.mxu0 0.0
        %1731 = vmatmul.mubr.f32.gmra.mrb[0].mxu0 %v1196
        %v1732 = vpop.f32.mrb[0].mxu0
        %v1733 = vadd.f32 0.0, %v1732
        %v1734 = vpop.f32.mrb[0].mxu0
        %1735 = vdwg.mxu0
        %v1737 = vsel %vm1198, %v1648, 0
        %1739 = vmatprep.subr.mxu0 0.0
        %1740 = vmatpush1.msra.mxu0 %v1737
        %1741 = vmatprep.subr.mxu0 0.0
        %1742 = vmatpush1.msra.mxu0 0.0
        %1743 = vmatprep.subr.mxu0 0.0
        %1744 = vmatpush1.msra.mxu0 0.0
        %1745 = vmatprep.subr.mxu0 0.0
        %1746 = vmatpush1.msra.mxu0 0.0
        %1747 = vmatprep.subr.mxu0 0.0
        %1748 = vmatpush1.msra.mxu0 0.0
        %1749 = vmatprep.subr.mxu0 0.0
        %1750 = vmatpush1.msra.mxu0 0.0
        %1751 = vmatprep.subr.mxu0 0.0
        %1752 = vmatpush1.msra.mxu0 0.0
        %1753 = vmatprep.subr.mxu0 0.0
        %1754 = vmatpush1.msra.mxu0 0.0
        %1755 = vmatprep.subr.mxu0 0.0
        %1756 = vmatpush1.msra.mxu0 0.0
        %1757 = vmatprep.subr.mxu0 0.0
        %1758 = vmatpush1.msra.mxu0 0.0
        %1759 = vmatprep.subr.mxu0 0.0
        %1760 = vmatpush1.msra.mxu0 0.0
        %1761 = vmatprep.subr.mxu0 0.0
        %1762 = vmatpush1.msra.mxu0 0.0
        %1763 = vmatprep.subr.mxu0 0.0
        %1764 = vmatpush1.msra.mxu0 0.0
        %1765 = vmatprep.subr.mxu0 0.0
        %1766 = vmatpush1.msra.mxu0 0.0
        %1767 = vmatprep.subr.mxu0 0.0
        %1768 = vmatpush1.msra.mxu0 0.0
        %1769 = vmatprep.subr.mxu0 0.0
        %1770 = vmatpush1.msra.mxu0 0.0
        %1771 = vmatprep.subr.mxu0 0.0
        %1772 = vmatpush1.msra.mxu0 0.0
        %1773 = vmatprep.subr.mxu0 0.0
        %1774 = vmatpush1.msra.mxu0 0.0
        %1775 = vmatprep.subr.mxu0 0.0
        %1776 = vmatpush1.msra.mxu0 0.0
        %1777 = vmatprep.subr.mxu0 0.0
        %1778 = vmatpush1.msra.mxu0 0.0
        %1779 = vmatprep.subr.mxu0 0.0
        %1780 = vmatpush1.msra.mxu0 0.0
        %1781 = vmatprep.subr.mxu0 0.0
        %1782 = vmatpush1.msra.mxu0 0.0
        %1783 = vmatprep.subr.mxu0 0.0
        %1784 = vmatpush1.msra.mxu0 0.0
        %1785 = vmatprep.subr.mxu0 0.0
        %1786 = vmatpush1.msra.mxu0 0.0
        %1787 = vmatprep.subr.mxu0 0.0
        %1788 = vmatpush1.msra.mxu0 0.0
        %1789 = vmatprep.subr.mxu0 0.0
        %1790 = vmatpush1.msra.mxu0 0.0
        %1791 = vmatprep.subr.mxu0 0.0
        %1792 = vmatpush1.msra.mxu0 0.0
        %1793 = vmatprep.subr.mxu0 0.0
        %1794 = vmatpush1.msra.mxu0 0.0
        %1795 = vmatprep.subr.mxu0 0.0
        %1796 = vmatpush1.msra.mxu0 0.0
        %1797 = vmatprep.subr.mxu0 0.0
        %1798 = vmatpush1.msra.mxu0 0.0
        %1799 = vmatprep.subr.mxu0 0.0
        %1800 = vmatpush1.msra.mxu0 0.0
        %1801 = vmatprep.subr.mxu0 0.0
        %1802 = vmatpush1.msra.mxu0 0.0
        %1803 = vmatprep.mubr.f32.mxu0 0.0
        %1804 = vmatmul.mubr.f32.gmra.mrb[0].mxu0 %v1283
        %v1805 = vpop.f32.mrb[0].mxu0
        %v1806 = vadd.f32 %v1723, %v1805
        %v1807 = vpop.f32.mrb[0].mxu0
        %1808 = vmatprep.mubr.f32.mxu0 0.0
        %1809 = vmatmul.mubr.f32.gmra.mrb[0].mxu0 %v1286
        %v1810 = vpop.f32.mrb[0].mxu0
        %v1811 = vadd.f32 %v1728, %v1810
        %v1812 = vpop.f32.mrb[0].mxu0
        %1813 = vmatprep.mubr.f32.mxu0 0.0
        %1814 = vmatmul.mubr.f32.gmra.mrb[0].mxu0 %v1289
        %v1815 = vpop.f32.mrb[0].mxu0
        %v1816 = vadd.f32 %v1733, %v1815
        %v1817 = vpop.f32.mrb[0].mxu0
        %1818 = vdwg.mxu0
        %v1819 = vadd.f32 %v1806, %v1377
        %v1820 = vadd.f32 %v1811, %v1382
        %v1821 = vadd.f32 %v1816, %v1387
        %v1822 = vsub.f32 0.0, %v1819
        %v1823 = vmul.f32 %v1822, 1.442695
        %v1824 = vpow.pop %v1823
        %v1825 = vadd.f32 %v1824, 1.0
        %v1826 = vrcp.pop %v1825
        %v1827 = vmul.f32 1.0, %v1826
        %v1828 = vsub.f32 0.0, %v1820
        %v1829 = vmul.f32 %v1828, 1.442695
        %v1830 = vpow.pop %v1829
        %v1831 = vadd.f32 %v1830, 1.0
        %v1832 = vrcp.pop %v1831
        %v1833 = vmul.f32 1.0, %v1832
        %v1836 = vrot.slane %v1820, 7
        %v1837 = vrot.slane %v1821, 7
        %v1838 = vsel %vm1406, %v1836, %v1837
        %v1840 = vmul.f32 %v1827, %v1838
        %v1842 = vrot.slane %v1840, 6
        %v1844 = vadd.f32 %v1820, %v1842
        %v1845 = vtanh.pop %v1844
        %v1846 = vsub.f32 1.0, %v1827
        %v1847 = vsub.f32 1.0, %v1833
        %v1849 = vrot.slane %v1845, 5
        %v1851 = vmul.f32 %v1846, %v1849
        %v1852 = vmul.f32 %v1847, %v1849
        %v1853 = vmul.f32 %v1827, %v1642
        %v1854 = vmul.f32 %v1833, %v1643
        %v1855 = vadd.f32 %v1851, %v1853
        %v1856 = vadd.f32 %v1852, %v1854
        %s1857 = scalar_lea.vmem %s281, 8
        %1858 = vst [vmem:[%s1857 - $0x5] sm:$0xe0] %v1855
        %1859 = vst [vmem:[%s1857 + $0x3] sm:$0x3] %v1856
        %v1860 = vld [vmem:[%s0] sm:$0x1f]
        %v1863 = vrot.slane %v1855, 5
        %v1864 = vrot.slane %v1856, 5
        %v1865 = vsel %vm1437, %v1863, %v1864
        %v1866 = vsel %vm1198, %v1865, 0
        %1868 = vmatprep.subr.mxu0 0.0
        %1869 = vmatpush1.msra.mxu0 %v1866
        %1870 = vmatprep.subr.mxu0 0.0
        %1871 = vmatpush1.msra.mxu0 0.0
        %1872 = vmatprep.subr.mxu0 0.0
        %1873 = vmatpush1.msra.mxu0 0.0
        %1874 = vmatprep.subr.mxu0 0.0
        %1875 = vmatpush1.msra.mxu0 0.0
        %1876 = vmatprep.subr.mxu0 0.0
        %1877 = vmatpush1.msra.mxu0 0.0
        %1878 = vmatprep.subr.mxu0 0.0
        %1879 = vmatpush1.msra.mxu0 0.0
        %1880 = vmatprep.subr.mxu0 0.0
        %1881 = vmatpush1.msra.mxu0 0.0
        %1882 = vmatprep.subr.mxu0 0.0
        %1883 = vmatpush1.msra.mxu0 0.0
        %1884 = vmatprep.subr.mxu0 0.0
        %1885 = vmatpush1.msra.mxu0 0.0
        %1886 = vmatprep.subr.mxu0 0.0
        %1887 = vmatpush1.msra.mxu0 0.0
        %1888 = vmatprep.subr.mxu0 0.0
        %1889 = vmatpush1.msra.mxu0 0.0
        %1890 = vmatprep.subr.mxu0 0.0
        %1891 = vmatpush1.msra.mxu0 0.0
        %1892 = vmatprep.subr.mxu0 0.0
        %1893 = vmatpush1.msra.mxu0 0.0
        %1894 = vmatprep.subr.mxu0 0.0
        %1895 = vmatpush1.msra.mxu0 0.0
        %1896 = vmatprep.subr.mxu0 0.0
        %1897 = vmatpush1.msra.mxu0 0.0
        %1898 = vmatprep.subr.mxu0 0.0
        %1899 = vmatpush1.msra.mxu0 0.0
        %1900 = vmatprep.subr.mxu0 0.0
        %1901 = vmatpush1.msra.mxu0 0.0
        %1902 = vmatprep.subr.mxu0 0.0
        %1903 = vmatpush1.msra.mxu0 0.0
        %1904 = vmatprep.subr.mxu0 0.0
        %1905 = vmatpush1.msra.mxu0 0.0
        %1906 = vmatprep.subr.mxu0 0.0
        %1907 = vmatpush1.msra.mxu0 0.0
        %1908 = vmatprep.subr.mxu0 0.0
        %1909 = vmatpush1.msra.mxu0 0.0
        %1910 = vmatprep.subr.mxu0 0.0
        %1911 = vmatpush1.msra.mxu0 0.0
        %1912 = vmatprep.subr.mxu0 0.0
        %1913 = vmatpush1.msra.mxu0 0.0
        %1914 = vmatprep.subr.mxu0 0.0
        %1915 = vmatpush1.msra.mxu0 0.0
        %1916 = vmatprep.subr.mxu0 0.0
        %1917 = vmatpush1.msra.mxu0 0.0
        %1918 = vmatprep.subr.mxu0 0.0
        %1919 = vmatpush1.msra.mxu0 0.0
        %1920 = vmatprep.subr.mxu0 0.0
        %1921 = vmatpush1.msra.mxu0 0.0
        %1922 = vmatprep.subr.mxu0 0.0
        %1923 = vmatpush1.msra.mxu0 0.0
        %1924 = vmatprep.subr.mxu0 0.0
        %1925 = vmatpush1.msra.mxu0 0.0
        %1926 = vmatprep.subr.mxu0 0.0
        %1927 = vmatpush1.msra.mxu0 0.0
        %1928 = vmatprep.subr.mxu0 0.0
        %1929 = vmatpush1.msra.mxu0 0.0
        %1930 = vmatprep.subr.mxu0 0.0
        %1931 = vmatpush1.msra.mxu0 0.0
        %1932 = vmatprep.mubr.f32.mxu0 0.0
        %1933 = vmatmul.mubr.f32.gmra.mrb[0].mxu0 %v1190
        %v1934 = vpop.f32.mrb[0].mxu0
        %v1935 = vadd.f32 0.0, %v1934
        %v1936 = vpop.f32.mrb[0].mxu0
        %1937 = vmatprep.mubr.f32.mxu0 0.0
        %1938 = vmatmul.mubr.f32.gmra.mrb[0].mxu0 %v1193
        %v1939 = vpop.f32.mrb[0].mxu0
        %v1940 = vadd.f32 0.0, %v1939
        %v1941 = vpop.f32.mrb[0].mxu0
        %1942 = vmatprep.mubr.f32.mxu0 0.0
        %1943 = vmatmul.mubr.f32.gmra.mrb[0].mxu0 %v1196
        %v1944 = vpop.f32.mrb[0].mxu0
        %v1945 = vadd.f32 0.0, %v1944
        %v1946 = vpop.f32.mrb[0].mxu0
        %1947 = vdwg.mxu0
        %v1949 = vsel %vm1198, %v1860, 0
        %1951 = vmatprep.subr.mxu0 0.0
        %1952 = vmatpush1.msra.mxu0 %v1949
        %1953 = vmatprep.subr.mxu0 0.0
        %1954 = vmatpush1.msra.mxu0 0.0
        %1955 = vmatprep.subr.mxu0 0.0
        %1956 = vmatpush1.msra.mxu0 0.0
        %1957 = vmatprep.subr.mxu0 0.0
        %1958 = vmatpush1.msra.mxu0 0.0
        %1959 = vmatprep.subr.mxu0 0.0
        %1960 = vmatpush1.msra.mxu0 0.0
        %1961 = vmatprep.subr.mxu0 0.0
        %1962 = vmatpush1.msra.mxu0 0.0
        %1963 = vmatprep.subr.mxu0 0.0
        %1964 = vmatpush1.msra.mxu0 0.0
        %1965 = vmatprep.subr.mxu0 0.0
        %1966 = vmatpush1.msra.mxu0 0.0
        %1967 = vmatprep.subr.mxu0 0.0
        %1968 = vmatpush1.msra.mxu0 0.0
        %1969 = vmatprep.subr.mxu0 0.0
        %1970 = vmatpush1.msra.mxu0 0.0
        %1971 = vmatprep.subr.mxu0 0.0
        %1972 = vmatpush1.msra.mxu0 0.0
        %1973 = vmatprep.subr.mxu0 0.0
        %1974 = vmatpush1.msra.mxu0 0.0
        %1975 = vmatprep.subr.mxu0 0.0
        %1976 = vmatpush1.msra.mxu0 0.0
        %1977 = vmatprep.subr.mxu0 0.0
        %1978 = vmatpush1.msra.mxu0 0.0
        %1979 = vmatprep.subr.mxu0 0.0
        %1980 = vmatpush1.msra.mxu0 0.0
        %1981 = vmatprep.subr.mxu0 0.0
        %1982 = vmatpush1.msra.mxu0 0.0
        %1983 = vmatprep.subr.mxu0 0.0
        %1984 = vmatpush1.msra.mxu0 0.0
        %1985 = vmatprep.subr.mxu0 0.0
        %1986 = vmatpush1.msra.mxu0 0.0
        %1987 = vmatprep.subr.mxu0 0.0
        %1988 = vmatpush1.msra.mxu0 0.0
        %1989 = vmatprep.subr.mxu0 0.0
        %1990 = vmatpush1.msra.mxu0 0.0
        %1991 = vmatprep.subr.mxu0 0.0
        %1992 = vmatpush1.msra.mxu0 0.0
        %1993 = vmatprep.subr.mxu0 0.0
        %1994 = vmatpush1.msra.mxu0 0.0
        %1995 = vmatprep.subr.mxu0 0.0
        %1996 = vmatpush1.msra.mxu0 0.0
        %1997 = vmatprep.subr.mxu0 0.0
        %1998 = vmatpush1.msra.mxu0 0.0
        %1999 = vmatprep.subr.mxu0 0.0
        %2000 = vmatpush1.msra.mxu0 0.0
        %2001 = vmatprep.subr.mxu0 0.0
        %2002 = vmatpush1.msra.mxu0 0.0
        %2003 = vmatprep.subr.mxu0 0.0
        %2004 = vmatpush1.msra.mxu0 0.0
        %2005 = vmatprep.subr.mxu0 0.0
        %2006 = vmatpush1.msra.mxu0 0.0
        %2007 = vmatprep.subr.mxu0 0.0
        %2008 = vmatpush1.msra.mxu0 0.0
        %2009 = vmatprep.subr.mxu0 0.0
        %2010 = vmatpush1.msra.mxu0 0.0
        %2011 = vmatprep.subr.mxu0 0.0
        %2012 = vmatpush1.msra.mxu0 0.0
        %2013 = vmatprep.subr.mxu0 0.0
        %2014 = vmatpush1.msra.mxu0 0.0
        %2015 = vmatprep.mubr.f32.mxu0 0.0
        %2016 = vmatmul.mubr.f32.gmra.mrb[0].mxu0 %v1283
        %v2017 = vpop.f32.mrb[0].mxu0
        %v2018 = vadd.f32 %v1935, %v2017
        %v2019 = vpop.f32.mrb[0].mxu0
        %2020 = vmatprep.mubr.f32.mxu0 0.0
        %2021 = vmatmul.mubr.f32.gmra.mrb[0].mxu0 %v1286
        %v2022 = vpop.f32.mrb[0].mxu0
        %v2023 = vadd.f32 %v1940, %v2022
        %v2024 = vpop.f32.mrb[0].mxu0
        %2025 = vmatprep.mubr.f32.mxu0 0.0
        %2026 = vmatmul.mubr.f32.gmra.mrb[0].mxu0 %v1289
        %v2027 = vpop.f32.mrb[0].mxu0
        %v2028 = vadd.f32 %v1945, %v2027
        %v2029 = vpop.f32.mrb[0].mxu0
        %2030 = vdwg.mxu0
        %v2031 = vadd.f32 %v2018, %v1377
        %v2032 = vadd.f32 %v2023, %v1382
        %v2033 = vadd.f32 %v2028, %v1387
        %v2034 = vsub.f32 0.0, %v2031
        %v2035 = vmul.f32 %v2034, 1.442695
        %v2036 = vpow.pop %v2035
        %v2037 = vadd.f32 %v2036, 1.0
        %v2038 = vrcp.pop %v2037
        %v2039 = vmul.f32 1.0, %v2038
        %v2040 = vsub.f32 0.0, %v2032
        %v2041 = vmul.f32 %v2040, 1.442695
        %v2042 = vpow.pop %v2041
        %v2043 = vadd.f32 %v2042, 1.0
        %v2044 = vrcp.pop %v2043
        %v2045 = vmul.f32 1.0, %v2044
        %v2048 = vrot.slane %v2032, 7
        %v2049 = vrot.slane %v2033, 7
        %v2050 = vsel %vm1406, %v2048, %v2049
        %v2052 = vmul.f32 %v2039, %v2050
        %v2054 = vrot.slane %v2052, 6
        %v2056 = vadd.f32 %v2032, %v2054
        %v2057 = vtanh.pop %v2056
        %v2058 = vsub.f32 1.0, %v2039
        %v2059 = vsub.f32 1.0, %v2045
        %v2061 = vrot.slane %v2057, 5
        %v2063 = vmul.f32 %v2058, %v2061
        %v2064 = vmul.f32 %v2059, %v2061
        %v2065 = vmul.f32 %v2039, %v1855
        %v2066 = vmul.f32 %v2045, %v1856
        %v2067 = vadd.f32 %v2063, %v2065
        %v2068 = vadd.f32 %v2064, %v2066
        %2069 = vst [vmem:[%s281 - $0x5] sm:$0xe0] %v2067
        %2070 = vst [vmem:[%s281 + $0x3] sm:$0x3] %v2068
      $region48: #{_lambda_.4} parent=39 // pred_fallthru
        _
      %p2071 = scmp.lt.s32.totalorder %s16, 1
      %s2072 = scalar_select %p2071, %s16, 1
      %s2073 = smul.addr %s2072, 4
      %s2074 = smul.addr %s2073, 8
      %s2075 = scalar_lea.vmem %s5, %s2074
      // Predicated region
      $region49: #{_lambda_.4} parent=39 // pred_check
        %p2076 = pneg %p159
      $region50: #{_lambda_.4} parent=39 // pred_check_branch
        %2078 = sbr.rel (%p2076) target = $region52
      $region51: #{_lambda_.4} parent=39 // pred_region
        _
      $region52: #{_lambda_.4} parent=39 // pred_fallthru
        _
    $region40: #{_lambda_.4} parent=5 // pred_fallthru
      _
    %p2079 = scmp.le.s32.totalorder 2, %s11
    // Predicated region
    $region53: #{_lambda_.4} parent=5 // pred_check
      %p2080 = pneg %p2079
    $region54: #{_lambda_.4} parent=5 // pred_check_branch
      %2082 = sbr.rel (%p2080) target = $region56
    $region55: #{_lambda_.4} parent=5 // pred_region
      %s2083 = ssub.s32 %s11, 2
      // Predicated region
      $region57: #{_lambda_.4} parent=55 // pred_check
        %p2084 = pneg %p165
      $region58: #{_lambda_.4} parent=55 // pred_check_branch
        %2086 = sbr.rel (%p2084) target = $region60
      $region59: #{_lambda_.4} parent=55 // pred_region
        %p2087 = scmp.lt.s32.totalorder %s17, 1
        %s2088 = scalar_select %p2087, %s17, 1
        %s2089 = smul.addr %s2088, 4
        %s2090 = smul.addr %s2089, 8
        %s2091 = scalar_lea.vmem %s5, %s2090
      $region60: #{_lambda_.4} parent=55 // pred_fallthru
        _
    $region56: #{_lambda_.4} parent=5 // pred_fallthru
      _
  $region6: #{_lambda_.4} parent=0 // loop_footer
    %s15 = sadd.s32 1, %s11
  $region7: #{_lambda_.4} parent=0 // loop_footer_branch
    %10 = sbr.rel target = $region3
  $region8: #{_lambda_.4} parent=0 // loop_exit
    _

// kernel: _lambda_.5
$region0: #{_lambda_.5}
  #allocation0 [shape = 'u32[]', space=smem, size = 0x4, offset = 0x4, fixed_abs, tag = 'smem constant byte address 0x4 - core index']
  #allocation1 [shape = 'u32[144,128]{1,0:T(1,128)}', space=vmem, size = 0x12000, scoped, tag = 'internal scratch']
  %s0 = inlined_call_operand.vmem [shape: f32[2,4,5,2,8,8], index: 0, kind: input, shape index: {}]
  %s1 = inlined_call_operand.vmem [shape: f32[4,5], index: 1, kind: input, shape index: {}]
  %s2 = inlined_call_operand.vmem [shape: f32[4], index: 2, kind: input, shape index: {}]
  %s3 = inlined_call_operand.vmem [shape: f32[4], index: 3, kind: input, shape index: {}]
  %s4 = inlined_call_operand.vmem [shape: f32[4], index: 4, kind: input, shape index: {}]
  %s5 = inlined_call_operand.vmem [shape: f32[3,4], index: 5, kind: input, shape index: {}]
  %s6 = inlined_call_operand.vmem [shape: f32[3], index: 6, kind: input, shape index: {}]
  %s7 = inlined_call_operand.hbm [shape: f32[2,3,8,8], index: 7, kind: output, shape index: {}]
  %s8 = sld [smem:[#allocation0]]
  $region123: #{_lambda_.5} parent=0
    _
  %s10 = ssub.s32 1, %s8
  %s11 = scalar_select 0, %s10, %s8
  $region1: #{_lambda_.5} parent=0
    #allocation2 [shape = 'u8[327680]{0}', space=vmem, size = 0x50000, scoped, tag = 'input window, operand 0']
    #allocation3 [shape = 'u8[2048]{0}', space=smem, size = 0x800, scoped, tag = 'input window, operand 1, single buffered']
    #allocation4 [shape = 's32[2]{0}', space=sflag, size = 0x8, scoped, tag = 'scoped memory for _lambda_.5']
    #allocation5 [shape = 's32[2]{0}', space=sflag, size = 0x8, scoped, tag = 'scoped memory for _lambda_.5']
    #allocation6 [shape = 'u8[512]{0}', space=smem, size = 0x200, scoped, tag = 'input window, operand 2, single buffered']
    #allocation7 [shape = 's32[1]{0}', space=sflag, size = 0x4, scoped, tag = 'scoped memory for _lambda_.5']
    #allocation8 [shape = 'u8[512]{0}', space=smem, size = 0x200, scoped, tag = 'input window, operand 3, single buffered']
    #allocation9 [shape = 'u8[512]{0}', space=smem, size = 0x200, scoped, tag = 'input window, operand 4, single buffered']
    #allocation10 [shape = 's32[1]{0}', space=sflag, size = 0x4, scoped, tag = 'scoped memory for _lambda_.5']
    #allocation11 [shape = 'u8[2048]{0}', space=smem, size = 0x800, scoped, tag = 'input window, operand 5, single buffered']
    #allocation12 [shape = 'u8[512]{0}', space=smem, size = 0x200, scoped, tag = 'input window, operand 6, single buffered']
    #allocation13 [shape = 's32[1]{0}', space=sflag, size = 0x4, scoped, tag = 'scoped memory for _lambda_.5']
    #allocation14 [shape = 'u8[24576]{0}', space=vmem, size = 0x6000, scoped, tag = 'output window, operand 0']
    %12 = vsyncpa [#allocation5], 0
    %13 = vsyncpa [#allocation7], 0
    %14 = vsyncpa [#allocation10], 0
    %15 = vsyncpa [#allocation13], 0
    %16 = vsyncpa [#allocation4], 0
    %s17 = scalar_lea.sflag [#allocation4], 1
    %18 = vsyncpa %s17, 0
    loop: start=0, step=1, limit=4
    $region2: #{_lambda_.5} parent=1 // loop_pre_header
      _
    $region3: #{_lambda_.5} parent=1 // loop_header
      %s20 = sphi 0, %s24
      %p21 = scmp.ge.s32.totalorder %s20, 4
      %s30 = sphi 0, %s32
      %s33 = sphi 0, %s30
      %s34 = sphi 0, %s33
      %s50 = sphi 0, %s34
      %s54 = sphi 0, %s54
      %s56 = sphi 0, %s54
      %s57 = sphi 0, %s56
      %s71 = sphi 0, %s57
      %s75 = sphi 0, %s75
      %s77 = sphi 0, %s75
      %s78 = sphi 0, %s77
      %s92 = sphi 0, %s78
      %s96 = sphi 0, %s96
      %s98 = sphi 0, %s96
      %s99 = sphi 0, %s98
      %s113 = sphi 0, %s99
      %s117 = sphi 0, %s117
      %s119 = sphi 0, %s117
      %s120 = sphi 0, %s119
      %s134 = sphi 0, %s120
      %s138 = sphi 0, %s138
      %s140 = sphi 0, %s138
      %s141 = sphi 0, %s140
      %s155 = sphi 0, %s141
      %s159 = sphi 0, %s159
      %s161 = sphi 0, %s159
      %s162 = sphi 0, %s161
      %s176 = sphi 0, %s162
      %s182 = sphi 0, %s184
      %s185 = sphi 0, %s182
      %s186 = sphi 0, %s185
      %s202 = sphi 0, %s186
    $region4: #{_lambda_.5} parent=1 // loop_header_branch
      %23 = sbr.rel (%p21) target = $region8
    $region5: #{_lambda_.5} parent=1 // loop_body
      %s25 = ssub.s32 %s20, 1
      %s26 = ssub.s32 %s20, 2
      %s27 = sadd.s32 %s20, 1
      %s28 = ssub.s32 %s20, %s27
      %p29 = scmp.eq.s32.totalorder %s28, 0
      %s31 = sadd.s32 %s30, 1
      %s32 = scalar_select %p29, %s30, %s31
      %p35 = pneg %p29
      %p36 = scmp.eq.s32.totalorder %s20, 1
      %p37 = por %p35, %p36
      %p38 = scmp.ne.s32.totalorder %s30, %s33
      %p39 = scmp.eq.s32.totalorder %s20, 0
      %p40 = por %p38, %p39
      %p41 = scmp.ne.s32.totalorder %s30, %s33
      %p42 = scmp.eq.s32.totalorder %s25, 1
      %p43 = por %p41, %p42
      %p44 = scmp.ne.s32.totalorder %s33, %s34
      %p45 = scmp.eq.s32.totalorder %s25, 0
      %p46 = por %p44, %p45
      %p47 = scmp.ne.s32.totalorder %s33, %s34
      %p48 = scmp.eq.s32.totalorder %s26, 1
      %p49 = por %p47, %p48
      %p51 = scmp.ne.s32.totalorder %s34, %s50
      %p52 = scmp.eq.s32.totalorder %s26, 0
      %p53 = por %p51, %p52
      %s55 = sadd.s32 %s54, 1
      %p58 = scmp.eq.s32.totalorder %s20, 1
      %p59 = scmp.ne.s32.totalorder %s54, %s56
      %p60 = scmp.eq.s32.totalorder %s20, 0
      %p61 = por %p59, %p60
      %p62 = scmp.ne.s32.totalorder %s54, %s56
      %p63 = scmp.eq.s32.totalorder %s25, 1
      %p64 = por %p62, %p63
      %p65 = scmp.ne.s32.totalorder %s56, %s57
      %p66 = scmp.eq.s32.totalorder %s25, 0
      %p67 = por %p65, %p66
      %p68 = scmp.ne.s32.totalorder %s56, %s57
      %p69 = scmp.eq.s32.totalorder %s26, 1
      %p70 = por %p68, %p69
      %p72 = scmp.ne.s32.totalorder %s57, %s71
      %p73 = scmp.eq.s32.totalorder %s26, 0
      %p74 = por %p72, %p73
      %s76 = sadd.s32 %s75, 1
      %p79 = scmp.eq.s32.totalorder %s20, 1
      %p80 = scmp.ne.s32.totalorder %s75, %s77
      %p81 = scmp.eq.s32.totalorder %s20, 0
      %p82 = por %p80, %p81
      %p83 = scmp.ne.s32.totalorder %s75, %s77
      %p84 = scmp.eq.s32.totalorder %s25, 1
      %p85 = por %p83, %p84
      %p86 = scmp.ne.s32.totalorder %s77, %s78
      %p87 = scmp.eq.s32.totalorder %s25, 0
      %p88 = por %p86, %p87
      %p89 = scmp.ne.s32.totalorder %s77, %s78
      %p90 = scmp.eq.s32.totalorder %s26, 1
      %p91 = por %p89, %p90
      %p93 = scmp.ne.s32.totalorder %s78, %s92
      %p94 = scmp.eq.s32.totalorder %s26, 0
      %p95 = por %p93, %p94
      %s97 = sadd.s32 %s96, 1
      %p100 = scmp.eq.s32.totalorder %s20, 1
      %p101 = scmp.ne.s32.totalorder %s96, %s98
      %p102 = scmp.eq.s32.totalorder %s20, 0
      %p103 = por %p101, %p102
      %p104 = scmp.ne.s32.totalorder %s96, %s98
      %p105 = scmp.eq.s32.totalorder %s25, 1
      %p106 = por %p104, %p105
      %p107 = scmp.ne.s32.totalorder %s98, %s99
      %p108 = scmp.eq.s32.totalorder %s25, 0
      %p109 = por %p107, %p108
      %p110 = scmp.ne.s32.totalorder %s98, %s99
      %p111 = scmp.eq.s32.totalorder %s26, 1
      %p112 = por %p110, %p111
      %p114 = scmp.ne.s32.totalorder %s99, %s113
      %p115 = scmp.eq.s32.totalorder %s26, 0
      %p116 = por %p114, %p115
      %s118 = sadd.s32 %s117, 1
      %p121 = scmp.eq.s32.totalorder %s20, 1
      %p122 = scmp.ne.s32.totalorder %s117, %s119
      %p123 = scmp.eq.s32.totalorder %s20, 0
      %p124 = por %p122, %p123
      %p125 = scmp.ne.s32.totalorder %s117, %s119
      %p126 = scmp.eq.s32.totalorder %s25, 1
      %p127 = por %p125, %p126
      %p128 = scmp.ne.s32.totalorder %s119, %s120
      %p129 = scmp.eq.s32.totalorder %s25, 0
      %p130 = por %p128, %p129
      %p131 = scmp.ne.s32.totalorder %s119, %s120
      %p132 = scmp.eq.s32.totalorder %s26, 1
      %p133 = por %p131, %p132
      %p135 = scmp.ne.s32.totalorder %s120, %s134
      %p136 = scmp.eq.s32.totalorder %s26, 0
      %p137 = por %p135, %p136
      %s139 = sadd.s32 %s138, 1
      %p142 = scmp.eq.s32.totalorder %s20, 1
      %p143 = scmp.ne.s32.totalorder %s138, %s140
      %p144 = scmp.eq.s32.totalorder %s20, 0
      %p145 = por %p143, %p144
      %p146 = scmp.ne.s32.totalorder %s138, %s140
      %p147 = scmp.eq.s32.totalorder %s25, 1
      %p148 = por %p146, %p147
      %p149 = scmp.ne.s32.totalorder %s140, %s141
      %p150 = scmp.eq.s32.totalorder %s25, 0
      %p151 = por %p149, %p150
      %p152 = scmp.ne.s32.totalorder %s140, %s141
      %p153 = scmp.eq.s32.totalorder %s26, 1
      %p154 = por %p152, %p153
      %p156 = scmp.ne.s32.totalorder %s141, %s155
      %p157 = scmp.eq.s32.totalorder %s26, 0
      %p158 = por %p156, %p157
      %s160 = sadd.s32 %s159, 1
      %p163 = scmp.eq.s32.totalorder %s20, 1
      %p164 = scmp.ne.s32.totalorder %s159, %s161
      %p165 = scmp.eq.s32.totalorder %s20, 0
      %p166 = por %p164, %p165
      %p167 = scmp.ne.s32.totalorder %s159, %s161
      %p168 = scmp.eq.s32.totalorder %s25, 1
      %p169 = por %p167, %p168
      %p170 = scmp.ne.s32.totalorder %s161, %s162
      %p171 = scmp.eq.s32.totalorder %s25, 0
      %p172 = por %p170, %p171
      %p173 = scmp.ne.s32.totalorder %s161, %s162
      %p174 = scmp.eq.s32.totalorder %s26, 1
      %p175 = por %p173, %p174
      %p177 = scmp.ne.s32.totalorder %s162, %s176
      %p178 = scmp.eq.s32.totalorder %s26, 0
      %p179 = por %p177, %p178
      %s180 = ssub.s32 %s20, %s27
      %p181 = scmp.eq.s32.totalorder %s180, 0
      %s183 = sadd.s32 %s182, 1
      %s184 = scalar_select %p181, %s182, %s183
      %p187 = pneg %p181
      %p188 = scmp.eq.s32.totalorder %s20, 1
      %p189 = por %p187, %p188
      %p190 = scmp.ne.s32.totalorder %s182, %s185
      %p191 = scmp.eq.s32.totalorder %s20, 0
      %p192 = por %p190, %p191
      %p193 = scmp.ne.s32.totalorder %s182, %s185
      %p194 = scmp.eq.s32.totalorder %s25, 1
      %p195 = por %p193, %p194
      %p196 = scmp.ne.s32.totalorder %s185, %s186
      %p197 = scmp.eq.s32.totalorder %s25, 0
      %p198 = por %p196, %p197
      %p199 = scmp.ne.s32.totalorder %s185, %s186
      %p200 = scmp.eq.s32.totalorder %s26, 1
      %p201 = por %p199, %p200
      %p203 = scmp.ne.s32.totalorder %s186, %s202
      %p204 = scmp.eq.s32.totalorder %s26, 0
      %p205 = por %p203, %p204
      %p206 = scmp.le.s32.totalorder 1, %s20
      %p207 = scmp.lt.s32.totalorder %s20, 3
      %p208 = pnand %p206, %p207
      %p209 = pneg %p208
      // Predicated region
      $region9: #{_lambda_.5} parent=5 // pred_check
        _
      $region10: #{_lambda_.5} parent=5 // pred_check_branch
        %211 = sbr.rel (%p208) target = $region12
      $region11: #{_lambda_.5} parent=5 // pred_region
        %s212 = ssub.s32 %s20, 1
        // Predicated region
        $region13: #{_lambda_.5} parent=11 // pred_check
          %p213 = pneg %p67
        $region14: #{_lambda_.5} parent=11 // pred_check_branch
          %215 = sbr.rel (%p213) target = $region16
        $region15: #{_lambda_.5} parent=11 // pred_region
          %s217 = ssub.s32 64, 64
          %218 = vsyncadd [#allocation5], %s217
          %s220 = sshll.u32 %s1, 4
          %s221 = int_to_ptr.vmem [resolvable:$true] %s220
          %223 = dma.vmem_to_smem %s221, 64, [#allocation3], [#allocation5]
        $region16: #{_lambda_.5} parent=11 // pred_fallthru
          _
        // Predicated region
        $region17: #{_lambda_.5} parent=11 // pred_check
          %p224 = pneg %p88
        $region18: #{_lambda_.5} parent=11 // pred_check_branch
          %226 = sbr.rel (%p224) target = $region20
        $region19: #{_lambda_.5} parent=11 // pred_region
          %s228 = ssub.s32 16, 16
          %229 = vsyncadd [#allocation7], %s228
          %s231 = sshll.u32 %s2, 4
          %s232 = int_to_ptr.vmem [resolvable:$true] %s231
          %234 = dma.vmem_to_smem %s232, 16, [#allocation6], [#allocation7]
        $region20: #{_lambda_.5} parent=11 // pred_fallthru
          _
        // Predicated region
        $region21: #{_lambda_.5} parent=11 // pred_check
          %p235 = pneg %p109
        $region22: #{_lambda_.5} parent=11 // pred_check_branch
          %237 = sbr.rel (%p235) target = $region24
        $region23: #{_lambda_.5} parent=11 // pred_region
          %s239 = ssub.s32 16, 16
          %240 = vsyncadd [#allocation7], %s239
          %s242 = sshll.u32 %s3, 4
          %s243 = int_to_ptr.vmem [resolvable:$true] %s242
          %245 = dma.vmem_to_smem %s243, 16, [#allocation8], [#allocation7]
        $region24: #{_lambda_.5} parent=11 // pred_fallthru
          _
        // Predicated region
        $region25: #{_lambda_.5} parent=11 // pred_check
          %p246 = pneg %p130
        $region26: #{_lambda_.5} parent=11 // pred_check_branch
          %248 = sbr.rel (%p246) target = $region28
        $region27: #{_lambda_.5} parent=11 // pred_region
          %s250 = ssub.s32 16, 16
          %251 = vsyncadd [#allocation10], %s250
          %s253 = sshll.u32 %s4, 4
          %s254 = int_to_ptr.vmem [resolvable:$true] %s253
          %256 = dma.vmem_to_smem %s254, 16, [#allocation9], [#allocation10]
        $region28: #{_lambda_.5} parent=11 // pred_fallthru
          _
        // Predicated region
        $region29: #{_lambda_.5} parent=11 // pred_check
          %p257 = pneg %p151
        $region30: #{_lambda_.5} parent=11 // pred_check_branch
          %259 = sbr.rel (%p257) target = $region32
        $region31: #{_lambda_.5} parent=11 // pred_region
          %s261 = ssub.s32 64, 64
          %262 = vsyncadd [#allocation10], %s261
          %s264 = sshll.u32 %s5, 4
          %s265 = int_to_ptr.vmem [resolvable:$true] %s264
          %267 = dma.vmem_to_smem %s265, 64, [#allocation11], [#allocation10]
        $region32: #{_lambda_.5} parent=11 // pred_fallthru
          _
        // Predicated region
        $region33: #{_lambda_.5} parent=11 // pred_check
          %p268 = pneg %p172
        $region34: #{_lambda_.5} parent=11 // pred_check_branch
          %270 = sbr.rel (%p268) target = $region36
        $region35: #{_lambda_.5} parent=11 // pred_region
          %s272 = ssub.s32 16, 16
          %273 = vsyncadd [#allocation13], %s272
          %s275 = sshll.u32 %s6, 4
          %s276 = int_to_ptr.vmem [resolvable:$true] %s275
          %278 = dma.vmem_to_smem %s276, 16, [#allocation12], [#allocation13]
        $region36: #{_lambda_.5} parent=11 // pred_fallthru
          _
      $region12: #{_lambda_.5} parent=5 // pred_fallthru
        _
      %p279 = scmp.lt.s32.totalorder %s20, 2
      // Predicated region
      $region37: #{_lambda_.5} parent=5 // pred_check
        %p280 = pneg %p279
      $region38: #{_lambda_.5} parent=5 // pred_check_branch
        %282 = sbr.rel (%p280) target = $region40
      $region39: #{_lambda_.5} parent=5 // pred_region
        // Predicated region
        $region41: #{_lambda_.5} parent=39 // pred_check
          %p283 = pneg %p40
        $region42: #{_lambda_.5} parent=39 // pred_check_branch
          %285 = sbr.rel (%p283) target = $region44
        $region43: #{_lambda_.5} parent=39 // pred_region
          %s286 = sand.u32 %s30, 1
          %s287 = sand.u32 %s30, 1
          %s288 = smul.addr %s287, 320
          %s289 = scalar_lea.vmem [#allocation2], %s288
          %s290 = smul.addr %s20, 8
          %s291 = scalar_lea.vmem %s0, %s290
          // Predicated region
          $region45: #{_lambda_.5} parent=43 // pred_check
            _
          $region46: #{_lambda_.5} parent=43 // pred_check_branch
            %293 = sbr.rel (0) target = $region48
          $region47: #{_lambda_.5} parent=43 // pred_region
            // Predicated region
            $region49: #{_lambda_.5} parent=47 // pred_check
              _
            $region50: #{_lambda_.5} parent=47 // pred_check_branch
              %295 = sbr.rel (0) target = $region52
            $region51: #{_lambda_.5} parent=47 // pred_region
              // Predicated region
              $region64: #{_lambda_.5} parent=51 // pred_check
                _
              $region65: #{_lambda_.5} parent=51 // pred_check_branch
                %388 = sbr.rel (0) target = $region67
              $region66: #{_lambda_.5} parent=51 // pred_region
                loop: start=0, step=1, limit=1
                $region68: #{_lambda_.5} parent=66 // loop_pre_header
                  _
                $region69: #{_lambda_.5} parent=66 // loop_header
                  %s390 = sphi 0, %s394
                  %p391 = scmp.ge.s32.totalorder %s390, 1
                  %s395 = sphi %s291, %s291
                  %s396 = sphi %s289, %s289
                $region70: #{_lambda_.5} parent=66 // loop_header_branch
                  %393 = sbr.rel (%p391) target = $region74
                $region71: #{_lambda_.5} parent=66 // loop_body
                  %v397 = vld [vmem:[%s395] sm:$0xff]
                  %398 = vst [vmem:[%s396] sm:$0xff] %v397
                  %v399 = vld [vmem:[%s395 + $0x10] sm:$0xff]
                  %400 = vst [vmem:[%s396 + $0x8] sm:$0xff] %v399
                  %v401 = vld [vmem:[%s395 + $0x20] sm:$0xff]
                  %402 = vst [vmem:[%s396 + $0x10] sm:$0xff] %v401
                  %v403 = vld [vmem:[%s395 + $0x30] sm:$0xff]
                  %404 = vst [vmem:[%s396 + $0x18] sm:$0xff] %v403
                  %v405 = vld [vmem:[%s395 + $0x40] sm:$0xff]
                  %406 = vst [vmem:[%s396 + $0x20] sm:$0xff] %v405
                  %v407 = vld [vmem:[%s395 + $0x50] sm:$0xff]
                  %408 = vst [vmem:[%s396 + $0x28] sm:$0xff] %v407
                  %v409 = vld [vmem:[%s395 + $0x60] sm:$0xff]
                  %410 = vst [vmem:[%s396 + $0x30] sm:$0xff] %v409
                  %v411 = vld [vmem:[%s395 + $0x70] sm:$0xff]
                  %412 = vst [vmem:[%s396 + $0x38] sm:$0xff] %v411
                  %v413 = vld [vmem:[%s395 + $0x80] sm:$0xff]
                  %414 = vst [vmem:[%s396 + $0x40] sm:$0xff] %v413
                  %v415 = vld [vmem:[%s395 + $0x90] sm:$0xff]
                  %416 = vst [vmem:[%s396 + $0x48] sm:$0xff] %v415
                  %v417 = vld [vmem:[%s395 + $0xa0] sm:$0xff]
                  %418 = vst [vmem:[%s396 + $0x50] sm:$0xff] %v417
                  %v419 = vld [vmem:[%s395 + $0xb0] sm:$0xff]
                  %420 = vst [vmem:[%s396 + $0x58] sm:$0xff] %v419
                  %v421 = vld [vmem:[%s395 + $0xc0] sm:$0xff]
                  %422 = vst [vmem:[%s396 + $0x60] sm:$0xff] %v421
                  %v423 = vld [vmem:[%s395 + $0xd0] sm:$0xff]
                  %424 = vst [vmem:[%s396 + $0x68] sm:$0xff] %v423
                  %v425 = vld [vmem:[%s395 + $0xe0] sm:$0xff]
                  %426 = vst [vmem:[%s396 + $0x70] sm:$0xff] %v425
                  %v427 = vld [vmem:[%s395 + $0xf0] sm:$0xff]
                  %428 = vst [vmem:[%s396 + $0x78] sm:$0xff] %v427
                  %v429 = vld [vmem:[%s395 + $0x100] sm:$0xff]
                  %430 = vst [vmem:[%s396 + $0x80] sm:$0xff] %v429
                  %v431 = vld [vmem:[%s395 + $0x110] sm:$0xff]
                  %432 = vst [vmem:[%s396 + $0x88] sm:$0xff] %v431
                  %v433 = vld [vmem:[%s395 + $0x120] sm:$0xff]
                  %434 = vst [vmem:[%s396 + $0x90] sm:$0xff] %v433
                  %v435 = vld [vmem:[%s395 + $0x130] sm:$0xff]
                  %436 = vst [vmem:[%s396 + $0x98] sm:$0xff] %v435
                  %v437 = vld [vmem:[%s395 + $0x140] sm:$0xff]
                  %438 = vst [vmem:[%s396 + $0xa0] sm:$0xff] %v437
                  %v439 = vld [vmem:[%s395 + $0x150] sm:$0xff]
                  %440 = vst [vmem:[%s396 + $0xa8] sm:$0xff] %v439
                  %v441 = vld [vmem:[%s395 + $0x160] sm:$0xff]
                  %442 = vst [vmem:[%s396 + $0xb0] sm:$0xff] %v441
                  %v443 = vld [vmem:[%s395 + $0x170] sm:$0xff]
                  %444 = vst [vmem:[%s396 + $0xb8] sm:$0xff] %v443
                  %v445 = vld [vmem:[%s395 + $0x180] sm:$0xff]
                  %446 = vst [vmem:[%s396 + $0xc0] sm:$0xff] %v445
                  %v447 = vld [vmem:[%s395 + $0x190] sm:$0xff]
                  %448 = vst [vmem:[%s396 + $0xc8] sm:$0xff] %v447
                  %v449 = vld [vmem:[%s395 + $0x1a0] sm:$0xff]
                  %450 = vst [vmem:[%s396 + $0xd0] sm:$0xff] %v449
                  %v451 = vld [vmem:[%s395 + $0x1b0] sm:$0xff]
                  %452 = vst [vmem:[%s396 + $0xd8] sm:$0xff] %v451
                  %v453 = vld [vmem:[%s395 + $0x1c0] sm:$0xff]
                  %454 = vst [vmem:[%s396 + $0xe0] sm:$0xff] %v453
                  %v455 = vld [vmem:[%s395 + $0x1d0] sm:$0xff]
                  %456 = vst [vmem:[%s396 + $0xe8] sm:$0xff] %v455
                  %v457 = vld [vmem:[%s395 + $0x1e0] sm:$0xff]
                  %458 = vst [vmem:[%s396 + $0xf0] sm:$0xff] %v457
                  %v459 = vld [vmem:[%s395 + $0x1f0] sm:$0xff]
                  %460 = vst [vmem:[%s396 + $0xf8] sm:$0xff] %v459
                  %v461 = vld [vmem:[%s395 + $0x200] sm:$0xff]
                  %462 = vst [vmem:[%s396 + $0x100] sm:$0xff] %v461
                  %v463 = vld [vmem:[%s395 + $0x210] sm:$0xff]
                  %464 = vst [vmem:[%s396 + $0x108] sm:$0xff] %v463
                  %v465 = vld [vmem:[%s395 + $0x220] sm:$0xff]
                  %466 = vst [vmem:[%s396 + $0x110] sm:$0xff] %v465
                  %v467 = vld [vmem:[%s395 + $0x230] sm:$0xff]
                  %468 = vst [vmem:[%s396 + $0x118] sm:$0xff] %v467
                  %v469 = vld [vmem:[%s395 + $0x240] sm:$0xff]
                  %470 = vst [vmem:[%s396 + $0x120] sm:$0xff] %v469
                  %v471 = vld [vmem:[%s395 + $0x250] sm:$0xff]
                  %472 = vst [vmem:[%s396 + $0x128] sm:$0xff] %v471
                  %v473 = vld [vmem:[%s395 + $0x260] sm:$0xff]
                  %474 = vst [vmem:[%s396 + $0x130] sm:$0xff] %v473
                  %v475 = vld [vmem:[%s395 + $0x270] sm:$0xff]
                  %476 = vst [vmem:[%s396 + $0x138] sm:$0xff] %v475
                $region72: #{_lambda_.5} parent=66 // loop_footer
                  %s394 = sadd.s32 1, %s390
                $region73: #{_lambda_.5} parent=66 // loop_footer_branch
                  %389 = sbr.rel target = $region69
                $region74: #{_lambda_.5} parent=66 // loop_exit
                  _
              $region67: #{_lambda_.5} parent=51 // pred_fallthru
                _
              // Predicated region
              $region75: #{_lambda_.5} parent=51 // pred_check
                _
              $region76: #{_lambda_.5} parent=51 // pred_check_branch
                %478 = sbr.rel target = $region78
              $region77: #{_lambda_.5} parent=51 // pred_region
                _
              $region78: #{_lambda_.5} parent=51 // pred_fallthru
                _
            $region52: #{_lambda_.5} parent=47 // pred_fallthru
              _
            // Predicated region
            $region53: #{_lambda_.5} parent=47 // pred_check
              _
            $region54: #{_lambda_.5} parent=47 // pred_check_branch
              %297 = sbr.rel target = $region56
            $region55: #{_lambda_.5} parent=47 // pred_region
              loop: start=0, step=1, limit=1
              $region57: #{_lambda_.5} parent=55 // loop_pre_header
                _
              $region58: #{_lambda_.5} parent=55 // loop_header
                %s300 = sphi 0, %s304
                %p301 = scmp.ge.s32.totalorder %s300, 1
                %s305 = sphi %s291, %s291
                %s306 = sphi %s289, %s289
              $region59: #{_lambda_.5} parent=55 // loop_header_branch
                %303 = sbr.rel (%p301) target = $region63
              $region60: #{_lambda_.5} parent=55 // loop_body
                %v307 = vld [vmem:[%s305] sm:$0xff]
                %308 = vst [vmem:[%s306] sm:$0xff] %v307
                %v309 = vld [vmem:[%s305 + $0x10] sm:$0xff]
                %310 = vst [vmem:[%s306 + $0x8] sm:$0xff] %v309
                %v311 = vld [vmem:[%s305 + $0x20] sm:$0xff]
                %312 = vst [vmem:[%s306 + $0x10] sm:$0xff] %v311
                %v313 = vld [vmem:[%s305 + $0x30] sm:$0xff]
                %314 = vst [vmem:[%s306 + $0x18] sm:$0xff] %v313
                %v315 = vld [vmem:[%s305 + $0x40] sm:$0xff]
                %316 = vst [vmem:[%s306 + $0x20] sm:$0xff] %v315
                %v317 = vld [vmem:[%s305 + $0x50] sm:$0xff]
                %318 = vst [vmem:[%s306 + $0x28] sm:$0xff] %v317
                %v319 = vld [vmem:[%s305 + $0x60] sm:$0xff]
                %320 = vst [vmem:[%s306 + $0x30] sm:$0xff] %v319
                %v321 = vld [vmem:[%s305 + $0x70] sm:$0xff]
                %322 = vst [vmem:[%s306 + $0x38] sm:$0xff] %v321
                %v323 = vld [vmem:[%s305 + $0x80] sm:$0xff]
                %324 = vst [vmem:[%s306 + $0x40] sm:$0xff] %v323
                %v325 = vld [vmem:[%s305 + $0x90] sm:$0xff]
                %326 = vst [vmem:[%s306 + $0x48] sm:$0xff] %v325
                %v327 = vld [vmem:[%s305 + $0xa0] sm:$0xff]
                %328 = vst [vmem:[%s306 + $0x50] sm:$0xff] %v327
                %v329 = vld [vmem:[%s305 + $0xb0] sm:$0xff]
                %330 = vst [vmem:[%s306 + $0x58] sm:$0xff] %v329
                %v331 = vld [vmem:[%s305 + $0xc0] sm:$0xff]
                %332 = vst [vmem:[%s306 + $0x60] sm:$0xff] %v331
                %v333 = vld [vmem:[%s305 + $0xd0] sm:$0xff]
                %334 = vst [vmem:[%s306 + $0x68] sm:$0xff] %v333
                %v335 = vld [vmem:[%s305 + $0xe0] sm:$0xff]
                %336 = vst [vmem:[%s306 + $0x70] sm:$0xff] %v335
                %v337 = vld [vmem:[%s305 + $0xf0] sm:$0xff]
                %338 = vst [vmem:[%s306 + $0x78] sm:$0xff] %v337
                %v339 = vld [vmem:[%s305 + $0x100] sm:$0xff]
                %340 = vst [vmem:[%s306 + $0x80] sm:$0xff] %v339
                %v341 = vld [vmem:[%s305 + $0x110] sm:$0xff]
                %342 = vst [vmem:[%s306 + $0x88] sm:$0xff] %v341
                %v343 = vld [vmem:[%s305 + $0x120] sm:$0xff]
                %344 = vst [vmem:[%s306 + $0x90] sm:$0xff] %v343
                %v345 = vld [vmem:[%s305 + $0x130] sm:$0xff]
                %346 = vst [vmem:[%s306 + $0x98] sm:$0xff] %v345
                %v347 = vld [vmem:[%s305 + $0x140] sm:$0xff]
                %348 = vst [vmem:[%s306 + $0xa0] sm:$0xff] %v347
                %v349 = vld [vmem:[%s305 + $0x150] sm:$0xff]
                %350 = vst [vmem:[%s306 + $0xa8] sm:$0xff] %v349
                %v351 = vld [vmem:[%s305 + $0x160] sm:$0xff]
                %352 = vst [vmem:[%s306 + $0xb0] sm:$0xff] %v351
                %v353 = vld [vmem:[%s305 + $0x170] sm:$0xff]
                %354 = vst [vmem:[%s306 + $0xb8] sm:$0xff] %v353
                %v355 = vld [vmem:[%s305 + $0x180] sm:$0xff]
                %356 = vst [vmem:[%s306 + $0xc0] sm:$0xff] %v355
                %v357 = vld [vmem:[%s305 + $0x190] sm:$0xff]
                %358 = vst [vmem:[%s306 + $0xc8] sm:$0xff] %v357
                %v359 = vld [vmem:[%s305 + $0x1a0] sm:$0xff]
                %360 = vst [vmem:[%s306 + $0xd0] sm:$0xff] %v359
                %v361 = vld [vmem:[%s305 + $0x1b0] sm:$0xff]
                %362 = vst [vmem:[%s306 + $0xd8] sm:$0xff] %v361
                %v363 = vld [vmem:[%s305 + $0x1c0] sm:$0xff]
                %364 = vst [vmem:[%s306 + $0xe0] sm:$0xff] %v363
                %v365 = vld [vmem:[%s305 + $0x1d0] sm:$0xff]
                %366 = vst [vmem:[%s306 + $0xe8] sm:$0xff] %v365
                %v367 = vld [vmem:[%s305 + $0x1e0] sm:$0xff]
                %368 = vst [vmem:[%s306 + $0xf0] sm:$0xff] %v367
                %v369 = vld [vmem:[%s305 + $0x1f0] sm:$0xff]
                %370 = vst [vmem:[%s306 + $0xf8] sm:$0xff] %v369
                %v371 = vld [vmem:[%s305 + $0x200] sm:$0xff]
                %372 = vst [vmem:[%s306 + $0x100] sm:$0xff] %v371
                %v373 = vld [vmem:[%s305 + $0x210] sm:$0xff]
                %374 = vst [vmem:[%s306 + $0x108] sm:$0xff] %v373
                %v375 = vld [vmem:[%s305 + $0x220] sm:$0xff]
                %376 = vst [vmem:[%s306 + $0x110] sm:$0xff] %v375
                %v377 = vld [vmem:[%s305 + $0x230] sm:$0xff]
                %378 = vst [vmem:[%s306 + $0x118] sm:$0xff] %v377
                %v379 = vld [vmem:[%s305 + $0x240] sm:$0xff]
                %380 = vst [vmem:[%s306 + $0x120] sm:$0xff] %v379
                %v381 = vld [vmem:[%s305 + $0x250] sm:$0xff]
                %382 = vst [vmem:[%s306 + $0x128] sm:$0xff] %v381
                %v383 = vld [vmem:[%s305 + $0x260] sm:$0xff]
                %384 = vst [vmem:[%s306 + $0x130] sm:$0xff] %v383
                %v385 = vld [vmem:[%s305 + $0x270] sm:$0xff]
                %386 = vst [vmem:[%s306 + $0x138] sm:$0xff] %v385
              $region61: #{_lambda_.5} parent=55 // loop_footer
                %s304 = sadd.s32 1, %s300
              $region62: #{_lambda_.5} parent=55 // loop_footer_branch
                %299 = sbr.rel target = $region58
              $region63: #{_lambda_.5} parent=55 // loop_exit
                _
            $region56: #{_lambda_.5} parent=47 // pred_fallthru
              _
          $region48: #{_lambda_.5} parent=43 // pred_fallthru
            _
          %479 = vnop
        $region44: #{_lambda_.5} parent=39 // pred_fallthru
          _
      $region40: #{_lambda_.5} parent=5 // pred_fallthru
        _
      %p480 = scmp.le.s32.totalorder 1, %s20
      %p481 = scmp.lt.s32.totalorder %s20, 3
      %p482 = pnand %p480, %p481
      %p483 = pneg %p482
      // Predicated region
      $region79: #{_lambda_.5} parent=5 // pred_check
        _
      $region80: #{_lambda_.5} parent=5 // pred_check_branch
        %485 = sbr.rel (%p482) target = $region82
      $region81: #{_lambda_.5} parent=5 // pred_region
        %s486 = ssub.s32 %s20, 1
        %s487 = sand.u32 %s33, 1
        %s488 = sand.u32 %s33, 1
        %s489 = smul.addr %s488, 320
        %s490 = scalar_lea.vmem [#allocation2], %s489
        // Predicated region
        $region83: #{_lambda_.5} parent=81 // pred_check
          %p491 = pneg %p46
        $region84: #{_lambda_.5} parent=81 // pred_check_branch
          %493 = sbr.rel (%p491) target = $region86
        $region85: #{_lambda_.5} parent=81 // pred_region
          _
        $region86: #{_lambda_.5} parent=81 // pred_fallthru
          _
        // Predicated region
        $region87: #{_lambda_.5} parent=81 // pred_check
          %p494 = pneg %p67
        $region88: #{_lambda_.5} parent=81 // pred_check_branch
          %496 = sbr.rel (%p494) target = $region90
        $region89: #{_lambda_.5} parent=81 // pred_region
          %497 = dma.done [#allocation5], 64
        $region90: #{_lambda_.5} parent=81 // pred_fallthru
          _
        // Predicated region
        $region91: #{_lambda_.5} parent=81 // pred_check
          %p498 = pneg %p88
        $region92: #{_lambda_.5} parent=81 // pred_check_branch
          %500 = sbr.rel (%p498) target = $region94
        $region93: #{_lambda_.5} parent=81 // pred_region
          %501 = dma.done [#allocation7], 16
        $region94: #{_lambda_.5} parent=81 // pred_fallthru
          _
        // Predicated region
        $region95: #{_lambda_.5} parent=81 // pred_check
          %p502 = pneg %p109
        $region96: #{_lambda_.5} parent=81 // pred_check_branch
          %504 = sbr.rel (%p502) target = $region98
        $region97: #{_lambda_.5} parent=81 // pred_region
          %505 = dma.done [#allocation7], 16
        $region98: #{_lambda_.5} parent=81 // pred_fallthru
          _
        // Predicated region
        $region99: #{_lambda_.5} parent=81 // pred_check
          %p506 = pneg %p130
        $region100: #{_lambda_.5} parent=81 // pred_check_branch
          %508 = sbr.rel (%p506) target = $region102
        $region101: #{_lambda_.5} parent=81 // pred_region
          %509 = dma.done [#allocation10], 16
        $region102: #{_lambda_.5} parent=81 // pred_fallthru
          _
        // Predicated region
        $region103: #{_lambda_.5} parent=81 // pred_check
          %p510 = pneg %p151
        $region104: #{_lambda_.5} parent=81 // pred_check_branch
          %512 = sbr.rel (%p510) target = $region106
        $region105: #{_lambda_.5} parent=81 // pred_region
          %513 = dma.done [#allocation10], 64
        $region106: #{_lambda_.5} parent=81 // pred_fallthru
          _
        // Predicated region
        $region107: #{_lambda_.5} parent=81 // pred_check
          %p514 = pneg %p172
        $region108: #{_lambda_.5} parent=81 // pred_check_branch
          %516 = sbr.rel (%p514) target = $region110
        $region109: #{_lambda_.5} parent=81 // pred_region
          %517 = dma.done [#allocation13], 16
        $region110: #{_lambda_.5} parent=81 // pred_fallthru
          _
        %518 = sfence
        %s519 = sand.u32 %s33, 1
        %s520 = sand.u32 %s33, 1
        %s521 = smul.addr %s520, 320
        %s522 = scalar_lea.vmem [#allocation2], %s521
        %p523 = pneg %p46
        %p524 = pneg %p43
        %p525 = pneg %p67
        %p526 = pneg %p64
        %p527 = pneg %p88
        %p528 = pneg %p85
        %p529 = pneg %p109
        %p530 = pneg %p106
        %p531 = pneg %p130
        %p532 = pneg %p127
        %p533 = pneg %p151
        %p534 = pneg %p148
        %p535 = pneg %p172
        %p536 = pneg %p169
        %p537 = pneg %p198
        %p538 = pneg %p195
        %s539 = sand.u32 %s185, 1
        %s540 = scalar_lea.sflag [#allocation4], %s539
        %s541 = sand.u32 %s185, 1
        %s542 = smul.addr %s541, 24
        %s543 = scalar_lea.vmem [#allocation14], %s542
        %v544 = vld [vmem:[%s490] sm:$0xff]
        %v545 = vld [vmem:[%s490 + $0x8] sm:$0xff]
        %v546 = vld [vmem:[%s490 + $0x10] sm:$0xff]
        %v547 = vld [vmem:[%s490 + $0x18] sm:$0xff]
        %v548 = vld [vmem:[%s490 + $0x20] sm:$0xff]
        %v549 = vld [vmem:[%s490 + $0x28] sm:$0xff]
        %v550 = vld [vmem:[%s490 + $0x30] sm:$0xff]
        %v551 = vld [vmem:[%s490 + $0x38] sm:$0xff]
        %v552 = vld [vmem:[%s490 + $0x40] sm:$0xff]
        %v553 = vld [vmem:[%s490 + $0x48] sm:$0xff]
        %v554 = vld [vmem:[%s490 + $0x50] sm:$0xff]
        %v555 = vld [vmem:[%s490 + $0x58] sm:$0xff]
        %v556 = vld [vmem:[%s490 + $0x60] sm:$0xff]
        %v557 = vld [vmem:[%s490 + $0x68] sm:$0xff]
        %v558 = vld [vmem:[%s490 + $0x70] sm:$0xff]
        %v559 = vld [vmem:[%s490 + $0x78] sm:$0xff]
        %v560 = vld [vmem:[%s490 + $0x80] sm:$0xff]
        %v561 = vld [vmem:[%s490 + $0x88] sm:$0xff]
        %v562 = vld [vmem:[%s490 + $0x90] sm:$0xff]
        %v563 = vld [vmem:[%s490 + $0x98] sm:$0xff]
        %v564 = vld [vmem:[%s490 + $0xa0] sm:$0xff]
        %v565 = vld [vmem:[%s490 + $0xa8] sm:$0xff]
        %v566 = vld [vmem:[%s490 + $0xb0] sm:$0xff]
        %v567 = vld [vmem:[%s490 + $0xb8] sm:$0xff]
        %v568 = vld [vmem:[%s490 + $0xc0] sm:$0xff]
        %v569 = vld [vmem:[%s490 + $0xc8] sm:$0xff]
        %v570 = vld [vmem:[%s490 + $0xd0] sm:$0xff]
        %v571 = vld [vmem:[%s490 + $0xd8] sm:$0xff]
        %v572 = vld [vmem:[%s490 + $0xe0] sm:$0xff]
        %v573 = vld [vmem:[%s490 + $0xe8] sm:$0xff]
        %v574 = vld [vmem:[%s490 + $0xf0] sm:$0xff]
        %v575 = vld [vmem:[%s490 + $0xf8] sm:$0xff]
        %v576 = vld [vmem:[%s490 + $0x100] sm:$0xff]
        %v577 = vld [vmem:[%s490 + $0x108] sm:$0xff]
        %v578 = vld [vmem:[%s490 + $0x110] sm:$0xff]
        %v579 = vld [vmem:[%s490 + $0x118] sm:$0xff]
        %v580 = vld [vmem:[%s490 + $0x120] sm:$0xff]
        %v581 = vld [vmem:[%s490 + $0x128] sm:$0xff]
        %v582 = vld [vmem:[%s490 + $0x130] sm:$0xff]
        %v583 = vld [vmem:[%s490 + $0x138] sm:$0xff]
        %v584 = vadd.f32 %v544, %v564
        %v585 = vadd.f32 %v545, %v565
        %v586 = vadd.f32 %v546, %v566
        %v587 = vadd.f32 %v547, %v567
        %v588 = vadd.f32 %v548, %v568
        %v589 = vadd.f32 %v549, %v569
        %v590 = vadd.f32 %v550, %v570
        %v591 = vadd.f32 %v551, %v571
        %v592 = vadd.f32 %v552, %v572
        %v593 = vadd.f32 %v553, %v573
        %v594 = vadd.f32 %v554, %v574
        %v595 = vadd.f32 %v555, %v575
        %v596 = vadd.f32 %v556, %v576
        %v597 = vadd.f32 %v557, %v577
        %v598 = vadd.f32 %v558, %v578
        %v599 = vadd.f32 %v559, %v579
        %v600 = vadd.f32 %v560, %v580
        %v601 = vadd.f32 %v561, %v581
        %v602 = vadd.f32 %v562, %v582
        %v603 = vadd.f32 %v563, %v583
        %v604 = vmul.f32 %v584, 0.5
        %v605 = vmul.f32 %v585, 0.5
        %v606 = vmul.f32 %v586, 0.5
        %v607 = vmul.f32 %v587, 0.5
        %v608 = vmul.f32 %v588, 0.5
        %v609 = vmul.f32 %v589, 0.5
        %v610 = vmul.f32 %v590, 0.5
        %v611 = vmul.f32 %v591, 0.5
        %v612 = vmul.f32 %v592, 0.5
        %v613 = vmul.f32 %v593, 0.5
        %v614 = vmul.f32 %v594, 0.5
        %v615 = vmul.f32 %v595, 0.5
        %v616 = vmul.f32 %v596, 0.5
        %v617 = vmul.f32 %v597, 0.5
        %v618 = vmul.f32 %v598, 0.5
        %v619 = vmul.f32 %v599, 0.5
        %v620 = vmul.f32 %v600, 0.5
        %v621 = vmul.f32 %v601, 0.5
        %v622 = vmul.f32 %v602, 0.5
        %v623 = vmul.f32 %v603, 0.5
        %s624 = sld [smem:[#allocation3]]
        %v625 = vstv %s624
        %v626 = vmul.f32 %v625, %v604
        %v627 = vmul.f32 %v625, %v609
        %v628 = vmul.f32 %v625, %v614
        %v629 = vmul.f32 %v625, %v619
        %s630 = sld [smem:[#allocation3 + $0x1]]
        %v631 = vstv %s630
        %v632 = vmul.f32 %v631, %v605
        %v633 = vmul.f32 %v631, %v610
        %v634 = vmul.f32 %v631, %v615
        %v635 = vmul.f32 %v631, %v620
        %v636 = vadd.f32 %v626, %v632
        %v637 = vadd.f32 %v627, %v633
        %v638 = vadd.f32 %v628, %v634
        %v639 = vadd.f32 %v629, %v635
        %s640 = sld [smem:[#allocation3 + $0x2]]
        %v641 = vstv %s640
        %v642 = vmul.f32 %v641, %v606
        %v643 = vmul.f32 %v641, %v611
        %v644 = vmul.f32 %v641, %v616
        %v645 = vmul.f32 %v641, %v621
        %v646 = vadd.f32 %v636, %v642
        %v647 = vadd.f32 %v637, %v643
        %v648 = vadd.f32 %v638, %v644
        %v649 = vadd.f32 %v639, %v645
        %s650 = sld [smem:[#allocation3 + $0x3]]
        %v651 = vstv %s650
        %v652 = vmul.f32 %v651, %v607
        %v653 = vmul.f32 %v651, %v612
        %v654 = vmul.f32 %v651, %v617
        %v655 = vmul.f32 %v651, %v622
        %v656 = vadd.f32 %v646, %v652
        %v657 = vadd.f32 %v647, %v653
        %v658 = vadd.f32 %v648, %v654
        %v659 = vadd.f32 %v649, %v655
        %s660 = sld [smem:[#allocation3 + $0x4]]
        %v661 = vstv %s660
        %v662 = vmul.f32 %v661, %v608
        %v663 = vmul.f32 %v661, %v613
        %v664 = vmul.f32 %v661, %v618
        %v665 = vmul.f32 %v661, %v623
        %v666 = vadd.f32 %v656, %v662
        %v667 = vadd.f32 %v657, %v663
        %v668 = vadd.f32 %v658, %v664
        %v669 = vadd.f32 %v659, %v665
        %s670 = sld [smem:[#allocation6]]
        %v671 = vstv %s670
        %v672 = vadd.f32 %v666, %v671
        %v673 = vadd.f32 %v667, %v671
        %v674 = vadd.f32 %v668, %v671
        %v675 = vadd.f32 %v669, %v671
        %s676 = sld [smem:[#allocation3 + $0x80]]
        %v677 = vstv %s676
        %v678 = vmul.f32 %v677, %v604
        %v679 = vmul.f32 %v677, %v609
        %v680 = vmul.f32 %v677, %v614
        %v681 = vmul.f32 %v677, %v619
        %s682 = sld [smem:[#allocation3 + $0x81]]
        %v683 = vstv %s682
        %v684 = vmul.f32 %v683, %v605
        %v685 = vmul.f32 %v683, %v610
        %v686 = vmul.f32 %v683, %v615
        %v687 = vmul.f32 %v683, %v620
        %v688 = vadd.f32 %v678, %v684
        %v689 = vadd.f32 %v679, %v685
        %v690 = vadd.f32 %v680, %v686
        %v691 = vadd.f32 %v681, %v687
        %s692 = sld [smem:[#allocation3 + $0x82]]
        %v693 = vstv %s692
        %v694 = vmul.f32 %v693, %v606
        %v695 = vmul.f32 %v693, %v611
        %v696 = vmul.f32 %v693, %v616
        %v697 = vmul.f32 %v693, %v621
        %v698 = vadd.f32 %v688, %v694
        %v699 = vadd.f32 %v689, %v695
        %v700 = vadd.f32 %v690, %v696
        %v701 = vadd.f32 %v691, %v697
        %s702 = sld [smem:[#allocation3 + $0x83]]
        %v703 = vstv %s702
        %v704 = vmul.f32 %v703, %v607
        %v705 = vmul.f32 %v703, %v612
        %v706 = vmul.f32 %v703, %v617
        %v707 = vmul.f32 %v703, %v622
        %v708 = vadd.f32 %v698, %v704
        %v709 = vadd.f32 %v699, %v705
        %v710 = vadd.f32 %v700, %v706
        %v711 = vadd.f32 %v701, %v707
        %s712 = sld [smem:[#allocation3 + $0x84]]
        %v713 = vstv %s712
        %v714 = vmul.f32 %v713, %v608
        %v715 = vmul.f32 %v713, %v613
        %v716 = vmul.f32 %v713, %v618
        %v717 = vmul.f32 %v713, %v623
        %v718 = vadd.f32 %v708, %v714
        %v719 = vadd.f32 %v709, %v715
        %v720 = vadd.f32 %v710, %v716
        %v721 = vadd.f32 %v711, %v717
        %s722 = sld [smem:[#allocation6 + $0x1]]
        %v723 = vstv %s722
        %v724 = vadd.f32 %v718, %v723
        %v725 = vadd.f32 %v719, %v723
        %v726 = vadd.f32 %v720, %v723
        %v727 = vadd.f32 %v721, %v723
        %s728 = sld [smem:[#allocation3 + $0x100]]
        %v729 = vstv %s728
        %v730 = vmul.f32 %v729, %v604
        %v731 = vmul.f32 %v729, %v609
        %v732 = vmul.f32 %v729, %v614
        %v733 = vmul.f32 %v729, %v619
        %s734 = sld [smem:[#allocation3 + $0x101]]
        %v735 = vstv %s734
        %v736 = vmul.f32 %v735, %v605
        %v737 = vmul.f32 %v735, %v610
        %v738 = vmul.f32 %v735, %v615
        %v739 = vmul.f32 %v735, %v620
        %v740 = vadd.f32 %v730, %v736
        %v741 = vadd.f32 %v731, %v737
        %v742 = vadd.f32 %v732, %v738
        %v743 = vadd.f32 %v733, %v739
        %s744 = sld [smem:[#allocation3 + $0x102]]
        %v745 = vstv %s744
        %v746 = vmul.f32 %v745, %v606
        %v747 = vmul.f32 %v745, %v611
        %v748 = vmul.f32 %v745, %v616
        %v749 = vmul.f32 %v745, %v621
        %v750 = vadd.f32 %v740, %v746
        %v751 = vadd.f32 %v741, %v747
        %v752 = vadd.f32 %v742, %v748
        %v753 = vadd.f32 %v743, %v749
        %s754 = sld [smem:[#allocation3 + $0x103]]
        %v755 = vstv %s754
        %v756 = vmul.f32 %v755, %v607
        %v757 = vmul.f32 %v755, %v612
        %v758 = vmul.f32 %v755, %v617
        %v759 = vmul.f32 %v755, %v622
        %v760 = vadd.f32 %v750, %v756
        %v761 = vadd.f32 %v751, %v757
        %v762 = vadd.f32 %v752, %v758
        %v763 = vadd.f32 %v753, %v759
        %s764 = sld [smem:[#allocation3 + $0x104]]
        %v765 = vstv %s764
        %v766 = vmul.f32 %v765, %v608
        %v767 = vmul.f32 %v765, %v613
        %v768 = vmul.f32 %v765, %v618
        %v769 = vmul.f32 %v765, %v623
        %v770 = vadd.f32 %v760, %v766
        %v771 = vadd.f32 %v761, %v767
        %v772 = vadd.f32 %v762, %v768
        %v773 = vadd.f32 %v763, %v769
        %s774 = sld [smem:[#allocation6 + $0x2]]
        %v775 = vstv %s774
        %v776 = vadd.f32 %v770, %v775
        %v777 = vadd.f32 %v771, %v775
        %v778 = vadd.f32 %v772, %v775
        %v779 = vadd.f32 %v773, %v775
        %s780 = sld [smem:[#allocation3 + $0x180]]
        %v781 = vstv %s780
        %v782 = vmul.f32 %v781, %v604
        %v783 = vmul.f32 %v781, %v609
        %v784 = vmul.f32 %v781, %v614
        %v785 = vmul.f32 %v781, %v619
        %s786 = sld [smem:[#allocation3 + $0x181]]
        %v787 = vstv %s786
        %v788 = vmul.f32 %v787, %v605
        %v789 = vmul.f32 %v787, %v610
        %v790 = vmul.f32 %v787, %v615
        %v791 = vmul.f32 %v787, %v620
        %v792 = vadd.f32 %v782, %v788
        %v793 = vadd.f32 %v783, %v789
        %v794 = vadd.f32 %v784, %v790
        %v795 = vadd.f32 %v785, %v791
        %s796 = sld [smem:[#allocation3 + $0x182]]
        %v797 = vstv %s796
        %v798 = vmul.f32 %v797, %v606
        %v799 = vmul.f32 %v797, %v611
        %v800 = vmul.f32 %v797, %v616
        %v801 = vmul.f32 %v797, %v621
        %v802 = vadd.f32 %v792, %v798
        %v803 = vadd.f32 %v793, %v799
        %v804 = vadd.f32 %v794, %v800
        %v805 = vadd.f32 %v795, %v801
        %s806 = sld [smem:[#allocation3 + $0x183]]
        %v807 = vstv %s806
        %v808 = vmul.f32 %v807, %v607
        %v809 = vmul.f32 %v807, %v612
        %v810 = vmul.f32 %v807, %v617
        %v811 = vmul.f32 %v807, %v622
        %v812 = vadd.f32 %v802, %v808
        %v813 = vadd.f32 %v803, %v809
        %v814 = vadd.f32 %v804, %v810
        %v815 = vadd.f32 %v805, %v811
        %s816 = sld [smem:[#allocation3 + $0x184]]
        %v817 = vstv %s816
        %v818 = vmul.f32 %v817, %v608
        %v819 = vmul.f32 %v817, %v613
        %v820 = vmul.f32 %v817, %v618
        %v821 = vmul.f32 %v817, %v623
        %v822 = vadd.f32 %v812, %v818
        %v823 = vadd.f32 %v813, %v819
        %v824 = vadd.f32 %v814, %v820
        %v825 = vadd.f32 %v815, %v821
        %s826 = sld [smem:[#allocation6 + $0x3]]
        %v827 = vstv %s826
        %v828 = vadd.f32 %v822, %v827
        %v829 = vadd.f32 %v823, %v827
        %v830 = vadd.f32 %v824, %v827
        %v831 = vadd.f32 %v825, %v827
        %v832 = vadd.f32 %v672, %v724
        %v833 = vadd.f32 %v673, %v725
        %v834 = vadd.f32 %v674, %v726
        %v835 = vadd.f32 %v675, %v727
        %v836 = vadd.f32 %v832, %v776
        %v837 = vadd.f32 %v833, %v777
        %v838 = vadd.f32 %v834, %v778
        %v839 = vadd.f32 %v835, %v779
        %v840 = vadd.f32 %v836, %v828
        %v841 = vadd.f32 %v837, %v829
        %v842 = vadd.f32 %v838, %v830
        %v843 = vadd.f32 %v839, %v831
        %v844 = vmul.f32 %v840, 0.25
        %v845 = vmul.f32 %v841, 0.25
        %v846 = vmul.f32 %v842, 0.25
        %v847 = vmul.f32 %v843, 0.25
        %v848 = vsub.f32 %v672, %v844
        %v849 = vsub.f32 %v673, %v845
        %v850 = vsub.f32 %v674, %v846
        %v851 = vsub.f32 %v675, %v847
        %v852 = vmul.f32 %v848, %v848
        %v853 = vmul.f32 %v849, %v849
        %v854 = vmul.f32 %v850, %v850
        %v855 = vmul.f32 %v851, %v851
        %v856 = vsub.f32 %v724, %v844
        %v857 = vsub.f32 %v725, %v845
        %v858 = vsub.f32 %v726, %v846
        %v859 = vsub.f32 %v727, %v847
        %v860 = vmul.f32 %v856, %v856
        %v861 = vmul.f32 %v857, %v857
        %v862 = vmul.f32 %v858, %v858
        %v863 = vmul.f32 %v859, %v859
        %v864 = vadd.f32 %v852, %v860
        %v865 = vadd.f32 %v853, %v861
        %v866 = vadd.f32 %v854, %v862
        %v867 = vadd.f32 %v855, %v863
        %v868 = vsub.f32 %v776, %v844
        %v869 = vsub.f32 %v777, %v845
        %v870 = vsub.f32 %v778, %v846
        %v871 = vsub.f32 %v779, %v847
        %v872 = vmul.f32 %v868, %v868
        %v873 = vmul.f32 %v869, %v869
        %v874 = vmul.f32 %v870, %v870
        %v875 = vmul.f32 %v871, %v871
        %v876 = vadd.f32 %v864, %v872
        %v877 = vadd.f32 %v865, %v873
        %v878 = vadd.f32 %v866, %v874
        %v879 = vadd.f32 %v867, %v875
        %v880 = vsub.f32 %v828, %v844
        %v881 = vsub.f32 %v829, %v845
        %v882 = vsub.f32 %v830, %v846
        %v883 = vsub.f32 %v831, %v847
        %v884 = vmul.f32 %v880, %v880
        %v885 = vmul.f32 %v881, %v881
        %v886 = vmul.f32 %v882, %v882
        %v887 = vmul.f32 %v883, %v883
        %v888 = vadd.f32 %v876, %v884
        %v889 = vadd.f32 %v877, %v885
        %v890 = vadd.f32 %v878, %v886
        %v891 = vadd.f32 %v879, %v887
        %v892 = vmul.f32 %v888, 0.25
        %v893 = vmul.f32 %v889, 0.25
        %v894 = vmul.f32 %v890, 0.25
        %v895 = vmul.f32 %v891, 0.25
        %v896 = vadd.f32 %v892, 1e-05
        %v897 = vadd.f32 %v893, 1e-05
        %v898 = vadd.f32 %v894, 1e-05
        %v899 = vadd.f32 %v895, 1e-05
        %v900 = vrsqrt.pop %v896
        %v901 = vrsqrt.pop %v897
        %v902 = vrsqrt.pop %v898
        %v903 = vrsqrt.pop %v899
        %v904 = vmul.f32 %v848, %v900
        %v905 = vmul.f32 %v849, %v901
        %v906 = vmul.f32 %v850, %v902
        %v907 = vmul.f32 %v851, %v903
        %s908 = sld [smem:[#allocation8]]
        %v909 = vstv %s908
        %v910 = vmul.f32 %v904, %v909
        %v911 = vmul.f32 %v905, %v909
        %v912 = vmul.f32 %v906, %v909
        %v913 = vmul.f32 %v907, %v909
        %s914 = sld [smem:[#allocation9]]
        %v915 = vstv %s914
        %v916 = vadd.f32 %v910, %v915
        %v917 = vadd.f32 %v911, %v915
        %v918 = vadd.f32 %v912, %v915
        %v919 = vadd.f32 %v913, %v915
        %vm920 = vcmp.gt.f32.partialorder %v916, 0.0
        %vm921 = vcmp.gt.f32.partialorder %v917, 0.0
        %vm922 = vcmp.gt.f32.partialorder %v918, 0.0
        %vm923 = vcmp.gt.f32.partialorder %v919, 0.0
        %v924 = vmin.f32 %v916, 0.0
        %v925 = vmin.f32 %v917, 0.0
        %v926 = vmin.f32 %v918, 0.0
        %v927 = vmin.f32 %v919, 0.0
        %v928 = vmul.f32 %v924, 1.442695
        %v929 = vpow.pop %v928
        %v930 = vmul.f32 %v925, 1.442695
        %v931 = vpow.pop %v930
        %v932 = vmul.f32 %v926, 1.442695
        %v933 = vpow.pop %v932
        %v934 = vmul.f32 %v927, 1.442695
        %v935 = vpow.pop %v934
        %v936 = vsub.f32 %v929, 1.0
        %v937 = vsub.f32 %v931, 1.0
        %v938 = vsub.f32 %v933, 1.0
        %v939 = vsub.f32 %v935, 1.0
        %v940 = vsel %vm920, %v916, %v936
        %v941 = vsel %vm921, %v917, %v937
        %v942 = vsel %vm922, %v918, %v938
        %v943 = vsel %vm923, %v919, %v939
        %944 = vxpose.xlu0.b32.start [1/16] %v940, 128
        %945 = vxpose.xlu0.b32.cont [2/16] 0.0, 128
        %946 = vxpose.xlu0.b32.cont [3/16] 0.0, 128
        %947 = vxpose.xlu0.b32.cont [4/16] 0.0, 128
        %948 = vxpose.xlu0.b32.cont [5/16] 0.0, 128
        %949 = vxpose.xlu0.b32.cont [6/16] 0.0, 128
        %950 = vxpose.xlu0.b32.cont [7/16] 0.0, 128
        %951 = vxpose.xlu0.b32.cont [8/16] 0.0, 128
        %952 = vxpose.xlu0.b32.cont [9/16] 0.0, 128
        %953 = vxpose.xlu0.b32.cont [10/16] 0.0, 128
        %954 = vxpose.xlu0.b32.cont [11/16] 0.0, 128
        %955 = vxpose.xlu0.b32.cont [12/16] 0.0, 128
        %956 = vxpose.xlu0.b32.cont [13/16] 0.0, 128
        %957 = vxpose.xlu0.b32.cont [14/16] 0.0, 128
        %958 = vxpose.xlu0.b32.cont [15/16] 0.0, 128
        %959 = vxpose.xlu0.b32.end [16/16] 0.0, 128
        %v960 = vpop.trf.xlu0
        %v961 = vpop.trf.xlu0
        %v962 = vpop.trf.xlu0
        %v963 = vpop.trf.xlu0
        %v964 = vpop.trf.xlu0
        %v965 = vpop.trf.xlu0
        %v966 = vpop.trf.xlu0
        %v967 = vpop.trf.xlu0
        %v968 = vpop.trf.xlu0
        %v969 = vpop.trf.xlu0
        %v970 = vpop.trf.xlu0
        %v971 = vpop.trf.xlu0
        %v972 = vpop.trf.xlu0
        %v973 = vpop.trf.xlu0
        %v974 = vpop.trf.xlu0
        %v975 = vpop.trf.xlu0
        %v976 = vadd.f32 %v940, %v960
        %v977 = vadd.f32 %v976, %v941
        %978 = vxpose.xlu0.b32.start [1/16] %v941, 128
        %979 = vxpose.xlu0.b32.cont [2/16] 0.0, 128
        %980 = vxpose.xlu0.b32.cont [3/16] 0.0, 128
        %981 = vxpose.xlu0.b32.cont [4/16] 0.0, 128
        %982 = vxpose.xlu0.b32.cont [5/16] 0.0, 128
        %983 = vxpose.xlu0.b32.cont [6/16] 0.0, 128
        %984 = vxpose.xlu0.b32.cont [7/16] 0.0, 128
        %985 = vxpose.xlu0.b32.cont [8/16] 0.0, 128
        %986 = vxpose.xlu0.b32.cont [9/16] 0.0, 128
        %987 = vxpose.xlu0.b32.cont [10/16] 0.0, 128
        %988 = vxpose.xlu0.b32.cont [11/16] 0.0, 128
        %989 = vxpose.xlu0.b32.cont [12/16] 0.0, 128
        %990 = vxpose.xlu0.b32.cont [13/16] 0.0, 128
        %991 = vxpose.xlu0.b32.cont [14/16] 0.0, 128
        %992 = vxpose.xlu0.b32.cont [15/16] 0.0, 128
        %993 = vxpose.xlu0.b32.end [16/16] 0.0, 128
        %v994 = vpop.trf.xlu0
        %v995 = vpop.trf.xlu0
        %v996 = vpop.trf.xlu0
        %v997 = vpop.trf.xlu0
        %v998 = vpop.trf.xlu0
        %v999 = vpop.trf.xlu0
        %v1000 = vpop.trf.xlu0
        %v1001 = vpop.trf.xlu0
        %v1002 = vpop.trf.xlu0
        %v1003 = vpop.trf.xlu0
        %v1004 = vpop.trf.xlu0
        %v1005 = vpop.trf.xlu0
        %v1006 = vpop.trf.xlu0
        %v1007 = vpop.trf.xlu0
        %v1008 = vpop.trf.xlu0
        %v1009 = vpop.trf.xlu0
        %v1010 = vadd.f32 %v977, %v994
        %v1011 = vadd.f32 %v1010, %v942
        %1012 = vxpose.xlu0.b32.start [1/16] %v942, 128
        %1013 = vxpose.xlu0.b32.cont [2/16] 0.0, 128
        %1014 = vxpose.xlu0.b32.cont [3/16] 0.0, 128
        %1015 = vxpose.xlu0.b32.cont [4/16] 0.0, 128
        %1016 = vxpose.xlu0.b32.cont [5/16] 0.0, 128
        %1017 = vxpose.xlu0.b32.cont [6/16] 0.0, 128
        %1018 = vxpose.xlu0.b32.cont [7/16] 0.0, 128
        %1019 = vxpose.xlu0.b32.cont [8/16] 0.0, 128
        %1020 = vxpose.xlu0.b32.cont [9/16] 0.0, 128
        %1021 = vxpose.xlu0.b32.cont [10/16] 0.0, 128
        %1022 = vxpose.xlu0.b32.cont [11/16] 0.0, 128
        %1023 = vxpose.xlu0.b32.cont [12/16] 0.0, 128
        %1024 = vxpose.xlu0.b32.cont [13/16] 0.0, 128
        %1025 = vxpose.xlu0.b32.cont [14/16] 0.0, 128
        %1026 = vxpose.xlu0.b32.cont [15/16] 0.0, 128
        %1027 = vxpose.xlu0.b32.end [16/16] 0.0, 128
        %v1028 = vpop.trf.xlu0
        %v1029 = vpop.trf.xlu0
        %v1030 = vpop.trf.xlu0
        %v1031 = vpop.trf.xlu0
        %v1032 = vpop.trf.xlu0
        %v1033 = vpop.trf.xlu0
        %v1034 = vpop.trf.xlu0
        %v1035 = vpop.trf.xlu0
        %v1036 = vpop.trf.xlu0
        %v1037 = vpop.trf.xlu0
        %v1038 = vpop.trf.xlu0
        %v1039 = vpop.trf.xlu0
        %v1040 = vpop.trf.xlu0
        %v1041 = vpop.trf.xlu0
        %v1042 = vpop.trf.xlu0
        %v1043 = vpop.trf.xlu0
        %v1044 = vadd.f32 %v1011, %v1028
        %v1045 = vadd.f32 %v1044, %v943
        %1046 = vxpose.xlu0.b32.start [1/16] %v943, 128
        %1047 = vxpose.xlu0.b32.cont [2/16] 0.0, 128
        %1048 = vxpose.xlu0.b32.cont [3/16] 0.0, 128
        %1049 = vxpose.xlu0.b32.cont [4/16] 0.0, 128
        %1050 = vxpose.xlu0.b32.cont [5/16] 0.0, 128
        %1051 = vxpose.xlu0.b32.cont [6/16] 0.0, 128
        %1052 = vxpose.xlu0.b32.cont [7/16] 0.0, 128
        %1053 = vxpose.xlu0.b32.cont [8/16] 0.0, 128
        %1054 = vxpose.xlu0.b32.cont [9/16] 0.0, 128
        %1055 = vxpose.xlu0.b32.cont [10/16] 0.0, 128
        %1056 = vxpose.xlu0.b32.cont [11/16] 0.0, 128
        %1057 = vxpose.xlu0.b32.cont [12/16] 0.0, 128
        %1058 = vxpose.xlu0.b32.cont [13/16] 0.0, 128
        %1059 = vxpose.xlu0.b32.cont [14/16] 0.0, 128
        %1060 = vxpose.xlu0.b32.cont [15/16] 0.0, 128
        %1061 = vxpose.xlu0.b32.end [16/16] 0.0, 128
        %v1062 = vpop.trf.xlu0
        %v1063 = vpop.trf.xlu0
        %v1064 = vpop.trf.xlu0
        %v1065 = vpop.trf.xlu0
        %v1066 = vpop.trf.xlu0
        %v1067 = vpop.trf.xlu0
        %v1068 = vpop.trf.xlu0
        %v1069 = vpop.trf.xlu0
        %v1070 = vpop.trf.xlu0
        %v1071 = vpop.trf.xlu0
        %v1072 = vpop.trf.xlu0
        %v1073 = vpop.trf.xlu0
        %v1074 = vpop.trf.xlu0
        %v1075 = vpop.trf.xlu0
        %v1076 = vpop.trf.xlu0
        %v1077 = vpop.trf.xlu0
        %v1078 = vadd.f32 %v1045, %v1062
        %v1079 = vmul.f32 %v1078, 0.125
        %v1080 = vmul.f32 %v856, %v900
        %v1081 = vmul.f32 %v857, %v901
        %v1082 = vmul.f32 %v858, %v902
        %v1083 = vmul.f32 %v859, %v903
        %s1084 = sld [smem:[#allocation8 + $0x1]]
        %v1085 = vstv %s1084
        %v1086 = vmul.f32 %v1080, %v1085
        %v1087 = vmul.f32 %v1081, %v1085
        %v1088 = vmul.f32 %v1082, %v1085
        %v1089 = vmul.f32 %v1083, %v1085
        %s1090 = sld [smem:[#allocation9 + $0x1]]
        %v1091 = vstv %s1090
        %v1092 = vadd.f32 %v1086, %v1091
        %v1093 = vadd.f32 %v1087, %v1091
        %v1094 = vadd.f32 %v1088, %v1091
        %v1095 = vadd.f32 %v1089, %v1091
        %vm1096 = vcmp.gt.f32.partialorder %v1092, 0.0
        %vm1097 = vcmp.gt.f32.partialorder %v1093, 0.0
        %vm1098 = vcmp.gt.f32.partialorder %v1094, 0.0
        %vm1099 = vcmp.gt.f32.partialorder %v1095, 0.0
        %v1100 = vmin.f32 %v1092, 0.0
        %v1101 = vmin.f32 %v1093, 0.0
        %v1102 = vmin.f32 %v1094, 0.0
        %v1103 = vmin.f32 %v1095, 0.0
        %v1104 = vmul.f32 %v1100, 1.442695
        %v1105 = vpow.pop %v1104
        %v1106 = vmul.f32 %v1101, 1.442695
        %v1107 = vpow.pop %v1106
        %v1108 = vmul.f32 %v1102, 1.442695
        %v1109 = vpow.pop %v1108
        %v1110 = vmul.f32 %v1103, 1.442695
        %v1111 = vpow.pop %v1110
        %v1112 = vsub.f32 %v1105, 1.0
        %v1113 = vsub.f32 %v1107, 1.0
        %v1114 = vsub.f32 %v1109, 1.0
        %v1115 = vsub.f32 %v1111, 1.0
        %v1116 = vsel %vm1096, %v1092, %v1112
        %v1117 = vsel %vm1097, %v1093, %v1113
        %v1118 = vsel %vm1098, %v1094, %v1114
        %v1119 = vsel %vm1099, %v1095, %v1115
        %1120 = vxpose.xlu0.b32.start [1/16] %v1116, 128
        %1121 = vxpose.xlu0.b32.cont [2/16] 0.0, 128
        %1122 = vxpose.xlu0.b32.cont [3/16] 0.0, 128
        %1123 = vxpose.xlu0.b32.cont [4/16] 0.0, 128
        %1124 = vxpose.xlu0.b32.cont [5/16] 0.0, 128
        %1125 = vxpose.xlu0.b32.cont [6/16] 0.0, 128
        %1126 = vxpose.xlu0.b32.cont [7/16] 0.0, 128
        %1127 = vxpose.xlu0.b32.cont [8/16] 0.0, 128
        %1128 = vxpose.xlu0.b32.cont [9/16] 0.0, 128
        %1129 = vxpose.xlu0.b32.cont [10/16] 0.0, 128
        %1130 = vxpose.xlu0.b32.cont [11/16] 0.0, 128
        %1131 = vxpose.xlu0.b32.cont [12/16] 0.0, 128
        %1132 = vxpose.xlu0.b32.cont [13/16] 0.0, 128
        %1133 = vxpose.xlu0.b32.cont [14/16] 0.0, 128
        %1134 = vxpose.xlu0.b32.cont [15/16] 0.0, 128
        %1135 = vxpose.xlu0.b32.end [16/16] 0.0, 128
        %v1136 = vpop.trf.xlu0
        %v1137 = vpop.trf.xlu0
        %v1138 = vpop.trf.xlu0
        %v1139 = vpop.trf.xlu0
        %v1140 = vpop.trf.xlu0
        %v1141 = vpop.trf.xlu0
        %v1142 = vpop.trf.xlu0
        %v1143 = vpop.trf.xlu0
        %v1144 = vpop.trf.xlu0
        %v1145 = vpop.trf.xlu0
        %v1146 = vpop.trf.xlu0
        %v1147 = vpop.trf.xlu0
        %v1148 = vpop.trf.xlu0
        %v1149 = vpop.trf.xlu0
        %v1150 = vpop.trf.xlu0
        %v1151 = vpop.trf.xlu0
        %v1152 = vadd.f32 %v1116, %v1136
        %v1153 = vadd.f32 %v1152, %v1117
        %1154 = vxpose.xlu0.b32.start [1/16] %v1117, 128
        %1155 = vxpose.xlu0.b32.cont [2/16] 0.0, 128
        %1156 = vxpose.xlu0.b32.cont [3/16] 0.0, 128
        %1157 = vxpose.xlu0.b32.cont [4/16] 0.0, 128
        %1158 = vxpose.xlu0.b32.cont [5/16] 0.0, 128
        %1159 = vxpose.xlu0.b32.cont [6/16] 0.0, 128
        %1160 = vxpose.xlu0.b32.cont [7/16] 0.0, 128
        %1161 = vxpose.xlu0.b32.cont [8/16] 0.0, 128
        %1162 = vxpose.xlu0.b32.cont [9/16] 0.0, 128
        %1163 = vxpose.xlu0.b32.cont [10/16] 0.0, 128
        %1164 = vxpose.xlu0.b32.cont [11/16] 0.0, 128
        %1165 = vxpose.xlu0.b32.cont [12/16] 0.0, 128
        %1166 = vxpose.xlu0.b32.cont [13/16] 0.0, 128
        %1167 = vxpose.xlu0.b32.cont [14/16] 0.0, 128
        %1168 = vxpose.xlu0.b32.cont [15/16] 0.0, 128
        %1169 = vxpose.xlu0.b32.end [16/16] 0.0, 128
        %v1170 = vpop.trf.xlu0
        %v1171 = vpop.trf.xlu0
        %v1172 = vpop.trf.xlu0
        %v1173 = vpop.trf.xlu0
        %v1174 = vpop.trf.xlu0
        %v1175 = vpop.trf.xlu0
        %v1176 = vpop.trf.xlu0
        %v1177 = vpop.trf.xlu0
        %v1178 = vpop.trf.xlu0
        %v1179 = vpop.trf.xlu0
        %v1180 = vpop.trf.xlu0
        %v1181 = vpop.trf.xlu0
        %v1182 = vpop.trf.xlu0
        %v1183 = vpop.trf.xlu0
        %v1184 = vpop.trf.xlu0
        %v1185 = vpop.trf.xlu0
        %v1186 = vadd.f32 %v1153, %v1170
        %v1187 = vadd.f32 %v1186, %v1118
        %1188 = vxpose.xlu0.b32.start [1/16] %v1118, 128
        %1189 = vxpose.xlu0.b32.cont [2/16] 0.0, 128
        %1190 = vxpose.xlu0.b32.cont [3/16] 0.0, 128
        %1191 = vxpose.xlu0.b32.cont [4/16] 0.0, 128
        %1192 = vxpose.xlu0.b32.cont [5/16] 0.0, 128
        %1193 = vxpose.xlu0.b32.cont [6/16] 0.0, 128
        %1194 = vxpose.xlu0.b32.cont [7/16] 0.0, 128
        %1195 = vxpose.xlu0.b32.cont [8/16] 0.0, 128
        %1196 = vxpose.xlu0.b32.cont [9/16] 0.0, 128
        %1197 = vxpose.xlu0.b32.cont [10/16] 0.0, 128
        %1198 = vxpose.xlu0.b32.cont [11/16] 0.0, 128
        %1199 = vxpose.xlu0.b32.cont [12/16] 0.0, 128
        %1200 = vxpose.xlu0.b32.cont [13/16] 0.0, 128
        %1201 = vxpose.xlu0.b32.cont [14/16] 0.0, 128
        %1202 = vxpose.xlu0.b32.cont [15/16] 0.0, 128
        %1203 = vxpose.xlu0.b32.end [16/16] 0.0, 128
        %v1204 = vpop.trf.xlu0
        %v1205 = vpop.trf.xlu0
        %v1206 = vpop.trf.xlu0
        %v1207 = vpop.trf.xlu0
        %v1208 = vpop.trf.xlu0
        %v1209 = vpop.trf.xlu0
        %v1210 = vpop.trf.xlu0
        %v1211 = vpop.trf.xlu0
        %v1212 = vpop.trf.xlu0
        %v1213 = vpop.trf.xlu0
        %v1214 = vpop.trf.xlu0
        %v1215 = vpop.trf.xlu0
        %v1216 = vpop.trf.xlu0
        %v1217 = vpop.trf.xlu0
        %v1218 = vpop.trf.xlu0
        %v1219 = vpop.trf.xlu0
        %v1220 = vadd.f32 %v1187, %v1204
        %v1221 = vadd.f32 %v1220, %v1119
        %1222 = vxpose.xlu0.b32.start [1/16] %v1119, 128
        %1223 = vxpose.xlu0.b32.cont [2/16] 0.0, 128
        %1224 = vxpose.xlu0.b32.cont [3/16] 0.0, 128
        %1225 = vxpose.xlu0.b32.cont [4/16] 0.0, 128
        %1226 = vxpose.xlu0.b32.cont [5/16] 0.0, 128
        %1227 = vxpose.xlu0.b32.cont [6/16] 0.0, 128
        %1228 = vxpose.xlu0.b32.cont [7/16] 0.0, 128
        %1229 = vxpose.xlu0.b32.cont [8/16] 0.0, 128
        %1230 = vxpose.xlu0.b32.cont [9/16] 0.0, 128
        %1231 = vxpose.xlu0.b32.cont [10/16] 0.0, 128
        %1232 = vxpose.xlu0.b32.cont [11/16] 0.0, 128
        %1233 = vxpose.xlu0.b32.cont [12/16] 0.0, 128
        %1234 = vxpose.xlu0.b32.cont [13/16] 0.0, 128
        %1235 = vxpose.xlu0.b32.cont [14/16] 0.0, 128
        %1236 = vxpose.xlu0.b32.cont [15/16] 0.0, 128
        %1237 = vxpose.xlu0.b32.end [16/16] 0.0, 128
        %v1238 = vpop.trf.xlu0
        %v1239 = vpop.trf.xlu0
        %v1240 = vpop.trf.xlu0
        %v1241 = vpop.trf.xlu0
        %v1242 = vpop.trf.xlu0
        %v1243 = vpop.trf.xlu0
        %v1244 = vpop.trf.xlu0
        %v1245 = vpop.trf.xlu0
        %v1246 = vpop.trf.xlu0
        %v1247 = vpop.trf.xlu0
        %v1248 = vpop.trf.xlu0
        %v1249 = vpop.trf.xlu0
        %v1250 = vpop.trf.xlu0
        %v1251 = vpop.trf.xlu0
        %v1252 = vpop.trf.xlu0
        %v1253 = vpop.trf.xlu0
        %v1254 = vadd.f32 %v1221, %v1238
        %v1255 = vmul.f32 %v1254, 0.125
        %v1256 = vmul.f32 %v868, %v900
        %v1257 = vmul.f32 %v869, %v901
        %v1258 = vmul.f32 %v870, %v902
        %v1259 = vmul.f32 %v871, %v903
        %s1260 = sld [smem:[#allocation8 + $0x2]]
        %v1261 = vstv %s1260
        %v1262 = vmul.f32 %v1256, %v1261
        %v1263 = vmul.f32 %v1257, %v1261
        %v1264 = vmul.f32 %v1258, %v1261
        %v1265 = vmul.f32 %v1259, %v1261
        %s1266 = sld [smem:[#allocation9 + $0x2]]
        %v1267 = vstv %s1266
        %v1268 = vadd.f32 %v1262, %v1267
        %v1269 = vadd.f32 %v1263, %v1267
        %v1270 = vadd.f32 %v1264, %v1267
        %v1271 = vadd.f32 %v1265, %v1267
        %vm1272 = vcmp.gt.f32.partialorder %v1268, 0.0
        %vm1273 = vcmp.gt.f32.partialorder %v1269, 0.0
        %vm1274 = vcmp.gt.f32.partialorder %v1270, 0.0
        %vm1275 = vcmp.gt.f32.partialorder %v1271, 0.0
        %v1276 = vmin.f32 %v1268, 0.0
        %v1277 = vmin.f32 %v1269, 0.0
        %v1278 = vmin.f32 %v1270, 0.0
        %v1279 = vmin.f32 %v1271, 0.0
        %v1280 = vmul.f32 %v1276, 1.442695
        %v1281 = vpow.pop %v1280
        %v1282 = vmul.f32 %v1277, 1.442695
        %v1283 = vpow.pop %v1282
        %v1284 = vmul.f32 %v1278, 1.442695
        %v1285 = vpow.pop %v1284
        %v1286 = vmul.f32 %v1279, 1.442695
        %v1287 = vpow.pop %v1286
        %v1288 = vsub.f32 %v1281, 1.0
        %v1289 = vsub.f32 %v1283, 1.0
        %v1290 = vsub.f32 %v1285, 1.0
        %v1291 = vsub.f32 %v1287, 1.0
        %v1292 = vsel %vm1272, %v1268, %v1288
        %v1293 = vsel %vm1273, %v1269, %v1289
        %v1294 = vsel %vm1274, %v1270, %v1290
        %v1295 = vsel %vm1275, %v1271, %v1291
        %1296 = vxpose.xlu0.b32.start [1/16] %v1292, 128
        %1297 = vxpose.xlu0.b32.cont [2/16] 0.0, 128
        %1298 = vxpose.xlu0.b32.cont [3/16] 0.0, 128
        %1299 = vxpose.xlu0.b32.cont [4/16] 0.0, 128
        %1300 = vxpose.xlu0.b32.cont [5/16] 0.0, 128
        %1301 = vxpose.xlu0.b32.cont [6/16] 0.0, 128
        %1302 = vxpose.xlu0.b32.cont [7/16] 0.0, 128
        %1303 = vxpose.xlu0.b32.cont [8/16] 0.0, 128
        %1304 = vxpose.xlu0.b32.cont [9/16] 0.0, 128
        %1305 = vxpose.xlu0.b32.cont [10/16] 0.0, 128
        %1306 = vxpose.xlu0.b32.cont [11/16] 0.0, 128
        %1307 = vxpose.xlu0.b32.cont [12/16] 0.0, 128
        %1308 = vxpose.xlu0.b32.cont [13/16] 0.0, 128
        %1309 = vxpose.xlu0.b32.cont [14/16] 0.0, 128
        %1310 = vxpose.xlu0.b32.cont [15/16] 0.0, 128
        %1311 = vxpose.xlu0.b32.end [16/16] 0.0, 128
        %v1312 = vpop.trf.xlu0
        %v1313 = vpop.trf.xlu0
        %v1314 = vpop.trf.xlu0
        %v1315 = vpop.trf.xlu0
        %v1316 = vpop.trf.xlu0
        %v1317 = vpop.trf.xlu0
        %v1318 = vpop.trf.xlu0
        %v1319 = vpop.trf.xlu0
        %v1320 = vpop.trf.xlu0
        %v1321 = vpop.trf.xlu0
        %v1322 = vpop.trf.xlu0
        %v1323 = vpop.trf.xlu0
        %v1324 = vpop.trf.xlu0
        %v1325 = vpop.trf.xlu0
        %v1326 = vpop.trf.xlu0
        %v1327 = vpop.trf.xlu0
        %v1328 = vadd.f32 %v1292, %v1312
        %v1329 = vadd.f32 %v1328, %v1293
        %1330 = vxpose.xlu0.b32.start [1/16] %v1293, 128
        %1331 = vxpose.xlu0.b32.cont [2/16] 0.0, 128
        %1332 = vxpose.xlu0.b32.cont [3/16] 0.0, 128
        %1333 = vxpose.xlu0.b32.cont [4/16] 0.0, 128
        %1334 = vxpose.xlu0.b32.cont [5/16] 0.0, 128
        %1335 = vxpose.xlu0.b32.cont [6/16] 0.0, 128
        %1336 = vxpose.xlu0.b32.cont [7/16] 0.0, 128
        %1337 = vxpose.xlu0.b32.cont [8/16] 0.0, 128
        %1338 = vxpose.xlu0.b32.cont [9/16] 0.0, 128
        %1339 = vxpose.xlu0.b32.cont [10/16] 0.0, 128
        %1340 = vxpose.xlu0.b32.cont [11/16] 0.0, 128
        %1341 = vxpose.xlu0.b32.cont [12/16] 0.0, 128
        %1342 = vxpose.xlu0.b32.cont [13/16] 0.0, 128
        %1343 = vxpose.xlu0.b32.cont [14/16] 0.0, 128
        %1344 = vxpose.xlu0.b32.cont [15/16] 0.0, 128
        %1345 = vxpose.xlu0.b32.end [16/16] 0.0, 128
        %v1346 = vpop.trf.xlu0
        %v1347 = vpop.trf.xlu0
        %v1348 = vpop.trf.xlu0
        %v1349 = vpop.trf.xlu0
        %v1350 = vpop.trf.xlu0
        %v1351 = vpop.trf.xlu0
        %v1352 = vpop.trf.xlu0
        %v1353 = vpop.trf.xlu0
        %v1354 = vpop.trf.xlu0
        %v1355 = vpop.trf.xlu0
        %v1356 = vpop.trf.xlu0
        %v1357 = vpop.trf.xlu0
        %v1358 = vpop.trf.xlu0
        %v1359 = vpop.trf.xlu0
        %v1360 = vpop.trf.xlu0
        %v1361 = vpop.trf.xlu0
        %v1362 = vadd.f32 %v1329, %v1346
        %v1363 = vadd.f32 %v1362, %v1294
        %1364 = vxpose.xlu0.b32.start [1/16] %v1294, 128
        %1365 = vxpose.xlu0.b32.cont [2/16] 0.0, 128
        %1366 = vxpose.xlu0.b32.cont [3/16] 0.0, 128
        %1367 = vxpose.xlu0.b32.cont [4/16] 0.0, 128
        %1368 = vxpose.xlu0.b32.cont [5/16] 0.0, 128
        %1369 = vxpose.xlu0.b32.cont [6/16] 0.0, 128
        %1370 = vxpose.xlu0.b32.cont [7/16] 0.0, 128
        %1371 = vxpose.xlu0.b32.cont [8/16] 0.0, 128
        %1372 = vxpose.xlu0.b32.cont [9/16] 0.0, 128
        %1373 = vxpose.xlu0.b32.cont [10/16] 0.0, 128
        %1374 = vxpose.xlu0.b32.cont [11/16] 0.0, 128
        %1375 = vxpose.xlu0.b32.cont [12/16] 0.0, 128
        %1376 = vxpose.xlu0.b32.cont [13/16] 0.0, 128
        %1377 = vxpose.xlu0.b32.cont [14/16] 0.0, 128
        %1378 = vxpose.xlu0.b32.cont [15/16] 0.0, 128
        %1379 = vxpose.xlu0.b32.end [16/16] 0.0, 128
        %v1380 = vpop.trf.xlu0
        %v1381 = vpop.trf.xlu0
        %v1382 = vpop.trf.xlu0
        %v1383 = vpop.trf.xlu0
        %v1384 = vpop.trf.xlu0
        %v1385 = vpop.trf.xlu0
        %v1386 = vpop.trf.xlu0
        %v1387 = vpop.trf.xlu0
        %v1388 = vpop.trf.xlu0
        %v1389 = vpop.trf.xlu0
        %v1390 = vpop.trf.xlu0
        %v1391 = vpop.trf.xlu0
        %v1392 = vpop.trf.xlu0
        %v1393 = vpop.trf.xlu0
        %v1394 = vpop.trf.xlu0
        %v1395 = vpop.trf.xlu0
        %v1396 = vadd.f32 %v1363, %v1380
        %v1397 = vadd.f32 %v1396, %v1295
        %1398 = vxpose.xlu0.b32.start [1/16] %v1295, 128
        %1399 = vxpose.xlu0.b32.cont [2/16] 0.0, 128
        %1400 = vxpose.xlu0.b32.cont [3/16] 0.0, 128
        %1401 = vxpose.xlu0.b32.cont [4/16] 0.0, 128
        %1402 = vxpose.xlu0.b32.cont [5/16] 0.0, 128
        %1403 = vxpose.xlu0.b32.cont [6/16] 0.0, 128
        %1404 = vxpose.xlu0.b32.cont [7/16] 0.0, 128
        %1405 = vxpose.xlu0.b32.cont [8/16] 0.0, 128
        %1406 = vxpose.xlu0.b32.cont [9/16] 0.0, 128
        %1407 = vxpose.xlu0.b32.cont [10/16] 0.0, 128
        %1408 = vxpose.xlu0.b32.cont [11/16] 0.0, 128
        %1409 = vxpose.xlu0.b32.cont [12/16] 0.0, 128
        %1410 = vxpose.xlu0.b32.cont [13/16] 0.0, 128
        %1411 = vxpose.xlu0.b32.cont [14/16] 0.0, 128
        %1412 = vxpose.xlu0.b32.cont [15/16] 0.0, 128
        %1413 = vxpose.xlu0.b32.end [16/16] 0.0, 128
        %v1414 = vpop.trf.xlu0
        %v1415 = vpop.trf.xlu0
        %v1416 = vpop.trf.xlu0
        %v1417 = vpop.trf.xlu0
        %v1418 = vpop.trf.xlu0
        %v1419 = vpop.trf.xlu0
        %v1420 = vpop.trf.xlu0
        %v1421 = vpop.trf.xlu0
        %v1422 = vpop.trf.xlu0
        %v1423 = vpop.trf.xlu0
        %v1424 = vpop.trf.xlu0
        %v1425 = vpop.trf.xlu0
        %v1426 = vpop.trf.xlu0
        %v1427 = vpop.trf.xlu0
        %v1428 = vpop.trf.xlu0
        %v1429 = vpop.trf.xlu0
        %v1430 = vadd.f32 %v1397, %v1414
        %v1431 = vmul.f32 %v1430, 0.125
        %v1432 = vmul.f32 %v880, %v900
        %v1433 = vmul.f32 %v881, %v901
        %v1434 = vmul.f32 %v882, %v902
        %v1435 = vmul.f32 %v883, %v903
        %s1436 = sld [smem:[#allocation8 + $0x3]]
        %v1437 = vstv %s1436
        %v1438 = vmul.f32 %v1432, %v1437
        %v1439 = vmul.f32 %v1433, %v1437
        %v1440 = vmul.f32 %v1434, %v1437
        %v1441 = vmul.f32 %v1435, %v1437
        %s1442 = sld [smem:[#allocation9 + $0x3]]
        %v1443 = vstv %s1442
        %v1444 = vadd.f32 %v1438, %v1443
        %v1445 = vadd.f32 %v1439, %v1443
        %v1446 = vadd.f32 %v1440, %v1443
        %v1447 = vadd.f32 %v1441, %v1443
        %vm1448 = vcmp.gt.f32.partialorder %v1444, 0.0
        %vm1449 = vcmp.gt.f32.partialorder %v1445, 0.0
        %vm1450 = vcmp.gt.f32.partialorder %v1446, 0.0
        %vm1451 = vcmp.gt.f32.partialorder %v1447, 0.0
        %v1452 = vmin.f32 %v1444, 0.0
        %v1453 = vmin.f32 %v1445, 0.0
        %v1454 = vmin.f32 %v1446, 0.0
        %v1455 = vmin.f32 %v1447, 0.0
        %v1456 = vmul.f32 %v1452, 1.442695
        %v1457 = vpow.pop %v1456
        %v1458 = vmul.f32 %v1453, 1.442695
        %v1459 = vpow.pop %v1458
        %v1460 = vmul.f32 %v1454, 1.442695
        %v1461 = vpow.pop %v1460
        %v1462 = vmul.f32 %v1455, 1.442695
        %v1463 = vpow.pop %v1462
        %v1464 = vsub.f32 %v1457, 1.0
        %v1465 = vsub.f32 %v1459, 1.0
        %v1466 = vsub.f32 %v1461, 1.0
        %v1467 = vsub.f32 %v1463, 1.0
        %v1468 = vsel %vm1448, %v1444, %v1464
        %v1469 = vsel %vm1449, %v1445, %v1465
        %v1470 = vsel %vm1450, %v1446, %v1466
        %v1471 = vsel %vm1451, %v1447, %v1467
        %1472 = vxpose.xlu0.b32.start [1/16] %v1468, 128
        %1473 = vxpose.xlu0.b32.cont [2/16] 0.0, 128
        %1474 = vxpose.xlu0.b32.cont [3/16] 0.0, 128
        %1475 = vxpose.xlu0.b32.cont [4/16] 0.0, 128
        %1476 = vxpose.xlu0.b32.cont [5/16] 0.0, 128
        %1477 = vxpose.xlu0.b32.cont [6/16] 0.0, 128
        %1478 = vxpose.xlu0.b32.cont [7/16] 0.0, 128
        %1479 = vxpose.xlu0.b32.cont [8/16] 0.0, 128
        %1480 = vxpose.xlu0.b32.cont [9/16] 0.0, 128
        %1481 = vxpose.xlu0.b32.cont [10/16] 0.0, 128
        %1482 = vxpose.xlu0.b32.cont [11/16] 0.0, 128
        %1483 = vxpose.xlu0.b32.cont [12/16] 0.0, 128
        %1484 = vxpose.xlu0.b32.cont [13/16] 0.0, 128
        %1485 = vxpose.xlu0.b32.cont [14/16] 0.0, 128
        %1486 = vxpose.xlu0.b32.cont [15/16] 0.0, 128
        %1487 = vxpose.xlu0.b32.end [16/16] 0.0, 128
        %v1488 = vpop.trf.xlu0
        %v1489 = vpop.trf.xlu0
        %v1490 = vpop.trf.xlu0
        %v1491 = vpop.trf.xlu0
        %v1492 = vpop.trf.xlu0
        %v1493 = vpop.trf.xlu0
        %v1494 = vpop.trf.xlu0
        %v1495 = vpop.trf.xlu0
        %v1496 = vpop.trf.xlu0
        %v1497 = vpop.trf.xlu0
        %v1498 = vpop.trf.xlu0
        %v1499 = vpop.trf.xlu0
        %v1500 = vpop.trf.xlu0
        %v1501 = vpop.trf.xlu0
        %v1502 = vpop.trf.xlu0
        %v1503 = vpop.trf.xlu0
        %v1504 = vadd.f32 %v1468, %v1488
        %v1505 = vadd.f32 %v1504, %v1469
        %1506 = vxpose.xlu0.b32.start [1/16] %v1469, 128
        %1507 = vxpose.xlu0.b32.cont [2/16] 0.0, 128
        %1508 = vxpose.xlu0.b32.cont [3/16] 0.0, 128
        %1509 = vxpose.xlu0.b32.cont [4/16] 0.0, 128
        %1510 = vxpose.xlu0.b32.cont [5/16] 0.0, 128
        %1511 = vxpose.xlu0.b32.cont [6/16] 0.0, 128
        %1512 = vxpose.xlu0.b32.cont [7/16] 0.0, 128
        %1513 = vxpose.xlu0.b32.cont [8/16] 0.0, 128
        %1514 = vxpose.xlu0.b32.cont [9/16] 0.0, 128
        %1515 = vxpose.xlu0.b32.cont [10/16] 0.0, 128
        %1516 = vxpose.xlu0.b32.cont [11/16] 0.0, 128
        %1517 = vxpose.xlu0.b32.cont [12/16] 0.0, 128
        %1518 = vxpose.xlu0.b32.cont [13/16] 0.0, 128
        %1519 = vxpose.xlu0.b32.cont [14/16] 0.0, 128
        %1520 = vxpose.xlu0.b32.cont [15/16] 0.0, 128
        %1521 = vxpose.xlu0.b32.end [16/16] 0.0, 128
        %v1522 = vpop.trf.xlu0
        %v1523 = vpop.trf.xlu0
        %v1524 = vpop.trf.xlu0
        %v1525 = vpop.trf.xlu0
        %v1526 = vpop.trf.xlu0
        %v1527 = vpop.trf.xlu0
        %v1528 = vpop.trf.xlu0
        %v1529 = vpop.trf.xlu0
        %v1530 = vpop.trf.xlu0
        %v1531 = vpop.trf.xlu0
        %v1532 = vpop.trf.xlu0
        %v1533 = vpop.trf.xlu0
        %v1534 = vpop.trf.xlu0
        %v1535 = vpop.trf.xlu0
        %v1536 = vpop.trf.xlu0
        %v1537 = vpop.trf.xlu0
        %v1538 = vadd.f32 %v1505, %v1522
        %v1539 = vadd.f32 %v1538, %v1470
        %1540 = vxpose.xlu0.b32.start [1/16] %v1470, 128
        %1541 = vxpose.xlu0.b32.cont [2/16] 0.0, 128
        %1542 = vxpose.xlu0.b32.cont [3/16] 0.0, 128
        %1543 = vxpose.xlu0.b32.cont [4/16] 0.0, 128
        %1544 = vxpose.xlu0.b32.cont [5/16] 0.0, 128
        %1545 = vxpose.xlu0.b32.cont [6/16] 0.0, 128
        %1546 = vxpose.xlu0.b32.cont [7/16] 0.0, 128
        %1547 = vxpose.xlu0.b32.cont [8/16] 0.0, 128
        %1548 = vxpose.xlu0.b32.cont [9/16] 0.0, 128
        %1549 = vxpose.xlu0.b32.cont [10/16] 0.0, 128
        %1550 = vxpose.xlu0.b32.cont [11/16] 0.0, 128
        %1551 = vxpose.xlu0.b32.cont [12/16] 0.0, 128
        %1552 = vxpose.xlu0.b32.cont [13/16] 0.0, 128
        %1553 = vxpose.xlu0.b32.cont [14/16] 0.0, 128
        %1554 = vxpose.xlu0.b32.cont [15/16] 0.0, 128
        %1555 = vxpose.xlu0.b32.end [16/16] 0.0, 128
        %v1556 = vpop.trf.xlu0
        %v1557 = vpop.trf.xlu0
        %v1558 = vpop.trf.xlu0
        %v1559 = vpop.trf.xlu0
        %v1560 = vpop.trf.xlu0
        %v1561 = vpop.trf.xlu0
        %v1562 = vpop.trf.xlu0
        %v1563 = vpop.trf.xlu0
        %v1564 = vpop.trf.xlu0
        %v1565 = vpop.trf.xlu0
        %v1566 = vpop.trf.xlu0
        %v1567 = vpop.trf.xlu0
        %v1568 = vpop.trf.xlu0
        %v1569 = vpop.trf.xlu0
        %v1570 = vpop.trf.xlu0
        %v1571 = vpop.trf.xlu0
        %v1572 = vadd.f32 %v1539, %v1556
        %v1573 = vadd.f32 %v1572, %v1471
        %1574 = vxpose.xlu0.b32.start [1/16] %v1471, 128
        %1575 = vxpose.xlu0.b32.cont [2/16] 0.0, 128
        %1576 = vxpose.xlu0.b32.cont [3/16] 0.0, 128
        %1577 = vxpose.xlu0.b32.cont [4/16] 0.0, 128
        %1578 = vxpose.xlu0.b32.cont [5/16] 0.0, 128
        %1579 = vxpose.xlu0.b32.cont [6/16] 0.0, 128
        %1580 = vxpose.xlu0.b32.cont [7/16] 0.0, 128
        %1581 = vxpose.xlu0.b32.cont [8/16] 0.0, 128
        %1582 = vxpose.xlu0.b32.cont [9/16] 0.0, 128
        %1583 = vxpose.xlu0.b32.cont [10/16] 0.0, 128
        %1584 = vxpose.xlu0.b32.cont [11/16] 0.0, 128
        %1585 = vxpose.xlu0.b32.cont [12/16] 0.0, 128
        %1586 = vxpose.xlu0.b32.cont [13/16] 0.0, 128
        %1587 = vxpose.xlu0.b32.cont [14/16] 0.0, 128
        %1588 = vxpose.xlu0.b32.cont [15/16] 0.0, 128
        %1589 = vxpose.xlu0.b32.end [16/16] 0.0, 128
        %v1590 = vpop.trf.xlu0
        %v1591 = vpop.trf.xlu0
        %v1592 = vpop.trf.xlu0
        %v1593 = vpop.trf.xlu0
        %v1594 = vpop.trf.xlu0
        %v1595 = vpop.trf.xlu0
        %v1596 = vpop.trf.xlu0
        %v1597 = vpop.trf.xlu0
        %v1598 = vpop.trf.xlu0
        %v1599 = vpop.trf.xlu0
        %v1600 = vpop.trf.xlu0
        %v1601 = vpop.trf.xlu0
        %v1602 = vpop.trf.xlu0
        %v1603 = vpop.trf.xlu0
        %v1604 = vpop.trf.xlu0
        %v1605 = vpop.trf.xlu0
        %v1606 = vadd.f32 %v1573, %v1590
        %v1607 = vmul.f32 %v1606, 0.125
        %s1608 = sld [smem:[#allocation11]]
        %v1609 = vstv %s1608
        %v1610 = vmul.f32 %v1609, %v1079
        %s1611 = sld [smem:[#allocation11 + $0x1]]
        %v1612 = vstv %s1611
        %v1613 = vmul.f32 %v1612, %v1255
        %v1614 = vadd.f32 %v1610, %v1613
        %s1615 = sld [smem:[#allocation11 + $0x2]]
        %v1616 = vstv %s1615
        %v1617 = vmul.f32 %v1616, %v1431
        %v1618 = vadd.f32 %v1614, %v1617
        %s1619 = sld [smem:[#allocation11 + $0x3]]
        %v1620 = vstv %s1619
        %v1621 = vmul.f32 %v1620, %v1607
        %v1622 = vadd.f32 %v1618, %v1621
        %s1623 = sld [smem:[#allocation12]]
        %v1624 = vstv %s1623
        %v1625 = vadd.f32 %v1622, %v1624
        %vm1626 = vcmask 64512
        %1627 = vst.msk [vmem:[%s543] sm:$0xff] %vm1626, %v1625
        %s1628 = sld [smem:[#allocation11 + $0x80]]
        %v1629 = vstv %s1628
        %v1630 = vmul.f32 %v1629, %v1079
        %s1631 = sld [smem:[#allocation11 + $0x81]]
        %v1632 = vstv %s1631
        %v1633 = vmul.f32 %v1632, %v1255
        %v1634 = vadd.f32 %v1630, %v1633
        %s1635 = sld [smem:[#allocation11 + $0x82]]
        %v1636 = vstv %s1635
        %v1637 = vmul.f32 %v1636, %v1431
        %v1638 = vadd.f32 %v1634, %v1637
        %s1639 = sld [smem:[#allocation11 + $0x83]]
        %v1640 = vstv %s1639
        %v1641 = vmul.f32 %v1640, %v1607
        %v1642 = vadd.f32 %v1638, %v1641
        %s1643 = sld [smem:[#allocation12 + $0x1]]
        %v1644 = vstv %s1643
        %v1645 = vadd.f32 %v1642, %v1644
        %s1646 = scalar_lea.vmem %s543, 8 [#allocation14]
        %1647 = vst.msk [vmem:[%s1646] sm:$0xff] %vm1626, %v1645
        %s1648 = sld [smem:[#allocation11 + $0x100]]
        %v1649 = vstv %s1648
        %v1650 = vmul.f32 %v1649, %v1079
        %s1651 = sld [smem:[#allocation11 + $0x101]]
        %v1652 = vstv %s1651
        %v1653 = vmul.f32 %v1652, %v1255
        %v1654 = vadd.f32 %v1650, %v1653
        %s1655 = sld [smem:[#allocation11 + $0x102]]
        %v1656 = vstv %s1655
        %v1657 = vmul.f32 %v1656, %v1431
        %v1658 = vadd.f32 %v1654, %v1657
        %s1659 = sld [smem:[#allocation11 + $0x103]]
        %v1660 = vstv %s1659
        %v1661 = vmul.f32 %v1660, %v1607
        %v1662 = vadd.f32 %v1658, %v1661
        %s1663 = sld [smem:[#allocation12 + $0x2]]
        %v1664 = vstv %s1663
        %v1665 = vadd.f32 %v1662, %v1664
        %s1666 = scalar_lea.vmem %s543, 16 [#allocation14]
        %1667 = vst.msk [vmem:[%s1666] sm:$0xff] %vm1626, %v1665
        %s1668 = sand.u32 %s185, 1
        %s1669 = scalar_lea.sflag [#allocation4], %s1668
        %s1670 = sand.u32 %s185, 1
        %s1671 = smul.addr %s1670, 24
        %s1672 = scalar_lea.vmem [#allocation14], %s1671
        // Predicated region
        $region111: #{_lambda_.5} parent=81 // pred_check
          %p1673 = pneg %p195
        $region112: #{_lambda_.5} parent=81 // pred_check_branch
          %1675 = sbr.rel (%p1673) target = $region114
        $region113: #{_lambda_.5} parent=81 // pred_region
          %s1677 = ssub.s32 384, 384
          %1678 = vsyncadd %s1669, %s1677
          %s1679 = smul.addr %s25, 3
          %s1680 = smul.addr %s1679, 128
          %s1681 = scalar_lea.hbm %s7, %s1680
          %s1682 = sshll.u32 %s1672, 4
          %s1683 = int_to_ptr.vmem [resolvable:$true] %s1682
          %1688 = dma.vmem_to_hbm [thread:$0]  %s1683, 384, %s1681, %s1669, 128, 128, 8
        $region114: #{_lambda_.5} parent=81 // pred_fallthru
          _
      $region82: #{_lambda_.5} parent=5 // pred_fallthru
        _
      %p1689 = scmp.le.s32.totalorder 2, %s20
      // Predicated region
      $region115: #{_lambda_.5} parent=5 // pred_check
        %p1690 = pneg %p1689
      $region116: #{_lambda_.5} parent=5 // pred_check_branch
        %1692 = sbr.rel (%p1690) target = $region118
      $region117: #{_lambda_.5} parent=5 // pred_region
        %s1693 = ssub.s32 %s20, 2
        // Predicated region
        $region119: #{_lambda_.5} parent=117 // pred_check
          %p1694 = pneg %p201
        $region120: #{_lambda_.5} parent=117 // pred_check_branch
          %1696 = sbr.rel (%p1694) target = $region122
        $region121: #{_lambda_.5} parent=117 // pred_region
          %s1697 = sand.u32 %s186, 1
          %s1698 = scalar_lea.sflag [#allocation4], %s1697
          %s1699 = sand.u32 %s186, 1
          %s1700 = smul.addr %s1699, 24
          %s1701 = scalar_lea.vmem [#allocation14], %s1700
          %1702 = dma.done %s1698, 384
        $region122: #{_lambda_.5} parent=117 // pred_fallthru
          _
      $region118: #{_lambda_.5} parent=5 // pred_fallthru
        _
    $region6: #{_lambda_.5} parent=1 // loop_footer
      %s24 = sadd.s32 1, %s20
    $region7: #{_lambda_.5} parent=1 // loop_footer_branch
      %19 = sbr.rel target = $region3
    $region8: #{_lambda_.5} parent=1 // loop_exit
      _
    %1703 = vsyncpa [#allocation4], 1
    %s1704 = scalar_lea.sflag [#allocation4], 1
    %1705 = vsyncpa %s1704, 1
    %1706 = vsyncpa [#allocation5], 1
    %s1707 = scalar_lea.sflag [#allocation5], 1
    %1708 = vsyncpa %s1707, 1
    %1709 = vsyncpa [#allocation7], 1
    %1710 = vsyncpa [#allocation10], 1
    %1711 = vsyncpa [#allocation13], 1

</llo_original>
